<compile_context>
chip_gen: v5e
topology: v5e:2x2
jax: 0.10.0
libtpu: 0.0.40
codegen_flags: <defaults>
</compile_context>

<pallas_src>
import numpy as np
import jax
import jax.numpy as jnp
from jax import lax
from jax.experimental import pallas as pl
from jax.experimental.pallas import tpu as pltpu

EMB_DIM    = 128            # analog of the 2048-wide embedding slice
EMBED_SIZE = 3 * EMB_DIM    # embed_size = trnemb.shape[-1] * 3
LSTM_UNITS = EMB_DIM        # so 2*EMB_DIM == 2*LSTM_UNITS (as in the original)
N_CLASSES  = 6
OUT_PAD    = 128            # lane-dense padded classifier width
B, T = 2, 8


# ----------------------------- Pallas kernel ------------------------------- #

def _lstm_cell(g, c, H):
    """PyTorch LSTM cell update from f32 pre-activation gates g: (rows, 4H)."""
    i_g = jax.nn.sigmoid(g[:, 0 * H:1 * H])
    f_g = jax.nn.sigmoid(g[:, 1 * H:2 * H])
    g_g = jnp.tanh(g[:, 2 * H:3 * H])
    o_g = jax.nn.sigmoid(g[:, 3 * H:4 * H])
    c_new = f_g * c + i_g * g_g
    h_new = o_g * jnp.tanh(c_new)
    return h_new, c_new


def _bilstm_layer(x_bf, wih_cat, whh_f, whh_b, b_cat, h_out_ref):
    """One bidirectional LSTM layer, fully unrolled, directions interleaved.

    x_bf:      (T*B, Din) bf16 value, time-major rows (row = t*B + b).
    wih_cat:   (Din, 8H) bf16  -- [fwd 4H | bwd 4H] input projections fused.
    whh_f/b:   (H, 4H) bf16 recurrent weights per direction.
    b_cat:     (1, 8H) f32     -- pre-summed (b_ih + b_hh), [fwd | bwd].
    h_out_ref: (T*B, 2H) f32 scratch; fwd hidden -> [:, :H], bwd -> [:, H:].
    """
    H = whh_f.shape[0]
    # Single fused MXU matmul for both directions' input projections.
    gx = jnp.dot(x_bf, wih_cat, preferred_element_type=jnp.float32) + b_cat

    zeros = jnp.zeros((B, H), jnp.float32)
    h_f, c_f = zeros, zeros
    h_b, c_b = zeros, zeros
    for t in range(T):                       # static -> fully unrolled
        tt = T - 1 - t                       # backward-direction time index
        g_f = gx[t * B:(t + 1) * B, 0:4 * H] + jnp.dot(
            h_f.astype(jnp.bfloat16), whh_f, preferred_element_type=jnp.float32)
        g_b = gx[tt * B:(tt + 1) * B, 4 * H:8 * H] + jnp.dot(
            h_b.astype(jnp.bfloat16), whh_b, preferred_element_type=jnp.float32)
        h_f, c_f = _lstm_cell(g_f, c_f, H)
        h_b, c_b = _lstm_cell(g_b, c_b, H)
        h_out_ref[t * B:(t + 1) * B, 0:H] = h_f
        h_out_ref[tt * B:(tt + 1) * B, H:2 * H] = h_b


def neuralnet_kernel(
        x_ref,
        wih1_ref, whh1f_ref, whh1b_ref, b1_ref,
        wih2_ref, whh2f_ref, whh2b_ref, b2_ref,
        wl1_ref, bl1_ref, wl2_ref, bl2_ref,
        wl_ref, wemb_ref, bl_ref,
        out_ref,
        h1_ref, h2_ref):
    H = LSTM_UNITS
    x_bf = x_ref[...]                                           # (T*B, E) bf16

    # --- lstm1 (bidirectional) ---
    _bilstm_layer(x_bf, wih1_ref[...], whh1f_ref[...], whh1b_ref[...],
                  b1_ref[...], h1_ref)
    h1 = h1_ref[...]                                            # (T*B, 2H) f32
    h1_bf = h1.astype(jnp.bfloat16)

    # --- lstm2 (bidirectional), input = h_lstm1 ---
    _bilstm_layer(h1_bf, wih2_ref[...], whh2f_ref[...], whh2b_ref[...],
                  b2_ref[...], h2_ref)
    h2 = h2_ref[...]
    h2_bf = h2.astype(jnp.bfloat16)

    # --- residual heads ---
    hc1 = jnp.maximum(
        jnp.dot(h1_bf, wl1_ref[...], preferred_element_type=jnp.float32)
        + bl1_ref[...], 0.0)
    hc2 = jnp.maximum(
        jnp.dot(h2_bf, wl2_ref[...], preferred_element_type=jnp.float32)
        + bl2_ref[...], 0.0)

    hidden = h1 + h2 + hc1 + hc2                                # (T*B, 2H) f32
    # h_embadd = cat(x[..., :H], x[..., :H]) contributes
    #   x[..., :H] @ (wl[:H] + wl[H:2H])
    # to the classifier, so it is folded into a second small matmul instead of
    # materializing a 2H-wide copy of x.
    out = (jnp.dot(hidden.astype(jnp.bfloat16), wl_ref[...],
                   preferred_element_type=jnp.float32)
           + jnp.dot(x_bf[:, 0:H], wemb_ref[...],
                     preferred_element_type=jnp.float32)
           + bl_ref[...])
    out_ref[...] = out                                          # (T*B, 128)


# ------------------------------- wrappers ----------------------------------- #

def prepare_params(params):
    """Fuse / pad / cast the per-direction PyTorch-style parameters."""
    (wih1f, whh1f, b1f, wih1b, whh1b, b1b,
     wih2f, whh2f, b2f, wih2b, whh2b, b2b,
     wl1, bl1, wl2, bl2, wl, bl) = params
    H = LSTM_UNITS
    bf = jnp.bfloat16
    wih1 = jnp.concatenate([wih1f, wih1b], axis=1).astype(bf)   # (E, 8H)
    b1 = jnp.concatenate([b1f, b1b], axis=1)                    # (1, 8H) f32
    wih2 = jnp.concatenate([wih2f, wih2b], axis=1).astype(bf)   # (2H, 8H)
    b2 = jnp.concatenate([b2f, b2b], axis=1)
    wl_pad = jnp.zeros((2 * H, OUT_PAD), jnp.float32).at[:, :N_CLASSES].set(wl)
    bl_pad = jnp.zeros((1, OUT_PAD), jnp.float32).at[:, :N_CLASSES].set(bl)
    wemb = wl_pad[:H] + wl_pad[H:2 * H]                         # h_embadd fold
    return (wih1, whh1f.astype(bf), whh1b.astype(bf), b1,
            wih2, whh2f.astype(bf), whh2b.astype(bf), b2,
            wl1.astype(bf), bl1, wl2.astype(bf), bl2,
            wl_pad.astype(bf), wemb.astype(bf), bl_pad)


def neuralnet_forward(x_bte, prep):
    """x_bte: (B, T, EMBED_SIZE) float32, batch_first like PyTorch."""
    Bn, Tn, E = x_bte.shape
    H = LSTM_UNITS
    # time-major flat layout: row = t*B + b
    x2d = jnp.transpose(x_bte, (1, 0, 2)).reshape(Tn * Bn, E).astype(jnp.bfloat16)
    vmem = pl.BlockSpec(memory_space=pltpu.MemorySpace.VMEM)
    args = (x2d,) + tuple(prep)

    out2d = pl.pallas_call(
        neuralnet_kernel,
        out_shape=jax.ShapeDtypeStruct((Tn * Bn, OUT_PAD), jnp.float32),
        in_specs=[vmem] * len(args),
        out_specs=vmem,
        scratch_shapes=[
            pltpu.VMEM((Tn * Bn, 2 * H), jnp.float32),   # lstm1 outputs
            pltpu.VMEM((Tn * Bn, 2 * H), jnp.float32),   # lstm2 outputs
        ],
    )(*args)
    out = out2d.reshape(Tn, Bn, OUT_PAD)[:, :, :N_CLASSES]
    return jnp.transpose(out, (1, 0, 2))                        # (B, T, C)


# -------------------------- plain-JAX reference ----------------------------- #
# Same math as the kernel (bf16 matmul operands, f32 accumulation, f32 gates
# and state), i.e. the PyTorch forward at bf16 matmul precision.

def forward_ref(x_bte, prep):
    (wih1, whh1f, whh1b, b1, wih2, whh2f, whh2b, b2,
     wl1, bl1, wl2, bl2, wl, wemb, bl) = prep
    Bn, Tn, E = x_bte.shape
    H = LSTM_UNITS
    x = jnp.transpose(x_bte, (1, 0, 2)).astype(jnp.bfloat16)    # (T, B, E)

    def cell(g, c):
        i = jax.nn.sigmoid(g[:, :H]); f = jax.nn.sigmoid(g[:, H:2 * H])
        gg = jnp.tanh(g[:, 2 * H:3 * H]); o = jax.nn.sigmoid(g[:, 3 * H:])
        c = f * c + i * gg
        return o * jnp.tanh(c), c

    def bilstm(xin_bf, wih, whhf, whhb, b):
        gx = jnp.dot(xin_bf.reshape(Tn * Bn, -1), wih,
                     preferred_element_type=jnp.float32) + b
        gx = gx.reshape(Tn, Bn, 8 * H)

        def scan_dir(gseq, whh):
            def step(carry, gt):
                h, c = carry
                g = gt + jnp.dot(h.astype(jnp.bfloat16), whh,
                                 preferred_element_type=jnp.float32)
                h, c = cell(g, c)
                return (h, c), h
            z = jnp.zeros((Bn, H), jnp.float32)
            _, hs = lax.scan(step, (z, z), gseq)
            return hs

        hf = scan_dir(gx[..., :4 * H], whhf)
        hb = scan_dir(gx[..., 4 * H:][::-1], whhb)[::-1]
        return jnp.concatenate([hf, hb], -1)                    # (T, B, 2H)

    h1 = bilstm(x, wih1, whh1f, whh1b, b1)
    h2 = bilstm(h1.astype(jnp.bfloat16), wih2, whh2f, whh2b, b2)
    h1_2d = h1.reshape(Tn * Bn, 2 * H)
    h2_2d = h2.reshape(Tn * Bn, 2 * H)
    hc1 = jax.nn.relu(jnp.dot(h1_2d.astype(jnp.bfloat16), wl1,
                              preferred_element_type=jnp.float32) + bl1)
    hc2 = jax.nn.relu(jnp.dot(h2_2d.astype(jnp.bfloat16), wl2,
                              preferred_element_type=jnp.float32) + bl2)
    hidden = h1_2d + h2_2d + hc1 + hc2
    x2d = x.reshape(Tn * Bn, E)
    out = (jnp.dot(hidden.astype(jnp.bfloat16), wl,
                   preferred_element_type=jnp.float32)
           + jnp.dot(x2d[:, :H], wemb, preferred_element_type=jnp.float32)
           + bl)
    out = out.reshape(Tn, Bn, OUT_PAD)[:, :, :N_CLASSES]
    return jnp.transpose(out, (1, 0, 2))


# ------------------------------ parameters ---------------------------------- #

def init_params(key):
    H, E, C = LSTM_UNITS, EMBED_SIZE, N_CLASSES
    scale = 1.0 / (H ** 0.5)
    keys = iter(jax.random.split(key, 32))

    def u(shape):
        return jax.random.uniform(next(keys), shape, jnp.float32, -scale, scale)

    def lstm_dir(din):
        w_ih = u((din, 4 * H))                  # pre-transposed: (Din, 4H)
        w_hh = u((H, 4 * H))                    # pre-transposed: (H, 4H)
        b = u((1, 4 * H)) + u((1, 4 * H))       # b_ih + b_hh pre-summed
        return [w_ih, w_hh, b]

    p = []
    p += lstm_dir(E)            # lstm1 forward
    p += lstm_dir(E)            # lstm1 backward
    p += lstm_dir(2 * H)        # lstm2 forward
    p += lstm_dir(2 * H)        # lstm2 backward
    p += [u((2 * H, 2 * H)), u((1, 2 * H))]     # linear1
    p += [u((2 * H, 2 * H)), u((1, 2 * H))]     # linear2
    p += [u((2 * H, C)), u((1, C))]             # linear (classifier)
    return tuple(p)


if __name__ == "__main__":
    key = jax.random.PRNGKey(0)
    kx, kp = jax.random.split(key)
    x = jax.random.normal(kx, (B, T, EMBED_SIZE), jnp.float32)
    params = init_params(kp)
    prep = prepare_params(params)

    out = jax.jit(neuralnet_forward)(x, prep)
    out = jax.block_until_ready(out)
    assert out.shape == (B, T, N_CLASSES)

    ref = jax.block_until_ready(jax.jit(forward_ref)(x, prep))
    np.testing.assert_allclose(np.asarray(out), np.asarray(ref),
                               rtol=2e-3, atol=2e-3)
    print("KERNEL_OK")
</pallas_src>

<mosaic_0001>
module attributes {stable_mosaic.version = 11 : i64} {
  func.func @neuralnet_kernel(%arg0: memref<16x384xbf16, #tpu.memory_space<vmem>>, %arg1: memref<384x1024xbf16, #tpu.memory_space<vmem>>, %arg2: memref<128x512xbf16, #tpu.memory_space<vmem>>, %arg3: memref<128x512xbf16, #tpu.memory_space<vmem>>, %arg4: memref<1x1024xf32, #tpu.memory_space<vmem>>, %arg5: memref<256x1024xbf16, #tpu.memory_space<vmem>>, %arg6: memref<128x512xbf16, #tpu.memory_space<vmem>>, %arg7: memref<128x512xbf16, #tpu.memory_space<vmem>>, %arg8: memref<1x1024xf32, #tpu.memory_space<vmem>>, %arg9: memref<256x256xbf16, #tpu.memory_space<vmem>>, %arg10: memref<1x256xf32, #tpu.memory_space<vmem>>, %arg11: memref<256x256xbf16, #tpu.memory_space<vmem>>, %arg12: memref<1x256xf32, #tpu.memory_space<vmem>>, %arg13: memref<256x128xbf16, #tpu.memory_space<vmem>>, %arg14: memref<128x128xbf16, #tpu.memory_space<vmem>>, %arg15: memref<1x128xf32, #tpu.memory_space<vmem>>, %arg16: memref<16x128xf32, #tpu.memory_space<vmem>>, %arg17: memref<16x256xf32, #tpu.memory_space<vmem>>, %arg18: memref<16x256xf32, #tpu.memory_space<vmem>>) attributes {dimension_semantics = [], scalar_prefetch = 0 : i64, scratch_operands = 2 : i64, tpu.core_type = #tpu.core_type<tc>} {
    %c0 = arith.constant 0 : index
    %c0_0 = arith.constant 0 : index
    %0 = vector.load %arg0[%c0, %c0_0] : memref<16x384xbf16, #tpu.memory_space<vmem>>, vector<16x384xbf16>
    %c0_1 = arith.constant 0 : index
    %c0_2 = arith.constant 0 : index
    %1 = vector.load %arg1[%c0_1, %c0_2] : memref<384x1024xbf16, #tpu.memory_space<vmem>>, vector<384x1024xbf16>
    %c0_3 = arith.constant 0 : index
    %c0_4 = arith.constant 0 : index
    %2 = vector.load %arg2[%c0_3, %c0_4] : memref<128x512xbf16, #tpu.memory_space<vmem>>, vector<128x512xbf16>
    %c0_5 = arith.constant 0 : index
    %c0_6 = arith.constant 0 : index
    %3 = vector.load %arg3[%c0_5, %c0_6] : memref<128x512xbf16, #tpu.memory_space<vmem>>, vector<128x512xbf16>
    %c0_7 = arith.constant 0 : index
    %c0_8 = arith.constant 0 : index
    %4 = vector.load %arg4[%c0_7, %c0_8] : memref<1x1024xf32, #tpu.memory_space<vmem>>, vector<1x1024xf32>
    %cst = arith.constant dense<0.000000e+00> : vector<16x1024xf32>
    %5 = tpu.matmul %0, %1, %cst {dimension_numbers = #tpu.dot_dimension_numbers<[1], [0], [0], [1], [0, 0, 1, 1], [], []>} : vector<16x384xbf16>, vector<384x1024xbf16>, vector<16x1024xf32> -> vector<16x1024xf32>
    %6 = vector.broadcast %4 : vector<1x1024xf32> to vector<16x1024xf32>
    %7 = arith.addf %5, %6 : vector<16x1024xf32>
    %cst_9 = arith.constant 0.000000e+00 : f32
    %8 = vector.broadcast %cst_9 : f32 to vector<2x128xf32>
    %9 = vector.extract_strided_slice %7 {offsets = [0, 0], sizes = [2, 512], strides = [1, 1]} : vector<16x1024xf32> to vector<2x512xf32>
    %10 = arith.truncf %8 : vector<2x128xf32> to vector<2x128xbf16>
    %cst_10 = arith.constant dense<0.000000e+00> : vector<2x512xf32>
    %11 = tpu.matmul %10, %2, %cst_10 {dimension_numbers = #tpu.dot_dimension_numbers<[1], [0], [0], [1], [0, 0, 1, 1], [], []>} : vector<2x128xbf16>, vector<128x512xbf16>, vector<2x512xf32> -> vector<2x512xf32>
    %12 = arith.addf %9, %11 : vector<2x512xf32>
    %13 = vector.extract_strided_slice %7 {offsets = [14, 512], sizes = [2, 512], strides = [1, 1]} : vector<16x1024xf32> to vector<2x512xf32>
    %14 = arith.truncf %8 : vector<2x128xf32> to vector<2x128xbf16>
    %cst_11 = arith.constant dense<0.000000e+00> : vector<2x512xf32>
    %15 = tpu.matmul %14, %3, %cst_11 {dimension_numbers = #tpu.dot_dimension_numbers<[1], [0], [0], [1], [0, 0, 1, 1], [], []>} : vector<2x128xbf16>, vector<128x512xbf16>, vector<2x512xf32> -> vector<2x512xf32>
    %16 = arith.addf %13, %15 : vector<2x512xf32>
    %17 = vector.extract_strided_slice %12 {offsets = [0, 0], sizes = [2, 128], strides = [1, 1]} : vector<2x512xf32> to vector<2x128xf32>
    %18 = arith.negf %17 : vector<2x128xf32>
    %19 = math.exp %18 : vector<2x128xf32>
    %cst_12 = arith.constant 1.000000e+00 : f32
    %20 = vector.broadcast %cst_12 : f32 to vector<2x128xf32>
    %21 = arith.addf %20, %19 : vector<2x128xf32>
    %22 = arith.divf %20, %21 : vector<2x128xf32>
    %23 = vector.extract_strided_slice %12 {offsets = [0, 128], sizes = [2, 128], strides = [1, 1]} : vector<2x512xf32> to vector<2x128xf32>
    %24 = arith.negf %23 : vector<2x128xf32>
    %25 = math.exp %24 : vector<2x128xf32>
    %cst_13 = arith.constant 1.000000e+00 : f32
    %26 = vector.broadcast %cst_13 : f32 to vector<2x128xf32>
    %27 = arith.addf %26, %25 : vector<2x128xf32>
    %28 = arith.divf %26, %27 : vector<2x128xf32>
    %29 = vector.extract_strided_slice %12 {offsets = [0, 256], sizes = [2, 128], strides = [1, 1]} : vector<2x512xf32> to vector<2x128xf32>
    %30 = math.tanh %29 : vector<2x128xf32>
    %31 = vector.extract_strided_slice %12 {offsets = [0, 384], sizes = [2, 128], strides = [1, 1]} : vector<2x512xf32> to vector<2x128xf32>
    %32 = arith.negf %31 : vector<2x128xf32>
    %33 = math.exp %32 : vector<2x128xf32>
    %cst_14 = arith.constant 1.000000e+00 : f32
    %34 = vector.broadcast %cst_14 : f32 to vector<2x128xf32>
    %35 = arith.addf %34, %33 : vector<2x128xf32>
    %36 = arith.divf %34, %35 : vector<2x128xf32>
    %37 = arith.mulf %28, %8 : vector<2x128xf32>
    %38 = arith.mulf %22, %30 : vector<2x128xf32>
    %39 = arith.addf %37, %38 : vector<2x128xf32>
    %40 = math.tanh %39 : vector<2x128xf32>
    %41 = arith.mulf %36, %40 : vector<2x128xf32>
    %42 = vector.extract_strided_slice %16 {offsets = [0, 0], sizes = [2, 128], strides = [1, 1]} : vector<2x512xf32> to vector<2x128xf32>
    %43 = arith.negf %42 : vector<2x128xf32>
    %44 = math.exp %43 : vector<2x128xf32>
    %cst_15 = arith.constant 1.000000e+00 : f32
    %45 = vector.broadcast %cst_15 : f32 to vector<2x128xf32>
    %46 = arith.addf %45, %44 : vector<2x128xf32>
    %47 = arith.divf %45, %46 : vector<2x128xf32>
    %48 = vector.extract_strided_slice %16 {offsets = [0, 128], sizes = [2, 128], strides = [1, 1]} : vector<2x512xf32> to vector<2x128xf32>
    %49 = arith.negf %48 : vector<2x128xf32>
    %50 = math.exp %49 : vector<2x128xf32>
    %cst_16 = arith.constant 1.000000e+00 : f32
    %51 = vector.broadcast %cst_16 : f32 to vector<2x128xf32>
    %52 = arith.addf %51, %50 : vector<2x128xf32>
    %53 = arith.divf %51, %52 : vector<2x128xf32>
    %54 = vector.extract_strided_slice %16 {offsets = [0, 256], sizes = [2, 128], strides = [1, 1]} : vector<2x512xf32> to vector<2x128xf32>
    %55 = math.tanh %54 : vector<2x128xf32>
    %56 = vector.extract_strided_slice %16 {offsets = [0, 384], sizes = [2, 128], strides = [1, 1]} : vector<2x512xf32> to vector<2x128xf32>
    %57 = arith.negf %56 : vector<2x128xf32>
    %58 = math.exp %57 : vector<2x128xf32>
    %cst_17 = arith.constant 1.000000e+00 : f32
    %59 = vector.broadcast %cst_17 : f32 to vector<2x128xf32>
    %60 = arith.addf %59, %58 : vector<2x128xf32>
    %61 = arith.divf %59, %60 : vector<2x128xf32>
    %62 = arith.mulf %53, %8 : vector<2x128xf32>
    %63 = arith.mulf %47, %55 : vector<2x128xf32>
    %64 = arith.addf %62, %63 : vector<2x128xf32>
    %65 = math.tanh %64 : vector<2x128xf32>
    %66 = arith.mulf %61, %65 : vector<2x128xf32>
    %c0_18 = arith.constant 0 : index
    %c0_19 = arith.constant 0 : index
    %67 = vector.load %arg17[%c0_18, %c0_19] : memref<16x256xf32, #tpu.memory_space<vmem>>, vector<2x128xf32>
    tpu.vector_store %arg17[%c0_18, %c0_19], %41 {strides = array<i32>} : memref<16x256xf32, #tpu.memory_space<vmem>>, vector<2x128xf32>,
    %c14 = arith.constant 14 : index
    %c128 = arith.constant 128 : index
    %68 = vector.load %arg17[%c14, %c128] : memref<16x256xf32, #tpu.memory_space<vmem>>, vector<2x128xf32>
    tpu.vector_store %arg17[%c14, %c128], %66 {strides = array<i32>} : memref<16x256xf32, #tpu.memory_space<vmem>>, vector<2x128xf32>,
    %69 = vector.extract_strided_slice %7 {offsets = [2, 0], sizes = [2, 512], strides = [1, 1]} : vector<16x1024xf32> to vector<2x512xf32>
    %70 = arith.truncf %41 : vector<2x128xf32> to vector<2x128xbf16>
    %cst_20 = arith.constant dense<0.000000e+00> : vector<2x512xf32>
    %71 = tpu.matmul %70, %2, %cst_20 {dimension_numbers = #tpu.dot_dimension_numbers<[1], [0], [0], [1], [0, 0, 1, 1], [], []>} : vector<2x128xbf16>, vector<128x512xbf16>, vector<2x512xf32> -> vector<2x512xf32>
    %72 = arith.addf %69, %71 : vector<2x512xf32>
    %73 = vector.extract_strided_slice %7 {offsets = [12, 512], sizes = [2, 512], strides = [1, 1]} : vector<16x1024xf32> to vector<2x512xf32>
    %74 = arith.truncf %66 : vector<2x128xf32> to vector<2x128xbf16>
    %cst_21 = arith.constant dense<0.000000e+00> : vector<2x512xf32>
    %75 = tpu.matmul %74, %3, %cst_21 {dimension_numbers = #tpu.dot_dimension_numbers<[1], [0], [0], [1], [0, 0, 1, 1], [], []>} : vector<2x128xbf16>, vector<128x512xbf16>, vector<2x512xf32> -> vector<2x512xf32>
    %76 = arith.addf %73, %75 : vector<2x512xf32>
    %77 = vector.extract_strided_slice %72 {offsets = [0, 0], sizes = [2, 128], strides = [1, 1]} : vector<2x512xf32> to vector<2x128xf32>
    %78 = arith.negf %77 : vector<2x128xf32>
    %79 = math.exp %78 : vector<2x128xf32>
    %cst_22 = arith.constant 1.000000e+00 : f32
    %80 = vector.broadcast %cst_22 : f32 to vector<2x128xf32>
    %81 = arith.addf %80, %79 : vector<2x128xf32>
    %82 = arith.divf %80, %81 : vector<2x128xf32>
    %83 = vector.extract_strided_slice %72 {offsets = [0, 128], sizes = [2, 128], strides = [1, 1]} : vector<2x512xf32> to vector<2x128xf32>
    %84 = arith.negf %83 : vector<2x128xf32>
    %85 = math.exp %84 : vector<2x128xf32>
    %cst_23 = arith.constant 1.000000e+00 : f32
    %86 = vector.broadcast %cst_23 : f32 to vector<2x128xf32>
    %87 = arith.addf %86, %85 : vector<2x128xf32>
    %88 = arith.divf %86, %87 : vector<2x128xf32>
    %89 = vector.extract_strided_slice %72 {offsets = [0, 256], sizes = [2, 128], strides = [1, 1]} : vector<2x512xf32> to vector<2x128xf32>
    %90 = math.tanh %89 : vector<2x128xf32>
    %91 = vector.extract_strided_slice %72 {offsets = [0, 384], sizes = [2, 128], strides = [1, 1]} : vector<2x512xf32> to vector<2x128xf32>
    %92 = arith.negf %91 : vector<2x128xf32>
    %93 = math.exp %92 : vector<2x128xf32>
    %cst_24 = arith.constant 1.000000e+00 : f32
    %94 = vector.broadcast %cst_24 : f32 to vector<2x128xf32>
    %95 = arith.addf %94, %93 : vector<2x128xf32>
    %96 = arith.divf %94, %95 : vector<2x128xf32>
    %97 = arith.mulf %88, %39 : vector<2x128xf32>
    %98 = arith.mulf %82, %90 : vector<2x128xf32>
    %99 = arith.addf %97, %98 : vector<2x128xf32>
    %100 = math.tanh %99 : vector<2x128xf32>
    %101 = arith.mulf %96, %100 : vector<2x128xf32>
    %102 = vector.extract_strided_slice %76 {offsets = [0, 0], sizes = [2, 128], strides = [1, 1]} : vector<2x512xf32> to vector<2x128xf32>
    %103 = arith.negf %102 : vector<2x128xf32>
    %104 = math.exp %103 : vector<2x128xf32>
    %cst_25 = arith.constant 1.000000e+00 : f32
    %105 = vector.broadcast %cst_25 : f32 to vector<2x128xf32>
    %106 = arith.addf %105, %104 : vector<2x128xf32>
    %107 = arith.divf %105, %106 : vector<2x128xf32>
    %108 = vector.extract_strided_slice %76 {offsets = [0, 128], sizes = [2, 128], strides = [1, 1]} : vector<2x512xf32> to vector<2x128xf32>
    %109 = arith.negf %108 : vector<2x128xf32>
    %110 = math.exp %109 : vector<2x128xf32>
    %cst_26 = arith.constant 1.000000e+00 : f32
    %111 = vector.broadcast %cst_26 : f32 to vector<2x128xf32>
    %112 = arith.addf %111, %110 : vector<2x128xf32>
    %113 = arith.divf %111, %112 : vector<2x128xf32>
    %114 = vector.extract_strided_slice %76 {offsets = [0, 256], sizes = [2, 128], strides = [1, 1]} : vector<2x512xf32> to vector<2x128xf32>
    %115 = math.tanh %114 : vector<2x128xf32>
    %116 = vector.extract_strided_slice %76 {offsets = [0, 384], sizes = [2, 128], strides = [1, 1]} : vector<2x512xf32> to vector<2x128xf32>
    %117 = arith.negf %116 : vector<2x128xf32>
    %118 = math.exp %117 : vector<2x128xf32>
    %cst_27 = arith.constant 1.000000e+00 : f32
    %119 = vector.broadcast %cst_27 : f32 to vector<2x128xf32>
    %120 = arith.addf %119, %118 : vector<2x128xf32>
    %121 = arith.divf %119, %120 : vector<2x128xf32>
    %122 = arith.mulf %113, %64 : vector<2x128xf32>
    %123 = arith.mulf %107, %115 : vector<2x128xf32>
    %124 = arith.addf %122, %123 : vector<2x128xf32>
    %125 = math.tanh %124 : vector<2x128xf32>
    %126 = arith.mulf %121, %125 : vector<2x128xf32>
    %c2 = arith.constant 2 : index
    %c0_28 = arith.constant 0 : index
    %127 = vector.load %arg17[%c2, %c0_28] : memref<16x256xf32, #tpu.memory_space<vmem>>, vector<2x128xf32>
    tpu.vector_store %arg17[%c2, %c0_28], %101 {strides = array<i32>} : memref<16x256xf32, #tpu.memory_space<vmem>>, vector<2x128xf32>,
    %c12 = arith.constant 12 : index
    %c128_29 = arith.constant 128 : index
    %128 = vector.load %arg17[%c12, %c128_29] : memref<16x256xf32, #tpu.memory_space<vmem>>, vector<2x128xf32>
    tpu.vector_store %arg17[%c12, %c128_29], %126 {strides = array<i32>} : memref<16x256xf32, #tpu.memory_space<vmem>>, vector<2x128xf32>,
    %129 = vector.extract_strided_slice %7 {offsets = [4, 0], sizes = [2, 512], strides = [1, 1]} : vector<16x1024xf32> to vector<2x512xf32>
    %130 = arith.truncf %101 : vector<2x128xf32> to vector<2x128xbf16>
    %cst_30 = arith.constant dense<0.000000e+00> : vector<2x512xf32>
    %131 = tpu.matmul %130, %2, %cst_30 {dimension_numbers = #tpu.dot_dimension_numbers<[1], [0], [0], [1], [0, 0, 1, 1], [], []>} : vector<2x128xbf16>, vector<128x512xbf16>, vector<2x512xf32> -> vector<2x512xf32>
    %132 = arith.addf %129, %131 : vector<2x512xf32>
    %133 = vector.extract_strided_slice %7 {offsets = [10, 512], sizes = [2, 512], strides = [1, 1]} : vector<16x1024xf32> to vector<2x512xf32>
    %134 = arith.truncf %126 : vector<2x128xf32> to vector<2x128xbf16>
    %cst_31 = arith.constant dense<0.000000e+00> : vector<2x512xf32>
    %135 = tpu.matmul %134, %3, %cst_31 {dimension_numbers = #tpu.dot_dimension_numbers<[1], [0], [0], [1], [0, 0, 1, 1], [], []>} : vector<2x128xbf16>, vector<128x512xbf16>, vector<2x512xf32> -> vector<2x512xf32>
    %136 = arith.addf %133, %135 : vector<2x512xf32>
    %137 = vector.extract_strided_slice %132 {offsets = [0, 0], sizes = [2, 128], strides = [1, 1]} : vector<2x512xf32> to vector<2x128xf32>
    %138 = arith.negf %137 : vector<2x128xf32>
    %139 = math.exp %138 : vector<2x128xf32>
    %cst_32 = arith.constant 1.000000e+00 : f32
    %140 = vector.broadcast %cst_32 : f32 to vector<2x128xf32>
    %141 = arith.addf %140, %139 : vector<2x128xf32>
    %142 = arith.divf %140, %141 : vector<2x128xf32>
    %143 = vector.extract_strided_slice %132 {offsets = [0, 128], sizes = [2, 128], strides = [1, 1]} : vector<2x512xf32> to vector<2x128xf32>
    %144 = arith.negf %143 : vector<2x128xf32>
    %145 = math.exp %144 : vector<2x128xf32>
    %cst_33 = arith.constant 1.000000e+00 : f32
    %146 = vector.broadcast %cst_33 : f32 to vector<2x128xf32>
    %147 = arith.addf %146, %145 : vector<2x128xf32>
    %148 = arith.divf %146, %147 : vector<2x128xf32>
    %149 = vector.extract_strided_slice %132 {offsets = [0, 256], sizes = [2, 128], strides = [1, 1]} : vector<2x512xf32> to vector<2x128xf32>
    %150 = math.tanh %149 : vector<2x128xf32>
    %151 = vector.extract_strided_slice %132 {offsets = [0, 384], sizes = [2, 128], strides = [1, 1]} : vector<2x512xf32> to vector<2x128xf32>
    %152 = arith.negf %151 : vector<2x128xf32>
    %153 = math.exp %152 : vector<2x128xf32>
    %cst_34 = arith.constant 1.000000e+00 : f32
    %154 = vector.broadcast %cst_34 : f32 to vector<2x128xf32>
    %155 = arith.addf %154, %153 : vector<2x128xf32>
    %156 = arith.divf %154, %155 : vector<2x128xf32>
    %157 = arith.mulf %148, %99 : vector<2x128xf32>
    %158 = arith.mulf %142, %150 : vector<2x128xf32>
    %159 = arith.addf %157, %158 : vector<2x128xf32>
    %160 = math.tanh %159 : vector<2x128xf32>
    %161 = arith.mulf %156, %160 : vector<2x128xf32>
    %162 = vector.extract_strided_slice %136 {offsets = [0, 0], sizes = [2, 128], strides = [1, 1]} : vector<2x512xf32> to vector<2x128xf32>
    %163 = arith.negf %162 : vector<2x128xf32>
    %164 = math.exp %163 : vector<2x128xf32>
    %cst_35 = arith.constant 1.000000e+00 : f32
    %165 = vector.broadcast %cst_35 : f32 to vector<2x128xf32>
    %166 = arith.addf %165, %164 : vector<2x128xf32>
    %167 = arith.divf %165, %166 : vector<2x128xf32>
    %168 = vector.extract_strided_slice %136 {offsets = [0, 128], sizes = [2, 128], strides = [1, 1]} : vector<2x512xf32> to vector<2x128xf32>
    %169 = arith.negf %168 : vector<2x128xf32>
    %170 = math.exp %169 : vector<2x128xf32>
    %cst_36 = arith.constant 1.000000e+00 : f32
    %171 = vector.broadcast %cst_36 : f32 to vector<2x128xf32>
    %172 = arith.addf %171, %170 : vector<2x128xf32>
    %173 = arith.divf %171, %172 : vector<2x128xf32>
    %174 = vector.extract_strided_slice %136 {offsets = [0, 256], sizes = [2, 128], strides = [1, 1]} : vector<2x512xf32> to vector<2x128xf32>
    %175 = math.tanh %174 : vector<2x128xf32>
    %176 = vector.extract_strided_slice %136 {offsets = [0, 384], sizes = [2, 128], strides = [1, 1]} : vector<2x512xf32> to vector<2x128xf32>
    %177 = arith.negf %176 : vector<2x128xf32>
    %178 = math.exp %177 : vector<2x128xf32>
    %cst_37 = arith.constant 1.000000e+00 : f32
    %179 = vector.broadcast %cst_37 : f32 to vector<2x128xf32>
    %180 = arith.addf %179, %178 : vector<2x128xf32>
    %181 = arith.divf %179, %180 : vector<2x128xf32>
    %182 = arith.mulf %173, %124 : vector<2x128xf32>
    %183 = arith.mulf %167, %175 : vector<2x128xf32>
    %184 = arith.addf %182, %183 : vector<2x128xf32>
    %185 = math.tanh %184 : vector<2x128xf32>
    %186 = arith.mulf %181, %185 : vector<2x128xf32>
    %c4 = arith.constant 4 : index
    %c0_38 = arith.constant 0 : index
    %187 = vector.load %arg17[%c4, %c0_38] : memref<16x256xf32, #tpu.memory_space<vmem>>, vector<2x128xf32>
    tpu.vector_store %arg17[%c4, %c0_38], %161 {strides = array<i32>} : memref<16x256xf32, #tpu.memory_space<vmem>>, vector<2x128xf32>,
    %c10 = arith.constant 10 : index
    %c128_39 = arith.constant 128 : index
    %188 = vector.load %arg17[%c10, %c128_39] : memref<16x256xf32, #tpu.memory_space<vmem>>, vector<2x128xf32>
    tpu.vector_store %arg17[%c10, %c128_39], %186 {strides = array<i32>} : memref<16x256xf32, #tpu.memory_space<vmem>>, vector<2x128xf32>,
    %189 = vector.extract_strided_slice %7 {offsets = [6, 0], sizes = [2, 512], strides = [1, 1]} : vector<16x1024xf32> to vector<2x512xf32>
    %190 = arith.truncf %161 : vector<2x128xf32> to vector<2x128xbf16>
    %cst_40 = arith.constant dense<0.000000e+00> : vector<2x512xf32>
    %191 = tpu.matmul %190, %2, %cst_40 {dimension_numbers = #tpu.dot_dimension_numbers<[1], [0], [0], [1], [0, 0, 1, 1], [], []>} : vector<2x128xbf16>, vector<128x512xbf16>, vector<2x512xf32> -> vector<2x512xf32>
    %192 = arith.addf %189, %191 : vector<2x512xf32>
    %193 = vector.extract_strided_slice %7 {offsets = [8, 512], sizes = [2, 512], strides = [1, 1]} : vector<16x1024xf32> to vector<2x512xf32>
    %194 = arith.truncf %186 : vector<2x128xf32> to vector<2x128xbf16>
    %cst_41 = arith.constant dense<0.000000e+00> : vector<2x512xf32>
    %195 = tpu.matmul %194, %3, %cst_41 {dimension_numbers = #tpu.dot_dimension_numbers<[1], [0], [0], [1], [0, 0, 1, 1], [], []>} : vector<2x128xbf16>, vector<128x512xbf16>, vector<2x512xf32> -> vector<2x512xf32>
    %196 = arith.addf %193, %195 : vector<2x512xf32>
    %197 = vector.extract_strided_slice %192 {offsets = [0, 0], sizes = [2, 128], strides = [1, 1]} : vector<2x512xf32> to vector<2x128xf32>
    %198 = arith.negf %197 : vector<2x128xf32>
    %199 = math.exp %198 : vector<2x128xf32>
    %cst_42 = arith.constant 1.000000e+00 : f32
    %200 = vector.broadcast %cst_42 : f32 to vector<2x128xf32>
    %201 = arith.addf %200, %199 : vector<2x128xf32>
    %202 = arith.divf %200, %201 : vector<2x128xf32>
    %203 = vector.extract_strided_slice %192 {offsets = [0, 128], sizes = [2, 128], strides = [1, 1]} : vector<2x512xf32> to vector<2x128xf32>
    %204 = arith.negf %203 : vector<2x128xf32>
    %205 = math.exp %204 : vector<2x128xf32>
    %cst_43 = arith.constant 1.000000e+00 : f32
    %206 = vector.broadcast %cst_43 : f32 to vector<2x128xf32>
    %207 = arith.addf %206, %205 : vector<2x128xf32>
    %208 = arith.divf %206, %207 : vector<2x128xf32>
    %209 = vector.extract_strided_slice %192 {offsets = [0, 256], sizes = [2, 128], strides = [1, 1]} : vector<2x512xf32> to vector<2x128xf32>
    %210 = math.tanh %209 : vector<2x128xf32>
    %211 = vector.extract_strided_slice %192 {offsets = [0, 384], sizes = [2, 128], strides = [1, 1]} : vector<2x512xf32> to vector<2x128xf32>
    %212 = arith.negf %211 : vector<2x128xf32>
    %213 = math.exp %212 : vector<2x128xf32>
    %cst_44 = arith.constant 1.000000e+00 : f32
    %214 = vector.broadcast %cst_44 : f32 to vector<2x128xf32>
    %215 = arith.addf %214, %213 : vector<2x128xf32>
    %216 = arith.divf %214, %215 : vector<2x128xf32>
    %217 = arith.mulf %208, %159 : vector<2x128xf32>
    %218 = arith.mulf %202, %210 : vector<2x128xf32>
    %219 = arith.addf %217, %218 : vector<2x128xf32>
    %220 = math.tanh %219 : vector<2x128xf32>
    %221 = arith.mulf %216, %220 : vector<2x128xf32>
    %222 = vector.extract_strided_slice %196 {offsets = [0, 0], sizes = [2, 128], strides = [1, 1]} : vector<2x512xf32> to vector<2x128xf32>
    %223 = arith.negf %222 : vector<2x128xf32>
    %224 = math.exp %223 : vector<2x128xf32>
    %cst_45 = arith.constant 1.000000e+00 : f32
    %225 = vector.broadcast %cst_45 : f32 to vector<2x128xf32>
    %226 = arith.addf %225, %224 : vector<2x128xf32>
    %227 = arith.divf %225, %226 : vector<2x128xf32>
    %228 = vector.extract_strided_slice %196 {offsets = [0, 128], sizes = [2, 128], strides = [1, 1]} : vector<2x512xf32> to vector<2x128xf32>
    %229 = arith.negf %228 : vector<2x128xf32>
    %230 = math.exp %229 : vector<2x128xf32>
    %cst_46 = arith.constant 1.000000e+00 : f32
    %231 = vector.broadcast %cst_46 : f32 to vector<2x128xf32>
    %232 = arith.addf %231, %230 : vector<2x128xf32>
    %233 = arith.divf %231, %232 : vector<2x128xf32>
    %234 = vector.extract_strided_slice %196 {offsets = [0, 256], sizes = [2, 128], strides = [1, 1]} : vector<2x512xf32> to vector<2x128xf32>
    %235 = math.tanh %234 : vector<2x128xf32>
    %236 = vector.extract_strided_slice %196 {offsets = [0, 384], sizes = [2, 128], strides = [1, 1]} : vector<2x512xf32> to vector<2x128xf32>
    %237 = arith.negf %236 : vector<2x128xf32>
    %238 = math.exp %237 : vector<2x128xf32>
    %cst_47 = arith.constant 1.000000e+00 : f32
    %239 = vector.broadcast %cst_47 : f32 to vector<2x128xf32>
    %240 = arith.addf %239, %238 : vector<2x128xf32>
    %241 = arith.divf %239, %240 : vector<2x128xf32>
    %242 = arith.mulf %233, %184 : vector<2x128xf32>
    %243 = arith.mulf %227, %235 : vector<2x128xf32>
    %244 = arith.addf %242, %243 : vector<2x128xf32>
    %245 = math.tanh %244 : vector<2x128xf32>
    %246 = arith.mulf %241, %245 : vector<2x128xf32>
    %c6 = arith.constant 6 : index
    %c0_48 = arith.constant 0 : index
    %247 = vector.load %arg17[%c6, %c0_48] : memref<16x256xf32, #tpu.memory_space<vmem>>, vector<2x128xf32>
    tpu.vector_store %arg17[%c6, %c0_48], %221 {strides = array<i32>} : memref<16x256xf32, #tpu.memory_space<vmem>>, vector<2x128xf32>,
    %c8 = arith.constant 8 : index
    %c128_49 = arith.constant 128 : index
    %248 = vector.load %arg17[%c8, %c128_49] : memref<16x256xf32, #tpu.memory_space<vmem>>, vector<2x128xf32>
    tpu.vector_store %arg17[%c8, %c128_49], %246 {strides = array<i32>} : memref<16x256xf32, #tpu.memory_space<vmem>>, vector<2x128xf32>,
    %249 = vector.extract_strided_slice %7 {offsets = [8, 0], sizes = [2, 512], strides = [1, 1]} : vector<16x1024xf32> to vector<2x512xf32>
    %250 = arith.truncf %221 : vector<2x128xf32> to vector<2x128xbf16>
    %cst_50 = arith.constant dense<0.000000e+00> : vector<2x512xf32>
    %251 = tpu.matmul %250, %2, %cst_50 {dimension_numbers = #tpu.dot_dimension_numbers<[1], [0], [0], [1], [0, 0, 1, 1], [], []>} : vector<2x128xbf16>, vector<128x512xbf16>, vector<2x512xf32> -> vector<2x512xf32>
    %252 = arith.addf %249, %251 : vector<2x512xf32>
    %253 = vector.extract_strided_slice %7 {offsets = [6, 512], sizes = [2, 512], strides = [1, 1]} : vector<16x1024xf32> to vector<2x512xf32>
    %254 = arith.truncf %246 : vector<2x128xf32> to vector<2x128xbf16>
    %cst_51 = arith.constant dense<0.000000e+00> : vector<2x512xf32>
    %255 = tpu.matmul %254, %3, %cst_51 {dimension_numbers = #tpu.dot_dimension_numbers<[1], [0], [0], [1], [0, 0, 1, 1], [], []>} : vector<2x128xbf16>, vector<128x512xbf16>, vector<2x512xf32> -> vector<2x512xf32>
    %256 = arith.addf %253, %255 : vector<2x512xf32>
    %257 = vector.extract_strided_slice %252 {offsets = [0, 0], sizes = [2, 128], strides = [1, 1]} : vector<2x512xf32> to vector<2x128xf32>
    %258 = arith.negf %257 : vector<2x128xf32>
    %259 = math.exp %258 : vector<2x128xf32>
    %cst_52 = arith.constant 1.000000e+00 : f32
    %260 = vector.broadcast %cst_52 : f32 to vector<2x128xf32>
    %261 = arith.addf %260, %259 : vector<2x128xf32>
    %262 = arith.divf %260, %261 : vector<2x128xf32>
    %263 = vector.extract_strided_slice %252 {offsets = [0, 128], sizes = [2, 128], strides = [1, 1]} : vector<2x512xf32> to vector<2x128xf32>
    %264 = arith.negf %263 : vector<2x128xf32>
    %265 = math.exp %264 : vector<2x128xf32>
    %cst_53 = arith.constant 1.000000e+00 : f32
    %266 = vector.broadcast %cst_53 : f32 to vector<2x128xf32>
    %267 = arith.addf %266, %265 : vector<2x128xf32>
    %268 = arith.divf %266, %267 : vector<2x128xf32>
    %269 = vector.extract_strided_slice %252 {offsets = [0, 256], sizes = [2, 128], strides = [1, 1]} : vector<2x512xf32> to vector<2x128xf32>
    %270 = math.tanh %269 : vector<2x128xf32>
    %271 = vector.extract_strided_slice %252 {offsets = [0, 384], sizes = [2, 128], strides = [1, 1]} : vector<2x512xf32> to vector<2x128xf32>
    %272 = arith.negf %271 : vector<2x128xf32>
    %273 = math.exp %272 : vector<2x128xf32>
    %cst_54 = arith.constant 1.000000e+00 : f32
    %274 = vector.broadcast %cst_54 : f32 to vector<2x128xf32>
    %275 = arith.addf %274, %273 : vector<2x128xf32>
    %276 = arith.divf %274, %275 : vector<2x128xf32>
    %277 = arith.mulf %268, %219 : vector<2x128xf32>
    %278 = arith.mulf %262, %270 : vector<2x128xf32>
    %279 = arith.addf %277, %278 : vector<2x128xf32>
    %280 = math.tanh %279 : vector<2x128xf32>
    %281 = arith.mulf %276, %280 : vector<2x128xf32>
    %282 = vector.extract_strided_slice %256 {offsets = [0, 0], sizes = [2, 128], strides = [1, 1]} : vector<2x512xf32> to vector<2x128xf32>
    %283 = arith.negf %282 : vector<2x128xf32>
    %284 = math.exp %283 : vector<2x128xf32>
    %cst_55 = arith.constant 1.000000e+00 : f32
    %285 = vector.broadcast %cst_55 : f32 to vector<2x128xf32>
    %286 = arith.addf %285, %284 : vector<2x128xf32>
    %287 = arith.divf %285, %286 : vector<2x128xf32>
    %288 = vector.extract_strided_slice %256 {offsets = [0, 128], sizes = [2, 128], strides = [1, 1]} : vector<2x512xf32> to vector<2x128xf32>
    %289 = arith.negf %288 : vector<2x128xf32>
    %290 = math.exp %289 : vector<2x128xf32>
    %cst_56 = arith.constant 1.000000e+00 : f32
    %291 = vector.broadcast %cst_56 : f32 to vector<2x128xf32>
    %292 = arith.addf %291, %290 : vector<2x128xf32>
    %293 = arith.divf %291, %292 : vector<2x128xf32>
    %294 = vector.extract_strided_slice %256 {offsets = [0, 256], sizes = [2, 128], strides = [1, 1]} : vector<2x512xf32> to vector<2x128xf32>
    %295 = math.tanh %294 : vector<2x128xf32>
    %296 = vector.extract_strided_slice %256 {offsets = [0, 384], sizes = [2, 128], strides = [1, 1]} : vector<2x512xf32> to vector<2x128xf32>
    %297 = arith.negf %296 : vector<2x128xf32>
    %298 = math.exp %297 : vector<2x128xf32>
    %cst_57 = arith.constant 1.000000e+00 : f32
    %299 = vector.broadcast %cst_57 : f32 to vector<2x128xf32>
    %300 = arith.addf %299, %298 : vector<2x128xf32>
    %301 = arith.divf %299, %300 : vector<2x128xf32>
    %302 = arith.mulf %293, %244 : vector<2x128xf32>
    %303 = arith.mulf %287, %295 : vector<2x128xf32>
    %304 = arith.addf %302, %303 : vector<2x128xf32>
    %305 = math.tanh %304 : vector<2x128xf32>
    %306 = arith.mulf %301, %305 : vector<2x128xf32>
    %c8_58 = arith.constant 8 : index
    %c0_59 = arith.constant 0 : index
    %307 = vector.load %arg17[%c8_58, %c0_59] : memref<16x256xf32, #tpu.memory_space<vmem>>, vector<2x128xf32>
    tpu.vector_store %arg17[%c8_58, %c0_59], %281 {strides = array<i32>} : memref<16x256xf32, #tpu.memory_space<vmem>>, vector<2x128xf32>,
    %c6_60 = arith.constant 6 : index
    %c128_61 = arith.constant 128 : index
    %308 = vector.load %arg17[%c6_60, %c128_61] : memref<16x256xf32, #tpu.memory_space<vmem>>, vector<2x128xf32>
    tpu.vector_store %arg17[%c6_60, %c128_61], %306 {strides = array<i32>} : memref<16x256xf32, #tpu.memory_space<vmem>>, vector<2x128xf32>,
    %309 = vector.extract_strided_slice %7 {offsets = [10, 0], sizes = [2, 512], strides = [1, 1]} : vector<16x1024xf32> to vector<2x512xf32>
    %310 = arith.truncf %281 : vector<2x128xf32> to vector<2x128xbf16>
    %cst_62 = arith.constant dense<0.000000e+00> : vector<2x512xf32>
    %311 = tpu.matmul %310, %2, %cst_62 {dimension_numbers = #tpu.dot_dimension_numbers<[1], [0], [0], [1], [0, 0, 1, 1], [], []>} : vector<2x128xbf16>, vector<128x512xbf16>, vector<2x512xf32> -> vector<2x512xf32>
    %312 = arith.addf %309, %311 : vector<2x512xf32>
    %313 = vector.extract_strided_slice %7 {offsets = [4, 512], sizes = [2, 512], strides = [1, 1]} : vector<16x1024xf32> to vector<2x512xf32>
    %314 = arith.truncf %306 : vector<2x128xf32> to vector<2x128xbf16>
    %cst_63 = arith.constant dense<0.000000e+00> : vector<2x512xf32>
    %315 = tpu.matmul %314, %3, %cst_63 {dimension_numbers = #tpu.dot_dimension_numbers<[1], [0], [0], [1], [0, 0, 1, 1], [], []>} : vector<2x128xbf16>, vector<128x512xbf16>, vector<2x512xf32> -> vector<2x512xf32>
    %316 = arith.addf %313, %315 : vector<2x512xf32>
    %317 = vector.extract_strided_slice %312 {offsets = [0, 0], sizes = [2, 128], strides = [1, 1]} : vector<2x512xf32> to vector<2x128xf32>
    %318 = arith.negf %317 : vector<2x128xf32>
    %319 = math.exp %318 : vector<2x128xf32>
    %cst_64 = arith.constant 1.000000e+00 : f32
    %320 = vector.broadcast %cst_64 : f32 to vector<2x128xf32>
    %321 = arith.addf %320, %319 : vector<2x128xf32>
    %322 = arith.divf %320, %321 : vector<2x128xf32>
    %323 = vector.extract_strided_slice %312 {offsets = [0, 128], sizes = [2, 128], strides = [1, 1]} : vector<2x512xf32> to vector<2x128xf32>
    %324 = arith.negf %323 : vector<2x128xf32>
    %325 = math.exp %324 : vector<2x128xf32>
    %cst_65 = arith.constant 1.000000e+00 : f32
    %326 = vector.broadcast %cst_65 : f32 to vector<2x128xf32>
    %327 = arith.addf %326, %325 : vector<2x128xf32>
    %328 = arith.divf %326, %327 : vector<2x128xf32>
    %329 = vector.extract_strided_slice %312 {offsets = [0, 256], sizes = [2, 128], strides = [1, 1]} : vector<2x512xf32> to vector<2x128xf32>
    %330 = math.tanh %329 : vector<2x128xf32>
    %331 = vector.extract_strided_slice %312 {offsets = [0, 384], sizes = [2, 128], strides = [1, 1]} : vector<2x512xf32> to vector<2x128xf32>
    %332 = arith.negf %331 : vector<2x128xf32>
    %333 = math.exp %332 : vector<2x128xf32>
    %cst_66 = arith.constant 1.000000e+00 : f32
    %334 = vector.broadcast %cst_66 : f32 to vector<2x128xf32>
    %335 = arith.addf %334, %333 : vector<2x128xf32>
    %336 = arith.divf %334, %335 : vector<2x128xf32>
    %337 = arith.mulf %328, %279 : vector<2x128xf32>
    %338 = arith.mulf %322, %330 : vector<2x128xf32>
    %339 = arith.addf %337, %338 : vector<2x128xf32>
    %340 = math.tanh %339 : vector<2x128xf32>
    %341 = arith.mulf %336, %340 : vector<2x128xf32>
    %342 = vector.extract_strided_slice %316 {offsets = [0, 0], sizes = [2, 128], strides = [1, 1]} : vector<2x512xf32> to vector<2x128xf32>
    %343 = arith.negf %342 : vector<2x128xf32>
    %344 = math.exp %343 : vector<2x128xf32>
    %cst_67 = arith.constant 1.000000e+00 : f32
    %345 = vector.broadcast %cst_67 : f32 to vector<2x128xf32>
    %346 = arith.addf %345, %344 : vector<2x128xf32>
    %347 = arith.divf %345, %346 : vector<2x128xf32>
    %348 = vector.extract_strided_slice %316 {offsets = [0, 128], sizes = [2, 128], strides = [1, 1]} : vector<2x512xf32> to vector<2x128xf32>
    %349 = arith.negf %348 : vector<2x128xf32>
    %350 = math.exp %349 : vector<2x128xf32>
    %cst_68 = arith.constant 1.000000e+00 : f32
    %351 = vector.broadcast %cst_68 : f32 to vector<2x128xf32>
    %352 = arith.addf %351, %350 : vector<2x128xf32>
    %353 = arith.divf %351, %352 : vector<2x128xf32>
    %354 = vector.extract_strided_slice %316 {offsets = [0, 256], sizes = [2, 128], strides = [1, 1]} : vector<2x512xf32> to vector<2x128xf32>
    %355 = math.tanh %354 : vector<2x128xf32>
    %356 = vector.extract_strided_slice %316 {offsets = [0, 384], sizes = [2, 128], strides = [1, 1]} : vector<2x512xf32> to vector<2x128xf32>
    %357 = arith.negf %356 : vector<2x128xf32>
    %358 = math.exp %357 : vector<2x128xf32>
    %cst_69 = arith.constant 1.000000e+00 : f32
    %359 = vector.broadcast %cst_69 : f32 to vector<2x128xf32>
    %360 = arith.addf %359, %358 : vector<2x128xf32>
    %361 = arith.divf %359, %360 : vector<2x128xf32>
    %362 = arith.mulf %353, %304 : vector<2x128xf32>
    %363 = arith.mulf %347, %355 : vector<2x128xf32>
    %364 = arith.addf %362, %363 : vector<2x128xf32>
    %365 = math.tanh %364 : vector<2x128xf32>
    %366 = arith.mulf %361, %365 : vector<2x128xf32>
    %c10_70 = arith.constant 10 : index
    %c0_71 = arith.constant 0 : index
    %367 = vector.load %arg17[%c10_70, %c0_71] : memref<16x256xf32, #tpu.memory_space<vmem>>, vector<2x128xf32>
    tpu.vector_store %arg17[%c10_70, %c0_71], %341 {strides = array<i32>} : memref<16x256xf32, #tpu.memory_space<vmem>>, vector<2x128xf32>,
    %c4_72 = arith.constant 4 : index
    %c128_73 = arith.constant 128 : index
    %368 = vector.load %arg17[%c4_72, %c128_73] : memref<16x256xf32, #tpu.memory_space<vmem>>, vector<2x128xf32>
    tpu.vector_store %arg17[%c4_72, %c128_73], %366 {strides = array<i32>} : memref<16x256xf32, #tpu.memory_space<vmem>>, vector<2x128xf32>,
    %369 = vector.extract_strided_slice %7 {offsets = [12, 0], sizes = [2, 512], strides = [1, 1]} : vector<16x1024xf32> to vector<2x512xf32>
    %370 = arith.truncf %341 : vector<2x128xf32> to vector<2x128xbf16>
    %cst_74 = arith.constant dense<0.000000e+00> : vector<2x512xf32>
    %371 = tpu.matmul %370, %2, %cst_74 {dimension_numbers = #tpu.dot_dimension_numbers<[1], [0], [0], [1], [0, 0, 1, 1], [], []>} : vector<2x128xbf16>, vector<128x512xbf16>, vector<2x512xf32> -> vector<2x512xf32>
    %372 = arith.addf %369, %371 : vector<2x512xf32>
    %373 = vector.extract_strided_slice %7 {offsets = [2, 512], sizes = [2, 512], strides = [1, 1]} : vector<16x1024xf32> to vector<2x512xf32>
    %374 = arith.truncf %366 : vector<2x128xf32> to vector<2x128xbf16>
    %cst_75 = arith.constant dense<0.000000e+00> : vector<2x512xf32>
    %375 = tpu.matmul %374, %3, %cst_75 {dimension_numbers = #tpu.dot_dimension_numbers<[1], [0], [0], [1], [0, 0, 1, 1], [], []>} : vector<2x128xbf16>, vector<128x512xbf16>, vector<2x512xf32> -> vector<2x512xf32>
    %376 = arith.addf %373, %375 : vector<2x512xf32>
    %377 = vector.extract_strided_slice %372 {offsets = [0, 0], sizes = [2, 128], strides = [1, 1]} : vector<2x512xf32> to vector<2x128xf32>
    %378 = arith.negf %377 : vector<2x128xf32>
    %379 = math.exp %378 : vector<2x128xf32>
    %cst_76 = arith.constant 1.000000e+00 : f32
    %380 = vector.broadcast %cst_76 : f32 to vector<2x128xf32>
    %381 = arith.addf %380, %379 : vector<2x128xf32>
    %382 = arith.divf %380, %381 : vector<2x128xf32>
    %383 = vector.extract_strided_slice %372 {offsets = [0, 128], sizes = [2, 128], strides = [1, 1]} : vector<2x512xf32> to vector<2x128xf32>
    %384 = arith.negf %383 : vector<2x128xf32>
    %385 = math.exp %384 : vector<2x128xf32>
    %cst_77 = arith.constant 1.000000e+00 : f32
    %386 = vector.broadcast %cst_77 : f32 to vector<2x128xf32>
    %387 = arith.addf %386, %385 : vector<2x128xf32>
    %388 = arith.divf %386, %387 : vector<2x128xf32>
    %389 = vector.extract_strided_slice %372 {offsets = [0, 256], sizes = [2, 128], strides = [1, 1]} : vector<2x512xf32> to vector<2x128xf32>
    %390 = math.tanh %389 : vector<2x128xf32>
    %391 = vector.extract_strided_slice %372 {offsets = [0, 384], sizes = [2, 128], strides = [1, 1]} : vector<2x512xf32> to vector<2x128xf32>
    %392 = arith.negf %391 : vector<2x128xf32>
    %393 = math.exp %392 : vector<2x128xf32>
    %cst_78 = arith.constant 1.000000e+00 : f32
    %394 = vector.broadcast %cst_78 : f32 to vector<2x128xf32>
    %395 = arith.addf %394, %393 : vector<2x128xf32>
    %396 = arith.divf %394, %395 : vector<2x128xf32>
    %397 = arith.mulf %388, %339 : vector<2x128xf32>
    %398 = arith.mulf %382, %390 : vector<2x128xf32>
    %399 = arith.addf %397, %398 : vector<2x128xf32>
    %400 = math.tanh %399 : vector<2x128xf32>
    %401 = arith.mulf %396, %400 : vector<2x128xf32>
    %402 = vector.extract_strided_slice %376 {offsets = [0, 0], sizes = [2, 128], strides = [1, 1]} : vector<2x512xf32> to vector<2x128xf32>
    %403 = arith.negf %402 : vector<2x128xf32>
    %404 = math.exp %403 : vector<2x128xf32>
    %cst_79 = arith.constant 1.000000e+00 : f32
    %405 = vector.broadcast %cst_79 : f32 to vector<2x128xf32>
    %406 = arith.addf %405, %404 : vector<2x128xf32>
    %407 = arith.divf %405, %406 : vector<2x128xf32>
    %408 = vector.extract_strided_slice %376 {offsets = [0, 128], sizes = [2, 128], strides = [1, 1]} : vector<2x512xf32> to vector<2x128xf32>
    %409 = arith.negf %408 : vector<2x128xf32>
    %410 = math.exp %409 : vector<2x128xf32>
    %cst_80 = arith.constant 1.000000e+00 : f32
    %411 = vector.broadcast %cst_80 : f32 to vector<2x128xf32>
    %412 = arith.addf %411, %410 : vector<2x128xf32>
    %413 = arith.divf %411, %412 : vector<2x128xf32>
    %414 = vector.extract_strided_slice %376 {offsets = [0, 256], sizes = [2, 128], strides = [1, 1]} : vector<2x512xf32> to vector<2x128xf32>
    %415 = math.tanh %414 : vector<2x128xf32>
    %416 = vector.extract_strided_slice %376 {offsets = [0, 384], sizes = [2, 128], strides = [1, 1]} : vector<2x512xf32> to vector<2x128xf32>
    %417 = arith.negf %416 : vector<2x128xf32>
    %418 = math.exp %417 : vector<2x128xf32>
    %cst_81 = arith.constant 1.000000e+00 : f32
    %419 = vector.broadcast %cst_81 : f32 to vector<2x128xf32>
    %420 = arith.addf %419, %418 : vector<2x128xf32>
    %421 = arith.divf %419, %420 : vector<2x128xf32>
    %422 = arith.mulf %413, %364 : vector<2x128xf32>
    %423 = arith.mulf %407, %415 : vector<2x128xf32>
    %424 = arith.addf %422, %423 : vector<2x128xf32>
    %425 = math.tanh %424 : vector<2x128xf32>
    %426 = arith.mulf %421, %425 : vector<2x128xf32>
    %c12_82 = arith.constant 12 : index
    %c0_83 = arith.constant 0 : index
    %427 = vector.load %arg17[%c12_82, %c0_83] : memref<16x256xf32, #tpu.memory_space<vmem>>, vector<2x128xf32>
    tpu.vector_store %arg17[%c12_82, %c0_83], %401 {strides = array<i32>} : memref<16x256xf32, #tpu.memory_space<vmem>>, vector<2x128xf32>,
    %c2_84 = arith.constant 2 : index
    %c128_85 = arith.constant 128 : index
    %428 = vector.load %arg17[%c2_84, %c128_85] : memref<16x256xf32, #tpu.memory_space<vmem>>, vector<2x128xf32>
    tpu.vector_store %arg17[%c2_84, %c128_85], %426 {strides = array<i32>} : memref<16x256xf32, #tpu.memory_space<vmem>>, vector<2x128xf32>,
    %429 = vector.extract_strided_slice %7 {offsets = [14, 0], sizes = [2, 512], strides = [1, 1]} : vector<16x1024xf32> to vector<2x512xf32>
    %430 = arith.truncf %401 : vector<2x128xf32> to vector<2x128xbf16>
    %cst_86 = arith.constant dense<0.000000e+00> : vector<2x512xf32>
    %431 = tpu.matmul %430, %2, %cst_86 {dimension_numbers = #tpu.dot_dimension_numbers<[1], [0], [0], [1], [0, 0, 1, 1], [], []>} : vector<2x128xbf16>, vector<128x512xbf16>, vector<2x512xf32> -> vector<2x512xf32>
    %432 = arith.addf %429, %431 : vector<2x512xf32>
    %433 = vector.extract_strided_slice %7 {offsets = [0, 512], sizes = [2, 512], strides = [1, 1]} : vector<16x1024xf32> to vector<2x512xf32>
    %434 = arith.truncf %426 : vector<2x128xf32> to vector<2x128xbf16>
    %cst_87 = arith.constant dense<0.000000e+00> : vector<2x512xf32>
    %435 = tpu.matmul %434, %3, %cst_87 {dimension_numbers = #tpu.dot_dimension_numbers<[1], [0], [0], [1], [0, 0, 1, 1], [], []>} : vector<2x128xbf16>, vector<128x512xbf16>, vector<2x512xf32> -> vector<2x512xf32>
    %436 = arith.addf %433, %435 : vector<2x512xf32>
    %437 = vector.extract_strided_slice %432 {offsets = [0, 0], sizes = [2, 128], strides = [1, 1]} : vector<2x512xf32> to vector<2x128xf32>
    %438 = arith.negf %437 : vector<2x128xf32>
    %439 = math.exp %438 : vector<2x128xf32>
    %cst_88 = arith.constant 1.000000e+00 : f32
    %440 = vector.broadcast %cst_88 : f32 to vector<2x128xf32>
    %441 = arith.addf %440, %439 : vector<2x128xf32>
    %442 = arith.divf %440, %441 : vector<2x128xf32>
    %443 = vector.extract_strided_slice %432 {offsets = [0, 128], sizes = [2, 128], strides = [1, 1]} : vector<2x512xf32> to vector<2x128xf32>
    %444 = arith.negf %443 : vector<2x128xf32>
    %445 = math.exp %444 : vector<2x128xf32>
    %cst_89 = arith.constant 1.000000e+00 : f32
    %446 = vector.broadcast %cst_89 : f32 to vector<2x128xf32>
    %447 = arith.addf %446, %445 : vector<2x128xf32>
    %448 = arith.divf %446, %447 : vector<2x128xf32>
    %449 = vector.extract_strided_slice %432 {offsets = [0, 256], sizes = [2, 128], strides = [1, 1]} : vector<2x512xf32> to vector<2x128xf32>
    %450 = math.tanh %449 : vector<2x128xf32>
    %451 = vector.extract_strided_slice %432 {offsets = [0, 384], sizes = [2, 128], strides = [1, 1]} : vector<2x512xf32> to vector<2x128xf32>
    %452 = arith.negf %451 : vector<2x128xf32>
    %453 = math.exp %452 : vector<2x128xf32>
    %cst_90 = arith.constant 1.000000e+00 : f32
    %454 = vector.broadcast %cst_90 : f32 to vector<2x128xf32>
    %455 = arith.addf %454, %453 : vector<2x128xf32>
    %456 = arith.divf %454, %455 : vector<2x128xf32>
    %457 = arith.mulf %448, %399 : vector<2x128xf32>
    %458 = arith.mulf %442, %450 : vector<2x128xf32>
    %459 = arith.addf %457, %458 : vector<2x128xf32>
    %460 = math.tanh %459 : vector<2x128xf32>
    %461 = arith.mulf %456, %460 : vector<2x128xf32>
    %462 = vector.extract_strided_slice %436 {offsets = [0, 0], sizes = [2, 128], strides = [1, 1]} : vector<2x512xf32> to vector<2x128xf32>
    %463 = arith.negf %462 : vector<2x128xf32>
    %464 = math.exp %463 : vector<2x128xf32>
    %cst_91 = arith.constant 1.000000e+00 : f32
    %465 = vector.broadcast %cst_91 : f32 to vector<2x128xf32>
    %466 = arith.addf %465, %464 : vector<2x128xf32>
    %467 = arith.divf %465, %466 : vector<2x128xf32>
    %468 = vector.extract_strided_slice %436 {offsets = [0, 128], sizes = [2, 128], strides = [1, 1]} : vector<2x512xf32> to vector<2x128xf32>
    %469 = arith.negf %468 : vector<2x128xf32>
    %470 = math.exp %469 : vector<2x128xf32>
    %cst_92 = arith.constant 1.000000e+00 : f32
    %471 = vector.broadcast %cst_92 : f32 to vector<2x128xf32>
    %472 = arith.addf %471, %470 : vector<2x128xf32>
    %473 = arith.divf %471, %472 : vector<2x128xf32>
    %474 = vector.extract_strided_slice %436 {offsets = [0, 256], sizes = [2, 128], strides = [1, 1]} : vector<2x512xf32> to vector<2x128xf32>
    %475 = math.tanh %474 : vector<2x128xf32>
    %476 = vector.extract_strided_slice %436 {offsets = [0, 384], sizes = [2, 128], strides = [1, 1]} : vector<2x512xf32> to vector<2x128xf32>
    %477 = arith.negf %476 : vector<2x128xf32>
    %478 = math.exp %477 : vector<2x128xf32>
    %cst_93 = arith.constant 1.000000e+00 : f32
    %479 = vector.broadcast %cst_93 : f32 to vector<2x128xf32>
    %480 = arith.addf %479, %478 : vector<2x128xf32>
    %481 = arith.divf %479, %480 : vector<2x128xf32>
    %482 = arith.mulf %473, %424 : vector<2x128xf32>
    %483 = arith.mulf %467, %475 : vector<2x128xf32>
    %484 = arith.addf %482, %483 : vector<2x128xf32>
    %485 = math.tanh %484 : vector<2x128xf32>
    %486 = arith.mulf %481, %485 : vector<2x128xf32>
    %c14_94 = arith.constant 14 : index
    %c0_95 = arith.constant 0 : index
    %487 = vector.load %arg17[%c14_94, %c0_95] : memref<16x256xf32, #tpu.memory_space<vmem>>, vector<2x128xf32>
    tpu.vector_store %arg17[%c14_94, %c0_95], %461 {strides = array<i32>} : memref<16x256xf32, #tpu.memory_space<vmem>>, vector<2x128xf32>,
    %c0_96 = arith.constant 0 : index
    %c128_97 = arith.constant 128 : index
    %488 = vector.load %arg17[%c0_96, %c128_97] : memref<16x256xf32, #tpu.memory_space<vmem>>, vector<2x128xf32>
    tpu.vector_store %arg17[%c0_96, %c128_97], %486 {strides = array<i32>} : memref<16x256xf32, #tpu.memory_space<vmem>>, vector<2x128xf32>,
    %c0_98 = arith.constant 0 : index
    %c0_99 = arith.constant 0 : index
    %489 = vector.load %arg17[%c0_98, %c0_99] : memref<16x256xf32, #tpu.memory_space<vmem>>, vector<16x256xf32>
    %490 = arith.truncf %489 : vector<16x256xf32> to vector<16x256xbf16>
    %c0_100 = arith.constant 0 : index
    %c0_101 = arith.constant 0 : index
    %491 = vector.load %arg5[%c0_100, %c0_101] : memref<256x1024xbf16, #tpu.memory_space<vmem>>, vector<256x1024xbf16>
    %c0_102 = arith.constant 0 : index
    %c0_103 = arith.constant 0 : index
    %492 = vector.load %arg6[%c0_102, %c0_103] : memref<128x512xbf16, #tpu.memory_space<vmem>>, vector<128x512xbf16>
    %c0_104 = arith.constant 0 : index
    %c0_105 = arith.constant 0 : index
    %493 = vector.load %arg7[%c0_104, %c0_105] : memref<128x512xbf16, #tpu.memory_space<vmem>>, vector<128x512xbf16>
    %c0_106 = arith.constant 0 : index
    %c0_107 = arith.constant 0 : index
    %494 = vector.load %arg8[%c0_106, %c0_107] : memref<1x1024xf32, #tpu.memory_space<vmem>>, vector<1x1024xf32>
    %cst_108 = arith.constant dense<0.000000e+00> : vector<16x1024xf32>
    %495 = tpu.matmul %490, %491, %cst_108 {dimension_numbers = #tpu.dot_dimension_numbers<[1], [0], [0], [1], [0, 0, 1, 1], [], []>} : vector<16x256xbf16>, vector<256x1024xbf16>, vector<16x1024xf32> -> vector<16x1024xf32>
    %496 = vector.broadcast %494 : vector<1x1024xf32> to vector<16x1024xf32>
    %497 = arith.addf %495, %496 : vector<16x1024xf32>
    %cst_109 = arith.constant 0.000000e+00 : f32
    %498 = vector.broadcast %cst_109 : f32 to vector<2x128xf32>
    %499 = vector.extract_strided_slice %497 {offsets = [0, 0], sizes = [2, 512], strides = [1, 1]} : vector<16x1024xf32> to vector<2x512xf32>
    %500 = arith.truncf %498 : vector<2x128xf32> to vector<2x128xbf16>
    %cst_110 = arith.constant dense<0.000000e+00> : vector<2x512xf32>
    %501 = tpu.matmul %500, %492, %cst_110 {dimension_numbers = #tpu.dot_dimension_numbers<[1], [0], [0], [1], [0, 0, 1, 1], [], []>} : vector<2x128xbf16>, vector<128x512xbf16>, vector<2x512xf32> -> vector<2x512xf32>
    %502 = arith.addf %499, %501 : vector<2x512xf32>
    %503 = vector.extract_strided_slice %497 {offsets = [14, 512], sizes = [2, 512], strides = [1, 1]} : vector<16x1024xf32> to vector<2x512xf32>
    %504 = arith.truncf %498 : vector<2x128xf32> to vector<2x128xbf16>
    %cst_111 = arith.constant dense<0.000000e+00> : vector<2x512xf32>
    %505 = tpu.matmul %504, %493, %cst_111 {dimension_numbers = #tpu.dot_dimension_numbers<[1], [0], [0], [1], [0, 0, 1, 1], [], []>} : vector<2x128xbf16>, vector<128x512xbf16>, vector<2x512xf32> -> vector<2x512xf32>
    %506 = arith.addf %503, %505 : vector<2x512xf32>
    %507 = vector.extract_strided_slice %502 {offsets = [0, 0], sizes = [2, 128], strides = [1, 1]} : vector<2x512xf32> to vector<2x128xf32>
    %508 = arith.negf %507 : vector<2x128xf32>
    %509 = math.exp %508 : vector<2x128xf32>
    %cst_112 = arith.constant 1.000000e+00 : f32
    %510 = vector.broadcast %cst_112 : f32 to vector<2x128xf32>
    %511 = arith.addf %510, %509 : vector<2x128xf32>
    %512 = arith.divf %510, %511 : vector<2x128xf32>
    %513 = vector.extract_strided_slice %502 {offsets = [0, 128], sizes = [2, 128], strides = [1, 1]} : vector<2x512xf32> to vector<2x128xf32>
    %514 = arith.negf %513 : vector<2x128xf32>
    %515 = math.exp %514 : vector<2x128xf32>
    %cst_113 = arith.constant 1.000000e+00 : f32
    %516 = vector.broadcast %cst_113 : f32 to vector<2x128xf32>
    %517 = arith.addf %516, %515 : vector<2x128xf32>
    %518 = arith.divf %516, %517 : vector<2x128xf32>
    %519 = vector.extract_strided_slice %502 {offsets = [0, 256], sizes = [2, 128], strides = [1, 1]} : vector<2x512xf32> to vector<2x128xf32>
    %520 = math.tanh %519 : vector<2x128xf32>
    %521 = vector.extract_strided_slice %502 {offsets = [0, 384], sizes = [2, 128], strides = [1, 1]} : vector<2x512xf32> to vector<2x128xf32>
    %522 = arith.negf %521 : vector<2x128xf32>
    %523 = math.exp %522 : vector<2x128xf32>
    %cst_114 = arith.constant 1.000000e+00 : f32
    %524 = vector.broadcast %cst_114 : f32 to vector<2x128xf32>
    %525 = arith.addf %524, %523 : vector<2x128xf32>
    %526 = arith.divf %524, %525 : vector<2x128xf32>
    %527 = arith.mulf %518, %498 : vector<2x128xf32>
    %528 = arith.mulf %512, %520 : vector<2x128xf32>
    %529 = arith.addf %527, %528 : vector<2x128xf32>
    %530 = math.tanh %529 : vector<2x128xf32>
    %531 = arith.mulf %526, %530 : vector<2x128xf32>
    %532 = vector.extract_strided_slice %506 {offsets = [0, 0], sizes = [2, 128], strides = [1, 1]} : vector<2x512xf32> to vector<2x128xf32>
    %533 = arith.negf %532 : vector<2x128xf32>
    %534 = math.exp %533 : vector<2x128xf32>
    %cst_115 = arith.constant 1.000000e+00 : f32
    %535 = vector.broadcast %cst_115 : f32 to vector<2x128xf32>
    %536 = arith.addf %535, %534 : vector<2x128xf32>
    %537 = arith.divf %535, %536 : vector<2x128xf32>
    %538 = vector.extract_strided_slice %506 {offsets = [0, 128], sizes = [2, 128], strides = [1, 1]} : vector<2x512xf32> to vector<2x128xf32>
    %539 = arith.negf %538 : vector<2x128xf32>
    %540 = math.exp %539 : vector<2x128xf32>
    %cst_116 = arith.constant 1.000000e+00 : f32
    %541 = vector.broadcast %cst_116 : f32 to vector<2x128xf32>
    %542 = arith.addf %541, %540 : vector<2x128xf32>
    %543 = arith.divf %541, %542 : vector<2x128xf32>
    %544 = vector.extract_strided_slice %506 {offsets = [0, 256], sizes = [2, 128], strides = [1, 1]} : vector<2x512xf32> to vector<2x128xf32>
    %545 = math.tanh %544 : vector<2x128xf32>
    %546 = vector.extract_strided_slice %506 {offsets = [0, 384], sizes = [2, 128], strides = [1, 1]} : vector<2x512xf32> to vector<2x128xf32>
    %547 = arith.negf %546 : vector<2x128xf32>
    %548 = math.exp %547 : vector<2x128xf32>
    %cst_117 = arith.constant 1.000000e+00 : f32
    %549 = vector.broadcast %cst_117 : f32 to vector<2x128xf32>
    %550 = arith.addf %549, %548 : vector<2x128xf32>
    %551 = arith.divf %549, %550 : vector<2x128xf32>
    %552 = arith.mulf %543, %498 : vector<2x128xf32>
    %553 = arith.mulf %537, %545 : vector<2x128xf32>
    %554 = arith.addf %552, %553 : vector<2x128xf32>
    %555 = math.tanh %554 : vector<2x128xf32>
    %556 = arith.mulf %551, %555 : vector<2x128xf32>
    %c0_118 = arith.constant 0 : index
    %c0_119 = arith.constant 0 : index
    %557 = vector.load %arg18[%c0_118, %c0_119] : memref<16x256xf32, #tpu.memory_space<vmem>>, vector<2x128xf32>
    tpu.vector_store %arg18[%c0_118, %c0_119], %531 {strides = array<i32>} : memref<16x256xf32, #tpu.memory_space<vmem>>, vector<2x128xf32>,
    %c14_120 = arith.constant 14 : index
    %c128_121 = arith.constant 128 : index
    %558 = vector.load %arg18[%c14_120, %c128_121] : memref<16x256xf32, #tpu.memory_space<vmem>>, vector<2x128xf32>
    tpu.vector_store %arg18[%c14_120, %c128_121], %556 {strides = array<i32>} : memref<16x256xf32, #tpu.memory_space<vmem>>, vector<2x128xf32>,
    %559 = vector.extract_strided_slice %497 {offsets = [2, 0], sizes = [2, 512], strides = [1, 1]} : vector<16x1024xf32> to vector<2x512xf32>
    %560 = arith.truncf %531 : vector<2x128xf32> to vector<2x128xbf16>
    %cst_122 = arith.constant dense<0.000000e+00> : vector<2x512xf32>
    %561 = tpu.matmul %560, %492, %cst_122 {dimension_numbers = #tpu.dot_dimension_numbers<[1], [0], [0], [1], [0, 0, 1, 1], [], []>} : vector<2x128xbf16>, vector<128x512xbf16>, vector<2x512xf32> -> vector<2x512xf32>
    %562 = arith.addf %559, %561 : vector<2x512xf32>
    %563 = vector.extract_strided_slice %497 {offsets = [12, 512], sizes = [2, 512], strides = [1, 1]} : vector<16x1024xf32> to vector<2x512xf32>
    %564 = arith.truncf %556 : vector<2x128xf32> to vector<2x128xbf16>
    %cst_123 = arith.constant dense<0.000000e+00> : vector<2x512xf32>
    %565 = tpu.matmul %564, %493, %cst_123 {dimension_numbers = #tpu.dot_dimension_numbers<[1], [0], [0], [1], [0, 0, 1, 1], [], []>} : vector<2x128xbf16>, vector<128x512xbf16>, vector<2x512xf32> -> vector<2x512xf32>
    %566 = arith.addf %563, %565 : vector<2x512xf32>
    %567 = vector.extract_strided_slice %562 {offsets = [0, 0], sizes = [2, 128], strides = [1, 1]} : vector<2x512xf32> to vector<2x128xf32>
    %568 = arith.negf %567 : vector<2x128xf32>
    %569 = math.exp %568 : vector<2x128xf32>
    %cst_124 = arith.constant 1.000000e+00 : f32
    %570 = vector.broadcast %cst_124 : f32 to vector<2x128xf32>
    %571 = arith.addf %570, %569 : vector<2x128xf32>
    %572 = arith.divf %570, %571 : vector<2x128xf32>
    %573 = vector.extract_strided_slice %562 {offsets = [0, 128], sizes = [2, 128], strides = [1, 1]} : vector<2x512xf32> to vector<2x128xf32>
    %574 = arith.negf %573 : vector<2x128xf32>
    %575 = math.exp %574 : vector<2x128xf32>
    %cst_125 = arith.constant 1.000000e+00 : f32
    %576 = vector.broadcast %cst_125 : f32 to vector<2x128xf32>
    %577 = arith.addf %576, %575 : vector<2x128xf32>
    %578 = arith.divf %576, %577 : vector<2x128xf32>
    %579 = vector.extract_strided_slice %562 {offsets = [0, 256], sizes = [2, 128], strides = [1, 1]} : vector<2x512xf32> to vector<2x128xf32>
    %580 = math.tanh %579 : vector<2x128xf32>
    %581 = vector.extract_strided_slice %562 {offsets = [0, 384], sizes = [2, 128], strides = [1, 1]} : vector<2x512xf32> to vector<2x128xf32>
    %582 = arith.negf %581 : vector<2x128xf32>
    %583 = math.exp %582 : vector<2x128xf32>
    %cst_126 = arith.constant 1.000000e+00 : f32
    %584 = vector.broadcast %cst_126 : f32 to vector<2x128xf32>
    %585 = arith.addf %584, %583 : vector<2x128xf32>
    %586 = arith.divf %584, %585 : vector<2x128xf32>
    %587 = arith.mulf %578, %529 : vector<2x128xf32>
    %588 = arith.mulf %572, %580 : vector<2x128xf32>
    %589 = arith.addf %587, %588 : vector<2x128xf32>
    %590 = math.tanh %589 : vector<2x128xf32>
    %591 = arith.mulf %586, %590 : vector<2x128xf32>
    %592 = vector.extract_strided_slice %566 {offsets = [0, 0], sizes = [2, 128], strides = [1, 1]} : vector<2x512xf32> to vector<2x128xf32>
    %593 = arith.negf %592 : vector<2x128xf32>
    %594 = math.exp %593 : vector<2x128xf32>
    %cst_127 = arith.constant 1.000000e+00 : f32
    %595 = vector.broadcast %cst_127 : f32 to vector<2x128xf32>
    %596 = arith.addf %595, %594 : vector<2x128xf32>
    %597 = arith.divf %595, %596 : vector<2x128xf32>
    %598 = vector.extract_strided_slice %566 {offsets = [0, 128], sizes = [2, 128], strides = [1, 1]} : vector<2x512xf32> to vector<2x128xf32>
    %599 = arith.negf %598 : vector<2x128xf32>
    %600 = math.exp %599 : vector<2x128xf32>
    %cst_128 = arith.constant 1.000000e+00 : f32
    %601 = vector.broadcast %cst_128 : f32 to vector<2x128xf32>
    %602 = arith.addf %601, %600 : vector<2x128xf32>
    %603 = arith.divf %601, %602 : vector<2x128xf32>
    %604 = vector.extract_strided_slice %566 {offsets = [0, 256], sizes = [2, 128], strides = [1, 1]} : vector<2x512xf32> to vector<2x128xf32>
    %605 = math.tanh %604 : vector<2x128xf32>
    %606 = vector.extract_strided_slice %566 {offsets = [0, 384], sizes = [2, 128], strides = [1, 1]} : vector<2x512xf32> to vector<2x128xf32>
    %607 = arith.negf %606 : vector<2x128xf32>
    %608 = math.exp %607 : vector<2x128xf32>
    %cst_129 = arith.constant 1.000000e+00 : f32
    %609 = vector.broadcast %cst_129 : f32 to vector<2x128xf32>
    %610 = arith.addf %609, %608 : vector<2x128xf32>
    %611 = arith.divf %609, %610 : vector<2x128xf32>
    %612 = arith.mulf %603, %554 : vector<2x128xf32>
    %613 = arith.mulf %597, %605 : vector<2x128xf32>
    %614 = arith.addf %612, %613 : vector<2x128xf32>
    %615 = math.tanh %614 : vector<2x128xf32>
    %616 = arith.mulf %611, %615 : vector<2x128xf32>
    %c2_130 = arith.constant 2 : index
    %c0_131 = arith.constant 0 : index
    %617 = vector.load %arg18[%c2_130, %c0_131] : memref<16x256xf32, #tpu.memory_space<vmem>>, vector<2x128xf32>
    tpu.vector_store %arg18[%c2_130, %c0_131], %591 {strides = array<i32>} : memref<16x256xf32, #tpu.memory_space<vmem>>, vector<2x128xf32>,
    %c12_132 = arith.constant 12 : index
    %c128_133 = arith.constant 128 : index
    %618 = vector.load %arg18[%c12_132, %c128_133] : memref<16x256xf32, #tpu.memory_space<vmem>>, vector<2x128xf32>
    tpu.vector_store %arg18[%c12_132, %c128_133], %616 {strides = array<i32>} : memref<16x256xf32, #tpu.memory_space<vmem>>, vector<2x128xf32>,
    %619 = vector.extract_strided_slice %497 {offsets = [4, 0], sizes = [2, 512], strides = [1, 1]} : vector<16x1024xf32> to vector<2x512xf32>
    %620 = arith.truncf %591 : vector<2x128xf32> to vector<2x128xbf16>
    %cst_134 = arith.constant dense<0.000000e+00> : vector<2x512xf32>
    %621 = tpu.matmul %620, %492, %cst_134 {dimension_numbers = #tpu.dot_dimension_numbers<[1], [0], [0], [1], [0, 0, 1, 1], [], []>} : vector<2x128xbf16>, vector<128x512xbf16>, vector<2x512xf32> -> vector<2x512xf32>
    %622 = arith.addf %619, %621 : vector<2x512xf32>
    %623 = vector.extract_strided_slice %497 {offsets = [10, 512], sizes = [2, 512], strides = [1, 1]} : vector<16x1024xf32> to vector<2x512xf32>
    %624 = arith.truncf %616 : vector<2x128xf32> to vector<2x128xbf16>
    %cst_135 = arith.constant dense<0.000000e+00> : vector<2x512xf32>
    %625 = tpu.matmul %624, %493, %cst_135 {dimension_numbers = #tpu.dot_dimension_numbers<[1], [0], [0], [1], [0, 0, 1, 1], [], []>} : vector<2x128xbf16>, vector<128x512xbf16>, vector<2x512xf32> -> vector<2x512xf32>
    %626 = arith.addf %623, %625 : vector<2x512xf32>
    %627 = vector.extract_strided_slice %622 {offsets = [0, 0], sizes = [2, 128], strides = [1, 1]} : vector<2x512xf32> to vector<2x128xf32>
    %628 = arith.negf %627 : vector<2x128xf32>
    %629 = math.exp %628 : vector<2x128xf32>
    %cst_136 = arith.constant 1.000000e+00 : f32
    %630 = vector.broadcast %cst_136 : f32 to vector<2x128xf32>
    %631 = arith.addf %630, %629 : vector<2x128xf32>
    %632 = arith.divf %630, %631 : vector<2x128xf32>
    %633 = vector.extract_strided_slice %622 {offsets = [0, 128], sizes = [2, 128], strides = [1, 1]} : vector<2x512xf32> to vector<2x128xf32>
    %634 = arith.negf %633 : vector<2x128xf32>
    %635 = math.exp %634 : vector<2x128xf32>
    %cst_137 = arith.constant 1.000000e+00 : f32
    %636 = vector.broadcast %cst_137 : f32 to vector<2x128xf32>
    %637 = arith.addf %636, %635 : vector<2x128xf32>
    %638 = arith.divf %636, %637 : vector<2x128xf32>
    %639 = vector.extract_strided_slice %622 {offsets = [0, 256], sizes = [2, 128], strides = [1, 1]} : vector<2x512xf32> to vector<2x128xf32>
    %640 = math.tanh %639 : vector<2x128xf32>
    %641 = vector.extract_strided_slice %622 {offsets = [0, 384], sizes = [2, 128], strides = [1, 1]} : vector<2x512xf32> to vector<2x128xf32>
    %642 = arith.negf %641 : vector<2x128xf32>
    %643 = math.exp %642 : vector<2x128xf32>
    %cst_138 = arith.constant 1.000000e+00 : f32
    %644 = vector.broadcast %cst_138 : f32 to vector<2x128xf32>
    %645 = arith.addf %644, %643 : vector<2x128xf32>
    %646 = arith.divf %644, %645 : vector<2x128xf32>
    %647 = arith.mulf %638, %589 : vector<2x128xf32>
    %648 = arith.mulf %632, %640 : vector<2x128xf32>
    %649 = arith.addf %647, %648 : vector<2x128xf32>
    %650 = math.tanh %649 : vector<2x128xf32>
    %651 = arith.mulf %646, %650 : vector<2x128xf32>
    %652 = vector.extract_strided_slice %626 {offsets = [0, 0], sizes = [2, 128], strides = [1, 1]} : vector<2x512xf32> to vector<2x128xf32>
    %653 = arith.negf %652 : vector<2x128xf32>
    %654 = math.exp %653 : vector<2x128xf32>
    %cst_139 = arith.constant 1.000000e+00 : f32
    %655 = vector.broadcast %cst_139 : f32 to vector<2x128xf32>
    %656 = arith.addf %655, %654 : vector<2x128xf32>
    %657 = arith.divf %655, %656 : vector<2x128xf32>
    %658 = vector.extract_strided_slice %626 {offsets = [0, 128], sizes = [2, 128], strides = [1, 1]} : vector<2x512xf32> to vector<2x128xf32>
    %659 = arith.negf %658 : vector<2x128xf32>
    %660 = math.exp %659 : vector<2x128xf32>
    %cst_140 = arith.constant 1.000000e+00 : f32
    %661 = vector.broadcast %cst_140 : f32 to vector<2x128xf32>
    %662 = arith.addf %661, %660 : vector<2x128xf32>
    %663 = arith.divf %661, %662 : vector<2x128xf32>
    %664 = vector.extract_strided_slice %626 {offsets = [0, 256], sizes = [2, 128], strides = [1, 1]} : vector<2x512xf32> to vector<2x128xf32>
    %665 = math.tanh %664 : vector<2x128xf32>
    %666 = vector.extract_strided_slice %626 {offsets = [0, 384], sizes = [2, 128], strides = [1, 1]} : vector<2x512xf32> to vector<2x128xf32>
    %667 = arith.negf %666 : vector<2x128xf32>
    %668 = math.exp %667 : vector<2x128xf32>
    %cst_141 = arith.constant 1.000000e+00 : f32
    %669 = vector.broadcast %cst_141 : f32 to vector<2x128xf32>
    %670 = arith.addf %669, %668 : vector<2x128xf32>
    %671 = arith.divf %669, %670 : vector<2x128xf32>
    %672 = arith.mulf %663, %614 : vector<2x128xf32>
    %673 = arith.mulf %657, %665 : vector<2x128xf32>
    %674 = arith.addf %672, %673 : vector<2x128xf32>
    %675 = math.tanh %674 : vector<2x128xf32>
    %676 = arith.mulf %671, %675 : vector<2x128xf32>
    %c4_142 = arith.constant 4 : index
    %c0_143 = arith.constant 0 : index
    %677 = vector.load %arg18[%c4_142, %c0_143] : memref<16x256xf32, #tpu.memory_space<vmem>>, vector<2x128xf32>
    tpu.vector_store %arg18[%c4_142, %c0_143], %651 {strides = array<i32>} : memref<16x256xf32, #tpu.memory_space<vmem>>, vector<2x128xf32>,
    %c10_144 = arith.constant 10 : index
    %c128_145 = arith.constant 128 : index
    %678 = vector.load %arg18[%c10_144, %c128_145] : memref<16x256xf32, #tpu.memory_space<vmem>>, vector<2x128xf32>
    tpu.vector_store %arg18[%c10_144, %c128_145], %676 {strides = array<i32>} : memref<16x256xf32, #tpu.memory_space<vmem>>, vector<2x128xf32>,
    %679 = vector.extract_strided_slice %497 {offsets = [6, 0], sizes = [2, 512], strides = [1, 1]} : vector<16x1024xf32> to vector<2x512xf32>
    %680 = arith.truncf %651 : vector<2x128xf32> to vector<2x128xbf16>
    %cst_146 = arith.constant dense<0.000000e+00> : vector<2x512xf32>
    %681 = tpu.matmul %680, %492, %cst_146 {dimension_numbers = #tpu.dot_dimension_numbers<[1], [0], [0], [1], [0, 0, 1, 1], [], []>} : vector<2x128xbf16>, vector<128x512xbf16>, vector<2x512xf32> -> vector<2x512xf32>
    %682 = arith.addf %679, %681 : vector<2x512xf32>
    %683 = vector.extract_strided_slice %497 {offsets = [8, 512], sizes = [2, 512], strides = [1, 1]} : vector<16x1024xf32> to vector<2x512xf32>
    %684 = arith.truncf %676 : vector<2x128xf32> to vector<2x128xbf16>
    %cst_147 = arith.constant dense<0.000000e+00> : vector<2x512xf32>
    %685 = tpu.matmul %684, %493, %cst_147 {dimension_numbers = #tpu.dot_dimension_numbers<[1], [0], [0], [1], [0, 0, 1, 1], [], []>} : vector<2x128xbf16>, vector<128x512xbf16>, vector<2x512xf32> -> vector<2x512xf32>
    %686 = arith.addf %683, %685 : vector<2x512xf32>
    %687 = vector.extract_strided_slice %682 {offsets = [0, 0], sizes = [2, 128], strides = [1, 1]} : vector<2x512xf32> to vector<2x128xf32>
    %688 = arith.negf %687 : vector<2x128xf32>
    %689 = math.exp %688 : vector<2x128xf32>
    %cst_148 = arith.constant 1.000000e+00 : f32
    %690 = vector.broadcast %cst_148 : f32 to vector<2x128xf32>
    %691 = arith.addf %690, %689 : vector<2x128xf32>
    %692 = arith.divf %690, %691 : vector<2x128xf32>
    %693 = vector.extract_strided_slice %682 {offsets = [0, 128], sizes = [2, 128], strides = [1, 1]} : vector<2x512xf32> to vector<2x128xf32>
    %694 = arith.negf %693 : vector<2x128xf32>
    %695 = math.exp %694 : vector<2x128xf32>
    %cst_149 = arith.constant 1.000000e+00 : f32
    %696 = vector.broadcast %cst_149 : f32 to vector<2x128xf32>
    %697 = arith.addf %696, %695 : vector<2x128xf32>
    %698 = arith.divf %696, %697 : vector<2x128xf32>
    %699 = vector.extract_strided_slice %682 {offsets = [0, 256], sizes = [2, 128], strides = [1, 1]} : vector<2x512xf32> to vector<2x128xf32>
    %700 = math.tanh %699 : vector<2x128xf32>
    %701 = vector.extract_strided_slice %682 {offsets = [0, 384], sizes = [2, 128], strides = [1, 1]} : vector<2x512xf32> to vector<2x128xf32>
    %702 = arith.negf %701 : vector<2x128xf32>
    %703 = math.exp %702 : vector<2x128xf32>
    %cst_150 = arith.constant 1.000000e+00 : f32
    %704 = vector.broadcast %cst_150 : f32 to vector<2x128xf32>
    %705 = arith.addf %704, %703 : vector<2x128xf32>
    %706 = arith.divf %704, %705 : vector<2x128xf32>
    %707 = arith.mulf %698, %649 : vector<2x128xf32>
    %708 = arith.mulf %692, %700 : vector<2x128xf32>
    %709 = arith.addf %707, %708 : vector<2x128xf32>
    %710 = math.tanh %709 : vector<2x128xf32>
    %711 = arith.mulf %706, %710 : vector<2x128xf32>
    %712 = vector.extract_strided_slice %686 {offsets = [0, 0], sizes = [2, 128], strides = [1, 1]} : vector<2x512xf32> to vector<2x128xf32>
    %713 = arith.negf %712 : vector<2x128xf32>
    %714 = math.exp %713 : vector<2x128xf32>
    %cst_151 = arith.constant 1.000000e+00 : f32
    %715 = vector.broadcast %cst_151 : f32 to vector<2x128xf32>
    %716 = arith.addf %715, %714 : vector<2x128xf32>
    %717 = arith.divf %715, %716 : vector<2x128xf32>
    %718 = vector.extract_strided_slice %686 {offsets = [0, 128], sizes = [2, 128], strides = [1, 1]} : vector<2x512xf32> to vector<2x128xf32>
    %719 = arith.negf %718 : vector<2x128xf32>
    %720 = math.exp %719 : vector<2x128xf32>
    %cst_152 = arith.constant 1.000000e+00 : f32
    %721 = vector.broadcast %cst_152 : f32 to vector<2x128xf32>
    %722 = arith.addf %721, %720 : vector<2x128xf32>
    %723 = arith.divf %721, %722 : vector<2x128xf32>
    %724 = vector.extract_strided_slice %686 {offsets = [0, 256], sizes = [2, 128], strides = [1, 1]} : vector<2x512xf32> to vector<2x128xf32>
    %725 = math.tanh %724 : vector<2x128xf32>
    %726 = vector.extract_strided_slice %686 {offsets = [0, 384], sizes = [2, 128], strides = [1, 1]} : vector<2x512xf32> to vector<2x128xf32>
    %727 = arith.negf %726 : vector<2x128xf32>
    %728 = math.exp %727 : vector<2x128xf32>
    %cst_153 = arith.constant 1.000000e+00 : f32
    %729 = vector.broadcast %cst_153 : f32 to vector<2x128xf32>
    %730 = arith.addf %729, %728 : vector<2x128xf32>
    %731 = arith.divf %729, %730 : vector<2x128xf32>
    %732 = arith.mulf %723, %674 : vector<2x128xf32>
    %733 = arith.mulf %717, %725 : vector<2x128xf32>
    %734 = arith.addf %732, %733 : vector<2x128xf32>
    %735 = math.tanh %734 : vector<2x128xf32>
    %736 = arith.mulf %731, %735 : vector<2x128xf32>
    %c6_154 = arith.constant 6 : index
    %c0_155 = arith.constant 0 : index
    %737 = vector.load %arg18[%c6_154, %c0_155] : memref<16x256xf32, #tpu.memory_space<vmem>>, vector<2x128xf32>
    tpu.vector_store %arg18[%c6_154, %c0_155], %711 {strides = array<i32>} : memref<16x256xf32, #tpu.memory_space<vmem>>, vector<2x128xf32>,
    %c8_156 = arith.constant 8 : index
    %c128_157 = arith.constant 128 : index
    %738 = vector.load %arg18[%c8_156, %c128_157] : memref<16x256xf32, #tpu.memory_space<vmem>>, vector<2x128xf32>
    tpu.vector_store %arg18[%c8_156, %c128_157], %736 {strides = array<i32>} : memref<16x256xf32, #tpu.memory_space<vmem>>, vector<2x128xf32>,
    %739 = vector.extract_strided_slice %497 {offsets = [8, 0], sizes = [2, 512], strides = [1, 1]} : vector<16x1024xf32> to vector<2x512xf32>
    %740 = arith.truncf %711 : vector<2x128xf32> to vector<2x128xbf16>
    %cst_158 = arith.constant dense<0.000000e+00> : vector<2x512xf32>
    %741 = tpu.matmul %740, %492, %cst_158 {dimension_numbers = #tpu.dot_dimension_numbers<[1], [0], [0], [1], [0, 0, 1, 1], [], []>} : vector<2x128xbf16>, vector<128x512xbf16>, vector<2x512xf32> -> vector<2x512xf32>
    %742 = arith.addf %739, %741 : vector<2x512xf32>
    %743 = vector.extract_strided_slice %497 {offsets = [6, 512], sizes = [2, 512], strides = [1, 1]} : vector<16x1024xf32> to vector<2x512xf32>
    %744 = arith.truncf %736 : vector<2x128xf32> to vector<2x128xbf16>
    %cst_159 = arith.constant dense<0.000000e+00> : vector<2x512xf32>
    %745 = tpu.matmul %744, %493, %cst_159 {dimension_numbers = #tpu.dot_dimension_numbers<[1], [0], [0], [1], [0, 0, 1, 1], [], []>} : vector<2x128xbf16>, vector<128x512xbf16>, vector<2x512xf32> -> vector<2x512xf32>
    %746 = arith.addf %743, %745 : vector<2x512xf32>
    %747 = vector.extract_strided_slice %742 {offsets = [0, 0], sizes = [2, 128], strides = [1, 1]} : vector<2x512xf32> to vector<2x128xf32>
    %748 = arith.negf %747 : vector<2x128xf32>
    %749 = math.exp %748 : vector<2x128xf32>
    %cst_160 = arith.constant 1.000000e+00 : f32
    %750 = vector.broadcast %cst_160 : f32 to vector<2x128xf32>
    %751 = arith.addf %750, %749 : vector<2x128xf32>
    %752 = arith.divf %750, %751 : vector<2x128xf32>
    %753 = vector.extract_strided_slice %742 {offsets = [0, 128], sizes = [2, 128], strides = [1, 1]} : vector<2x512xf32> to vector<2x128xf32>
    %754 = arith.negf %753 : vector<2x128xf32>
    %755 = math.exp %754 : vector<2x128xf32>
    %cst_161 = arith.constant 1.000000e+00 : f32
    %756 = vector.broadcast %cst_161 : f32 to vector<2x128xf32>
    %757 = arith.addf %756, %755 : vector<2x128xf32>
    %758 = arith.divf %756, %757 : vector<2x128xf32>
    %759 = vector.extract_strided_slice %742 {offsets = [0, 256], sizes = [2, 128], strides = [1, 1]} : vector<2x512xf32> to vector<2x128xf32>
    %760 = math.tanh %759 : vector<2x128xf32>
    %761 = vector.extract_strided_slice %742 {offsets = [0, 384], sizes = [2, 128], strides = [1, 1]} : vector<2x512xf32> to vector<2x128xf32>
    %762 = arith.negf %761 : vector<2x128xf32>
    %763 = math.exp %762 : vector<2x128xf32>
    %cst_162 = arith.constant 1.000000e+00 : f32
    %764 = vector.broadcast %cst_162 : f32 to vector<2x128xf32>
    %765 = arith.addf %764, %763 : vector<2x128xf32>
    %766 = arith.divf %764, %765 : vector<2x128xf32>
    %767 = arith.mulf %758, %709 : vector<2x128xf32>
    %768 = arith.mulf %752, %760 : vector<2x128xf32>
    %769 = arith.addf %767, %768 : vector<2x128xf32>
    %770 = math.tanh %769 : vector<2x128xf32>
    %771 = arith.mulf %766, %770 : vector<2x128xf32>
    %772 = vector.extract_strided_slice %746 {offsets = [0, 0], sizes = [2, 128], strides = [1, 1]} : vector<2x512xf32> to vector<2x128xf32>
    %773 = arith.negf %772 : vector<2x128xf32>
    %774 = math.exp %773 : vector<2x128xf32>
    %cst_163 = arith.constant 1.000000e+00 : f32
    %775 = vector.broadcast %cst_163 : f32 to vector<2x128xf32>
    %776 = arith.addf %775, %774 : vector<2x128xf32>
    %777 = arith.divf %775, %776 : vector<2x128xf32>
    %778 = vector.extract_strided_slice %746 {offsets = [0, 128], sizes = [2, 128], strides = [1, 1]} : vector<2x512xf32> to vector<2x128xf32>
    %779 = arith.negf %778 : vector<2x128xf32>
    %780 = math.exp %779 : vector<2x128xf32>
    %cst_164 = arith.constant 1.000000e+00 : f32
    %781 = vector.broadcast %cst_164 : f32 to vector<2x128xf32>
    %782 = arith.addf %781, %780 : vector<2x128xf32>
    %783 = arith.divf %781, %782 : vector<2x128xf32>
    %784 = vector.extract_strided_slice %746 {offsets = [0, 256], sizes = [2, 128], strides = [1, 1]} : vector<2x512xf32> to vector<2x128xf32>
    %785 = math.tanh %784 : vector<2x128xf32>
    %786 = vector.extract_strided_slice %746 {offsets = [0, 384], sizes = [2, 128], strides = [1, 1]} : vector<2x512xf32> to vector<2x128xf32>
    %787 = arith.negf %786 : vector<2x128xf32>
    %788 = math.exp %787 : vector<2x128xf32>
    %cst_165 = arith.constant 1.000000e+00 : f32
    %789 = vector.broadcast %cst_165 : f32 to vector<2x128xf32>
    %790 = arith.addf %789, %788 : vector<2x128xf32>
    %791 = arith.divf %789, %790 : vector<2x128xf32>
    %792 = arith.mulf %783, %734 : vector<2x128xf32>
    %793 = arith.mulf %777, %785 : vector<2x128xf32>
    %794 = arith.addf %792, %793 : vector<2x128xf32>
    %795 = math.tanh %794 : vector<2x128xf32>
    %796 = arith.mulf %791, %795 : vector<2x128xf32>
    %c8_166 = arith.constant 8 : index
    %c0_167 = arith.constant 0 : index
    %797 = vector.load %arg18[%c8_166, %c0_167] : memref<16x256xf32, #tpu.memory_space<vmem>>, vector<2x128xf32>
    tpu.vector_store %arg18[%c8_166, %c0_167], %771 {strides = array<i32>} : memref<16x256xf32, #tpu.memory_space<vmem>>, vector<2x128xf32>,
    %c6_168 = arith.constant 6 : index
    %c128_169 = arith.constant 128 : index
    %798 = vector.load %arg18[%c6_168, %c128_169] : memref<16x256xf32, #tpu.memory_space<vmem>>, vector<2x128xf32>
    tpu.vector_store %arg18[%c6_168, %c128_169], %796 {strides = array<i32>} : memref<16x256xf32, #tpu.memory_space<vmem>>, vector<2x128xf32>,
    %799 = vector.extract_strided_slice %497 {offsets = [10, 0], sizes = [2, 512], strides = [1, 1]} : vector<16x1024xf32> to vector<2x512xf32>
    %800 = arith.truncf %771 : vector<2x128xf32> to vector<2x128xbf16>
    %cst_170 = arith.constant dense<0.000000e+00> : vector<2x512xf32>
    %801 = tpu.matmul %800, %492, %cst_170 {dimension_numbers = #tpu.dot_dimension_numbers<[1], [0], [0], [1], [0, 0, 1, 1], [], []>} : vector<2x128xbf16>, vector<128x512xbf16>, vector<2x512xf32> -> vector<2x512xf32>
    %802 = arith.addf %799, %801 : vector<2x512xf32>
    %803 = vector.extract_strided_slice %497 {offsets = [4, 512], sizes = [2, 512], strides = [1, 1]} : vector<16x1024xf32> to vector<2x512xf32>
    %804 = arith.truncf %796 : vector<2x128xf32> to vector<2x128xbf16>
    %cst_171 = arith.constant dense<0.000000e+00> : vector<2x512xf32>
    %805 = tpu.matmul %804, %493, %cst_171 {dimension_numbers = #tpu.dot_dimension_numbers<[1], [0], [0], [1], [0, 0, 1, 1], [], []>} : vector<2x128xbf16>, vector<128x512xbf16>, vector<2x512xf32> -> vector<2x512xf32>
    %806 = arith.addf %803, %805 : vector<2x512xf32>
    %807 = vector.extract_strided_slice %802 {offsets = [0, 0], sizes = [2, 128], strides = [1, 1]} : vector<2x512xf32> to vector<2x128xf32>
    %808 = arith.negf %807 : vector<2x128xf32>
    %809 = math.exp %808 : vector<2x128xf32>
    %cst_172 = arith.constant 1.000000e+00 : f32
    %810 = vector.broadcast %cst_172 : f32 to vector<2x128xf32>
    %811 = arith.addf %810, %809 : vector<2x128xf32>
    %812 = arith.divf %810, %811 : vector<2x128xf32>
    %813 = vector.extract_strided_slice %802 {offsets = [0, 128], sizes = [2, 128], strides = [1, 1]} : vector<2x512xf32> to vector<2x128xf32>
    %814 = arith.negf %813 : vector<2x128xf32>
    %815 = math.exp %814 : vector<2x128xf32>
    %cst_173 = arith.constant 1.000000e+00 : f32
    %816 = vector.broadcast %cst_173 : f32 to vector<2x128xf32>
    %817 = arith.addf %816, %815 : vector<2x128xf32>
    %818 = arith.divf %816, %817 : vector<2x128xf32>
    %819 = vector.extract_strided_slice %802 {offsets = [0, 256], sizes = [2, 128], strides = [1, 1]} : vector<2x512xf32> to vector<2x128xf32>
    %820 = math.tanh %819 : vector<2x128xf32>
    %821 = vector.extract_strided_slice %802 {offsets = [0, 384], sizes = [2, 128], strides = [1, 1]} : vector<2x512xf32> to vector<2x128xf32>
    %822 = arith.negf %821 : vector<2x128xf32>
    %823 = math.exp %822 : vector<2x128xf32>
    %cst_174 = arith.constant 1.000000e+00 : f32
    %824 = vector.broadcast %cst_174 : f32 to vector<2x128xf32>
    %825 = arith.addf %824, %823 : vector<2x128xf32>
    %826 = arith.divf %824, %825 : vector<2x128xf32>
    %827 = arith.mulf %818, %769 : vector<2x128xf32>
    %828 = arith.mulf %812, %820 : vector<2x128xf32>
    %829 = arith.addf %827, %828 : vector<2x128xf32>
    %830 = math.tanh %829 : vector<2x128xf32>
    %831 = arith.mulf %826, %830 : vector<2x128xf32>
    %832 = vector.extract_strided_slice %806 {offsets = [0, 0], sizes = [2, 128], strides = [1, 1]} : vector<2x512xf32> to vector<2x128xf32>
    %833 = arith.negf %832 : vector<2x128xf32>
    %834 = math.exp %833 : vector<2x128xf32>
    %cst_175 = arith.constant 1.000000e+00 : f32
    %835 = vector.broadcast %cst_175 : f32 to vector<2x128xf32>
    %836 = arith.addf %835, %834 : vector<2x128xf32>
    %837 = arith.divf %835, %836 : vector<2x128xf32>
    %838 = vector.extract_strided_slice %806 {offsets = [0, 128], sizes = [2, 128], strides = [1, 1]} : vector<2x512xf32> to vector<2x128xf32>
    %839 = arith.negf %838 : vector<2x128xf32>
    %840 = math.exp %839 : vector<2x128xf32>
    %cst_176 = arith.constant 1.000000e+00 : f32
    %841 = vector.broadcast %cst_176 : f32 to vector<2x128xf32>
    %842 = arith.addf %841, %840 : vector<2x128xf32>
    %843 = arith.divf %841, %842 : vector<2x128xf32>
    %844 = vector.extract_strided_slice %806 {offsets = [0, 256], sizes = [2, 128], strides = [1, 1]} : vector<2x512xf32> to vector<2x128xf32>
    %845 = math.tanh %844 : vector<2x128xf32>
    %846 = vector.extract_strided_slice %806 {offsets = [0, 384], sizes = [2, 128], strides = [1, 1]} : vector<2x512xf32> to vector<2x128xf32>
    %847 = arith.negf %846 : vector<2x128xf32>
    %848 = math.exp %847 : vector<2x128xf32>
    %cst_177 = arith.constant 1.000000e+00 : f32
    %849 = vector.broadcast %cst_177 : f32 to vector<2x128xf32>
    %850 = arith.addf %849, %848 : vector<2x128xf32>
    %851 = arith.divf %849, %850 : vector<2x128xf32>
    %852 = arith.mulf %843, %794 : vector<2x128xf32>
    %853 = arith.mulf %837, %845 : vector<2x128xf32>
    %854 = arith.addf %852, %853 : vector<2x128xf32>
    %855 = math.tanh %854 : vector<2x128xf32>
    %856 = arith.mulf %851, %855 : vector<2x128xf32>
    %c10_178 = arith.constant 10 : index
    %c0_179 = arith.constant 0 : index
    %857 = vector.load %arg18[%c10_178, %c0_179] : memref<16x256xf32, #tpu.memory_space<vmem>>, vector<2x128xf32>
    tpu.vector_store %arg18[%c10_178, %c0_179], %831 {strides = array<i32>} : memref<16x256xf32, #tpu.memory_space<vmem>>, vector<2x128xf32>,
    %c4_180 = arith.constant 4 : index
    %c128_181 = arith.constant 128 : index
    %858 = vector.load %arg18[%c4_180, %c128_181] : memref<16x256xf32, #tpu.memory_space<vmem>>, vector<2x128xf32>
    tpu.vector_store %arg18[%c4_180, %c128_181], %856 {strides = array<i32>} : memref<16x256xf32, #tpu.memory_space<vmem>>, vector<2x128xf32>,
    %859 = vector.extract_strided_slice %497 {offsets = [12, 0], sizes = [2, 512], strides = [1, 1]} : vector<16x1024xf32> to vector<2x512xf32>
    %860 = arith.truncf %831 : vector<2x128xf32> to vector<2x128xbf16>
    %cst_182 = arith.constant dense<0.000000e+00> : vector<2x512xf32>
    %861 = tpu.matmul %860, %492, %cst_182 {dimension_numbers = #tpu.dot_dimension_numbers<[1], [0], [0], [1], [0, 0, 1, 1], [], []>} : vector<2x128xbf16>, vector<128x512xbf16>, vector<2x512xf32> -> vector<2x512xf32>
    %862 = arith.addf %859, %861 : vector<2x512xf32>
    %863 = vector.extract_strided_slice %497 {offsets = [2, 512], sizes = [2, 512], strides = [1, 1]} : vector<16x1024xf32> to vector<2x512xf32>
    %864 = arith.truncf %856 : vector<2x128xf32> to vector<2x128xbf16>
    %cst_183 = arith.constant dense<0.000000e+00> : vector<2x512xf32>
    %865 = tpu.matmul %864, %493, %cst_183 {dimension_numbers = #tpu.dot_dimension_numbers<[1], [0], [0], [1], [0, 0, 1, 1], [], []>} : vector<2x128xbf16>, vector<128x512xbf16>, vector<2x512xf32> -> vector<2x512xf32>
    %866 = arith.addf %863, %865 : vector<2x512xf32>
    %867 = vector.extract_strided_slice %862 {offsets = [0, 0], sizes = [2, 128], strides = [1, 1]} : vector<2x512xf32> to vector<2x128xf32>
    %868 = arith.negf %867 : vector<2x128xf32>
    %869 = math.exp %868 : vector<2x128xf32>
    %cst_184 = arith.constant 1.000000e+00 : f32
    %870 = vector.broadcast %cst_184 : f32 to vector<2x128xf32>
    %871 = arith.addf %870, %869 : vector<2x128xf32>
    %872 = arith.divf %870, %871 : vector<2x128xf32>
    %873 = vector.extract_strided_slice %862 {offsets = [0, 128], sizes = [2, 128], strides = [1, 1]} : vector<2x512xf32> to vector<2x128xf32>
    %874 = arith.negf %873 : vector<2x128xf32>
    %875 = math.exp %874 : vector<2x128xf32>
    %cst_185 = arith.constant 1.000000e+00 : f32
    %876 = vector.broadcast %cst_185 : f32 to vector<2x128xf32>
    %877 = arith.addf %876, %875 : vector<2x128xf32>
    %878 = arith.divf %876, %877 : vector<2x128xf32>
    %879 = vector.extract_strided_slice %862 {offsets = [0, 256], sizes = [2, 128], strides = [1, 1]} : vector<2x512xf32> to vector<2x128xf32>
    %880 = math.tanh %879 : vector<2x128xf32>
    %881 = vector.extract_strided_slice %862 {offsets = [0, 384], sizes = [2, 128], strides = [1, 1]} : vector<2x512xf32> to vector<2x128xf32>
    %882 = arith.negf %881 : vector<2x128xf32>
    %883 = math.exp %882 : vector<2x128xf32>
    %cst_186 = arith.constant 1.000000e+00 : f32
    %884 = vector.broadcast %cst_186 : f32 to vector<2x128xf32>
    %885 = arith.addf %884, %883 : vector<2x128xf32>
    %886 = arith.divf %884, %885 : vector<2x128xf32>
    %887 = arith.mulf %878, %829 : vector<2x128xf32>
    %888 = arith.mulf %872, %880 : vector<2x128xf32>
    %889 = arith.addf %887, %888 : vector<2x128xf32>
    %890 = math.tanh %889 : vector<2x128xf32>
    %891 = arith.mulf %886, %890 : vector<2x128xf32>
    %892 = vector.extract_strided_slice %866 {offsets = [0, 0], sizes = [2, 128], strides = [1, 1]} : vector<2x512xf32> to vector<2x128xf32>
    %893 = arith.negf %892 : vector<2x128xf32>
    %894 = math.exp %893 : vector<2x128xf32>
    %cst_187 = arith.constant 1.000000e+00 : f32
    %895 = vector.broadcast %cst_187 : f32 to vector<2x128xf32>
    %896 = arith.addf %895, %894 : vector<2x128xf32>
    %897 = arith.divf %895, %896 : vector<2x128xf32>
    %898 = vector.extract_strided_slice %866 {offsets = [0, 128], sizes = [2, 128], strides = [1, 1]} : vector<2x512xf32> to vector<2x128xf32>
    %899 = arith.negf %898 : vector<2x128xf32>
    %900 = math.exp %899 : vector<2x128xf32>
    %cst_188 = arith.constant 1.000000e+00 : f32
    %901 = vector.broadcast %cst_188 : f32 to vector<2x128xf32>
    %902 = arith.addf %901, %900 : vector<2x128xf32>
    %903 = arith.divf %901, %902 : vector<2x128xf32>
    %904 = vector.extract_strided_slice %866 {offsets = [0, 256], sizes = [2, 128], strides = [1, 1]} : vector<2x512xf32> to vector<2x128xf32>
    %905 = math.tanh %904 : vector<2x128xf32>
    %906 = vector.extract_strided_slice %866 {offsets = [0, 384], sizes = [2, 128], strides = [1, 1]} : vector<2x512xf32> to vector<2x128xf32>
    %907 = arith.negf %906 : vector<2x128xf32>
    %908 = math.exp %907 : vector<2x128xf32>
    %cst_189 = arith.constant 1.000000e+00 : f32
    %909 = vector.broadcast %cst_189 : f32 to vector<2x128xf32>
    %910 = arith.addf %909, %908 : vector<2x128xf32>
    %911 = arith.divf %909, %910 : vector<2x128xf32>
    %912 = arith.mulf %903, %854 : vector<2x128xf32>
    %913 = arith.mulf %897, %905 : vector<2x128xf32>
    %914 = arith.addf %912, %913 : vector<2x128xf32>
    %915 = math.tanh %914 : vector<2x128xf32>
    %916 = arith.mulf %911, %915 : vector<2x128xf32>
    %c12_190 = arith.constant 12 : index
    %c0_191 = arith.constant 0 : index
    %917 = vector.load %arg18[%c12_190, %c0_191] : memref<16x256xf32, #tpu.memory_space<vmem>>, vector<2x128xf32>
    tpu.vector_store %arg18[%c12_190, %c0_191], %891 {strides = array<i32>} : memref<16x256xf32, #tpu.memory_space<vmem>>, vector<2x128xf32>,
    %c2_192 = arith.constant 2 : index
    %c128_193 = arith.constant 128 : index
    %918 = vector.load %arg18[%c2_192, %c128_193] : memref<16x256xf32, #tpu.memory_space<vmem>>, vector<2x128xf32>
    tpu.vector_store %arg18[%c2_192, %c128_193], %916 {strides = array<i32>} : memref<16x256xf32, #tpu.memory_space<vmem>>, vector<2x128xf32>,
    %919 = vector.extract_strided_slice %497 {offsets = [14, 0], sizes = [2, 512], strides = [1, 1]} : vector<16x1024xf32> to vector<2x512xf32>
    %920 = arith.truncf %891 : vector<2x128xf32> to vector<2x128xbf16>
    %cst_194 = arith.constant dense<0.000000e+00> : vector<2x512xf32>
    %921 = tpu.matmul %920, %492, %cst_194 {dimension_numbers = #tpu.dot_dimension_numbers<[1], [0], [0], [1], [0, 0, 1, 1], [], []>} : vector<2x128xbf16>, vector<128x512xbf16>, vector<2x512xf32> -> vector<2x512xf32>
    %922 = arith.addf %919, %921 : vector<2x512xf32>
    %923 = vector.extract_strided_slice %497 {offsets = [0, 512], sizes = [2, 512], strides = [1, 1]} : vector<16x1024xf32> to vector<2x512xf32>
    %924 = arith.truncf %916 : vector<2x128xf32> to vector<2x128xbf16>
    %cst_195 = arith.constant dense<0.000000e+00> : vector<2x512xf32>
    %925 = tpu.matmul %924, %493, %cst_195 {dimension_numbers = #tpu.dot_dimension_numbers<[1], [0], [0], [1], [0, 0, 1, 1], [], []>} : vector<2x128xbf16>, vector<128x512xbf16>, vector<2x512xf32> -> vector<2x512xf32>
    %926 = arith.addf %923, %925 : vector<2x512xf32>
    %927 = vector.extract_strided_slice %922 {offsets = [0, 0], sizes = [2, 128], strides = [1, 1]} : vector<2x512xf32> to vector<2x128xf32>
    %928 = arith.negf %927 : vector<2x128xf32>
    %929 = math.exp %928 : vector<2x128xf32>
    %cst_196 = arith.constant 1.000000e+00 : f32
    %930 = vector.broadcast %cst_196 : f32 to vector<2x128xf32>
    %931 = arith.addf %930, %929 : vector<2x128xf32>
    %932 = arith.divf %930, %931 : vector<2x128xf32>
    %933 = vector.extract_strided_slice %922 {offsets = [0, 128], sizes = [2, 128], strides = [1, 1]} : vector<2x512xf32> to vector<2x128xf32>
    %934 = arith.negf %933 : vector<2x128xf32>
    %935 = math.exp %934 : vector<2x128xf32>
    %cst_197 = arith.constant 1.000000e+00 : f32
    %936 = vector.broadcast %cst_197 : f32 to vector<2x128xf32>
    %937 = arith.addf %936, %935 : vector<2x128xf32>
    %938 = arith.divf %936, %937 : vector<2x128xf32>
    %939 = vector.extract_strided_slice %922 {offsets = [0, 256], sizes = [2, 128], strides = [1, 1]} : vector<2x512xf32> to vector<2x128xf32>
    %940 = math.tanh %939 : vector<2x128xf32>
    %941 = vector.extract_strided_slice %922 {offsets = [0, 384], sizes = [2, 128], strides = [1, 1]} : vector<2x512xf32> to vector<2x128xf32>
    %942 = arith.negf %941 : vector<2x128xf32>
    %943 = math.exp %942 : vector<2x128xf32>
    %cst_198 = arith.constant 1.000000e+00 : f32
    %944 = vector.broadcast %cst_198 : f32 to vector<2x128xf32>
    %945 = arith.addf %944, %943 : vector<2x128xf32>
    %946 = arith.divf %944, %945 : vector<2x128xf32>
    %947 = arith.mulf %938, %889 : vector<2x128xf32>
    %948 = arith.mulf %932, %940 : vector<2x128xf32>
    %949 = arith.addf %947, %948 : vector<2x128xf32>
    %950 = math.tanh %949 : vector<2x128xf32>
    %951 = arith.mulf %946, %950 : vector<2x128xf32>
    %952 = vector.extract_strided_slice %926 {offsets = [0, 0], sizes = [2, 128], strides = [1, 1]} : vector<2x512xf32> to vector<2x128xf32>
    %953 = arith.negf %952 : vector<2x128xf32>
    %954 = math.exp %953 : vector<2x128xf32>
    %cst_199 = arith.constant 1.000000e+00 : f32
    %955 = vector.broadcast %cst_199 : f32 to vector<2x128xf32>
    %956 = arith.addf %955, %954 : vector<2x128xf32>
    %957 = arith.divf %955, %956 : vector<2x128xf32>
    %958 = vector.extract_strided_slice %926 {offsets = [0, 128], sizes = [2, 128], strides = [1, 1]} : vector<2x512xf32> to vector<2x128xf32>
    %959 = arith.negf %958 : vector<2x128xf32>
    %960 = math.exp %959 : vector<2x128xf32>
    %cst_200 = arith.constant 1.000000e+00 : f32
    %961 = vector.broadcast %cst_200 : f32 to vector<2x128xf32>
    %962 = arith.addf %961, %960 : vector<2x128xf32>
    %963 = arith.divf %961, %962 : vector<2x128xf32>
    %964 = vector.extract_strided_slice %926 {offsets = [0, 256], sizes = [2, 128], strides = [1, 1]} : vector<2x512xf32> to vector<2x128xf32>
    %965 = math.tanh %964 : vector<2x128xf32>
    %966 = vector.extract_strided_slice %926 {offsets = [0, 384], sizes = [2, 128], strides = [1, 1]} : vector<2x512xf32> to vector<2x128xf32>
    %967 = arith.negf %966 : vector<2x128xf32>
    %968 = math.exp %967 : vector<2x128xf32>
    %cst_201 = arith.constant 1.000000e+00 : f32
    %969 = vector.broadcast %cst_201 : f32 to vector<2x128xf32>
    %970 = arith.addf %969, %968 : vector<2x128xf32>
    %971 = arith.divf %969, %970 : vector<2x128xf32>
    %972 = arith.mulf %963, %914 : vector<2x128xf32>
    %973 = arith.mulf %957, %965 : vector<2x128xf32>
    %974 = arith.addf %972, %973 : vector<2x128xf32>
    %975 = math.tanh %974 : vector<2x128xf32>
    %976 = arith.mulf %971, %975 : vector<2x128xf32>
    %c14_202 = arith.constant 14 : index
    %c0_203 = arith.constant 0 : index
    %977 = vector.load %arg18[%c14_202, %c0_203] : memref<16x256xf32, #tpu.memory_space<vmem>>, vector<2x128xf32>
    tpu.vector_store %arg18[%c14_202, %c0_203], %951 {strides = array<i32>} : memref<16x256xf32, #tpu.memory_space<vmem>>, vector<2x128xf32>,
    %c0_204 = arith.constant 0 : index
    %c128_205 = arith.constant 128 : index
    %978 = vector.load %arg18[%c0_204, %c128_205] : memref<16x256xf32, #tpu.memory_space<vmem>>, vector<2x128xf32>
    tpu.vector_store %arg18[%c0_204, %c128_205], %976 {strides = array<i32>} : memref<16x256xf32, #tpu.memory_space<vmem>>, vector<2x128xf32>,
    %c0_206 = arith.constant 0 : index
    %c0_207 = arith.constant 0 : index
    %979 = vector.load %arg18[%c0_206, %c0_207] : memref<16x256xf32, #tpu.memory_space<vmem>>, vector<16x256xf32>
    %980 = arith.truncf %979 : vector<16x256xf32> to vector<16x256xbf16>
    %c0_208 = arith.constant 0 : index
    %c0_209 = arith.constant 0 : index
    %981 = vector.load %arg9[%c0_208, %c0_209] : memref<256x256xbf16, #tpu.memory_space<vmem>>, vector<256x256xbf16>
    %cst_210 = arith.constant dense<0.000000e+00> : vector<16x256xf32>
    %982 = tpu.matmul %490, %981, %cst_210 {dimension_numbers = #tpu.dot_dimension_numbers<[1], [0], [0], [1], [0, 0, 1, 1], [], []>} : vector<16x256xbf16>, vector<256x256xbf16>, vector<16x256xf32> -> vector<16x256xf32>
    %c0_211 = arith.constant 0 : index
    %c0_212 = arith.constant 0 : index
    %983 = vector.load %arg10[%c0_211, %c0_212] : memref<1x256xf32, #tpu.memory_space<vmem>>, vector<1x256xf32>
    %984 = vector.broadcast %983 : vector<1x256xf32> to vector<16x256xf32>
    %985 = arith.addf %982, %984 : vector<16x256xf32>
    %cst_213 = arith.constant 0.000000e+00 : f32
    %986 = vector.broadcast %cst_213 : f32 to vector<16x256xf32>
    %987 = arith.maximumf %985, %986 : vector<16x256xf32>
    %c0_214 = arith.constant 0 : index
    %c0_215 = arith.constant 0 : index
    %988 = vector.load %arg11[%c0_214, %c0_215] : memref<256x256xbf16, #tpu.memory_space<vmem>>, vector<256x256xbf16>
    %cst_216 = arith.constant dense<0.000000e+00> : vector<16x256xf32>
    %989 = tpu.matmul %980, %988, %cst_216 {dimension_numbers = #tpu.dot_dimension_numbers<[1], [0], [0], [1], [0, 0, 1, 1], [], []>} : vector<16x256xbf16>, vector<256x256xbf16>, vector<16x256xf32> -> vector<16x256xf32>
    %c0_217 = arith.constant 0 : index
    %c0_218 = arith.constant 0 : index
    %990 = vector.load %arg12[%c0_217, %c0_218] : memref<1x256xf32, #tpu.memory_space<vmem>>, vector<1x256xf32>
    %991 = vector.broadcast %990 : vector<1x256xf32> to vector<16x256xf32>
    %992 = arith.addf %989, %991 : vector<16x256xf32>
    %cst_219 = arith.constant 0.000000e+00 : f32
    %993 = vector.broadcast %cst_219 : f32 to vector<16x256xf32>
    %994 = arith.maximumf %992, %993 : vector<16x256xf32>
    %995 = arith.addf %489, %979 : vector<16x256xf32>
    %996 = arith.addf %995, %987 : vector<16x256xf32>
    %997 = arith.addf %996, %994 : vector<16x256xf32>
    %998 = arith.truncf %997 : vector<16x256xf32> to vector<16x256xbf16>
    %c0_220 = arith.constant 0 : index
    %c0_221 = arith.constant 0 : index
    %999 = vector.load %arg13[%c0_220, %c0_221] : memref<256x128xbf16, #tpu.memory_space<vmem>>, vector<256x128xbf16>
    %cst_222 = arith.constant dense<0.000000e+00> : vector<16x128xf32>
    %1000 = tpu.matmul %998, %999, %cst_222 {dimension_numbers = #tpu.dot_dimension_numbers<[1], [0], [0], [1], [0, 0, 1, 1], [], []>} : vector<16x256xbf16>, vector<256x128xbf16>, vector<16x128xf32> -> vector<16x128xf32>
    %1001 = vector.extract_strided_slice %0 {offsets = [0, 0], sizes = [16, 128], strides = [1, 1]} : vector<16x384xbf16> to vector<16x128xbf16>
    %c0_223 = arith.constant 0 : index
    %c0_224 = arith.constant 0 : index
    %1002 = vector.load %arg14[%c0_223, %c0_224] : memref<128x128xbf16, #tpu.memory_space<vmem>>, vector<128x128xbf16>
    %cst_225 = arith.constant dense<0.000000e+00> : vector<16x128xf32>
    %1003 = tpu.matmul %1001, %1002, %cst_225 {dimension_numbers = #tpu.dot_dimension_numbers<[1], [0], [0], [1], [0, 0, 1, 1], [], []>} : vector<16x128xbf16>, vector<128x128xbf16>, vector<16x128xf32> -> vector<16x128xf32>
    %1004 = arith.addf %1000, %1003 : vector<16x128xf32>
    %c0_226 = arith.constant 0 : index
    %c0_227 = arith.constant 0 : index
    %1005 = vector.load %arg15[%c0_226, %c0_227] : memref<1x128xf32, #tpu.memory_space<vmem>>, vector<1x128xf32>
    %1006 = vector.broadcast %1005 : vector<1x128xf32> to vector<16x128xf32>
    %1007 = arith.addf %1004, %1006 : vector<16x128xf32>
    %c0_228 = arith.constant 0 : index
    %c0_229 = arith.constant 0 : index
    %1008 = vector.load %arg16[%c0_228, %c0_229] : memref<16x128xf32, #tpu.memory_space<vmem>>, vector<16x128xf32>
    tpu.vector_store %arg16[%c0_228, %c0_229], %1007 {strides = array<i32>} : memref<16x128xf32, #tpu.memory_space<vmem>>, vector<16x128xf32>,
    return
  }
}

</mosaic_0001>

<llo_original>
// kernel: neuralnet_forward.1
$region0: #{neuralnet_forward.1}
  #allocation0 [shape = 'u32[]', space=smem, size = 0x4, offset = 0x4, fixed_abs, tag = 'smem constant byte address 0x4 - core index']
  #allocation1 [shape = 'u32[72,128]{1,0:T(1,128)}', space=vmem, size = 0x9000, scoped, tag = 'internal scratch']
  #allocation2 [shape = 'f32[16,256]{1,0:T(8,128)}', space=vmem, size = 0x4000, scoped, tag = 'scratch operand']
  #allocation3 [shape = 'f32[16,256]{1,0:T(8,128)}', space=vmem, size = 0x4000, scoped, tag = 'scratch operand']
  %s0 = inlined_call_operand.vmem [shape: bf16[16,384], index: 0, kind: input, shape index: {}]
  %s1 = inlined_call_operand.hbm [shape: bf16[384,1024], index: 1, kind: input, shape index: {}]
  %s2 = inlined_call_operand.hbm [shape: bf16[128,512], index: 2, kind: input, shape index: {}]
  %s3 = inlined_call_operand.hbm [shape: bf16[128,512], index: 3, kind: input, shape index: {}]
  %s4 = inlined_call_operand.vmem [shape: f32[1,1024], index: 4, kind: input, shape index: {}]
  %s5 = inlined_call_operand.hbm [shape: bf16[256,1024], index: 5, kind: input, shape index: {}]
  %s6 = inlined_call_operand.hbm [shape: bf16[128,512], index: 6, kind: input, shape index: {}]
  %s7 = inlined_call_operand.hbm [shape: bf16[128,512], index: 7, kind: input, shape index: {}]
  %s8 = inlined_call_operand.vmem [shape: f32[1,1024], index: 8, kind: input, shape index: {}]
  %s9 = inlined_call_operand.hbm [shape: bf16[256,256], index: 9, kind: input, shape index: {}]
  %s10 = inlined_call_operand.vmem [shape: f32[1,256], index: 10, kind: input, shape index: {}]
  %s11 = inlined_call_operand.hbm [shape: bf16[256,256], index: 11, kind: input, shape index: {}]
  %s12 = inlined_call_operand.vmem [shape: f32[1,256], index: 12, kind: input, shape index: {}]
  %s13 = inlined_call_operand.vmem [shape: bf16[256,128], index: 13, kind: input, shape index: {}]
  %s14 = inlined_call_operand.hbm [shape: bf16[128,128], index: 14, kind: input, shape index: {}]
  %s15 = inlined_call_operand.vmem [shape: f32[1,128], index: 15, kind: input, shape index: {}]
  %s16 = inlined_call_operand.vmem [shape: f32[16,128], index: 16, kind: output, shape index: {}]
  %s17 = sld [smem:[#allocation0]]
  $region110: #{neuralnet_forward.1} parent=0
    _
  %s19 = ssub.s32 1, %s17
  %s20 = scalar_select 0, %s19, %s17
  $region1: #{neuralnet_forward.1} parent=0
    #allocation4 [shape = 'u8[786432]{0}', space=vmem, size = 0xc0000, scoped, tag = 'input window, operand 1, single buffered']
    #allocation5 [shape = 's32[1]{0}', space=sflag, size = 0x4, scoped, tag = 'scoped memory for neuralnet_forward.1']
    #allocation6 [shape = 'u8[131072]{0}', space=vmem, size = 0x20000, scoped, tag = 'input window, operand 2, single buffered']
    #allocation7 [shape = 's32[1]{0}', space=sflag, size = 0x4, scoped, tag = 'scoped memory for neuralnet_forward.1']
    #allocation8 [shape = 'u8[131072]{0}', space=vmem, size = 0x20000, scoped, tag = 'input window, operand 3, single buffered']
    #allocation9 [shape = 'u8[524288]{0}', space=vmem, size = 0x80000, scoped, tag = 'input window, operand 5, single buffered']
    #allocation10 [shape = 's32[1]{0}', space=sflag, size = 0x4, scoped, tag = 'scoped memory for neuralnet_forward.1']
    #allocation11 [shape = 'u8[131072]{0}', space=vmem, size = 0x20000, scoped, tag = 'input window, operand 6, single buffered']
    #allocation12 [shape = 'u8[131072]{0}', space=vmem, size = 0x20000, scoped, tag = 'input window, operand 7, single buffered']
    #allocation13 [shape = 's32[1]{0}', space=sflag, size = 0x4, scoped, tag = 'scoped memory for neuralnet_forward.1']
    #allocation14 [shape = 'u8[131072]{0}', space=vmem, size = 0x20000, scoped, tag = 'input window, operand 9, single buffered']
    #allocation15 [shape = 'u8[131072]{0}', space=vmem, size = 0x20000, scoped, tag = 'input window, operand 11, single buffered']
    #allocation16 [shape = 's32[1]{0}', space=sflag, size = 0x4, scoped, tag = 'scoped memory for neuralnet_forward.1']
    #allocation17 [shape = 'u8[32768]{0}', space=vmem, size = 0x8000, scoped, tag = 'input window, operand 14, single buffered']
    %21 = vsyncpa [#allocation5], 0
    %22 = vsyncpa [#allocation7], 0
    %23 = vsyncpa [#allocation10], 0
    %24 = vsyncpa [#allocation13], 0
    %25 = vsyncpa [#allocation16], 0
    // Predicated region
    $region2: #{neuralnet_forward.1} parent=1 // pred_check
      _
    $region3: #{neuralnet_forward.1} parent=1 // pred_check_branch
      %27 = sbr.rel (0) target = $region5
    $region4: #{neuralnet_forward.1} parent=1 // pred_region
      _
    $region5: #{neuralnet_forward.1} parent=1 // pred_fallthru
      _
    // Predicated region
    $region6: #{neuralnet_forward.1} parent=1 // pred_check
      _
    $region7: #{neuralnet_forward.1} parent=1 // pred_check_branch
      %29 = sbr.rel (0) target = $region9
    $region8: #{neuralnet_forward.1} parent=1 // pred_region
      %31 = vsyncadd [#allocation5], 0
      %s32 = sshll.u32 %s1, 4
      %s33 = int_to_ptr.hbm [resolvable:$true] %s32
      %s34 = sshll.u32 [#allocation4], 4
      %s35 = int_to_ptr.vmem [resolvable:$true] %s34
      %40 = dma.hbm_to_vmem [thread:$0]  %s33, 24576, %s35, [#allocation5], 512, 512, 32
    $region9: #{neuralnet_forward.1} parent=1 // pred_fallthru
      _
    // Predicated region
    $region10: #{neuralnet_forward.1} parent=1 // pred_check
      _
    $region11: #{neuralnet_forward.1} parent=1 // pred_check_branch
      %42 = sbr.rel (0) target = $region13
    $region12: #{neuralnet_forward.1} parent=1 // pred_region
      %44 = vsyncadd [#allocation7], 0
      %s45 = sshll.u32 %s2, 4
      %s46 = int_to_ptr.hbm [resolvable:$true] %s45
      %s47 = sshll.u32 [#allocation6], 4
      %s48 = int_to_ptr.vmem [resolvable:$true] %s47
      %53 = dma.hbm_to_vmem [thread:$0]  %s46, 4096, %s48, [#allocation7], 256, 256, 16
    $region13: #{neuralnet_forward.1} parent=1 // pred_fallthru
      _
    // Predicated region
    $region14: #{neuralnet_forward.1} parent=1 // pred_check
      _
    $region15: #{neuralnet_forward.1} parent=1 // pred_check_branch
      %55 = sbr.rel (0) target = $region17
    $region16: #{neuralnet_forward.1} parent=1 // pred_region
      %57 = vsyncadd [#allocation7], 0
      %s58 = sshll.u32 %s3, 4
      %s59 = int_to_ptr.hbm [resolvable:$true] %s58
      %s60 = sshll.u32 [#allocation8], 4
      %s61 = int_to_ptr.vmem [resolvable:$true] %s60
      %66 = dma.hbm_to_vmem [thread:$0]  %s59, 4096, %s61, [#allocation7], 256, 256, 16
    $region17: #{neuralnet_forward.1} parent=1 // pred_fallthru
      _
    // Predicated region
    $region18: #{neuralnet_forward.1} parent=1 // pred_check
      _
    $region19: #{neuralnet_forward.1} parent=1 // pred_check_branch
      %68 = sbr.rel (0) target = $region21
    $region20: #{neuralnet_forward.1} parent=1 // pred_region
      _
    $region21: #{neuralnet_forward.1} parent=1 // pred_fallthru
      _
    // Predicated region
    $region22: #{neuralnet_forward.1} parent=1 // pred_check
      _
    $region23: #{neuralnet_forward.1} parent=1 // pred_check_branch
      %70 = sbr.rel (0) target = $region25
    $region24: #{neuralnet_forward.1} parent=1 // pred_region
      %72 = vsyncadd [#allocation10], 0
      %s73 = sshll.u32 %s5, 4
      %s74 = int_to_ptr.hbm [resolvable:$true] %s73
      %s75 = sshll.u32 [#allocation9], 4
      %s76 = int_to_ptr.vmem [resolvable:$true] %s75
      %81 = dma.hbm_to_vmem [thread:$0]  %s74, 16384, %s76, [#allocation10], 512, 512, 32
    $region25: #{neuralnet_forward.1} parent=1 // pred_fallthru
      _
    // Predicated region
    $region26: #{neuralnet_forward.1} parent=1 // pred_check
      _
    $region27: #{neuralnet_forward.1} parent=1 // pred_check_branch
      %83 = sbr.rel (0) target = $region29
    $region28: #{neuralnet_forward.1} parent=1 // pred_region
      %85 = vsyncadd [#allocation10], 0
      %s86 = sshll.u32 %s6, 4
      %s87 = int_to_ptr.hbm [resolvable:$true] %s86
      %s88 = sshll.u32 [#allocation11], 4
      %s89 = int_to_ptr.vmem [resolvable:$true] %s88
      %94 = dma.hbm_to_vmem [thread:$0]  %s87, 4096, %s89, [#allocation10], 256, 256, 16
    $region29: #{neuralnet_forward.1} parent=1 // pred_fallthru
      _
    // Predicated region
    $region30: #{neuralnet_forward.1} parent=1 // pred_check
      _
    $region31: #{neuralnet_forward.1} parent=1 // pred_check_branch
      %96 = sbr.rel (0) target = $region33
    $region32: #{neuralnet_forward.1} parent=1 // pred_region
      %98 = vsyncadd [#allocation13], 0
      %s99 = sshll.u32 %s7, 4
      %s100 = int_to_ptr.hbm [resolvable:$true] %s99
      %s101 = sshll.u32 [#allocation12], 4
      %s102 = int_to_ptr.vmem [resolvable:$true] %s101
      %107 = dma.hbm_to_vmem [thread:$0]  %s100, 4096, %s102, [#allocation13], 256, 256, 16
    $region33: #{neuralnet_forward.1} parent=1 // pred_fallthru
      _
    // Predicated region
    $region34: #{neuralnet_forward.1} parent=1 // pred_check
      _
    $region35: #{neuralnet_forward.1} parent=1 // pred_check_branch
      %109 = sbr.rel (0) target = $region37
    $region36: #{neuralnet_forward.1} parent=1 // pred_region
      _
    $region37: #{neuralnet_forward.1} parent=1 // pred_fallthru
      _
    // Predicated region
    $region38: #{neuralnet_forward.1} parent=1 // pred_check
      _
    $region39: #{neuralnet_forward.1} parent=1 // pred_check_branch
      %111 = sbr.rel (0) target = $region41
    $region40: #{neuralnet_forward.1} parent=1 // pred_region
      %113 = vsyncadd [#allocation13], 0
      %s114 = sshll.u32 %s9, 4
      %s115 = int_to_ptr.hbm [resolvable:$true] %s114
      %s116 = sshll.u32 [#allocation14], 4
      %s117 = int_to_ptr.vmem [resolvable:$true] %s116
      %122 = dma.hbm_to_vmem [thread:$0]  %s115, 4096, %s117, [#allocation13], 128, 128, 8
    $region41: #{neuralnet_forward.1} parent=1 // pred_fallthru
      _
    // Predicated region
    $region42: #{neuralnet_forward.1} parent=1 // pred_check
      _
    $region43: #{neuralnet_forward.1} parent=1 // pred_check_branch
      %124 = sbr.rel (0) target = $region45
    $region44: #{neuralnet_forward.1} parent=1 // pred_region
      _
    $region45: #{neuralnet_forward.1} parent=1 // pred_fallthru
      _
    // Predicated region
    $region46: #{neuralnet_forward.1} parent=1 // pred_check
      _
    $region47: #{neuralnet_forward.1} parent=1 // pred_check_branch
      %126 = sbr.rel (0) target = $region49
    $region48: #{neuralnet_forward.1} parent=1 // pred_region
      %128 = vsyncadd [#allocation16], 0
      %s129 = sshll.u32 %s11, 4
      %s130 = int_to_ptr.hbm [resolvable:$true] %s129
      %s131 = sshll.u32 [#allocation15], 4
      %s132 = int_to_ptr.vmem [resolvable:$true] %s131
      %137 = dma.hbm_to_vmem [thread:$0]  %s130, 4096, %s132, [#allocation16], 128, 128, 8
    $region49: #{neuralnet_forward.1} parent=1 // pred_fallthru
      _
    // Predicated region
    $region50: #{neuralnet_forward.1} parent=1 // pred_check
      _
    $region51: #{neuralnet_forward.1} parent=1 // pred_check_branch
      %139 = sbr.rel (0) target = $region53
    $region52: #{neuralnet_forward.1} parent=1 // pred_region
      _
    $region53: #{neuralnet_forward.1} parent=1 // pred_fallthru
      _
    // Predicated region
    $region54: #{neuralnet_forward.1} parent=1 // pred_check
      _
    $region55: #{neuralnet_forward.1} parent=1 // pred_check_branch
      %141 = sbr.rel (0) target = $region57
    $region56: #{neuralnet_forward.1} parent=1 // pred_region
      _
    $region57: #{neuralnet_forward.1} parent=1 // pred_fallthru
      _
    // Predicated region
    $region58: #{neuralnet_forward.1} parent=1 // pred_check
      _
    $region59: #{neuralnet_forward.1} parent=1 // pred_check_branch
      %143 = sbr.rel (0) target = $region61
    $region60: #{neuralnet_forward.1} parent=1 // pred_region
      %145 = vsyncadd [#allocation16], 0
      %s146 = sshll.u32 %s14, 4
      %s147 = int_to_ptr.hbm [resolvable:$true] %s146
      %s148 = sshll.u32 [#allocation17], 4
      %s149 = int_to_ptr.vmem [resolvable:$true] %s148
      %154 = dma.hbm_to_vmem [thread:$0]  %s147, 1024, %s149, [#allocation16], 64, 64, 4
    $region61: #{neuralnet_forward.1} parent=1 // pred_fallthru
      _
    // Predicated region
    $region62: #{neuralnet_forward.1} parent=1 // pred_check
      _
    $region63: #{neuralnet_forward.1} parent=1 // pred_check_branch
      %156 = sbr.rel (0) target = $region65
    $region64: #{neuralnet_forward.1} parent=1 // pred_region
      _
    $region65: #{neuralnet_forward.1} parent=1 // pred_fallthru
      _
    // Predicated region
    $region66: #{neuralnet_forward.1} parent=1 // pred_check
      _
    $region67: #{neuralnet_forward.1} parent=1 // pred_check_branch
      %158 = sbr.rel (0) target = $region69
    $region68: #{neuralnet_forward.1} parent=1 // pred_region
      %160 = dma.done [#allocation5], 24576
    $region69: #{neuralnet_forward.1} parent=1 // pred_fallthru
      _
    // Predicated region
    $region70: #{neuralnet_forward.1} parent=1 // pred_check
      _
    $region71: #{neuralnet_forward.1} parent=1 // pred_check_branch
      %162 = sbr.rel (0) target = $region73
    $region72: #{neuralnet_forward.1} parent=1 // pred_region
      %164 = dma.done [#allocation7], 4096
    $region73: #{neuralnet_forward.1} parent=1 // pred_fallthru
      _
    // Predicated region
    $region74: #{neuralnet_forward.1} parent=1 // pred_check
      _
    $region75: #{neuralnet_forward.1} parent=1 // pred_check_branch
      %166 = sbr.rel (0) target = $region77
    $region76: #{neuralnet_forward.1} parent=1 // pred_region
      %168 = dma.done [#allocation7], 4096
    $region77: #{neuralnet_forward.1} parent=1 // pred_fallthru
      _
    // Predicated region
    $region78: #{neuralnet_forward.1} parent=1 // pred_check
      _
    $region79: #{neuralnet_forward.1} parent=1 // pred_check_branch
      %170 = sbr.rel (0) target = $region81
    $region80: #{neuralnet_forward.1} parent=1 // pred_region
      %172 = dma.done [#allocation10], 16384
    $region81: #{neuralnet_forward.1} parent=1 // pred_fallthru
      _
    // Predicated region
    $region82: #{neuralnet_forward.1} parent=1 // pred_check
      _
    $region83: #{neuralnet_forward.1} parent=1 // pred_check_branch
      %174 = sbr.rel (0) target = $region85
    $region84: #{neuralnet_forward.1} parent=1 // pred_region
      %176 = dma.done [#allocation10], 4096
    $region85: #{neuralnet_forward.1} parent=1 // pred_fallthru
      _
    // Predicated region
    $region86: #{neuralnet_forward.1} parent=1 // pred_check
      _
    $region87: #{neuralnet_forward.1} parent=1 // pred_check_branch
      %178 = sbr.rel (0) target = $region89
    $region88: #{neuralnet_forward.1} parent=1 // pred_region
      %180 = dma.done [#allocation13], 4096
    $region89: #{neuralnet_forward.1} parent=1 // pred_fallthru
      _
    // Predicated region
    $region90: #{neuralnet_forward.1} parent=1 // pred_check
      _
    $region91: #{neuralnet_forward.1} parent=1 // pred_check_branch
      %182 = sbr.rel (0) target = $region93
    $region92: #{neuralnet_forward.1} parent=1 // pred_region
      %184 = dma.done [#allocation13], 4096
    $region93: #{neuralnet_forward.1} parent=1 // pred_fallthru
      _
    // Predicated region
    $region94: #{neuralnet_forward.1} parent=1 // pred_check
      _
    $region95: #{neuralnet_forward.1} parent=1 // pred_check_branch
      %186 = sbr.rel (0) target = $region97
    $region96: #{neuralnet_forward.1} parent=1 // pred_region
      %188 = dma.done [#allocation16], 4096
    $region97: #{neuralnet_forward.1} parent=1 // pred_fallthru
      _
    // Predicated region
    $region98: #{neuralnet_forward.1} parent=1 // pred_check
      _
    $region99: #{neuralnet_forward.1} parent=1 // pred_check_branch
      %190 = sbr.rel (0) target = $region101
    $region100: #{neuralnet_forward.1} parent=1 // pred_region
      %192 = dma.done [#allocation16], 1024
    $region101: #{neuralnet_forward.1} parent=1 // pred_fallthru
      _
    %v194 = vld [vmem:[%s0] sm:$0xff]
    %v195 = vld [vmem:[%s0 + $0x8] sm:$0xf]
    %v196 = vld [vmem:[%s0 + $0xc] sm:$0xff]
    %v197 = vld [vmem:[%s0 + $0x14] sm:$0xf]
    %v198 = vld [vmem:[#allocation4] sm:$0xff]
    %v199 = vld [vmem:[#allocation4 + $0x8] sm:$0xff]
    %v200 = vld [vmem:[#allocation4 + $0x10] sm:$0xff]
    %v201 = vld [vmem:[#allocation4 + $0x18] sm:$0xff]
    %v202 = vld [vmem:[#allocation4 + $0x20] sm:$0xff]
    %v203 = vld [vmem:[#allocation4 + $0x28] sm:$0xff]
    %v204 = vld [vmem:[#allocation4 + $0x30] sm:$0xff]
    %v205 = vld [vmem:[#allocation4 + $0x38] sm:$0xff]
    %v206 = vld [vmem:[#allocation4 + $0x40] sm:$0xff]
    %v207 = vld [vmem:[#allocation4 + $0x48] sm:$0xff]
    %v208 = vld [vmem:[#allocation4 + $0x50] sm:$0xff]
    %v209 = vld [vmem:[#allocation4 + $0x58] sm:$0xff]
    %v210 = vld [vmem:[#allocation4 + $0x60] sm:$0xff]
    %v211 = vld [vmem:[#allocation4 + $0x68] sm:$0xff]
    %v212 = vld [vmem:[#allocation4 + $0x70] sm:$0xff]
    %v213 = vld [vmem:[#allocation4 + $0x78] sm:$0xff]
    %v214 = vld [vmem:[#allocation4 + $0x80] sm:$0xff]
    %v215 = vld [vmem:[#allocation4 + $0x88] sm:$0xff]
    %v216 = vld [vmem:[#allocation4 + $0x90] sm:$0xff]
    %v217 = vld [vmem:[#allocation4 + $0x98] sm:$0xff]
    %v218 = vld [vmem:[#allocation4 + $0xa0] sm:$0xff]
    %v219 = vld [vmem:[#allocation4 + $0xa8] sm:$0xff]
    %v220 = vld [vmem:[#allocation4 + $0xb0] sm:$0xff]
    %v221 = vld [vmem:[#allocation4 + $0xb8] sm:$0xff]
    %v222 = vld [vmem:[#allocation4 + $0xc0] sm:$0xff]
    %v223 = vld [vmem:[#allocation4 + $0xc8] sm:$0xff]
    %v224 = vld [vmem:[#allocation4 + $0xd0] sm:$0xff]
    %v225 = vld [vmem:[#allocation4 + $0xd8] sm:$0xff]
    %v226 = vld [vmem:[#allocation4 + $0xe0] sm:$0xff]
    %v227 = vld [vmem:[#allocation4 + $0xe8] sm:$0xff]
    %v228 = vld [vmem:[#allocation4 + $0xf0] sm:$0xff]
    %v229 = vld [vmem:[#allocation4 + $0xf8] sm:$0xff]
    %v230 = vld [vmem:[#allocation4 + $0x100] sm:$0xff]
    %v231 = vld [vmem:[#allocation4 + $0x108] sm:$0xff]
    %v232 = vld [vmem:[#allocation4 + $0x110] sm:$0xff]
    %v233 = vld [vmem:[#allocation4 + $0x118] sm:$0xff]
    %v234 = vld [vmem:[#allocation4 + $0x120] sm:$0xff]
    %v235 = vld [vmem:[#allocation4 + $0x128] sm:$0xff]
    %v236 = vld [vmem:[#allocation4 + $0x130] sm:$0xff]
    %v237 = vld [vmem:[#allocation4 + $0x138] sm:$0xff]
    %v238 = vld [vmem:[#allocation4 + $0x140] sm:$0xff]
    %v239 = vld [vmem:[#allocation4 + $0x148] sm:$0xff]
    %v240 = vld [vmem:[#allocation4 + $0x150] sm:$0xff]
    %v241 = vld [vmem:[#allocation4 + $0x158] sm:$0xff]
    %v242 = vld [vmem:[#allocation4 + $0x160] sm:$0xff]
    %v243 = vld [vmem:[#allocation4 + $0x168] sm:$0xff]
    %v244 = vld [vmem:[#allocation4 + $0x170] sm:$0xff]
    %v245 = vld [vmem:[#allocation4 + $0x178] sm:$0xff]
    %v246 = vld [vmem:[#allocation4 + $0x180] sm:$0xff]
    %v247 = vld [vmem:[#allocation4 + $0x188] sm:$0xff]
    %v248 = vld [vmem:[#allocation4 + $0x190] sm:$0xff]
    %v249 = vld [vmem:[#allocation4 + $0x198] sm:$0xff]
    %v250 = vld [vmem:[#allocation4 + $0x1a0] sm:$0xff]
    %v251 = vld [vmem:[#allocation4 + $0x1a8] sm:$0xff]
    %v252 = vld [vmem:[#allocation4 + $0x1b0] sm:$0xff]
    %v253 = vld [vmem:[#allocation4 + $0x1b8] sm:$0xff]
    %v254 = vld [vmem:[#allocation4 + $0x1c0] sm:$0xff]
    %v255 = vld [vmem:[#allocation4 + $0x1c8] sm:$0xff]
    %v256 = vld [vmem:[#allocation4 + $0x1d0] sm:$0xff]
    %v257 = vld [vmem:[#allocation4 + $0x1d8] sm:$0xff]
    %v258 = vld [vmem:[#allocation4 + $0x1e0] sm:$0xff]
    %v259 = vld [vmem:[#allocation4 + $0x1e8] sm:$0xff]
    %v260 = vld [vmem:[#allocation4 + $0x1f0] sm:$0xff]
    %v261 = vld [vmem:[#allocation4 + $0x1f8] sm:$0xff]
    %v262 = vld [vmem:[#allocation4 + $0x200] sm:$0xff]
    %v263 = vld [vmem:[#allocation4 + $0x208] sm:$0xff]
    %v264 = vld [vmem:[#allocation4 + $0x210] sm:$0xff]
    %v265 = vld [vmem:[#allocation4 + $0x218] sm:$0xff]
    %v266 = vld [vmem:[#allocation4 + $0x220] sm:$0xff]
    %v267 = vld [vmem:[#allocation4 + $0x228] sm:$0xff]
    %v268 = vld [vmem:[#allocation4 + $0x230] sm:$0xff]
    %v269 = vld [vmem:[#allocation4 + $0x238] sm:$0xff]
    %v270 = vld [vmem:[#allocation4 + $0x240] sm:$0xff]
    %v271 = vld [vmem:[#allocation4 + $0x248] sm:$0xff]
    %v272 = vld [vmem:[#allocation4 + $0x250] sm:$0xff]
    %v273 = vld [vmem:[#allocation4 + $0x258] sm:$0xff]
    %v274 = vld [vmem:[#allocation4 + $0x260] sm:$0xff]
    %v275 = vld [vmem:[#allocation4 + $0x268] sm:$0xff]
    %v276 = vld [vmem:[#allocation4 + $0x270] sm:$0xff]
    %v277 = vld [vmem:[#allocation4 + $0x278] sm:$0xff]
    %v278 = vld [vmem:[#allocation4 + $0x280] sm:$0xff]
    %v279 = vld [vmem:[#allocation4 + $0x288] sm:$0xff]
    %v280 = vld [vmem:[#allocation4 + $0x290] sm:$0xff]
    %v281 = vld [vmem:[#allocation4 + $0x298] sm:$0xff]
    %v282 = vld [vmem:[#allocation4 + $0x2a0] sm:$0xff]
    %v283 = vld [vmem:[#allocation4 + $0x2a8] sm:$0xff]
    %v284 = vld [vmem:[#allocation4 + $0x2b0] sm:$0xff]
    %v285 = vld [vmem:[#allocation4 + $0x2b8] sm:$0xff]
    %v286 = vld [vmem:[#allocation4 + $0x2c0] sm:$0xff]
    %v287 = vld [vmem:[#allocation4 + $0x2c8] sm:$0xff]
    %v288 = vld [vmem:[#allocation4 + $0x2d0] sm:$0xff]
    %v289 = vld [vmem:[#allocation4 + $0x2d8] sm:$0xff]
    %v290 = vld [vmem:[#allocation4 + $0x2e0] sm:$0xff]
    %v291 = vld [vmem:[#allocation4 + $0x2e8] sm:$0xff]
    %v292 = vld [vmem:[#allocation4 + $0x2f0] sm:$0xff]
    %v293 = vld [vmem:[#allocation4 + $0x2f8] sm:$0xff]
    %v294 = vld [vmem:[#allocation4 + $0x300] sm:$0xff]
    %v295 = vld [vmem:[#allocation4 + $0x308] sm:$0xff]
    %v296 = vld [vmem:[#allocation4 + $0x310] sm:$0xff]
    %v297 = vld [vmem:[#allocation4 + $0x318] sm:$0xff]
    %v298 = vld [vmem:[#allocation4 + $0x320] sm:$0xff]
    %v299 = vld [vmem:[#allocation4 + $0x328] sm:$0xff]
    %v300 = vld [vmem:[#allocation4 + $0x330] sm:$0xff]
    %v301 = vld [vmem:[#allocation4 + $0x338] sm:$0xff]
    %v302 = vld [vmem:[#allocation4 + $0x340] sm:$0xff]
    %v303 = vld [vmem:[#allocation4 + $0x348] sm:$0xff]
    %v304 = vld [vmem:[#allocation4 + $0x350] sm:$0xff]
    %v305 = vld [vmem:[#allocation4 + $0x358] sm:$0xff]
    %v306 = vld [vmem:[#allocation4 + $0x360] sm:$0xff]
    %v307 = vld [vmem:[#allocation4 + $0x368] sm:$0xff]
    %v308 = vld [vmem:[#allocation4 + $0x370] sm:$0xff]
    %v309 = vld [vmem:[#allocation4 + $0x378] sm:$0xff]
    %v310 = vld [vmem:[#allocation4 + $0x380] sm:$0xff]
    %v311 = vld [vmem:[#allocation4 + $0x388] sm:$0xff]
    %v312 = vld [vmem:[#allocation4 + $0x390] sm:$0xff]
    %v313 = vld [vmem:[#allocation4 + $0x398] sm:$0xff]
    %v314 = vld [vmem:[#allocation4 + $0x3a0] sm:$0xff]
    %v315 = vld [vmem:[#allocation4 + $0x3a8] sm:$0xff]
    %v316 = vld [vmem:[#allocation4 + $0x3b0] sm:$0xff]
    %v317 = vld [vmem:[#allocation4 + $0x3b8] sm:$0xff]
    %v318 = vld [vmem:[#allocation4 + $0x3c0] sm:$0xff]
    %v319 = vld [vmem:[#allocation4 + $0x3c8] sm:$0xff]
    %v320 = vld [vmem:[#allocation4 + $0x3d0] sm:$0xff]
    %v321 = vld [vmem:[#allocation4 + $0x3d8] sm:$0xff]
    %v322 = vld [vmem:[#allocation4 + $0x3e0] sm:$0xff]
    %v323 = vld [vmem:[#allocation4 + $0x3e8] sm:$0xff]
    %v324 = vld [vmem:[#allocation4 + $0x3f0] sm:$0xff]
    %v325 = vld [vmem:[#allocation4 + $0x3f8] sm:$0xff]
    %v326 = vld [vmem:[#allocation4 + $0x400] sm:$0xff]
    %v327 = vld [vmem:[#allocation4 + $0x408] sm:$0xff]
    %v328 = vld [vmem:[#allocation4 + $0x410] sm:$0xff]
    %v329 = vld [vmem:[#allocation4 + $0x418] sm:$0xff]
    %v330 = vld [vmem:[#allocation4 + $0x420] sm:$0xff]
    %v331 = vld [vmem:[#allocation4 + $0x428] sm:$0xff]
    %v332 = vld [vmem:[#allocation4 + $0x430] sm:$0xff]
    %v333 = vld [vmem:[#allocation4 + $0x438] sm:$0xff]
    %v334 = vld [vmem:[#allocation4 + $0x440] sm:$0xff]
    %v335 = vld [vmem:[#allocation4 + $0x448] sm:$0xff]
    %v336 = vld [vmem:[#allocation4 + $0x450] sm:$0xff]
    %v337 = vld [vmem:[#allocation4 + $0x458] sm:$0xff]
    %v338 = vld [vmem:[#allocation4 + $0x460] sm:$0xff]
    %v339 = vld [vmem:[#allocation4 + $0x468] sm:$0xff]
    %v340 = vld [vmem:[#allocation4 + $0x470] sm:$0xff]
    %v341 = vld [vmem:[#allocation4 + $0x478] sm:$0xff]
    %v342 = vld [vmem:[#allocation4 + $0x480] sm:$0xff]
    %v343 = vld [vmem:[#allocation4 + $0x488] sm:$0xff]
    %v344 = vld [vmem:[#allocation4 + $0x490] sm:$0xff]
    %v345 = vld [vmem:[#allocation4 + $0x498] sm:$0xff]
    %v346 = vld [vmem:[#allocation4 + $0x4a0] sm:$0xff]
    %v347 = vld [vmem:[#allocation4 + $0x4a8] sm:$0xff]
    %v348 = vld [vmem:[#allocation4 + $0x4b0] sm:$0xff]
    %v349 = vld [vmem:[#allocation4 + $0x4b8] sm:$0xff]
    %v350 = vld [vmem:[#allocation4 + $0x4c0] sm:$0xff]
    %v351 = vld [vmem:[#allocation4 + $0x4c8] sm:$0xff]
    %v352 = vld [vmem:[#allocation4 + $0x4d0] sm:$0xff]
    %v353 = vld [vmem:[#allocation4 + $0x4d8] sm:$0xff]
    %v354 = vld [vmem:[#allocation4 + $0x4e0] sm:$0xff]
    %v355 = vld [vmem:[#allocation4 + $0x4e8] sm:$0xff]
    %v356 = vld [vmem:[#allocation4 + $0x4f0] sm:$0xff]
    %v357 = vld [vmem:[#allocation4 + $0x4f8] sm:$0xff]
    %v358 = vld [vmem:[#allocation4 + $0x500] sm:$0xff]
    %v359 = vld [vmem:[#allocation4 + $0x508] sm:$0xff]
    %v360 = vld [vmem:[#allocation4 + $0x510] sm:$0xff]
    %v361 = vld [vmem:[#allocation4 + $0x518] sm:$0xff]
    %v362 = vld [vmem:[#allocation4 + $0x520] sm:$0xff]
    %v363 = vld [vmem:[#allocation4 + $0x528] sm:$0xff]
    %v364 = vld [vmem:[#allocation4 + $0x530] sm:$0xff]
    %v365 = vld [vmem:[#allocation4 + $0x538] sm:$0xff]
    %v366 = vld [vmem:[#allocation4 + $0x540] sm:$0xff]
    %v367 = vld [vmem:[#allocation4 + $0x548] sm:$0xff]
    %v368 = vld [vmem:[#allocation4 + $0x550] sm:$0xff]
    %v369 = vld [vmem:[#allocation4 + $0x558] sm:$0xff]
    %v370 = vld [vmem:[#allocation4 + $0x560] sm:$0xff]
    %v371 = vld [vmem:[#allocation4 + $0x568] sm:$0xff]
    %v372 = vld [vmem:[#allocation4 + $0x570] sm:$0xff]
    %v373 = vld [vmem:[#allocation4 + $0x578] sm:$0xff]
    %v374 = vld [vmem:[#allocation4 + $0x580] sm:$0xff]
    %v375 = vld [vmem:[#allocation4 + $0x588] sm:$0xff]
    %v376 = vld [vmem:[#allocation4 + $0x590] sm:$0xff]
    %v377 = vld [vmem:[#allocation4 + $0x598] sm:$0xff]
    %v378 = vld [vmem:[#allocation4 + $0x5a0] sm:$0xff]
    %v379 = vld [vmem:[#allocation4 + $0x5a8] sm:$0xff]
    %v380 = vld [vmem:[#allocation4 + $0x5b0] sm:$0xff]
    %v381 = vld [vmem:[#allocation4 + $0x5b8] sm:$0xff]
    %v382 = vld [vmem:[#allocation4 + $0x5c0] sm:$0xff]
    %v383 = vld [vmem:[#allocation4 + $0x5c8] sm:$0xff]
    %v384 = vld [vmem:[#allocation4 + $0x5d0] sm:$0xff]
    %v385 = vld [vmem:[#allocation4 + $0x5d8] sm:$0xff]
    %v386 = vld [vmem:[#allocation4 + $0x5e0] sm:$0xff]
    %v387 = vld [vmem:[#allocation4 + $0x5e8] sm:$0xff]
    %v388 = vld [vmem:[#allocation4 + $0x5f0] sm:$0xff]
    %v389 = vld [vmem:[#allocation4 + $0x5f8] sm:$0xff]
    %v390 = vld [vmem:[#allocation6] sm:$0xff]
    %v391 = vld [vmem:[#allocation6 + $0x8] sm:$0xff]
    %v392 = vld [vmem:[#allocation6 + $0x10] sm:$0xff]
    %v393 = vld [vmem:[#allocation6 + $0x18] sm:$0xff]
    %v394 = vld [vmem:[#allocation6 + $0x20] sm:$0xff]
    %v395 = vld [vmem:[#allocation6 + $0x28] sm:$0xff]
    %v396 = vld [vmem:[#allocation6 + $0x30] sm:$0xff]
    %v397 = vld [vmem:[#allocation6 + $0x38] sm:$0xff]
    %v398 = vld [vmem:[#allocation6 + $0x40] sm:$0xff]
    %v399 = vld [vmem:[#allocation6 + $0x48] sm:$0xff]
    %v400 = vld [vmem:[#allocation6 + $0x50] sm:$0xff]
    %v401 = vld [vmem:[#allocation6 + $0x58] sm:$0xff]
    %v402 = vld [vmem:[#allocation6 + $0x60] sm:$0xff]
    %v403 = vld [vmem:[#allocation6 + $0x68] sm:$0xff]
    %v404 = vld [vmem:[#allocation6 + $0x70] sm:$0xff]
    %v405 = vld [vmem:[#allocation6 + $0x78] sm:$0xff]
    %v406 = vld [vmem:[#allocation6 + $0x80] sm:$0xff]
    %v407 = vld [vmem:[#allocation6 + $0x88] sm:$0xff]
    %v408 = vld [vmem:[#allocation6 + $0x90] sm:$0xff]
    %v409 = vld [vmem:[#allocation6 + $0x98] sm:$0xff]
    %v410 = vld [vmem:[#allocation6 + $0xa0] sm:$0xff]
    %v411 = vld [vmem:[#allocation6 + $0xa8] sm:$0xff]
    %v412 = vld [vmem:[#allocation6 + $0xb0] sm:$0xff]
    %v413 = vld [vmem:[#allocation6 + $0xb8] sm:$0xff]
    %v414 = vld [vmem:[#allocation6 + $0xc0] sm:$0xff]
    %v415 = vld [vmem:[#allocation6 + $0xc8] sm:$0xff]
    %v416 = vld [vmem:[#allocation6 + $0xd0] sm:$0xff]
    %v417 = vld [vmem:[#allocation6 + $0xd8] sm:$0xff]
    %v418 = vld [vmem:[#allocation6 + $0xe0] sm:$0xff]
    %v419 = vld [vmem:[#allocation6 + $0xe8] sm:$0xff]
    %v420 = vld [vmem:[#allocation6 + $0xf0] sm:$0xff]
    %v421 = vld [vmem:[#allocation6 + $0xf8] sm:$0xff]
    %v422 = vld [vmem:[#allocation8] sm:$0xff]
    %v423 = vld [vmem:[#allocation8 + $0x8] sm:$0xff]
    %v424 = vld [vmem:[#allocation8 + $0x10] sm:$0xff]
    %v425 = vld [vmem:[#allocation8 + $0x18] sm:$0xff]
    %v426 = vld [vmem:[#allocation8 + $0x20] sm:$0xff]
    %v427 = vld [vmem:[#allocation8 + $0x28] sm:$0xff]
    %v428 = vld [vmem:[#allocation8 + $0x30] sm:$0xff]
    %v429 = vld [vmem:[#allocation8 + $0x38] sm:$0xff]
    %v430 = vld [vmem:[#allocation8 + $0x40] sm:$0xff]
    %v431 = vld [vmem:[#allocation8 + $0x48] sm:$0xff]
    %v432 = vld [vmem:[#allocation8 + $0x50] sm:$0xff]
    %v433 = vld [vmem:[#allocation8 + $0x58] sm:$0xff]
    %v434 = vld [vmem:[#allocation8 + $0x60] sm:$0xff]
    %v435 = vld [vmem:[#allocation8 + $0x68] sm:$0xff]
    %v436 = vld [vmem:[#allocation8 + $0x70] sm:$0xff]
    %v437 = vld [vmem:[#allocation8 + $0x78] sm:$0xff]
    %v438 = vld [vmem:[#allocation8 + $0x80] sm:$0xff]
    %v439 = vld [vmem:[#allocation8 + $0x88] sm:$0xff]
    %v440 = vld [vmem:[#allocation8 + $0x90] sm:$0xff]
    %v441 = vld [vmem:[#allocation8 + $0x98] sm:$0xff]
    %v442 = vld [vmem:[#allocation8 + $0xa0] sm:$0xff]
    %v443 = vld [vmem:[#allocation8 + $0xa8] sm:$0xff]
    %v444 = vld [vmem:[#allocation8 + $0xb0] sm:$0xff]
    %v445 = vld [vmem:[#allocation8 + $0xb8] sm:$0xff]
    %v446 = vld [vmem:[#allocation8 + $0xc0] sm:$0xff]
    %v447 = vld [vmem:[#allocation8 + $0xc8] sm:$0xff]
    %v448 = vld [vmem:[#allocation8 + $0xd0] sm:$0xff]
    %v449 = vld [vmem:[#allocation8 + $0xd8] sm:$0xff]
    %v450 = vld [vmem:[#allocation8 + $0xe0] sm:$0xff]
    %v451 = vld [vmem:[#allocation8 + $0xe8] sm:$0xff]
    %v452 = vld [vmem:[#allocation8 + $0xf0] sm:$0xff]
    %v453 = vld [vmem:[#allocation8 + $0xf8] sm:$0xff]
    %v454 = vld [vmem:[%s4] sm:$0xff]
    %v456 = vperm.slane %v454, 0
    %v457 = vperm.slane %v454, 1
    %v458 = vperm.slane %v454, 2
    %v459 = vperm.slane %v454, 3
    %v460 = vperm.slane %v454, 4
    %v461 = vperm.slane %v454, 5
    %v462 = vperm.slane %v454, 6
    %v463 = vperm.slane %v454, 7
    %v476 = vunpack.c.l.b16 %v194
    %v477 = vunpack.c.h.b16 %v194
    %v478 = vunpack.c.l.b16 %v195
    %v479 = vunpack.c.l.b16 %v196
    %v480 = vunpack.c.h.b16 %v196
    %v481 = vunpack.c.l.b16 %v197
    %v482 = vpack.c.b16 %v479, %v476
    %v483 = vpack.c.b16 %v480, %v477
    %v484 = vpack.c.b16 %v481, %v478
    %v680 = vunpack.c.l.b16 %v198
    %v681 = vunpack.c.h.b16 %v198
    %v682 = vunpack.c.l.b16 %v199
    %v683 = vunpack.c.h.b16 %v199
    %v684 = vunpack.c.l.b16 %v200
    %v685 = vunpack.c.h.b16 %v200
    %v686 = vunpack.c.l.b16 %v201
    %v687 = vunpack.c.h.b16 %v201
    %v688 = vunpack.c.l.b16 %v202
    %v689 = vunpack.c.h.b16 %v202
    %v690 = vunpack.c.l.b16 %v203
    %v691 = vunpack.c.h.b16 %v203
    %v692 = vunpack.c.l.b16 %v204
    %v693 = vunpack.c.h.b16 %v204
    %v694 = vunpack.c.l.b16 %v205
    %v695 = vunpack.c.h.b16 %v205
    %v696 = vunpack.c.l.b16 %v206
    %v697 = vunpack.c.h.b16 %v206
    %v698 = vunpack.c.l.b16 %v207
    %v699 = vunpack.c.h.b16 %v207
    %v700 = vunpack.c.l.b16 %v208
    %v701 = vunpack.c.h.b16 %v208
    %v702 = vunpack.c.l.b16 %v209
    %v703 = vunpack.c.h.b16 %v209
    %v704 = vunpack.c.l.b16 %v210
    %v705 = vunpack.c.h.b16 %v210
    %v706 = vunpack.c.l.b16 %v211
    %v707 = vunpack.c.h.b16 %v211
    %v708 = vunpack.c.l.b16 %v212
    %v709 = vunpack.c.h.b16 %v212
    %v710 = vunpack.c.l.b16 %v213
    %v711 = vunpack.c.h.b16 %v213
    %v712 = vunpack.c.l.b16 %v214
    %v713 = vunpack.c.h.b16 %v214
    %v714 = vunpack.c.l.b16 %v215
    %v715 = vunpack.c.h.b16 %v215
    %v716 = vunpack.c.l.b16 %v216
    %v717 = vunpack.c.h.b16 %v216
    %v718 = vunpack.c.l.b16 %v217
    %v719 = vunpack.c.h.b16 %v217
    %v720 = vunpack.c.l.b16 %v218
    %v721 = vunpack.c.h.b16 %v218
    %v722 = vunpack.c.l.b16 %v219
    %v723 = vunpack.c.h.b16 %v219
    %v724 = vunpack.c.l.b16 %v220
    %v725 = vunpack.c.h.b16 %v220
    %v726 = vunpack.c.l.b16 %v221
    %v727 = vunpack.c.h.b16 %v221
    %v728 = vunpack.c.l.b16 %v222
    %v729 = vunpack.c.h.b16 %v222
    %v730 = vunpack.c.l.b16 %v223
    %v731 = vunpack.c.h.b16 %v223
    %v732 = vunpack.c.l.b16 %v224
    %v733 = vunpack.c.h.b16 %v224
    %v734 = vunpack.c.l.b16 %v225
    %v735 = vunpack.c.h.b16 %v225
    %v736 = vunpack.c.l.b16 %v226
    %v737 = vunpack.c.h.b16 %v226
    %v738 = vunpack.c.l.b16 %v227
    %v739 = vunpack.c.h.b16 %v227
    %v740 = vunpack.c.l.b16 %v228
    %v741 = vunpack.c.h.b16 %v228
    %v742 = vunpack.c.l.b16 %v229
    %v743 = vunpack.c.h.b16 %v229
    %v744 = vunpack.c.l.b16 %v230
    %v745 = vunpack.c.h.b16 %v230
    %v746 = vunpack.c.l.b16 %v231
    %v747 = vunpack.c.h.b16 %v231
    %v748 = vunpack.c.l.b16 %v232
    %v749 = vunpack.c.h.b16 %v232
    %v750 = vunpack.c.l.b16 %v233
    %v751 = vunpack.c.h.b16 %v233
    %v752 = vunpack.c.l.b16 %v234
    %v753 = vunpack.c.h.b16 %v234
    %v754 = vunpack.c.l.b16 %v235
    %v755 = vunpack.c.h.b16 %v235
    %v756 = vunpack.c.l.b16 %v236
    %v757 = vunpack.c.h.b16 %v236
    %v758 = vunpack.c.l.b16 %v237
    %v759 = vunpack.c.h.b16 %v237
    %v760 = vunpack.c.l.b16 %v238
    %v761 = vunpack.c.h.b16 %v238
    %v762 = vunpack.c.l.b16 %v239
    %v763 = vunpack.c.h.b16 %v239
    %v764 = vunpack.c.l.b16 %v240
    %v765 = vunpack.c.h.b16 %v240
    %v766 = vunpack.c.l.b16 %v241
    %v767 = vunpack.c.h.b16 %v241
    %v768 = vunpack.c.l.b16 %v242
    %v769 = vunpack.c.h.b16 %v242
    %v770 = vunpack.c.l.b16 %v243
    %v771 = vunpack.c.h.b16 %v243
    %v772 = vunpack.c.l.b16 %v244
    %v773 = vunpack.c.h.b16 %v244
    %v774 = vunpack.c.l.b16 %v245
    %v775 = vunpack.c.h.b16 %v245
    %v776 = vunpack.c.l.b16 %v246
    %v777 = vunpack.c.h.b16 %v246
    %v778 = vunpack.c.l.b16 %v247
    %v779 = vunpack.c.h.b16 %v247
    %v780 = vunpack.c.l.b16 %v248
    %v781 = vunpack.c.h.b16 %v248
    %v782 = vunpack.c.l.b16 %v249
    %v783 = vunpack.c.h.b16 %v249
    %v784 = vunpack.c.l.b16 %v250
    %v785 = vunpack.c.h.b16 %v250
    %v786 = vunpack.c.l.b16 %v251
    %v787 = vunpack.c.h.b16 %v251
    %v788 = vunpack.c.l.b16 %v252
    %v789 = vunpack.c.h.b16 %v252
    %v790 = vunpack.c.l.b16 %v253
    %v791 = vunpack.c.h.b16 %v253
    %v792 = vunpack.c.l.b16 %v254
    %v793 = vunpack.c.h.b16 %v254
    %v794 = vunpack.c.l.b16 %v255
    %v795 = vunpack.c.h.b16 %v255
    %v796 = vunpack.c.l.b16 %v256
    %v797 = vunpack.c.h.b16 %v256
    %v798 = vunpack.c.l.b16 %v257
    %v799 = vunpack.c.h.b16 %v257
    %v800 = vunpack.c.l.b16 %v258
    %v801 = vunpack.c.h.b16 %v258
    %v802 = vunpack.c.l.b16 %v259
    %v803 = vunpack.c.h.b16 %v259
    %v804 = vunpack.c.l.b16 %v260
    %v805 = vunpack.c.h.b16 %v260
    %v806 = vunpack.c.l.b16 %v261
    %v807 = vunpack.c.h.b16 %v261
    %v808 = vunpack.c.l.b16 %v262
    %v809 = vunpack.c.h.b16 %v262
    %v810 = vunpack.c.l.b16 %v263
    %v811 = vunpack.c.h.b16 %v263
    %v812 = vunpack.c.l.b16 %v264
    %v813 = vunpack.c.h.b16 %v264
    %v814 = vunpack.c.l.b16 %v265
    %v815 = vunpack.c.h.b16 %v265
    %v816 = vunpack.c.l.b16 %v266
    %v817 = vunpack.c.h.b16 %v266
    %v818 = vunpack.c.l.b16 %v267
    %v819 = vunpack.c.h.b16 %v267
    %v820 = vunpack.c.l.b16 %v268
    %v821 = vunpack.c.h.b16 %v268
    %v822 = vunpack.c.l.b16 %v269
    %v823 = vunpack.c.h.b16 %v269
    %v824 = vunpack.c.l.b16 %v270
    %v825 = vunpack.c.h.b16 %v270
    %v826 = vunpack.c.l.b16 %v271
    %v827 = vunpack.c.h.b16 %v271
    %v828 = vunpack.c.l.b16 %v272
    %v829 = vunpack.c.h.b16 %v272
    %v830 = vunpack.c.l.b16 %v273
    %v831 = vunpack.c.h.b16 %v273
    %v832 = vunpack.c.l.b16 %v274
    %v833 = vunpack.c.h.b16 %v274
    %v834 = vunpack.c.l.b16 %v275
    %v835 = vunpack.c.h.b16 %v275
    %v836 = vunpack.c.l.b16 %v276
    %v837 = vunpack.c.h.b16 %v276
    %v838 = vunpack.c.l.b16 %v277
    %v839 = vunpack.c.h.b16 %v277
    %v840 = vunpack.c.l.b16 %v278
    %v841 = vunpack.c.h.b16 %v278
    %v842 = vunpack.c.l.b16 %v279
    %v843 = vunpack.c.h.b16 %v279
    %v844 = vunpack.c.l.b16 %v280
    %v845 = vunpack.c.h.b16 %v280
    %v846 = vunpack.c.l.b16 %v281
    %v847 = vunpack.c.h.b16 %v281
    %v848 = vunpack.c.l.b16 %v282
    %v849 = vunpack.c.h.b16 %v282
    %v850 = vunpack.c.l.b16 %v283
    %v851 = vunpack.c.h.b16 %v283
    %v852 = vunpack.c.l.b16 %v284
    %v853 = vunpack.c.h.b16 %v284
    %v854 = vunpack.c.l.b16 %v285
    %v855 = vunpack.c.h.b16 %v285
    %v856 = vunpack.c.l.b16 %v286
    %v857 = vunpack.c.h.b16 %v286
    %v858 = vunpack.c.l.b16 %v287
    %v859 = vunpack.c.h.b16 %v287
    %v860 = vunpack.c.l.b16 %v288
    %v861 = vunpack.c.h.b16 %v288
    %v862 = vunpack.c.l.b16 %v289
    %v863 = vunpack.c.h.b16 %v289
    %v864 = vunpack.c.l.b16 %v290
    %v865 = vunpack.c.h.b16 %v290
    %v866 = vunpack.c.l.b16 %v291
    %v867 = vunpack.c.h.b16 %v291
    %v868 = vunpack.c.l.b16 %v292
    %v869 = vunpack.c.h.b16 %v292
    %v870 = vunpack.c.l.b16 %v293
    %v871 = vunpack.c.h.b16 %v293
    %v872 = vunpack.c.l.b16 %v294
    %v873 = vunpack.c.h.b16 %v294
    %v874 = vunpack.c.l.b16 %v295
    %v875 = vunpack.c.h.b16 %v295
    %v876 = vunpack.c.l.b16 %v296
    %v877 = vunpack.c.h.b16 %v296
    %v878 = vunpack.c.l.b16 %v297
    %v879 = vunpack.c.h.b16 %v297
    %v880 = vunpack.c.l.b16 %v298
    %v881 = vunpack.c.h.b16 %v298
    %v882 = vunpack.c.l.b16 %v299
    %v883 = vunpack.c.h.b16 %v299
    %v884 = vunpack.c.l.b16 %v300
    %v885 = vunpack.c.h.b16 %v300
    %v886 = vunpack.c.l.b16 %v301
    %v887 = vunpack.c.h.b16 %v301
    %v888 = vunpack.c.l.b16 %v302
    %v889 = vunpack.c.h.b16 %v302
    %v890 = vunpack.c.l.b16 %v303
    %v891 = vunpack.c.h.b16 %v303
    %v892 = vunpack.c.l.b16 %v304
    %v893 = vunpack.c.h.b16 %v304
    %v894 = vunpack.c.l.b16 %v305
    %v895 = vunpack.c.h.b16 %v305
    %v896 = vunpack.c.l.b16 %v306
    %v897 = vunpack.c.h.b16 %v306
    %v898 = vunpack.c.l.b16 %v307
    %v899 = vunpack.c.h.b16 %v307
    %v900 = vunpack.c.l.b16 %v308
    %v901 = vunpack.c.h.b16 %v308
    %v902 = vunpack.c.l.b16 %v309
    %v903 = vunpack.c.h.b16 %v309
    %v904 = vunpack.c.l.b16 %v310
    %v905 = vunpack.c.h.b16 %v310
    %v906 = vunpack.c.l.b16 %v311
    %v907 = vunpack.c.h.b16 %v311
    %v908 = vunpack.c.l.b16 %v312
    %v909 = vunpack.c.h.b16 %v312
    %v910 = vunpack.c.l.b16 %v313
    %v911 = vunpack.c.h.b16 %v313
    %v912 = vunpack.c.l.b16 %v314
    %v913 = vunpack.c.h.b16 %v314
    %v914 = vunpack.c.l.b16 %v315
    %v915 = vunpack.c.h.b16 %v315
    %v916 = vunpack.c.l.b16 %v316
    %v917 = vunpack.c.h.b16 %v316
    %v918 = vunpack.c.l.b16 %v317
    %v919 = vunpack.c.h.b16 %v317
    %v920 = vunpack.c.l.b16 %v318
    %v921 = vunpack.c.h.b16 %v318
    %v922 = vunpack.c.l.b16 %v319
    %v923 = vunpack.c.h.b16 %v319
    %v924 = vunpack.c.l.b16 %v320
    %v925 = vunpack.c.h.b16 %v320
    %v926 = vunpack.c.l.b16 %v321
    %v927 = vunpack.c.h.b16 %v321
    %v928 = vunpack.c.l.b16 %v322
    %v929 = vunpack.c.h.b16 %v322
    %v930 = vunpack.c.l.b16 %v323
    %v931 = vunpack.c.h.b16 %v323
    %v932 = vunpack.c.l.b16 %v324
    %v933 = vunpack.c.h.b16 %v324
    %v934 = vunpack.c.l.b16 %v325
    %v935 = vunpack.c.h.b16 %v325
    %v936 = vunpack.c.l.b16 %v326
    %v937 = vunpack.c.h.b16 %v326
    %v938 = vunpack.c.l.b16 %v327
    %v939 = vunpack.c.h.b16 %v327
    %v940 = vunpack.c.l.b16 %v328
    %v941 = vunpack.c.h.b16 %v328
    %v942 = vunpack.c.l.b16 %v329
    %v943 = vunpack.c.h.b16 %v329
    %v944 = vunpack.c.l.b16 %v330
    %v945 = vunpack.c.h.b16 %v330
    %v946 = vunpack.c.l.b16 %v331
    %v947 = vunpack.c.h.b16 %v331
    %v948 = vunpack.c.l.b16 %v332
    %v949 = vunpack.c.h.b16 %v332
    %v950 = vunpack.c.l.b16 %v333
    %v951 = vunpack.c.h.b16 %v333
    %v952 = vunpack.c.l.b16 %v334
    %v953 = vunpack.c.h.b16 %v334
    %v954 = vunpack.c.l.b16 %v335
    %v955 = vunpack.c.h.b16 %v335
    %v956 = vunpack.c.l.b16 %v336
    %v957 = vunpack.c.h.b16 %v336
    %v958 = vunpack.c.l.b16 %v337
    %v959 = vunpack.c.h.b16 %v337
    %v960 = vunpack.c.l.b16 %v338
    %v961 = vunpack.c.h.b16 %v338
    %v962 = vunpack.c.l.b16 %v339
    %v963 = vunpack.c.h.b16 %v339
    %v964 = vunpack.c.l.b16 %v340
    %v965 = vunpack.c.h.b16 %v340
    %v966 = vunpack.c.l.b16 %v341
    %v967 = vunpack.c.h.b16 %v341
    %v968 = vunpack.c.l.b16 %v342
    %v969 = vunpack.c.h.b16 %v342
    %v970 = vunpack.c.l.b16 %v343
    %v971 = vunpack.c.h.b16 %v343
    %v972 = vunpack.c.l.b16 %v344
    %v973 = vunpack.c.h.b16 %v344
    %v974 = vunpack.c.l.b16 %v345
    %v975 = vunpack.c.h.b16 %v345
    %v976 = vunpack.c.l.b16 %v346
    %v977 = vunpack.c.h.b16 %v346
    %v978 = vunpack.c.l.b16 %v347
    %v979 = vunpack.c.h.b16 %v347
    %v980 = vunpack.c.l.b16 %v348
    %v981 = vunpack.c.h.b16 %v348
    %v982 = vunpack.c.l.b16 %v349
    %v983 = vunpack.c.h.b16 %v349
    %v984 = vunpack.c.l.b16 %v350
    %v985 = vunpack.c.h.b16 %v350
    %v986 = vunpack.c.l.b16 %v351
    %v987 = vunpack.c.h.b16 %v351
    %v988 = vunpack.c.l.b16 %v352
    %v989 = vunpack.c.h.b16 %v352
    %v990 = vunpack.c.l.b16 %v353
    %v991 = vunpack.c.h.b16 %v353
    %v992 = vunpack.c.l.b16 %v354
    %v993 = vunpack.c.h.b16 %v354
    %v994 = vunpack.c.l.b16 %v355
    %v995 = vunpack.c.h.b16 %v355
    %v996 = vunpack.c.l.b16 %v356
    %v997 = vunpack.c.h.b16 %v356
    %v998 = vunpack.c.l.b16 %v357
    %v999 = vunpack.c.h.b16 %v357
    %v1000 = vunpack.c.l.b16 %v358
    %v1001 = vunpack.c.h.b16 %v358
    %v1002 = vunpack.c.l.b16 %v359
    %v1003 = vunpack.c.h.b16 %v359
    %v1004 = vunpack.c.l.b16 %v360
    %v1005 = vunpack.c.h.b16 %v360
    %v1006 = vunpack.c.l.b16 %v361
    %v1007 = vunpack.c.h.b16 %v361
    %v1008 = vunpack.c.l.b16 %v362
    %v1009 = vunpack.c.h.b16 %v362
    %v1010 = vunpack.c.l.b16 %v363
    %v1011 = vunpack.c.h.b16 %v363
    %v1012 = vunpack.c.l.b16 %v364
    %v1013 = vunpack.c.h.b16 %v364
    %v1014 = vunpack.c.l.b16 %v365
    %v1015 = vunpack.c.h.b16 %v365
    %v1016 = vunpack.c.l.b16 %v366
    %v1017 = vunpack.c.h.b16 %v366
    %v1018 = vunpack.c.l.b16 %v367
    %v1019 = vunpack.c.h.b16 %v367
    %v1020 = vunpack.c.l.b16 %v368
    %v1021 = vunpack.c.h.b16 %v368
    %v1022 = vunpack.c.l.b16 %v369
    %v1023 = vunpack.c.h.b16 %v369
    %v1024 = vunpack.c.l.b16 %v370
    %v1025 = vunpack.c.h.b16 %v370
    %v1026 = vunpack.c.l.b16 %v371
    %v1027 = vunpack.c.h.b16 %v371
    %v1028 = vunpack.c.l.b16 %v372
    %v1029 = vunpack.c.h.b16 %v372
    %v1030 = vunpack.c.l.b16 %v373
    %v1031 = vunpack.c.h.b16 %v373
    %v1032 = vunpack.c.l.b16 %v374
    %v1033 = vunpack.c.h.b16 %v374
    %v1034 = vunpack.c.l.b16 %v375
    %v1035 = vunpack.c.h.b16 %v375
    %v1036 = vunpack.c.l.b16 %v376
    %v1037 = vunpack.c.h.b16 %v376
    %v1038 = vunpack.c.l.b16 %v377
    %v1039 = vunpack.c.h.b16 %v377
    %v1040 = vunpack.c.l.b16 %v378
    %v1041 = vunpack.c.h.b16 %v378
    %v1042 = vunpack.c.l.b16 %v379
    %v1043 = vunpack.c.h.b16 %v379
    %v1044 = vunpack.c.l.b16 %v380
    %v1045 = vunpack.c.h.b16 %v380
    %v1046 = vunpack.c.l.b16 %v381
    %v1047 = vunpack.c.h.b16 %v381
    %v1048 = vunpack.c.l.b16 %v382
    %v1049 = vunpack.c.h.b16 %v382
    %v1050 = vunpack.c.l.b16 %v383
    %v1051 = vunpack.c.h.b16 %v383
    %v1052 = vunpack.c.l.b16 %v384
    %v1053 = vunpack.c.h.b16 %v384
    %v1054 = vunpack.c.l.b16 %v385
    %v1055 = vunpack.c.h.b16 %v385
    %v1056 = vunpack.c.l.b16 %v386
    %v1057 = vunpack.c.h.b16 %v386
    %v1058 = vunpack.c.l.b16 %v387
    %v1059 = vunpack.c.h.b16 %v387
    %v1060 = vunpack.c.l.b16 %v388
    %v1061 = vunpack.c.h.b16 %v388
    %v1062 = vunpack.c.l.b16 %v389
    %v1063 = vunpack.c.h.b16 %v389
    %v1064 = vpack.c.b16 %v688, %v680
    %v1065 = vpack.c.b16 %v689, %v681
    %v1066 = vpack.c.b16 %v690, %v682
    %v1067 = vpack.c.b16 %v691, %v683
    %v1068 = vpack.c.b16 %v692, %v684
    %v1069 = vpack.c.b16 %v693, %v685
    %v1070 = vpack.c.b16 %v694, %v686
    %v1071 = vpack.c.b16 %v695, %v687
    %v1072 = vpack.c.b16 %v704, %v696
    %v1073 = vpack.c.b16 %v705, %v697
    %v1074 = vpack.c.b16 %v706, %v698
    %v1075 = vpack.c.b16 %v707, %v699
    %v1076 = vpack.c.b16 %v708, %v700
    %v1077 = vpack.c.b16 %v709, %v701
    %v1078 = vpack.c.b16 %v710, %v702
    %v1079 = vpack.c.b16 %v711, %v703
    %v1080 = vpack.c.b16 %v720, %v712
    %v1081 = vpack.c.b16 %v721, %v713
    %v1082 = vpack.c.b16 %v722, %v714
    %v1083 = vpack.c.b16 %v723, %v715
    %v1084 = vpack.c.b16 %v724, %v716
    %v1085 = vpack.c.b16 %v725, %v717
    %v1086 = vpack.c.b16 %v726, %v718
    %v1087 = vpack.c.b16 %v727, %v719
    %v1088 = vpack.c.b16 %v736, %v728
    %v1089 = vpack.c.b16 %v737, %v729
    %v1090 = vpack.c.b16 %v738, %v730
    %v1091 = vpack.c.b16 %v739, %v731
    %v1092 = vpack.c.b16 %v740, %v732
    %v1093 = vpack.c.b16 %v741, %v733
    %v1094 = vpack.c.b16 %v742, %v734
    %v1095 = vpack.c.b16 %v743, %v735
    %v1096 = vpack.c.b16 %v752, %v744
    %v1097 = vpack.c.b16 %v753, %v745
    %v1098 = vpack.c.b16 %v754, %v746
    %v1099 = vpack.c.b16 %v755, %v747
    %v1100 = vpack.c.b16 %v756, %v748
    %v1101 = vpack.c.b16 %v757, %v749
    %v1102 = vpack.c.b16 %v758, %v750
    %v1103 = vpack.c.b16 %v759, %v751
    %v1104 = vpack.c.b16 %v768, %v760
    %v1105 = vpack.c.b16 %v769, %v761
    %v1106 = vpack.c.b16 %v770, %v762
    %v1107 = vpack.c.b16 %v771, %v763
    %v1108 = vpack.c.b16 %v772, %v764
    %v1109 = vpack.c.b16 %v773, %v765
    %v1110 = vpack.c.b16 %v774, %v766
    %v1111 = vpack.c.b16 %v775, %v767
    %v1112 = vpack.c.b16 %v784, %v776
    %v1113 = vpack.c.b16 %v785, %v777
    %v1114 = vpack.c.b16 %v786, %v778
    %v1115 = vpack.c.b16 %v787, %v779
    %v1116 = vpack.c.b16 %v788, %v780
    %v1117 = vpack.c.b16 %v789, %v781
    %v1118 = vpack.c.b16 %v790, %v782
    %v1119 = vpack.c.b16 %v791, %v783
    %v1120 = vpack.c.b16 %v800, %v792
    %v1121 = vpack.c.b16 %v801, %v793
    %v1122 = vpack.c.b16 %v802, %v794
    %v1123 = vpack.c.b16 %v803, %v795
    %v1124 = vpack.c.b16 %v804, %v796
    %v1125 = vpack.c.b16 %v805, %v797
    %v1126 = vpack.c.b16 %v806, %v798
    %v1127 = vpack.c.b16 %v807, %v799
    %v1128 = vpack.c.b16 %v816, %v808
    %v1129 = vpack.c.b16 %v817, %v809
    %v1130 = vpack.c.b16 %v818, %v810
    %v1131 = vpack.c.b16 %v819, %v811
    %v1132 = vpack.c.b16 %v820, %v812
    %v1133 = vpack.c.b16 %v821, %v813
    %v1134 = vpack.c.b16 %v822, %v814
    %v1135 = vpack.c.b16 %v823, %v815
    %v1136 = vpack.c.b16 %v832, %v824
    %v1137 = vpack.c.b16 %v833, %v825
    %v1138 = vpack.c.b16 %v834, %v826
    %v1139 = vpack.c.b16 %v835, %v827
    %v1140 = vpack.c.b16 %v836, %v828
    %v1141 = vpack.c.b16 %v837, %v829
    %v1142 = vpack.c.b16 %v838, %v830
    %v1143 = vpack.c.b16 %v839, %v831
    %v1144 = vpack.c.b16 %v848, %v840
    %v1145 = vpack.c.b16 %v849, %v841
    %v1146 = vpack.c.b16 %v850, %v842
    %v1147 = vpack.c.b16 %v851, %v843
    %v1148 = vpack.c.b16 %v852, %v844
    %v1149 = vpack.c.b16 %v853, %v845
    %v1150 = vpack.c.b16 %v854, %v846
    %v1151 = vpack.c.b16 %v855, %v847
    %v1152 = vpack.c.b16 %v864, %v856
    %v1153 = vpack.c.b16 %v865, %v857
    %v1154 = vpack.c.b16 %v866, %v858
    %v1155 = vpack.c.b16 %v867, %v859
    %v1156 = vpack.c.b16 %v868, %v860
    %v1157 = vpack.c.b16 %v869, %v861
    %v1158 = vpack.c.b16 %v870, %v862
    %v1159 = vpack.c.b16 %v871, %v863
    %v1160 = vpack.c.b16 %v880, %v872
    %v1161 = vpack.c.b16 %v881, %v873
    %v1162 = vpack.c.b16 %v882, %v874
    %v1163 = vpack.c.b16 %v883, %v875
    %v1164 = vpack.c.b16 %v884, %v876
    %v1165 = vpack.c.b16 %v885, %v877
    %v1166 = vpack.c.b16 %v886, %v878
    %v1167 = vpack.c.b16 %v887, %v879
    %v1168 = vpack.c.b16 %v896, %v888
    %v1169 = vpack.c.b16 %v897, %v889
    %v1170 = vpack.c.b16 %v898, %v890
    %v1171 = vpack.c.b16 %v899, %v891
    %v1172 = vpack.c.b16 %v900, %v892
    %v1173 = vpack.c.b16 %v901, %v893
    %v1174 = vpack.c.b16 %v902, %v894
    %v1175 = vpack.c.b16 %v903, %v895
    %v1176 = vpack.c.b16 %v912, %v904
    %v1177 = vpack.c.b16 %v913, %v905
    %v1178 = vpack.c.b16 %v914, %v906
    %v1179 = vpack.c.b16 %v915, %v907
    %v1180 = vpack.c.b16 %v916, %v908
    %v1181 = vpack.c.b16 %v917, %v909
    %v1182 = vpack.c.b16 %v918, %v910
    %v1183 = vpack.c.b16 %v919, %v911
    %v1184 = vpack.c.b16 %v928, %v920
    %v1185 = vpack.c.b16 %v929, %v921
    %v1186 = vpack.c.b16 %v930, %v922
    %v1187 = vpack.c.b16 %v931, %v923
    %v1188 = vpack.c.b16 %v932, %v924
    %v1189 = vpack.c.b16 %v933, %v925
    %v1190 = vpack.c.b16 %v934, %v926
    %v1191 = vpack.c.b16 %v935, %v927
    %v1192 = vpack.c.b16 %v944, %v936
    %v1193 = vpack.c.b16 %v945, %v937
    %v1194 = vpack.c.b16 %v946, %v938
    %v1195 = vpack.c.b16 %v947, %v939
    %v1196 = vpack.c.b16 %v948, %v940
    %v1197 = vpack.c.b16 %v949, %v941
    %v1198 = vpack.c.b16 %v950, %v942
    %v1199 = vpack.c.b16 %v951, %v943
    %v1200 = vpack.c.b16 %v960, %v952
    %v1201 = vpack.c.b16 %v961, %v953
    %v1202 = vpack.c.b16 %v962, %v954
    %v1203 = vpack.c.b16 %v963, %v955
    %v1204 = vpack.c.b16 %v964, %v956
    %v1205 = vpack.c.b16 %v965, %v957
    %v1206 = vpack.c.b16 %v966, %v958
    %v1207 = vpack.c.b16 %v967, %v959
    %v1208 = vpack.c.b16 %v976, %v968
    %v1209 = vpack.c.b16 %v977, %v969
    %v1210 = vpack.c.b16 %v978, %v970
    %v1211 = vpack.c.b16 %v979, %v971
    %v1212 = vpack.c.b16 %v980, %v972
    %v1213 = vpack.c.b16 %v981, %v973
    %v1214 = vpack.c.b16 %v982, %v974
    %v1215 = vpack.c.b16 %v983, %v975
    %v1216 = vpack.c.b16 %v992, %v984
    %v1217 = vpack.c.b16 %v993, %v985
    %v1218 = vpack.c.b16 %v994, %v986
    %v1219 = vpack.c.b16 %v995, %v987
    %v1220 = vpack.c.b16 %v996, %v988
    %v1221 = vpack.c.b16 %v997, %v989
    %v1222 = vpack.c.b16 %v998, %v990
    %v1223 = vpack.c.b16 %v999, %v991
    %v1224 = vpack.c.b16 %v1008, %v1000
    %v1225 = vpack.c.b16 %v1009, %v1001
    %v1226 = vpack.c.b16 %v1010, %v1002
    %v1227 = vpack.c.b16 %v1011, %v1003
    %v1228 = vpack.c.b16 %v1012, %v1004
    %v1229 = vpack.c.b16 %v1013, %v1005
    %v1230 = vpack.c.b16 %v1014, %v1006
    %v1231 = vpack.c.b16 %v1015, %v1007
    %v1232 = vpack.c.b16 %v1024, %v1016
    %v1233 = vpack.c.b16 %v1025, %v1017
    %v1234 = vpack.c.b16 %v1026, %v1018
    %v1235 = vpack.c.b16 %v1027, %v1019
    %v1236 = vpack.c.b16 %v1028, %v1020
    %v1237 = vpack.c.b16 %v1029, %v1021
    %v1238 = vpack.c.b16 %v1030, %v1022
    %v1239 = vpack.c.b16 %v1031, %v1023
    %v1240 = vpack.c.b16 %v1040, %v1032
    %v1241 = vpack.c.b16 %v1041, %v1033
    %v1242 = vpack.c.b16 %v1042, %v1034
    %v1243 = vpack.c.b16 %v1043, %v1035
    %v1244 = vpack.c.b16 %v1044, %v1036
    %v1245 = vpack.c.b16 %v1045, %v1037
    %v1246 = vpack.c.b16 %v1046, %v1038
    %v1247 = vpack.c.b16 %v1047, %v1039
    %v1248 = vpack.c.b16 %v1056, %v1048
    %v1249 = vpack.c.b16 %v1057, %v1049
    %v1250 = vpack.c.b16 %v1058, %v1050
    %v1251 = vpack.c.b16 %v1059, %v1051
    %v1252 = vpack.c.b16 %v1060, %v1052
    %v1253 = vpack.c.b16 %v1061, %v1053
    %v1254 = vpack.c.b16 %v1062, %v1054
    %v1255 = vpack.c.b16 %v1063, %v1055
    %1448 = vmatpush.bf16.msra.mxu0 %v1120
    %1449 = vmatpush.bf16.msra.mxu0 %v1112
    %1450 = vmatpush.bf16.msra.mxu0 %v1104
    %1451 = vmatpush.bf16.msra.mxu0 %v1096
    %1452 = vmatpush.bf16.msra.mxu0 %v1088
    %1453 = vmatpush.bf16.msra.mxu0 %v1080
    %1454 = vmatpush.bf16.msra.mxu0 %v1072
    %1455 = vmatpush.bf16.msra.mxu0 %v1064
    %1456 = vmatmul.bf16.gmra.mxu0 %v482
    %v1457 = vpop.f32.mrf.mxu0
    %v1458 = vadd.f32 %v456, %v1457
    %v1459 = vpop.f32.mrf.mxu0
    %v1460 = vadd.f32 %v456, %v1459
    %1461 = vdwg.mxu0
    %1462 = vmatpush.bf16.msra.mxu0 %v1184
    %1463 = vmatpush.bf16.msra.mxu0 %v1176
    %1464 = vmatpush.bf16.msra.mxu0 %v1168
    %1465 = vmatpush.bf16.msra.mxu0 %v1160
    %1466 = vmatpush.bf16.msra.mxu0 %v1152
    %1467 = vmatpush.bf16.msra.mxu0 %v1144
    %1468 = vmatpush.bf16.msra.mxu0 %v1136
    %1469 = vmatpush.bf16.msra.mxu0 %v1128
    %1470 = vmatmul.bf16.gmra.mxu0 %v483
    %v1471 = vpop.f32.mrf.mxu0
    %v1472 = vadd.f32 %v1458, %v1471
    %v1473 = vpop.f32.mrf.mxu0
    %v1474 = vadd.f32 %v1460, %v1473
    %1475 = vdwg.mxu0
    %1476 = vmatpush.bf16.msra.mxu0 %v1248
    %1477 = vmatpush.bf16.msra.mxu0 %v1240
    %1478 = vmatpush.bf16.msra.mxu0 %v1232
    %1479 = vmatpush.bf16.msra.mxu0 %v1224
    %1480 = vmatpush.bf16.msra.mxu0 %v1216
    %1481 = vmatpush.bf16.msra.mxu0 %v1208
    %1482 = vmatpush.bf16.msra.mxu0 %v1200
    %1483 = vmatpush.bf16.msra.mxu0 %v1192
    %1484 = vmatmul.bf16.gmra.mxu0 %v484
    %v1485 = vpop.f32.mrf.mxu0
    %v1486 = vadd.f32 %v1472, %v1485
    %v1487 = vpop.f32.mrf.mxu0
    %v1488 = vadd.f32 %v1474, %v1487
    %1489 = vdwg.mxu0
    %1490 = vmatpush.bf16.msra.mxu0 %v1121
    %1491 = vmatpush.bf16.msra.mxu0 %v1113
    %1492 = vmatpush.bf16.msra.mxu0 %v1105
    %1493 = vmatpush.bf16.msra.mxu0 %v1097
    %1494 = vmatpush.bf16.msra.mxu0 %v1089
    %1495 = vmatpush.bf16.msra.mxu0 %v1081
    %1496 = vmatpush.bf16.msra.mxu0 %v1073
    %1497 = vmatpush.bf16.msra.mxu0 %v1065
    %1498 = vmatmul.bf16.gmra.mxu0 %v482
    %v1499 = vpop.f32.mrf.mxu0
    %v1500 = vadd.f32 %v457, %v1499
    %v1501 = vpop.f32.mrf.mxu0
    %v1502 = vadd.f32 %v457, %v1501
    %1503 = vdwg.mxu0
    %1504 = vmatpush.bf16.msra.mxu0 %v1185
    %1505 = vmatpush.bf16.msra.mxu0 %v1177
    %1506 = vmatpush.bf16.msra.mxu0 %v1169
    %1507 = vmatpush.bf16.msra.mxu0 %v1161
    %1508 = vmatpush.bf16.msra.mxu0 %v1153
    %1509 = vmatpush.bf16.msra.mxu0 %v1145
    %1510 = vmatpush.bf16.msra.mxu0 %v1137
    %1511 = vmatpush.bf16.msra.mxu0 %v1129
    %1512 = vmatmul.bf16.gmra.mxu0 %v483
    %v1513 = vpop.f32.mrf.mxu0
    %v1514 = vadd.f32 %v1500, %v1513
    %v1515 = vpop.f32.mrf.mxu0
    %v1516 = vadd.f32 %v1502, %v1515
    %1517 = vdwg.mxu0
    %1518 = vmatpush.bf16.msra.mxu0 %v1249
    %1519 = vmatpush.bf16.msra.mxu0 %v1241
    %1520 = vmatpush.bf16.msra.mxu0 %v1233
    %1521 = vmatpush.bf16.msra.mxu0 %v1225
    %1522 = vmatpush.bf16.msra.mxu0 %v1217
    %1523 = vmatpush.bf16.msra.mxu0 %v1209
    %1524 = vmatpush.bf16.msra.mxu0 %v1201
    %1525 = vmatpush.bf16.msra.mxu0 %v1193
    %1526 = vmatmul.bf16.gmra.mxu0 %v484
    %v1527 = vpop.f32.mrf.mxu0
    %v1528 = vadd.f32 %v1514, %v1527
    %v1529 = vpop.f32.mrf.mxu0
    %v1530 = vadd.f32 %v1516, %v1529
    %1531 = vdwg.mxu0
    %1532 = vmatpush.bf16.msra.mxu0 %v1122
    %1533 = vmatpush.bf16.msra.mxu0 %v1114
    %1534 = vmatpush.bf16.msra.mxu0 %v1106
    %1535 = vmatpush.bf16.msra.mxu0 %v1098
    %1536 = vmatpush.bf16.msra.mxu0 %v1090
    %1537 = vmatpush.bf16.msra.mxu0 %v1082
    %1538 = vmatpush.bf16.msra.mxu0 %v1074
    %1539 = vmatpush.bf16.msra.mxu0 %v1066
    %1540 = vmatmul.bf16.gmra.mxu0 %v482
    %v1541 = vpop.f32.mrf.mxu0
    %v1542 = vadd.f32 %v458, %v1541
    %v1543 = vpop.f32.mrf.mxu0
    %v1544 = vadd.f32 %v458, %v1543
    %1545 = vdwg.mxu0
    %1546 = vmatpush.bf16.msra.mxu0 %v1186
    %1547 = vmatpush.bf16.msra.mxu0 %v1178
    %1548 = vmatpush.bf16.msra.mxu0 %v1170
    %1549 = vmatpush.bf16.msra.mxu0 %v1162
    %1550 = vmatpush.bf16.msra.mxu0 %v1154
    %1551 = vmatpush.bf16.msra.mxu0 %v1146
    %1552 = vmatpush.bf16.msra.mxu0 %v1138
    %1553 = vmatpush.bf16.msra.mxu0 %v1130
    %1554 = vmatmul.bf16.gmra.mxu0 %v483
    %v1555 = vpop.f32.mrf.mxu0
    %v1556 = vadd.f32 %v1542, %v1555
    %v1557 = vpop.f32.mrf.mxu0
    %v1558 = vadd.f32 %v1544, %v1557
    %1559 = vdwg.mxu0
    %1560 = vmatpush.bf16.msra.mxu0 %v1250
    %1561 = vmatpush.bf16.msra.mxu0 %v1242
    %1562 = vmatpush.bf16.msra.mxu0 %v1234
    %1563 = vmatpush.bf16.msra.mxu0 %v1226
    %1564 = vmatpush.bf16.msra.mxu0 %v1218
    %1565 = vmatpush.bf16.msra.mxu0 %v1210
    %1566 = vmatpush.bf16.msra.mxu0 %v1202
    %1567 = vmatpush.bf16.msra.mxu0 %v1194
    %1568 = vmatmul.bf16.gmra.mxu0 %v484
    %v1569 = vpop.f32.mrf.mxu0
    %v1570 = vadd.f32 %v1556, %v1569
    %v1571 = vpop.f32.mrf.mxu0
    %v1572 = vadd.f32 %v1558, %v1571
    %1573 = vdwg.mxu0
    %1574 = vmatpush.bf16.msra.mxu0 %v1123
    %1575 = vmatpush.bf16.msra.mxu0 %v1115
    %1576 = vmatpush.bf16.msra.mxu0 %v1107
    %1577 = vmatpush.bf16.msra.mxu0 %v1099
    %1578 = vmatpush.bf16.msra.mxu0 %v1091
    %1579 = vmatpush.bf16.msra.mxu0 %v1083
    %1580 = vmatpush.bf16.msra.mxu0 %v1075
    %1581 = vmatpush.bf16.msra.mxu0 %v1067
    %1582 = vmatmul.bf16.gmra.mxu0 %v482
    %v1583 = vpop.f32.mrf.mxu0
    %v1584 = vadd.f32 %v459, %v1583
    %v1585 = vpop.f32.mrf.mxu0
    %v1586 = vadd.f32 %v459, %v1585
    %1587 = vdwg.mxu0
    %1588 = vmatpush.bf16.msra.mxu0 %v1187
    %1589 = vmatpush.bf16.msra.mxu0 %v1179
    %1590 = vmatpush.bf16.msra.mxu0 %v1171
    %1591 = vmatpush.bf16.msra.mxu0 %v1163
    %1592 = vmatpush.bf16.msra.mxu0 %v1155
    %1593 = vmatpush.bf16.msra.mxu0 %v1147
    %1594 = vmatpush.bf16.msra.mxu0 %v1139
    %1595 = vmatpush.bf16.msra.mxu0 %v1131
    %1596 = vmatmul.bf16.gmra.mxu0 %v483
    %v1597 = vpop.f32.mrf.mxu0
    %v1598 = vadd.f32 %v1584, %v1597
    %v1599 = vpop.f32.mrf.mxu0
    %v1600 = vadd.f32 %v1586, %v1599
    %1601 = vdwg.mxu0
    %1602 = vmatpush.bf16.msra.mxu0 %v1251
    %1603 = vmatpush.bf16.msra.mxu0 %v1243
    %1604 = vmatpush.bf16.msra.mxu0 %v1235
    %1605 = vmatpush.bf16.msra.mxu0 %v1227
    %1606 = vmatpush.bf16.msra.mxu0 %v1219
    %1607 = vmatpush.bf16.msra.mxu0 %v1211
    %1608 = vmatpush.bf16.msra.mxu0 %v1203
    %1609 = vmatpush.bf16.msra.mxu0 %v1195
    %1610 = vmatmul.bf16.gmra.mxu0 %v484
    %v1611 = vpop.f32.mrf.mxu0
    %v1612 = vadd.f32 %v1598, %v1611
    %v1613 = vpop.f32.mrf.mxu0
    %v1614 = vadd.f32 %v1600, %v1613
    %1615 = vdwg.mxu0
    %1616 = vmatpush.bf16.msra.mxu0 %v1124
    %1617 = vmatpush.bf16.msra.mxu0 %v1116
    %1618 = vmatpush.bf16.msra.mxu0 %v1108
    %1619 = vmatpush.bf16.msra.mxu0 %v1100
    %1620 = vmatpush.bf16.msra.mxu0 %v1092
    %1621 = vmatpush.bf16.msra.mxu0 %v1084
    %1622 = vmatpush.bf16.msra.mxu0 %v1076
    %1623 = vmatpush.bf16.msra.mxu0 %v1068
    %1624 = vmatmul.bf16.gmra.mxu0 %v482
    %v1625 = vpop.f32.mrf.mxu0
    %v1626 = vadd.f32 %v460, %v1625
    %v1627 = vpop.f32.mrf.mxu0
    %v1628 = vadd.f32 %v460, %v1627
    %1629 = vdwg.mxu0
    %1630 = vmatpush.bf16.msra.mxu0 %v1188
    %1631 = vmatpush.bf16.msra.mxu0 %v1180
    %1632 = vmatpush.bf16.msra.mxu0 %v1172
    %1633 = vmatpush.bf16.msra.mxu0 %v1164
    %1634 = vmatpush.bf16.msra.mxu0 %v1156
    %1635 = vmatpush.bf16.msra.mxu0 %v1148
    %1636 = vmatpush.bf16.msra.mxu0 %v1140
    %1637 = vmatpush.bf16.msra.mxu0 %v1132
    %1638 = vmatmul.bf16.gmra.mxu0 %v483
    %v1639 = vpop.f32.mrf.mxu0
    %v1640 = vadd.f32 %v1626, %v1639
    %v1641 = vpop.f32.mrf.mxu0
    %v1642 = vadd.f32 %v1628, %v1641
    %1643 = vdwg.mxu0
    %1644 = vmatpush.bf16.msra.mxu0 %v1252
    %1645 = vmatpush.bf16.msra.mxu0 %v1244
    %1646 = vmatpush.bf16.msra.mxu0 %v1236
    %1647 = vmatpush.bf16.msra.mxu0 %v1228
    %1648 = vmatpush.bf16.msra.mxu0 %v1220
    %1649 = vmatpush.bf16.msra.mxu0 %v1212
    %1650 = vmatpush.bf16.msra.mxu0 %v1204
    %1651 = vmatpush.bf16.msra.mxu0 %v1196
    %1652 = vmatmul.bf16.gmra.mxu0 %v484
    %v1653 = vpop.f32.mrf.mxu0
    %v1654 = vadd.f32 %v1640, %v1653
    %v1655 = vpop.f32.mrf.mxu0
    %v1656 = vadd.f32 %v1642, %v1655
    %1657 = vdwg.mxu0
    %1658 = vmatpush.bf16.msra.mxu0 %v1125
    %1659 = vmatpush.bf16.msra.mxu0 %v1117
    %1660 = vmatpush.bf16.msra.mxu0 %v1109
    %1661 = vmatpush.bf16.msra.mxu0 %v1101
    %1662 = vmatpush.bf16.msra.mxu0 %v1093
    %1663 = vmatpush.bf16.msra.mxu0 %v1085
    %1664 = vmatpush.bf16.msra.mxu0 %v1077
    %1665 = vmatpush.bf16.msra.mxu0 %v1069
    %1666 = vmatmul.bf16.gmra.mxu0 %v482
    %v1667 = vpop.f32.mrf.mxu0
    %v1668 = vadd.f32 %v461, %v1667
    %v1669 = vpop.f32.mrf.mxu0
    %v1670 = vadd.f32 %v461, %v1669
    %1671 = vdwg.mxu0
    %1672 = vmatpush.bf16.msra.mxu0 %v1189
    %1673 = vmatpush.bf16.msra.mxu0 %v1181
    %1674 = vmatpush.bf16.msra.mxu0 %v1173
    %1675 = vmatpush.bf16.msra.mxu0 %v1165
    %1676 = vmatpush.bf16.msra.mxu0 %v1157
    %1677 = vmatpush.bf16.msra.mxu0 %v1149
    %1678 = vmatpush.bf16.msra.mxu0 %v1141
    %1679 = vmatpush.bf16.msra.mxu0 %v1133
    %1680 = vmatmul.bf16.gmra.mxu0 %v483
    %v1681 = vpop.f32.mrf.mxu0
    %v1682 = vadd.f32 %v1668, %v1681
    %v1683 = vpop.f32.mrf.mxu0
    %v1684 = vadd.f32 %v1670, %v1683
    %1685 = vdwg.mxu0
    %1686 = vmatpush.bf16.msra.mxu0 %v1253
    %1687 = vmatpush.bf16.msra.mxu0 %v1245
    %1688 = vmatpush.bf16.msra.mxu0 %v1237
    %1689 = vmatpush.bf16.msra.mxu0 %v1229
    %1690 = vmatpush.bf16.msra.mxu0 %v1221
    %1691 = vmatpush.bf16.msra.mxu0 %v1213
    %1692 = vmatpush.bf16.msra.mxu0 %v1205
    %1693 = vmatpush.bf16.msra.mxu0 %v1197
    %1694 = vmatmul.bf16.gmra.mxu0 %v484
    %v1695 = vpop.f32.mrf.mxu0
    %v1696 = vadd.f32 %v1682, %v1695
    %v1697 = vpop.f32.mrf.mxu0
    %v1698 = vadd.f32 %v1684, %v1697
    %1699 = vdwg.mxu0
    %1700 = vmatpush.bf16.msra.mxu0 %v1126
    %1701 = vmatpush.bf16.msra.mxu0 %v1118
    %1702 = vmatpush.bf16.msra.mxu0 %v1110
    %1703 = vmatpush.bf16.msra.mxu0 %v1102
    %1704 = vmatpush.bf16.msra.mxu0 %v1094
    %1705 = vmatpush.bf16.msra.mxu0 %v1086
    %1706 = vmatpush.bf16.msra.mxu0 %v1078
    %1707 = vmatpush.bf16.msra.mxu0 %v1070
    %1708 = vmatmul.bf16.gmra.mxu0 %v482
    %v1709 = vpop.f32.mrf.mxu0
    %v1710 = vadd.f32 %v462, %v1709
    %v1711 = vpop.f32.mrf.mxu0
    %v1712 = vadd.f32 %v462, %v1711
    %1713 = vdwg.mxu0
    %1714 = vmatpush.bf16.msra.mxu0 %v1190
    %1715 = vmatpush.bf16.msra.mxu0 %v1182
    %1716 = vmatpush.bf16.msra.mxu0 %v1174
    %1717 = vmatpush.bf16.msra.mxu0 %v1166
    %1718 = vmatpush.bf16.msra.mxu0 %v1158
    %1719 = vmatpush.bf16.msra.mxu0 %v1150
    %1720 = vmatpush.bf16.msra.mxu0 %v1142
    %1721 = vmatpush.bf16.msra.mxu0 %v1134
    %1722 = vmatmul.bf16.gmra.mxu0 %v483
    %v1723 = vpop.f32.mrf.mxu0
    %v1724 = vadd.f32 %v1710, %v1723
    %v1725 = vpop.f32.mrf.mxu0
    %v1726 = vadd.f32 %v1712, %v1725
    %1727 = vdwg.mxu0
    %1728 = vmatpush.bf16.msra.mxu0 %v1254
    %1729 = vmatpush.bf16.msra.mxu0 %v1246
    %1730 = vmatpush.bf16.msra.mxu0 %v1238
    %1731 = vmatpush.bf16.msra.mxu0 %v1230
    %1732 = vmatpush.bf16.msra.mxu0 %v1222
    %1733 = vmatpush.bf16.msra.mxu0 %v1214
    %1734 = vmatpush.bf16.msra.mxu0 %v1206
    %1735 = vmatpush.bf16.msra.mxu0 %v1198
    %1736 = vmatmul.bf16.gmra.mxu0 %v484
    %v1737 = vpop.f32.mrf.mxu0
    %v1738 = vadd.f32 %v1724, %v1737
    %v1739 = vpop.f32.mrf.mxu0
    %v1740 = vadd.f32 %v1726, %v1739
    %1741 = vdwg.mxu0
    %1742 = vmatpush.bf16.msra.mxu0 %v1127
    %1743 = vmatpush.bf16.msra.mxu0 %v1119
    %1744 = vmatpush.bf16.msra.mxu0 %v1111
    %1745 = vmatpush.bf16.msra.mxu0 %v1103
    %1746 = vmatpush.bf16.msra.mxu0 %v1095
    %1747 = vmatpush.bf16.msra.mxu0 %v1087
    %1748 = vmatpush.bf16.msra.mxu0 %v1079
    %1749 = vmatpush.bf16.msra.mxu0 %v1071
    %1750 = vmatmul.bf16.gmra.mxu0 %v482
    %v1751 = vpop.f32.mrf.mxu0
    %v1752 = vadd.f32 %v463, %v1751
    %v1753 = vpop.f32.mrf.mxu0
    %v1754 = vadd.f32 %v463, %v1753
    %1755 = vdwg.mxu0
    %1756 = vmatpush.bf16.msra.mxu0 %v1191
    %1757 = vmatpush.bf16.msra.mxu0 %v1183
    %1758 = vmatpush.bf16.msra.mxu0 %v1175
    %1759 = vmatpush.bf16.msra.mxu0 %v1167
    %1760 = vmatpush.bf16.msra.mxu0 %v1159
    %1761 = vmatpush.bf16.msra.mxu0 %v1151
    %1762 = vmatpush.bf16.msra.mxu0 %v1143
    %1763 = vmatpush.bf16.msra.mxu0 %v1135
    %1764 = vmatmul.bf16.gmra.mxu0 %v483
    %v1765 = vpop.f32.mrf.mxu0
    %v1766 = vadd.f32 %v1752, %v1765
    %v1767 = vpop.f32.mrf.mxu0
    %v1768 = vadd.f32 %v1754, %v1767
    %1769 = vdwg.mxu0
    %1770 = vmatpush.bf16.msra.mxu0 %v1255
    %1771 = vmatpush.bf16.msra.mxu0 %v1247
    %1772 = vmatpush.bf16.msra.mxu0 %v1239
    %1773 = vmatpush.bf16.msra.mxu0 %v1231
    %1774 = vmatpush.bf16.msra.mxu0 %v1223
    %1775 = vmatpush.bf16.msra.mxu0 %v1215
    %1776 = vmatpush.bf16.msra.mxu0 %v1207
    %1777 = vmatpush.bf16.msra.mxu0 %v1199
    %1778 = vmatmul.bf16.gmra.mxu0 %v484
    %v1779 = vpop.f32.mrf.mxu0
    %v1780 = vadd.f32 %v1766, %v1779
    %v1781 = vpop.f32.mrf.mxu0
    %v1782 = vadd.f32 %v1768, %v1781
    %1783 = vdwg.mxu0
    %v1816 = vunpack.c.l.b16 %v390
    %v1817 = vunpack.c.h.b16 %v390
    %v1818 = vunpack.c.l.b16 %v391
    %v1819 = vunpack.c.h.b16 %v391
    %v1820 = vunpack.c.l.b16 %v392
    %v1821 = vunpack.c.h.b16 %v392
    %v1822 = vunpack.c.l.b16 %v393
    %v1823 = vunpack.c.h.b16 %v393
    %v1824 = vunpack.c.l.b16 %v394
    %v1825 = vunpack.c.h.b16 %v394
    %v1826 = vunpack.c.l.b16 %v395
    %v1827 = vunpack.c.h.b16 %v395
    %v1828 = vunpack.c.l.b16 %v396
    %v1829 = vunpack.c.h.b16 %v396
    %v1830 = vunpack.c.l.b16 %v397
    %v1831 = vunpack.c.h.b16 %v397
    %v1832 = vunpack.c.l.b16 %v398
    %v1833 = vunpack.c.h.b16 %v398
    %v1834 = vunpack.c.l.b16 %v399
    %v1835 = vunpack.c.h.b16 %v399
    %v1836 = vunpack.c.l.b16 %v400
    %v1837 = vunpack.c.h.b16 %v400
    %v1838 = vunpack.c.l.b16 %v401
    %v1839 = vunpack.c.h.b16 %v401
    %v1840 = vunpack.c.l.b16 %v402
    %v1841 = vunpack.c.h.b16 %v402
    %v1842 = vunpack.c.l.b16 %v403
    %v1843 = vunpack.c.h.b16 %v403
    %v1844 = vunpack.c.l.b16 %v404
    %v1845 = vunpack.c.h.b16 %v404
    %v1846 = vunpack.c.l.b16 %v405
    %v1847 = vunpack.c.h.b16 %v405
    %v1848 = vunpack.c.l.b16 %v406
    %v1849 = vunpack.c.h.b16 %v406
    %v1850 = vunpack.c.l.b16 %v407
    %v1851 = vunpack.c.h.b16 %v407
    %v1852 = vunpack.c.l.b16 %v408
    %v1853 = vunpack.c.h.b16 %v408
    %v1854 = vunpack.c.l.b16 %v409
    %v1855 = vunpack.c.h.b16 %v409
    %v1856 = vunpack.c.l.b16 %v410
    %v1857 = vunpack.c.h.b16 %v410
    %v1858 = vunpack.c.l.b16 %v411
    %v1859 = vunpack.c.h.b16 %v411
    %v1860 = vunpack.c.l.b16 %v412
    %v1861 = vunpack.c.h.b16 %v412
    %v1862 = vunpack.c.l.b16 %v413
    %v1863 = vunpack.c.h.b16 %v413
    %v1864 = vunpack.c.l.b16 %v414
    %v1865 = vunpack.c.h.b16 %v414
    %v1866 = vunpack.c.l.b16 %v415
    %v1867 = vunpack.c.h.b16 %v415
    %v1868 = vunpack.c.l.b16 %v416
    %v1869 = vunpack.c.h.b16 %v416
    %v1870 = vunpack.c.l.b16 %v417
    %v1871 = vunpack.c.h.b16 %v417
    %v1872 = vunpack.c.l.b16 %v418
    %v1873 = vunpack.c.h.b16 %v418
    %v1874 = vunpack.c.l.b16 %v419
    %v1875 = vunpack.c.h.b16 %v419
    %v1876 = vunpack.c.l.b16 %v420
    %v1877 = vunpack.c.h.b16 %v420
    %v1878 = vunpack.c.l.b16 %v421
    %v1879 = vunpack.c.h.b16 %v421
    %v1880 = vpack.c.b16 %v1820, %v1816
    %v1881 = vpack.c.b16 %v1821, %v1817
    %v1882 = vpack.c.b16 %v1822, %v1818
    %v1883 = vpack.c.b16 %v1823, %v1819
    %v1884 = vpack.c.b16 %v1828, %v1824
    %v1885 = vpack.c.b16 %v1829, %v1825
    %v1886 = vpack.c.b16 %v1830, %v1826
    %v1887 = vpack.c.b16 %v1831, %v1827
    %v1888 = vpack.c.b16 %v1836, %v1832
    %v1889 = vpack.c.b16 %v1837, %v1833
    %v1890 = vpack.c.b16 %v1838, %v1834
    %v1891 = vpack.c.b16 %v1839, %v1835
    %v1892 = vpack.c.b16 %v1844, %v1840
    %v1893 = vpack.c.b16 %v1845, %v1841
    %v1894 = vpack.c.b16 %v1846, %v1842
    %v1895 = vpack.c.b16 %v1847, %v1843
    %v1896 = vpack.c.b16 %v1852, %v1848
    %v1897 = vpack.c.b16 %v1853, %v1849
    %v1898 = vpack.c.b16 %v1854, %v1850
    %v1899 = vpack.c.b16 %v1855, %v1851
    %v1900 = vpack.c.b16 %v1860, %v1856
    %v1901 = vpack.c.b16 %v1861, %v1857
    %v1902 = vpack.c.b16 %v1862, %v1858
    %v1903 = vpack.c.b16 %v1863, %v1859
    %v1904 = vpack.c.b16 %v1868, %v1864
    %v1905 = vpack.c.b16 %v1869, %v1865
    %v1906 = vpack.c.b16 %v1870, %v1866
    %v1907 = vpack.c.b16 %v1871, %v1867
    %v1908 = vpack.c.b16 %v1876, %v1872
    %v1909 = vpack.c.b16 %v1877, %v1873
    %v1910 = vpack.c.b16 %v1878, %v1874
    %v1911 = vpack.c.b16 %v1879, %v1875
    %1944 = vmatpush.bf16.msra.mxu0 %v1908
    %1945 = vmatpush.bf16.msra.mxu0 %v1904
    %1946 = vmatpush.bf16.msra.mxu0 %v1900
    %1947 = vmatpush.bf16.msra.mxu0 %v1896
    %1948 = vmatpush.bf16.msra.mxu0 %v1892
    %1949 = vmatpush.bf16.msra.mxu0 %v1888
    %1950 = vmatpush.bf16.msra.mxu0 %v1884
    %1951 = vmatpush.bf16.msra.mxu0 %v1880
    %1952 = vmatmul.bf16.gmra.mxu0 0
    %v1953 = vpop.f32.mrf.mxu0
    %v1954 = vadd.f32 0.0, %v1953
    %v1955 = vpop.f32.mrf.mxu0
    %1956 = vdwg.mxu0
    %1957 = vmatpush.bf16.msra.mxu0 %v1909
    %1958 = vmatpush.bf16.msra.mxu0 %v1905
    %1959 = vmatpush.bf16.msra.mxu0 %v1901
    %1960 = vmatpush.bf16.msra.mxu0 %v1897
    %1961 = vmatpush.bf16.msra.mxu0 %v1893
    %1962 = vmatpush.bf16.msra.mxu0 %v1889
    %1963 = vmatpush.bf16.msra.mxu0 %v1885
    %1964 = vmatpush.bf16.msra.mxu0 %v1881
    %1965 = vmatmul.bf16.gmra.mxu0 0
    %v1966 = vpop.f32.mrf.mxu0
    %v1967 = vadd.f32 0.0, %v1966
    %v1968 = vpop.f32.mrf.mxu0
    %1969 = vdwg.mxu0
    %1970 = vmatpush.bf16.msra.mxu0 %v1910
    %1971 = vmatpush.bf16.msra.mxu0 %v1906
    %1972 = vmatpush.bf16.msra.mxu0 %v1902
    %1973 = vmatpush.bf16.msra.mxu0 %v1898
    %1974 = vmatpush.bf16.msra.mxu0 %v1894
    %1975 = vmatpush.bf16.msra.mxu0 %v1890
    %1976 = vmatpush.bf16.msra.mxu0 %v1886
    %1977 = vmatpush.bf16.msra.mxu0 %v1882
    %1978 = vmatmul.bf16.gmra.mxu0 0
    %v1979 = vpop.f32.mrf.mxu0
    %v1980 = vadd.f32 0.0, %v1979
    %v1981 = vpop.f32.mrf.mxu0
    %1982 = vdwg.mxu0
    %1983 = vmatpush.bf16.msra.mxu0 %v1911
    %1984 = vmatpush.bf16.msra.mxu0 %v1907
    %1985 = vmatpush.bf16.msra.mxu0 %v1903
    %1986 = vmatpush.bf16.msra.mxu0 %v1899
    %1987 = vmatpush.bf16.msra.mxu0 %v1895
    %1988 = vmatpush.bf16.msra.mxu0 %v1891
    %1989 = vmatpush.bf16.msra.mxu0 %v1887
    %1990 = vmatpush.bf16.msra.mxu0 %v1883
    %1991 = vmatmul.bf16.gmra.mxu0 0
    %v1992 = vpop.f32.mrf.mxu0
    %v1993 = vadd.f32 0.0, %v1992
    %v1994 = vpop.f32.mrf.mxu0
    %1995 = vdwg.mxu0
    %v1996 = vadd.f32 %v1486, %v1954
    %v1997 = vadd.f32 %v1528, %v1967
    %v1998 = vadd.f32 %v1570, %v1980
    %v1999 = vadd.f32 %v1612, %v1993
    %v2032 = vunpack.c.l.b16 %v422
    %v2033 = vunpack.c.h.b16 %v422
    %v2034 = vunpack.c.l.b16 %v423
    %v2035 = vunpack.c.h.b16 %v423
    %v2036 = vunpack.c.l.b16 %v424
    %v2037 = vunpack.c.h.b16 %v424
    %v2038 = vunpack.c.l.b16 %v425
    %v2039 = vunpack.c.h.b16 %v425
    %v2040 = vunpack.c.l.b16 %v426
    %v2041 = vunpack.c.h.b16 %v426
    %v2042 = vunpack.c.l.b16 %v427
    %v2043 = vunpack.c.h.b16 %v427
    %v2044 = vunpack.c.l.b16 %v428
    %v2045 = vunpack.c.h.b16 %v428
    %v2046 = vunpack.c.l.b16 %v429
    %v2047 = vunpack.c.h.b16 %v429
    %v2048 = vunpack.c.l.b16 %v430
    %v2049 = vunpack.c.h.b16 %v430
    %v2050 = vunpack.c.l.b16 %v431
    %v2051 = vunpack.c.h.b16 %v431
    %v2052 = vunpack.c.l.b16 %v432
    %v2053 = vunpack.c.h.b16 %v432
    %v2054 = vunpack.c.l.b16 %v433
    %v2055 = vunpack.c.h.b16 %v433
    %v2056 = vunpack.c.l.b16 %v434
    %v2057 = vunpack.c.h.b16 %v434
    %v2058 = vunpack.c.l.b16 %v435
    %v2059 = vunpack.c.h.b16 %v435
    %v2060 = vunpack.c.l.b16 %v436
    %v2061 = vunpack.c.h.b16 %v436
    %v2062 = vunpack.c.l.b16 %v437
    %v2063 = vunpack.c.h.b16 %v437
    %v2064 = vunpack.c.l.b16 %v438
    %v2065 = vunpack.c.h.b16 %v438
    %v2066 = vunpack.c.l.b16 %v439
    %v2067 = vunpack.c.h.b16 %v439
    %v2068 = vunpack.c.l.b16 %v440
    %v2069 = vunpack.c.h.b16 %v440
    %v2070 = vunpack.c.l.b16 %v441
    %v2071 = vunpack.c.h.b16 %v441
    %v2072 = vunpack.c.l.b16 %v442
    %v2073 = vunpack.c.h.b16 %v442
    %v2074 = vunpack.c.l.b16 %v443
    %v2075 = vunpack.c.h.b16 %v443
    %v2076 = vunpack.c.l.b16 %v444
    %v2077 = vunpack.c.h.b16 %v444
    %v2078 = vunpack.c.l.b16 %v445
    %v2079 = vunpack.c.h.b16 %v445
    %v2080 = vunpack.c.l.b16 %v446
    %v2081 = vunpack.c.h.b16 %v446
    %v2082 = vunpack.c.l.b16 %v447
    %v2083 = vunpack.c.h.b16 %v447
    %v2084 = vunpack.c.l.b16 %v448
    %v2085 = vunpack.c.h.b16 %v448
    %v2086 = vunpack.c.l.b16 %v449
    %v2087 = vunpack.c.h.b16 %v449
    %v2088 = vunpack.c.l.b16 %v450
    %v2089 = vunpack.c.h.b16 %v450
    %v2090 = vunpack.c.l.b16 %v451
    %v2091 = vunpack.c.h.b16 %v451
    %v2092 = vunpack.c.l.b16 %v452
    %v2093 = vunpack.c.h.b16 %v452
    %v2094 = vunpack.c.l.b16 %v453
    %v2095 = vunpack.c.h.b16 %v453
    %v2096 = vpack.c.b16 %v2036, %v2032
    %v2097 = vpack.c.b16 %v2037, %v2033
    %v2098 = vpack.c.b16 %v2038, %v2034
    %v2099 = vpack.c.b16 %v2039, %v2035
    %v2100 = vpack.c.b16 %v2044, %v2040
    %v2101 = vpack.c.b16 %v2045, %v2041
    %v2102 = vpack.c.b16 %v2046, %v2042
    %v2103 = vpack.c.b16 %v2047, %v2043
    %v2104 = vpack.c.b16 %v2052, %v2048
    %v2105 = vpack.c.b16 %v2053, %v2049
    %v2106 = vpack.c.b16 %v2054, %v2050
    %v2107 = vpack.c.b16 %v2055, %v2051
    %v2108 = vpack.c.b16 %v2060, %v2056
    %v2109 = vpack.c.b16 %v2061, %v2057
    %v2110 = vpack.c.b16 %v2062, %v2058
    %v2111 = vpack.c.b16 %v2063, %v2059
    %v2112 = vpack.c.b16 %v2068, %v2064
    %v2113 = vpack.c.b16 %v2069, %v2065
    %v2114 = vpack.c.b16 %v2070, %v2066
    %v2115 = vpack.c.b16 %v2071, %v2067
    %v2116 = vpack.c.b16 %v2076, %v2072
    %v2117 = vpack.c.b16 %v2077, %v2073
    %v2118 = vpack.c.b16 %v2078, %v2074
    %v2119 = vpack.c.b16 %v2079, %v2075
    %v2120 = vpack.c.b16 %v2084, %v2080
    %v2121 = vpack.c.b16 %v2085, %v2081
    %v2122 = vpack.c.b16 %v2086, %v2082
    %v2123 = vpack.c.b16 %v2087, %v2083
    %v2124 = vpack.c.b16 %v2092, %v2088
    %v2125 = vpack.c.b16 %v2093, %v2089
    %v2126 = vpack.c.b16 %v2094, %v2090
    %v2127 = vpack.c.b16 %v2095, %v2091
    %2160 = vmatpush.bf16.msra.mxu0 %v2124
    %2161 = vmatpush.bf16.msra.mxu0 %v2120
    %2162 = vmatpush.bf16.msra.mxu0 %v2116
    %2163 = vmatpush.bf16.msra.mxu0 %v2112
    %2164 = vmatpush.bf16.msra.mxu0 %v2108
    %2165 = vmatpush.bf16.msra.mxu0 %v2104
    %2166 = vmatpush.bf16.msra.mxu0 %v2100
    %2167 = vmatpush.bf16.msra.mxu0 %v2096
    %2168 = vmatmul.bf16.gmra.mxu0 0
    %v2169 = vpop.f32.mrf.mxu0
    %v2170 = vadd.f32 0.0, %v2169
    %v2171 = vpop.f32.mrf.mxu0
    %2172 = vdwg.mxu0
    %2173 = vmatpush.bf16.msra.mxu0 %v2125
    %2174 = vmatpush.bf16.msra.mxu0 %v2121
    %2175 = vmatpush.bf16.msra.mxu0 %v2117
    %2176 = vmatpush.bf16.msra.mxu0 %v2113
    %2177 = vmatpush.bf16.msra.mxu0 %v2109
    %2178 = vmatpush.bf16.msra.mxu0 %v2105
    %2179 = vmatpush.bf16.msra.mxu0 %v2101
    %2180 = vmatpush.bf16.msra.mxu0 %v2097
    %2181 = vmatmul.bf16.gmra.mxu0 0
    %v2182 = vpop.f32.mrf.mxu0
    %v2183 = vadd.f32 0.0, %v2182
    %v2184 = vpop.f32.mrf.mxu0
    %2185 = vdwg.mxu0
    %2186 = vmatpush.bf16.msra.mxu0 %v2126
    %2187 = vmatpush.bf16.msra.mxu0 %v2122
    %2188 = vmatpush.bf16.msra.mxu0 %v2118
    %2189 = vmatpush.bf16.msra.mxu0 %v2114
    %2190 = vmatpush.bf16.msra.mxu0 %v2110
    %2191 = vmatpush.bf16.msra.mxu0 %v2106
    %2192 = vmatpush.bf16.msra.mxu0 %v2102
    %2193 = vmatpush.bf16.msra.mxu0 %v2098
    %2194 = vmatmul.bf16.gmra.mxu0 0
    %v2195 = vpop.f32.mrf.mxu0
    %v2196 = vadd.f32 0.0, %v2195
    %v2197 = vpop.f32.mrf.mxu0
    %2198 = vdwg.mxu0
    %2199 = vmatpush.bf16.msra.mxu0 %v2127
    %2200 = vmatpush.bf16.msra.mxu0 %v2123
    %2201 = vmatpush.bf16.msra.mxu0 %v2119
    %2202 = vmatpush.bf16.msra.mxu0 %v2115
    %2203 = vmatpush.bf16.msra.mxu0 %v2111
    %2204 = vmatpush.bf16.msra.mxu0 %v2107
    %2205 = vmatpush.bf16.msra.mxu0 %v2103
    %2206 = vmatpush.bf16.msra.mxu0 %v2099
    %2207 = vmatmul.bf16.gmra.mxu0 0
    %v2208 = vpop.f32.mrf.mxu0
    %v2209 = vadd.f32 0.0, %v2208
    %v2210 = vpop.f32.mrf.mxu0
    %2211 = vdwg.mxu0
    %v2216 = vrot.slane %v2170, 2
    %v2217 = vrot.slane %v2183, 2
    %v2218 = vrot.slane %v2196, 2
    %v2219 = vrot.slane %v2209, 2
    %v2224 = vadd.f32 %v1656, %v2216
    %v2225 = vadd.f32 %v1698, %v2217
    %v2226 = vadd.f32 %v1740, %v2218
    %v2227 = vadd.f32 %v1782, %v2219
    %v2228 = vxor.u32 %v1996, 2147483648
    %v2229 = vmul.f32 %v2228, 1.442695
    %v2230 = vpow.pop %v2229
    %v2231 = vadd.f32 %v2230, 1.0
    %v2232 = vrcp.pop %v2231
    %v2233 = vmul.f32 %v2231, %v2232
    %v2234 = vsub.f32 1.0, %v2233
    %v2235 = vmul.f32 %v2232, %v2234
    %v2236 = vadd.f32 %v2232, %v2235
    %vm2237 = vweird.f32 %v2231
    %vm2238 = vweird.f32 %v2232
    %vm2239 = vmor %vm2237, %vm2238
    %v2240 = vsel %vm2239, %v2232, %v2236
    %v2241 = vand.u32 2147483647, %v2231
    %vm2242 = vcmp.eq.f32.partialorder %v2241, 8.507059e+37
    %v2243 = vand.u32 %v2231, 2147483648
    %v2244 = vor.u32 1.1754944e-38, %v2243
    %v2245 = vsel %vm2242, %v2244, %v2240
    %v2246 = vmul.f32 1.0, %v2245
    %v2247 = vxor.u32 %v1997, 2147483648
    %v2248 = vmul.f32 %v2247, 1.442695
    %v2249 = vpow.pop %v2248
    %v2250 = vadd.f32 %v2249, 1.0
    %v2251 = vrcp.pop %v2250
    %v2252 = vmul.f32 %v2250, %v2251
    %v2253 = vsub.f32 1.0, %v2252
    %v2254 = vmul.f32 %v2251, %v2253
    %v2255 = vadd.f32 %v2251, %v2254
    %vm2256 = vweird.f32 %v2250
    %vm2257 = vweird.f32 %v2251
    %vm2258 = vmor %vm2256, %vm2257
    %v2259 = vsel %vm2258, %v2251, %v2255
    %v2260 = vand.u32 2147483647, %v2250
    %vm2261 = vcmp.eq.f32.partialorder %v2260, 8.507059e+37
    %v2262 = vand.u32 %v2250, 2147483648
    %v2263 = vor.u32 1.1754944e-38, %v2262
    %v2264 = vsel %vm2261, %v2263, %v2259
    %v2265 = vmul.f32 1.0, %v2264
    %v2266 = vtanh.pop %v1998
    %v2267 = vxor.u32 %v1999, 2147483648
    %v2268 = vmul.f32 %v2267, 1.442695
    %v2269 = vpow.pop %v2268
    %v2270 = vadd.f32 %v2269, 1.0
    %v2271 = vrcp.pop %v2270
    %v2272 = vmul.f32 %v2270, %v2271
    %v2273 = vsub.f32 1.0, %v2272
    %v2274 = vmul.f32 %v2271, %v2273
    %v2275 = vadd.f32 %v2271, %v2274
    %vm2276 = vweird.f32 %v2270
    %vm2277 = vweird.f32 %v2271
    %vm2278 = vmor %vm2276, %vm2277
    %v2279 = vsel %vm2278, %v2271, %v2275
    %v2280 = vand.u32 2147483647, %v2270
    %vm2281 = vcmp.eq.f32.partialorder %v2280, 8.507059e+37
    %v2282 = vand.u32 %v2270, 2147483648
    %v2283 = vor.u32 1.1754944e-38, %v2282
    %v2284 = vsel %vm2281, %v2283, %v2279
    %v2285 = vmul.f32 1.0, %v2284
    %v2286 = vmul.f32 %v2265, 0.0
    %v2287 = vmul.f32 %v2246, %v2266
    %v2288 = vadd.f32 %v2286, %v2287
    %v2289 = vtanh.pop %v2288
    %v2290 = vmul.f32 %v2285, %v2289
    %v2291 = vxor.u32 %v2224, 2147483648
    %v2292 = vmul.f32 %v2291, 1.442695
    %v2293 = vpow.pop %v2292
    %v2294 = vadd.f32 %v2293, 1.0
    %v2295 = vrcp.pop %v2294
    %v2296 = vmul.f32 %v2294, %v2295
    %v2297 = vsub.f32 1.0, %v2296
    %v2298 = vmul.f32 %v2295, %v2297
    %v2299 = vadd.f32 %v2295, %v2298
    %vm2300 = vweird.f32 %v2294
    %vm2301 = vweird.f32 %v2295
    %vm2302 = vmor %vm2300, %vm2301
    %v2303 = vsel %vm2302, %v2295, %v2299
    %v2304 = vand.u32 2147483647, %v2294
    %vm2305 = vcmp.eq.f32.partialorder %v2304, 8.507059e+37
    %v2306 = vand.u32 %v2294, 2147483648
    %v2307 = vor.u32 1.1754944e-38, %v2306
    %v2308 = vsel %vm2305, %v2307, %v2303
    %v2309 = vmul.f32 1.0, %v2308
    %v2310 = vxor.u32 %v2225, 2147483648
    %v2311 = vmul.f32 %v2310, 1.442695
    %v2312 = vpow.pop %v2311
    %v2313 = vadd.f32 %v2312, 1.0
    %v2314 = vrcp.pop %v2313
    %v2315 = vmul.f32 %v2313, %v2314
    %v2316 = vsub.f32 1.0, %v2315
    %v2317 = vmul.f32 %v2314, %v2316
    %v2318 = vadd.f32 %v2314, %v2317
    %vm2319 = vweird.f32 %v2313
    %vm2320 = vweird.f32 %v2314
    %vm2321 = vmor %vm2319, %vm2320
    %v2322 = vsel %vm2321, %v2314, %v2318
    %v2323 = vand.u32 2147483647, %v2313
    %vm2324 = vcmp.eq.f32.partialorder %v2323, 8.507059e+37
    %v2325 = vand.u32 %v2313, 2147483648
    %v2326 = vor.u32 1.1754944e-38, %v2325
    %v2327 = vsel %vm2324, %v2326, %v2322
    %v2328 = vmul.f32 1.0, %v2327
    %v2329 = vtanh.pop %v2226
    %v2330 = vxor.u32 %v2227, 2147483648
    %v2331 = vmul.f32 %v2330, 1.442695
    %v2332 = vpow.pop %v2331
    %v2333 = vadd.f32 %v2332, 1.0
    %v2334 = vrcp.pop %v2333
    %v2335 = vmul.f32 %v2333, %v2334
    %v2336 = vsub.f32 1.0, %v2335
    %v2337 = vmul.f32 %v2334, %v2336
    %v2338 = vadd.f32 %v2334, %v2337
    %vm2339 = vweird.f32 %v2333
    %vm2340 = vweird.f32 %v2334
    %vm2341 = vmor %vm2339, %vm2340
    %v2342 = vsel %vm2341, %v2334, %v2338
    %v2343 = vand.u32 2147483647, %v2333
    %vm2344 = vcmp.eq.f32.partialorder %v2343, 8.507059e+37
    %v2345 = vand.u32 %v2333, 2147483648
    %v2346 = vor.u32 1.1754944e-38, %v2345
    %v2347 = vsel %vm2344, %v2346, %v2342
    %v2348 = vmul.f32 1.0, %v2347
    %v2349 = vmul.f32 %v2328, 0.0
    %v2350 = vmul.f32 %v2309, %v2329
    %v2351 = vadd.f32 %v2349, %v2350
    %v2352 = vtanh.pop %v2351
    %v2353 = vmul.f32 %v2348, %v2352
    %2354 = vst [vmem:[#allocation2] sm:$0x3] %v2290
    %2355 = vst [vmem:[#allocation2 + $0x18] sm:$0xc0] %v2353
    %v2356 = vpack.c.bf16 %v2290, %v2290
    %2357 = vmatpush.bf16.msra.mxu0 %v1908
    %2358 = vmatpush.bf16.msra.mxu0 %v1904
    %2359 = vmatpush.bf16.msra.mxu0 %v1900
    %2360 = vmatpush.bf16.msra.mxu0 %v1896
    %2361 = vmatpush.bf16.msra.mxu0 %v1892
    %2362 = vmatpush.bf16.msra.mxu0 %v1888
    %2363 = vmatpush.bf16.msra.mxu0 %v1884
    %2364 = vmatpush.bf16.msra.mxu0 %v1880
    %2365 = vmatmul.bf16.gmra.mxu0 %v2356
    %v2366 = vpop.f32.mrf.mxu0
    %v2367 = vadd.f32 0.0, %v2366
    %v2368 = vpop.f32.mrf.mxu0
    %2369 = vdwg.mxu0
    %2370 = vmatpush.bf16.msra.mxu0 %v1909
    %2371 = vmatpush.bf16.msra.mxu0 %v1905
    %2372 = vmatpush.bf16.msra.mxu0 %v1901
    %2373 = vmatpush.bf16.msra.mxu0 %v1897
    %2374 = vmatpush.bf16.msra.mxu0 %v1893
    %2375 = vmatpush.bf16.msra.mxu0 %v1889
    %2376 = vmatpush.bf16.msra.mxu0 %v1885
    %2377 = vmatpush.bf16.msra.mxu0 %v1881
    %2378 = vmatmul.bf16.gmra.mxu0 %v2356
    %v2379 = vpop.f32.mrf.mxu0
    %v2380 = vadd.f32 0.0, %v2379
    %v2381 = vpop.f32.mrf.mxu0
    %2382 = vdwg.mxu0
    %2383 = vmatpush.bf16.msra.mxu0 %v1910
    %2384 = vmatpush.bf16.msra.mxu0 %v1906
    %2385 = vmatpush.bf16.msra.mxu0 %v1902
    %2386 = vmatpush.bf16.msra.mxu0 %v1898
    %2387 = vmatpush.bf16.msra.mxu0 %v1894
    %2388 = vmatpush.bf16.msra.mxu0 %v1890
    %2389 = vmatpush.bf16.msra.mxu0 %v1886
    %2390 = vmatpush.bf16.msra.mxu0 %v1882
    %2391 = vmatmul.bf16.gmra.mxu0 %v2356
    %v2392 = vpop.f32.mrf.mxu0
    %v2393 = vadd.f32 0.0, %v2392
    %v2394 = vpop.f32.mrf.mxu0
    %2395 = vdwg.mxu0
    %2396 = vmatpush.bf16.msra.mxu0 %v1911
    %2397 = vmatpush.bf16.msra.mxu0 %v1907
    %2398 = vmatpush.bf16.msra.mxu0 %v1903
    %2399 = vmatpush.bf16.msra.mxu0 %v1899
    %2400 = vmatpush.bf16.msra.mxu0 %v1895
    %2401 = vmatpush.bf16.msra.mxu0 %v1891
    %2402 = vmatpush.bf16.msra.mxu0 %v1887
    %2403 = vmatpush.bf16.msra.mxu0 %v1883
    %2404 = vmatmul.bf16.gmra.mxu0 %v2356
    %v2405 = vpop.f32.mrf.mxu0
    %v2406 = vadd.f32 0.0, %v2405
    %v2407 = vpop.f32.mrf.mxu0
    %2408 = vdwg.mxu0
    %v2413 = vrot.slane %v2367, 6
    %v2414 = vrot.slane %v2380, 6
    %v2415 = vrot.slane %v2393, 6
    %v2416 = vrot.slane %v2406, 6
    %v2421 = vadd.f32 %v1486, %v2413
    %v2422 = vadd.f32 %v1528, %v2414
    %v2423 = vadd.f32 %v1570, %v2415
    %v2424 = vadd.f32 %v1612, %v2416
    %v2425 = vpack.c.bf16 %v2353, %v2353
    %v2427 = vrot.slane %v2425, 3
    %2429 = vmatpush.bf16.msra.mxu0 %v2124
    %2430 = vmatpush.bf16.msra.mxu0 %v2120
    %2431 = vmatpush.bf16.msra.mxu0 %v2116
    %2432 = vmatpush.bf16.msra.mxu0 %v2112
    %2433 = vmatpush.bf16.msra.mxu0 %v2108
    %2434 = vmatpush.bf16.msra.mxu0 %v2104
    %2435 = vmatpush.bf16.msra.mxu0 %v2100
    %2436 = vmatpush.bf16.msra.mxu0 %v2096
    %2437 = vmatmul.bf16.gmra.mxu0 %v2427
    %v2438 = vpop.f32.mrf.mxu0
    %v2439 = vadd.f32 0.0, %v2438
    %v2440 = vpop.f32.mrf.mxu0
    %2441 = vdwg.mxu0
    %2442 = vmatpush.bf16.msra.mxu0 %v2125
    %2443 = vmatpush.bf16.msra.mxu0 %v2121
    %2444 = vmatpush.bf16.msra.mxu0 %v2117
    %2445 = vmatpush.bf16.msra.mxu0 %v2113
    %2446 = vmatpush.bf16.msra.mxu0 %v2109
    %2447 = vmatpush.bf16.msra.mxu0 %v2105
    %2448 = vmatpush.bf16.msra.mxu0 %v2101
    %2449 = vmatpush.bf16.msra.mxu0 %v2097
    %2450 = vmatmul.bf16.gmra.mxu0 %v2427
    %v2451 = vpop.f32.mrf.mxu0
    %v2452 = vadd.f32 0.0, %v2451
    %v2453 = vpop.f32.mrf.mxu0
    %2454 = vdwg.mxu0
    %2455 = vmatpush.bf16.msra.mxu0 %v2126
    %2456 = vmatpush.bf16.msra.mxu0 %v2122
    %2457 = vmatpush.bf16.msra.mxu0 %v2118
    %2458 = vmatpush.bf16.msra.mxu0 %v2114
    %2459 = vmatpush.bf16.msra.mxu0 %v2110
    %2460 = vmatpush.bf16.msra.mxu0 %v2106
    %2461 = vmatpush.bf16.msra.mxu0 %v2102
    %2462 = vmatpush.bf16.msra.mxu0 %v2098
    %2463 = vmatmul.bf16.gmra.mxu0 %v2427
    %v2464 = vpop.f32.mrf.mxu0
    %v2465 = vadd.f32 0.0, %v2464
    %v2466 = vpop.f32.mrf.mxu0
    %2467 = vdwg.mxu0
    %2468 = vmatpush.bf16.msra.mxu0 %v2127
    %2469 = vmatpush.bf16.msra.mxu0 %v2123
    %2470 = vmatpush.bf16.msra.mxu0 %v2119
    %2471 = vmatpush.bf16.msra.mxu0 %v2115
    %2472 = vmatpush.bf16.msra.mxu0 %v2111
    %2473 = vmatpush.bf16.msra.mxu0 %v2107
    %2474 = vmatpush.bf16.msra.mxu0 %v2103
    %2475 = vmatpush.bf16.msra.mxu0 %v2099
    %2476 = vmatmul.bf16.gmra.mxu0 %v2427
    %v2477 = vpop.f32.mrf.mxu0
    %v2478 = vadd.f32 0.0, %v2477
    %v2479 = vpop.f32.mrf.mxu0
    %2480 = vdwg.mxu0
    %v2485 = vrot.slane %v2439, 4
    %v2486 = vrot.slane %v2452, 4
    %v2487 = vrot.slane %v2465, 4
    %v2488 = vrot.slane %v2478, 4
    %v2493 = vadd.f32 %v1656, %v2485
    %v2494 = vadd.f32 %v1698, %v2486
    %v2495 = vadd.f32 %v1740, %v2487
    %v2496 = vadd.f32 %v1782, %v2488
    %v2497 = vxor.u32 %v2421, 2147483648
    %v2498 = vmul.f32 %v2497, 1.442695
    %v2499 = vpow.pop %v2498
    %v2500 = vadd.f32 %v2499, 1.0
    %v2501 = vrcp.pop %v2500
    %v2502 = vmul.f32 %v2500, %v2501
    %v2503 = vsub.f32 1.0, %v2502
    %v2504 = vmul.f32 %v2501, %v2503
    %v2505 = vadd.f32 %v2501, %v2504
    %vm2506 = vweird.f32 %v2500
    %vm2507 = vweird.f32 %v2501
    %vm2508 = vmor %vm2506, %vm2507
    %v2509 = vsel %vm2508, %v2501, %v2505
    %v2510 = vand.u32 2147483647, %v2500
    %vm2511 = vcmp.eq.f32.partialorder %v2510, 8.507059e+37
    %v2512 = vand.u32 %v2500, 2147483648
    %v2513 = vor.u32 1.1754944e-38, %v2512
    %v2514 = vsel %vm2511, %v2513, %v2509
    %v2515 = vmul.f32 1.0, %v2514
    %v2516 = vxor.u32 %v2422, 2147483648
    %v2517 = vmul.f32 %v2516, 1.442695
    %v2518 = vpow.pop %v2517
    %v2519 = vadd.f32 %v2518, 1.0
    %v2520 = vrcp.pop %v2519
    %v2521 = vmul.f32 %v2519, %v2520
    %v2522 = vsub.f32 1.0, %v2521
    %v2523 = vmul.f32 %v2520, %v2522
    %v2524 = vadd.f32 %v2520, %v2523
    %vm2525 = vweird.f32 %v2519
    %vm2526 = vweird.f32 %v2520
    %vm2527 = vmor %vm2525, %vm2526
    %v2528 = vsel %vm2527, %v2520, %v2524
    %v2529 = vand.u32 2147483647, %v2519
    %vm2530 = vcmp.eq.f32.partialorder %v2529, 8.507059e+37
    %v2531 = vand.u32 %v2519, 2147483648
    %v2532 = vor.u32 1.1754944e-38, %v2531
    %v2533 = vsel %vm2530, %v2532, %v2528
    %v2534 = vmul.f32 1.0, %v2533
    %v2535 = vtanh.pop %v2423
    %v2536 = vxor.u32 %v2424, 2147483648
    %v2537 = vmul.f32 %v2536, 1.442695
    %v2538 = vpow.pop %v2537
    %v2539 = vadd.f32 %v2538, 1.0
    %v2540 = vrcp.pop %v2539
    %v2541 = vmul.f32 %v2539, %v2540
    %v2542 = vsub.f32 1.0, %v2541
    %v2543 = vmul.f32 %v2540, %v2542
    %v2544 = vadd.f32 %v2540, %v2543
    %vm2545 = vweird.f32 %v2539
    %vm2546 = vweird.f32 %v2540
    %vm2547 = vmor %vm2545, %vm2546
    %v2548 = vsel %vm2547, %v2540, %v2544
    %v2549 = vand.u32 2147483647, %v2539
    %vm2550 = vcmp.eq.f32.partialorder %v2549, 8.507059e+37
    %v2551 = vand.u32 %v2539, 2147483648
    %v2552 = vor.u32 1.1754944e-38, %v2551
    %v2553 = vsel %vm2550, %v2552, %v2548
    %v2554 = vmul.f32 1.0, %v2553
    %v2556 = vrot.slane %v2288, 6
    %v2558 = vmul.f32 %v2534, %v2556
    %v2559 = vmul.f32 %v2515, %v2535
    %v2560 = vadd.f32 %v2558, %v2559
    %v2561 = vtanh.pop %v2560
    %v2562 = vmul.f32 %v2554, %v2561
    %v2563 = vxor.u32 %v2493, 2147483648
    %v2564 = vmul.f32 %v2563, 1.442695
    %v2565 = vpow.pop %v2564
    %v2566 = vadd.f32 %v2565, 1.0
    %v2567 = vrcp.pop %v2566
    %v2568 = vmul.f32 %v2566, %v2567
    %v2569 = vsub.f32 1.0, %v2568
    %v2570 = vmul.f32 %v2567, %v2569
    %v2571 = vadd.f32 %v2567, %v2570
    %vm2572 = vweird.f32 %v2566
    %vm2573 = vweird.f32 %v2567
    %vm2574 = vmor %vm2572, %vm2573
    %v2575 = vsel %vm2574, %v2567, %v2571
    %v2576 = vand.u32 2147483647, %v2566
    %vm2577 = vcmp.eq.f32.partialorder %v2576, 8.507059e+37
    %v2578 = vand.u32 %v2566, 2147483648
    %v2579 = vor.u32 1.1754944e-38, %v2578
    %v2580 = vsel %vm2577, %v2579, %v2575
    %v2581 = vmul.f32 1.0, %v2580
    %v2582 = vxor.u32 %v2494, 2147483648
    %v2583 = vmul.f32 %v2582, 1.442695
    %v2584 = vpow.pop %v2583
    %v2585 = vadd.f32 %v2584, 1.0
    %v2586 = vrcp.pop %v2585
    %v2587 = vmul.f32 %v2585, %v2586
    %v2588 = vsub.f32 1.0, %v2587
    %v2589 = vmul.f32 %v2586, %v2588
    %v2590 = vadd.f32 %v2586, %v2589
    %vm2591 = vweird.f32 %v2585
    %vm2592 = vweird.f32 %v2586
    %vm2593 = vmor %vm2591, %vm2592
    %v2594 = vsel %vm2593, %v2586, %v2590
    %v2595 = vand.u32 2147483647, %v2585
    %vm2596 = vcmp.eq.f32.partialorder %v2595, 8.507059e+37
    %v2597 = vand.u32 %v2585, 2147483648
    %v2598 = vor.u32 1.1754944e-38, %v2597
    %v2599 = vsel %vm2596, %v2598, %v2594
    %v2600 = vmul.f32 1.0, %v2599
    %v2601 = vtanh.pop %v2495
    %v2602 = vxor.u32 %v2496, 2147483648
    %v2603 = vmul.f32 %v2602, 1.442695
    %v2604 = vpow.pop %v2603
    %v2605 = vadd.f32 %v2604, 1.0
    %v2606 = vrcp.pop %v2605
    %v2607 = vmul.f32 %v2605, %v2606
    %v2608 = vsub.f32 1.0, %v2607
    %v2609 = vmul.f32 %v2606, %v2608
    %v2610 = vadd.f32 %v2606, %v2609
    %vm2611 = vweird.f32 %v2605
    %vm2612 = vweird.f32 %v2606
    %vm2613 = vmor %vm2611, %vm2612
    %v2614 = vsel %vm2613, %v2606, %v2610
    %v2615 = vand.u32 2147483647, %v2605
    %vm2616 = vcmp.eq.f32.partialorder %v2615, 8.507059e+37
    %v2617 = vand.u32 %v2605, 2147483648
    %v2618 = vor.u32 1.1754944e-38, %v2617
    %v2619 = vsel %vm2616, %v2618, %v2614
    %v2620 = vmul.f32 1.0, %v2619
    %v2622 = vrot.slane %v2351, 2
    %v2624 = vmul.f32 %v2600, %v2622
    %v2625 = vmul.f32 %v2581, %v2601
    %v2626 = vadd.f32 %v2624, %v2625
    %v2627 = vtanh.pop %v2626
    %v2628 = vmul.f32 %v2620, %v2627
    %2629 = vst [vmem:[#allocation2] sm:$0xc] %v2562
    %2630 = vst [vmem:[#allocation2 + $0x18] sm:$0x30] %v2628
    %v2631 = vpack.c.bf16 %v2562, %v2562
    %v2633 = vrot.slane %v2631, 1
    %2635 = vmatpush.bf16.msra.mxu0 %v1908
    %2636 = vmatpush.bf16.msra.mxu0 %v1904
    %2637 = vmatpush.bf16.msra.mxu0 %v1900
    %2638 = vmatpush.bf16.msra.mxu0 %v1896
    %2639 = vmatpush.bf16.msra.mxu0 %v1892
    %2640 = vmatpush.bf16.msra.mxu0 %v1888
    %2641 = vmatpush.bf16.msra.mxu0 %v1884
    %2642 = vmatpush.bf16.msra.mxu0 %v1880
    %2643 = vmatmul.bf16.gmra.mxu0 %v2633
    %v2644 = vpop.f32.mrf.mxu0
    %v2645 = vadd.f32 0.0, %v2644
    %v2646 = vpop.f32.mrf.mxu0
    %2647 = vdwg.mxu0
    %2648 = vmatpush.bf16.msra.mxu0 %v1909
    %2649 = vmatpush.bf16.msra.mxu0 %v1905
    %2650 = vmatpush.bf16.msra.mxu0 %v1901
    %2651 = vmatpush.bf16.msra.mxu0 %v1897
    %2652 = vmatpush.bf16.msra.mxu0 %v1893
    %2653 = vmatpush.bf16.msra.mxu0 %v1889
    %2654 = vmatpush.bf16.msra.mxu0 %v1885
    %2655 = vmatpush.bf16.msra.mxu0 %v1881
    %2656 = vmatmul.bf16.gmra.mxu0 %v2633
    %v2657 = vpop.f32.mrf.mxu0
    %v2658 = vadd.f32 0.0, %v2657
    %v2659 = vpop.f32.mrf.mxu0
    %2660 = vdwg.mxu0
    %2661 = vmatpush.bf16.msra.mxu0 %v1910
    %2662 = vmatpush.bf16.msra.mxu0 %v1906
    %2663 = vmatpush.bf16.msra.mxu0 %v1902
    %2664 = vmatpush.bf16.msra.mxu0 %v1898
    %2665 = vmatpush.bf16.msra.mxu0 %v1894
    %2666 = vmatpush.bf16.msra.mxu0 %v1890
    %2667 = vmatpush.bf16.msra.mxu0 %v1886
    %2668 = vmatpush.bf16.msra.mxu0 %v1882
    %2669 = vmatmul.bf16.gmra.mxu0 %v2633
    %v2670 = vpop.f32.mrf.mxu0
    %v2671 = vadd.f32 0.0, %v2670
    %v2672 = vpop.f32.mrf.mxu0
    %2673 = vdwg.mxu0
    %2674 = vmatpush.bf16.msra.mxu0 %v1911
    %2675 = vmatpush.bf16.msra.mxu0 %v1907
    %2676 = vmatpush.bf16.msra.mxu0 %v1903
    %2677 = vmatpush.bf16.msra.mxu0 %v1899
    %2678 = vmatpush.bf16.msra.mxu0 %v1895
    %2679 = vmatpush.bf16.msra.mxu0 %v1891
    %2680 = vmatpush.bf16.msra.mxu0 %v1887
    %2681 = vmatpush.bf16.msra.mxu0 %v1883
    %2682 = vmatmul.bf16.gmra.mxu0 %v2633
    %v2683 = vpop.f32.mrf.mxu0
    %v2684 = vadd.f32 0.0, %v2683
    %v2685 = vpop.f32.mrf.mxu0
    %2686 = vdwg.mxu0
    %v2691 = vrot.slane %v2645, 4
    %v2692 = vrot.slane %v2658, 4
    %v2693 = vrot.slane %v2671, 4
    %v2694 = vrot.slane %v2684, 4
    %v2699 = vadd.f32 %v1486, %v2691
    %v2700 = vadd.f32 %v1528, %v2692
    %v2701 = vadd.f32 %v1570, %v2693
    %v2702 = vadd.f32 %v1612, %v2694
    %v2703 = vpack.c.bf16 %v2628, %v2628
    %v2705 = vrot.slane %v2703, 2
    %2707 = vmatpush.bf16.msra.mxu0 %v2124
    %2708 = vmatpush.bf16.msra.mxu0 %v2120
    %2709 = vmatpush.bf16.msra.mxu0 %v2116
    %2710 = vmatpush.bf16.msra.mxu0 %v2112
    %2711 = vmatpush.bf16.msra.mxu0 %v2108
    %2712 = vmatpush.bf16.msra.mxu0 %v2104
    %2713 = vmatpush.bf16.msra.mxu0 %v2100
    %2714 = vmatpush.bf16.msra.mxu0 %v2096
    %2715 = vmatmul.bf16.gmra.mxu0 %v2705
    %v2716 = vpop.f32.mrf.mxu0
    %v2717 = vadd.f32 0.0, %v2716
    %v2718 = vpop.f32.mrf.mxu0
    %2719 = vdwg.mxu0
    %2720 = vmatpush.bf16.msra.mxu0 %v2125
    %2721 = vmatpush.bf16.msra.mxu0 %v2121
    %2722 = vmatpush.bf16.msra.mxu0 %v2117
    %2723 = vmatpush.bf16.msra.mxu0 %v2113
    %2724 = vmatpush.bf16.msra.mxu0 %v2109
    %2725 = vmatpush.bf16.msra.mxu0 %v2105
    %2726 = vmatpush.bf16.msra.mxu0 %v2101
    %2727 = vmatpush.bf16.msra.mxu0 %v2097
    %2728 = vmatmul.bf16.gmra.mxu0 %v2705
    %v2729 = vpop.f32.mrf.mxu0
    %v2730 = vadd.f32 0.0, %v2729
    %v2731 = vpop.f32.mrf.mxu0
    %2732 = vdwg.mxu0
    %2733 = vmatpush.bf16.msra.mxu0 %v2126
    %2734 = vmatpush.bf16.msra.mxu0 %v2122
    %2735 = vmatpush.bf16.msra.mxu0 %v2118
    %2736 = vmatpush.bf16.msra.mxu0 %v2114
    %2737 = vmatpush.bf16.msra.mxu0 %v2110
    %2738 = vmatpush.bf16.msra.mxu0 %v2106
    %2739 = vmatpush.bf16.msra.mxu0 %v2102
    %2740 = vmatpush.bf16.msra.mxu0 %v2098
    %2741 = vmatmul.bf16.gmra.mxu0 %v2705
    %v2742 = vpop.f32.mrf.mxu0
    %v2743 = vadd.f32 0.0, %v2742
    %v2744 = vpop.f32.mrf.mxu0
    %2745 = vdwg.mxu0
    %2746 = vmatpush.bf16.msra.mxu0 %v2127
    %2747 = vmatpush.bf16.msra.mxu0 %v2123
    %2748 = vmatpush.bf16.msra.mxu0 %v2119
    %2749 = vmatpush.bf16.msra.mxu0 %v2115
    %2750 = vmatpush.bf16.msra.mxu0 %v2111
    %2751 = vmatpush.bf16.msra.mxu0 %v2107
    %2752 = vmatpush.bf16.msra.mxu0 %v2103
    %2753 = vmatpush.bf16.msra.mxu0 %v2099
    %2754 = vmatmul.bf16.gmra.mxu0 %v2705
    %v2755 = vpop.f32.mrf.mxu0
    %v2756 = vadd.f32 0.0, %v2755
    %v2757 = vpop.f32.mrf.mxu0
    %2758 = vdwg.mxu0
    %v2763 = vrot.slane %v2717, 6
    %v2764 = vrot.slane %v2730, 6
    %v2765 = vrot.slane %v2743, 6
    %v2766 = vrot.slane %v2756, 6
    %v2771 = vadd.f32 %v1656, %v2763
    %v2772 = vadd.f32 %v1698, %v2764
    %v2773 = vadd.f32 %v1740, %v2765
    %v2774 = vadd.f32 %v1782, %v2766
    %v2775 = vxor.u32 %v2699, 2147483648
    %v2776 = vmul.f32 %v2775, 1.442695
    %v2777 = vpow.pop %v2776
    %v2778 = vadd.f32 %v2777, 1.0
    %v2779 = vrcp.pop %v2778
    %v2780 = vmul.f32 %v2778, %v2779
    %v2781 = vsub.f32 1.0, %v2780
    %v2782 = vmul.f32 %v2779, %v2781
    %v2783 = vadd.f32 %v2779, %v2782
    %vm2784 = vweird.f32 %v2778
    %vm2785 = vweird.f32 %v2779
    %vm2786 = vmor %vm2784, %vm2785
    %v2787 = vsel %vm2786, %v2779, %v2783
    %v2788 = vand.u32 2147483647, %v2778
    %vm2789 = vcmp.eq.f32.partialorder %v2788, 8.507059e+37
    %v2790 = vand.u32 %v2778, 2147483648
    %v2791 = vor.u32 1.1754944e-38, %v2790
    %v2792 = vsel %vm2789, %v2791, %v2787
    %v2793 = vmul.f32 1.0, %v2792
    %v2794 = vxor.u32 %v2700, 2147483648
    %v2795 = vmul.f32 %v2794, 1.442695
    %v2796 = vpow.pop %v2795
    %v2797 = vadd.f32 %v2796, 1.0
    %v2798 = vrcp.pop %v2797
    %v2799 = vmul.f32 %v2797, %v2798
    %v2800 = vsub.f32 1.0, %v2799
    %v2801 = vmul.f32 %v2798, %v2800
    %v2802 = vadd.f32 %v2798, %v2801
    %vm2803 = vweird.f32 %v2797
    %vm2804 = vweird.f32 %v2798
    %vm2805 = vmor %vm2803, %vm2804
    %v2806 = vsel %vm2805, %v2798, %v2802
    %v2807 = vand.u32 2147483647, %v2797
    %vm2808 = vcmp.eq.f32.partialorder %v2807, 8.507059e+37
    %v2809 = vand.u32 %v2797, 2147483648
    %v2810 = vor.u32 1.1754944e-38, %v2809
    %v2811 = vsel %vm2808, %v2810, %v2806
    %v2812 = vmul.f32 1.0, %v2811
    %v2813 = vtanh.pop %v2701
    %v2814 = vxor.u32 %v2702, 2147483648
    %v2815 = vmul.f32 %v2814, 1.442695
    %v2816 = vpow.pop %v2815
    %v2817 = vadd.f32 %v2816, 1.0
    %v2818 = vrcp.pop %v2817
    %v2819 = vmul.f32 %v2817, %v2818
    %v2820 = vsub.f32 1.0, %v2819
    %v2821 = vmul.f32 %v2818, %v2820
    %v2822 = vadd.f32 %v2818, %v2821
    %vm2823 = vweird.f32 %v2817
    %vm2824 = vweird.f32 %v2818
    %vm2825 = vmor %vm2823, %vm2824
    %v2826 = vsel %vm2825, %v2818, %v2822
    %v2827 = vand.u32 2147483647, %v2817
    %vm2828 = vcmp.eq.f32.partialorder %v2827, 8.507059e+37
    %v2829 = vand.u32 %v2817, 2147483648
    %v2830 = vor.u32 1.1754944e-38, %v2829
    %v2831 = vsel %vm2828, %v2830, %v2826
    %v2832 = vmul.f32 1.0, %v2831
    %v2834 = vrot.slane %v2560, 6
    %v2836 = vmul.f32 %v2812, %v2834
    %v2837 = vmul.f32 %v2793, %v2813
    %v2838 = vadd.f32 %v2836, %v2837
    %v2839 = vtanh.pop %v2838
    %v2840 = vmul.f32 %v2832, %v2839
    %v2841 = vxor.u32 %v2771, 2147483648
    %v2842 = vmul.f32 %v2841, 1.442695
    %v2843 = vpow.pop %v2842
    %v2844 = vadd.f32 %v2843, 1.0
    %v2845 = vrcp.pop %v2844
    %v2846 = vmul.f32 %v2844, %v2845
    %v2847 = vsub.f32 1.0, %v2846
    %v2848 = vmul.f32 %v2845, %v2847
    %v2849 = vadd.f32 %v2845, %v2848
    %vm2850 = vweird.f32 %v2844
    %vm2851 = vweird.f32 %v2845
    %vm2852 = vmor %vm2850, %vm2851
    %v2853 = vsel %vm2852, %v2845, %v2849
    %v2854 = vand.u32 2147483647, %v2844
    %vm2855 = vcmp.eq.f32.partialorder %v2854, 8.507059e+37
    %v2856 = vand.u32 %v2844, 2147483648
    %v2857 = vor.u32 1.1754944e-38, %v2856
    %v2858 = vsel %vm2855, %v2857, %v2853
    %v2859 = vmul.f32 1.0, %v2858
    %v2860 = vxor.u32 %v2772, 2147483648
    %v2861 = vmul.f32 %v2860, 1.442695
    %v2862 = vpow.pop %v2861
    %v2863 = vadd.f32 %v2862, 1.0
    %v2864 = vrcp.pop %v2863
    %v2865 = vmul.f32 %v2863, %v2864
    %v2866 = vsub.f32 1.0, %v2865
    %v2867 = vmul.f32 %v2864, %v2866
    %v2868 = vadd.f32 %v2864, %v2867
    %vm2869 = vweird.f32 %v2863
    %vm2870 = vweird.f32 %v2864
    %vm2871 = vmor %vm2869, %vm2870
    %v2872 = vsel %vm2871, %v2864, %v2868
    %v2873 = vand.u32 2147483647, %v2863
    %vm2874 = vcmp.eq.f32.partialorder %v2873, 8.507059e+37
    %v2875 = vand.u32 %v2863, 2147483648
    %v2876 = vor.u32 1.1754944e-38, %v2875
    %v2877 = vsel %vm2874, %v2876, %v2872
    %v2878 = vmul.f32 1.0, %v2877
    %v2879 = vtanh.pop %v2773
    %v2880 = vxor.u32 %v2774, 2147483648
    %v2881 = vmul.f32 %v2880, 1.442695
    %v2882 = vpow.pop %v2881
    %v2883 = vadd.f32 %v2882, 1.0
    %v2884 = vrcp.pop %v2883
    %v2885 = vmul.f32 %v2883, %v2884
    %v2886 = vsub.f32 1.0, %v2885
    %v2887 = vmul.f32 %v2884, %v2886
    %v2888 = vadd.f32 %v2884, %v2887
    %vm2889 = vweird.f32 %v2883
    %vm2890 = vweird.f32 %v2884
    %vm2891 = vmor %vm2889, %vm2890
    %v2892 = vsel %vm2891, %v2884, %v2888
    %v2893 = vand.u32 2147483647, %v2883
    %vm2894 = vcmp.eq.f32.partialorder %v2893, 8.507059e+37
    %v2895 = vand.u32 %v2883, 2147483648
    %v2896 = vor.u32 1.1754944e-38, %v2895
    %v2897 = vsel %vm2894, %v2896, %v2892
    %v2898 = vmul.f32 1.0, %v2897
    %v2900 = vrot.slane %v2626, 2
    %v2902 = vmul.f32 %v2878, %v2900
    %v2903 = vmul.f32 %v2859, %v2879
    %v2904 = vadd.f32 %v2902, %v2903
    %v2905 = vtanh.pop %v2904
    %v2906 = vmul.f32 %v2898, %v2905
    %2907 = vst [vmem:[#allocation2] sm:$0x30] %v2840
    %2908 = vst [vmem:[#allocation2 + $0x18] sm:$0xc] %v2906
    %v2909 = vpack.c.bf16 %v2840, %v2840
    %v2911 = vrot.slane %v2909, 2
    %2913 = vmatpush.bf16.msra.mxu0 %v1908
    %2914 = vmatpush.bf16.msra.mxu0 %v1904
    %2915 = vmatpush.bf16.msra.mxu0 %v1900
    %2916 = vmatpush.bf16.msra.mxu0 %v1896
    %2917 = vmatpush.bf16.msra.mxu0 %v1892
    %2918 = vmatpush.bf16.msra.mxu0 %v1888
    %2919 = vmatpush.bf16.msra.mxu0 %v1884
    %2920 = vmatpush.bf16.msra.mxu0 %v1880
    %2921 = vmatmul.bf16.gmra.mxu0 %v2911
    %v2922 = vpop.f32.mrf.mxu0
    %v2923 = vadd.f32 0.0, %v2922
    %v2924 = vpop.f32.mrf.mxu0
    %2925 = vdwg.mxu0
    %2926 = vmatpush.bf16.msra.mxu0 %v1909
    %2927 = vmatpush.bf16.msra.mxu0 %v1905
    %2928 = vmatpush.bf16.msra.mxu0 %v1901
    %2929 = vmatpush.bf16.msra.mxu0 %v1897
    %2930 = vmatpush.bf16.msra.mxu0 %v1893
    %2931 = vmatpush.bf16.msra.mxu0 %v1889
    %2932 = vmatpush.bf16.msra.mxu0 %v1885
    %2933 = vmatpush.bf16.msra.mxu0 %v1881
    %2934 = vmatmul.bf16.gmra.mxu0 %v2911
    %v2935 = vpop.f32.mrf.mxu0
    %v2936 = vadd.f32 0.0, %v2935
    %v2937 = vpop.f32.mrf.mxu0
    %2938 = vdwg.mxu0
    %2939 = vmatpush.bf16.msra.mxu0 %v1910
    %2940 = vmatpush.bf16.msra.mxu0 %v1906
    %2941 = vmatpush.bf16.msra.mxu0 %v1902
    %2942 = vmatpush.bf16.msra.mxu0 %v1898
    %2943 = vmatpush.bf16.msra.mxu0 %v1894
    %2944 = vmatpush.bf16.msra.mxu0 %v1890
    %2945 = vmatpush.bf16.msra.mxu0 %v1886
    %2946 = vmatpush.bf16.msra.mxu0 %v1882
    %2947 = vmatmul.bf16.gmra.mxu0 %v2911
    %v2948 = vpop.f32.mrf.mxu0
    %v2949 = vadd.f32 0.0, %v2948
    %v2950 = vpop.f32.mrf.mxu0
    %2951 = vdwg.mxu0
    %2952 = vmatpush.bf16.msra.mxu0 %v1911
    %2953 = vmatpush.bf16.msra.mxu0 %v1907
    %2954 = vmatpush.bf16.msra.mxu0 %v1903
    %2955 = vmatpush.bf16.msra.mxu0 %v1899
    %2956 = vmatpush.bf16.msra.mxu0 %v1895
    %2957 = vmatpush.bf16.msra.mxu0 %v1891
    %2958 = vmatpush.bf16.msra.mxu0 %v1887
    %2959 = vmatpush.bf16.msra.mxu0 %v1883
    %2960 = vmatmul.bf16.gmra.mxu0 %v2911
    %v2961 = vpop.f32.mrf.mxu0
    %v2962 = vadd.f32 0.0, %v2961
    %v2963 = vpop.f32.mrf.mxu0
    %2964 = vdwg.mxu0
    %v2969 = vrot.slane %v2923, 2
    %v2970 = vrot.slane %v2936, 2
    %v2971 = vrot.slane %v2949, 2
    %v2972 = vrot.slane %v2962, 2
    %v2977 = vadd.f32 %v1486, %v2969
    %v2978 = vadd.f32 %v1528, %v2970
    %v2979 = vadd.f32 %v1570, %v2971
    %v2980 = vadd.f32 %v1612, %v2972
    %v2981 = vpack.c.bf16 %v2906, %v2906
    %v2983 = vrot.slane %v2981, 1
    %2985 = vmatpush.bf16.msra.mxu0 %v2124
    %2986 = vmatpush.bf16.msra.mxu0 %v2120
    %2987 = vmatpush.bf16.msra.mxu0 %v2116
    %2988 = vmatpush.bf16.msra.mxu0 %v2112
    %2989 = vmatpush.bf16.msra.mxu0 %v2108
    %2990 = vmatpush.bf16.msra.mxu0 %v2104
    %2991 = vmatpush.bf16.msra.mxu0 %v2100
    %2992 = vmatpush.bf16.msra.mxu0 %v2096
    %2993 = vmatmul.bf16.gmra.mxu0 %v2983
    %v2994 = vpop.f32.mrf.mxu0
    %v2995 = vadd.f32 0.0, %v2994
    %v2996 = vpop.f32.mrf.mxu0
    %2997 = vdwg.mxu0
    %2998 = vmatpush.bf16.msra.mxu0 %v2125
    %2999 = vmatpush.bf16.msra.mxu0 %v2121
    %3000 = vmatpush.bf16.msra.mxu0 %v2117
    %3001 = vmatpush.bf16.msra.mxu0 %v2113
    %3002 = vmatpush.bf16.msra.mxu0 %v2109
    %3003 = vmatpush.bf16.msra.mxu0 %v2105
    %3004 = vmatpush.bf16.msra.mxu0 %v2101
    %3005 = vmatpush.bf16.msra.mxu0 %v2097
    %3006 = vmatmul.bf16.gmra.mxu0 %v2983
    %v3007 = vpop.f32.mrf.mxu0
    %v3008 = vadd.f32 0.0, %v3007
    %v3009 = vpop.f32.mrf.mxu0
    %3010 = vdwg.mxu0
    %3011 = vmatpush.bf16.msra.mxu0 %v2126
    %3012 = vmatpush.bf16.msra.mxu0 %v2122
    %3013 = vmatpush.bf16.msra.mxu0 %v2118
    %3014 = vmatpush.bf16.msra.mxu0 %v2114
    %3015 = vmatpush.bf16.msra.mxu0 %v2110
    %3016 = vmatpush.bf16.msra.mxu0 %v2106
    %3017 = vmatpush.bf16.msra.mxu0 %v2102
    %3018 = vmatpush.bf16.msra.mxu0 %v2098
    %3019 = vmatmul.bf16.gmra.mxu0 %v2983
    %v3020 = vpop.f32.mrf.mxu0
    %v3021 = vadd.f32 0.0, %v3020
    %v3022 = vpop.f32.mrf.mxu0
    %3023 = vdwg.mxu0
    %3024 = vmatpush.bf16.msra.mxu0 %v2127
    %3025 = vmatpush.bf16.msra.mxu0 %v2123
    %3026 = vmatpush.bf16.msra.mxu0 %v2119
    %3027 = vmatpush.bf16.msra.mxu0 %v2115
    %3028 = vmatpush.bf16.msra.mxu0 %v2111
    %3029 = vmatpush.bf16.msra.mxu0 %v2107
    %3030 = vmatpush.bf16.msra.mxu0 %v2103
    %3031 = vmatpush.bf16.msra.mxu0 %v2099
    %3032 = vmatmul.bf16.gmra.mxu0 %v2983
    %v3033 = vpop.f32.mrf.mxu0
    %v3034 = vadd.f32 0.0, %v3033
    %v3035 = vpop.f32.mrf.mxu0
    %3036 = vdwg.mxu0
    %v3037 = vadd.f32 %v1656, %v2995
    %v3038 = vadd.f32 %v1698, %v3008
    %v3039 = vadd.f32 %v1740, %v3021
    %v3040 = vadd.f32 %v1782, %v3034
    %v3041 = vxor.u32 %v2977, 2147483648
    %v3042 = vmul.f32 %v3041, 1.442695
    %v3043 = vpow.pop %v3042
    %v3044 = vadd.f32 %v3043, 1.0
    %v3045 = vrcp.pop %v3044
    %v3046 = vmul.f32 %v3044, %v3045
    %v3047 = vsub.f32 1.0, %v3046
    %v3048 = vmul.f32 %v3045, %v3047
    %v3049 = vadd.f32 %v3045, %v3048
    %vm3050 = vweird.f32 %v3044
    %vm3051 = vweird.f32 %v3045
    %vm3052 = vmor %vm3050, %vm3051
    %v3053 = vsel %vm3052, %v3045, %v3049
    %v3054 = vand.u32 2147483647, %v3044
    %vm3055 = vcmp.eq.f32.partialorder %v3054, 8.507059e+37
    %v3056 = vand.u32 %v3044, 2147483648
    %v3057 = vor.u32 1.1754944e-38, %v3056
    %v3058 = vsel %vm3055, %v3057, %v3053
    %v3059 = vmul.f32 1.0, %v3058
    %v3060 = vxor.u32 %v2978, 2147483648
    %v3061 = vmul.f32 %v3060, 1.442695
    %v3062 = vpow.pop %v3061
    %v3063 = vadd.f32 %v3062, 1.0
    %v3064 = vrcp.pop %v3063
    %v3065 = vmul.f32 %v3063, %v3064
    %v3066 = vsub.f32 1.0, %v3065
    %v3067 = vmul.f32 %v3064, %v3066
    %v3068 = vadd.f32 %v3064, %v3067
    %vm3069 = vweird.f32 %v3063
    %vm3070 = vweird.f32 %v3064
    %vm3071 = vmor %vm3069, %vm3070
    %v3072 = vsel %vm3071, %v3064, %v3068
    %v3073 = vand.u32 2147483647, %v3063
    %vm3074 = vcmp.eq.f32.partialorder %v3073, 8.507059e+37
    %v3075 = vand.u32 %v3063, 2147483648
    %v3076 = vor.u32 1.1754944e-38, %v3075
    %v3077 = vsel %vm3074, %v3076, %v3072
    %v3078 = vmul.f32 1.0, %v3077
    %v3079 = vtanh.pop %v2979
    %v3080 = vxor.u32 %v2980, 2147483648
    %v3081 = vmul.f32 %v3080, 1.442695
    %v3082 = vpow.pop %v3081
    %v3083 = vadd.f32 %v3082, 1.0
    %v3084 = vrcp.pop %v3083
    %v3085 = vmul.f32 %v3083, %v3084
    %v3086 = vsub.f32 1.0, %v3085
    %v3087 = vmul.f32 %v3084, %v3086
    %v3088 = vadd.f32 %v3084, %v3087
    %vm3089 = vweird.f32 %v3083
    %vm3090 = vweird.f32 %v3084
    %vm3091 = vmor %vm3089, %vm3090
    %v3092 = vsel %vm3091, %v3084, %v3088
    %v3093 = vand.u32 2147483647, %v3083
    %vm3094 = vcmp.eq.f32.partialorder %v3093, 8.507059e+37
    %v3095 = vand.u32 %v3083, 2147483648
    %v3096 = vor.u32 1.1754944e-38, %v3095
    %v3097 = vsel %vm3094, %v3096, %v3092
    %v3098 = vmul.f32 1.0, %v3097
    %v3100 = vrot.slane %v2838, 6
    %v3102 = vmul.f32 %v3078, %v3100
    %v3103 = vmul.f32 %v3059, %v3079
    %v3104 = vadd.f32 %v3102, %v3103
    %v3105 = vtanh.pop %v3104
    %v3106 = vmul.f32 %v3098, %v3105
    %v3107 = vxor.u32 %v3037, 2147483648
    %v3108 = vmul.f32 %v3107, 1.442695
    %v3109 = vpow.pop %v3108
    %v3110 = vadd.f32 %v3109, 1.0
    %v3111 = vrcp.pop %v3110
    %v3112 = vmul.f32 %v3110, %v3111
    %v3113 = vsub.f32 1.0, %v3112
    %v3114 = vmul.f32 %v3111, %v3113
    %v3115 = vadd.f32 %v3111, %v3114
    %vm3116 = vweird.f32 %v3110
    %vm3117 = vweird.f32 %v3111
    %vm3118 = vmor %vm3116, %vm3117
    %v3119 = vsel %vm3118, %v3111, %v3115
    %v3120 = vand.u32 2147483647, %v3110
    %vm3121 = vcmp.eq.f32.partialorder %v3120, 8.507059e+37
    %v3122 = vand.u32 %v3110, 2147483648
    %v3123 = vor.u32 1.1754944e-38, %v3122
    %v3124 = vsel %vm3121, %v3123, %v3119
    %v3125 = vmul.f32 1.0, %v3124
    %v3126 = vxor.u32 %v3038, 2147483648
    %v3127 = vmul.f32 %v3126, 1.442695
    %v3128 = vpow.pop %v3127
    %v3129 = vadd.f32 %v3128, 1.0
    %v3130 = vrcp.pop %v3129
    %v3131 = vmul.f32 %v3129, %v3130
    %v3132 = vsub.f32 1.0, %v3131
    %v3133 = vmul.f32 %v3130, %v3132
    %v3134 = vadd.f32 %v3130, %v3133
    %vm3135 = vweird.f32 %v3129
    %vm3136 = vweird.f32 %v3130
    %vm3137 = vmor %vm3135, %vm3136
    %v3138 = vsel %vm3137, %v3130, %v3134
    %v3139 = vand.u32 2147483647, %v3129
    %vm3140 = vcmp.eq.f32.partialorder %v3139, 8.507059e+37
    %v3141 = vand.u32 %v3129, 2147483648
    %v3142 = vor.u32 1.1754944e-38, %v3141
    %v3143 = vsel %vm3140, %v3142, %v3138
    %v3144 = vmul.f32 1.0, %v3143
    %v3145 = vtanh.pop %v3039
    %v3146 = vxor.u32 %v3040, 2147483648
    %v3147 = vmul.f32 %v3146, 1.442695
    %v3148 = vpow.pop %v3147
    %v3149 = vadd.f32 %v3148, 1.0
    %v3150 = vrcp.pop %v3149
    %v3151 = vmul.f32 %v3149, %v3150
    %v3152 = vsub.f32 1.0, %v3151
    %v3153 = vmul.f32 %v3150, %v3152
    %v3154 = vadd.f32 %v3150, %v3153
    %vm3155 = vweird.f32 %v3149
    %vm3156 = vweird.f32 %v3150
    %vm3157 = vmor %vm3155, %vm3156
    %v3158 = vsel %vm3157, %v3150, %v3154
    %v3159 = vand.u32 2147483647, %v3149
    %vm3160 = vcmp.eq.f32.partialorder %v3159, 8.507059e+37
    %v3161 = vand.u32 %v3149, 2147483648
    %v3162 = vor.u32 1.1754944e-38, %v3161
    %v3163 = vsel %vm3160, %v3162, %v3158
    %v3164 = vmul.f32 1.0, %v3163
    %v3166 = vrot.slane %v2904, 2
    %v3168 = vmul.f32 %v3144, %v3166
    %v3169 = vmul.f32 %v3125, %v3145
    %v3170 = vadd.f32 %v3168, %v3169
    %v3171 = vtanh.pop %v3170
    %v3172 = vmul.f32 %v3164, %v3171
    %3173 = vst [vmem:[#allocation2] sm:$0xc0] %v3106
    %3174 = vst [vmem:[#allocation2 + $0x18] sm:$0x3] %v3172
    %v3175 = vpack.c.bf16 %v3106, %v3106
    %v3177 = vrot.slane %v3175, 3
    %3179 = vmatpush.bf16.msra.mxu0 %v1908
    %3180 = vmatpush.bf16.msra.mxu0 %v1904
    %3181 = vmatpush.bf16.msra.mxu0 %v1900
    %3182 = vmatpush.bf16.msra.mxu0 %v1896
    %3183 = vmatpush.bf16.msra.mxu0 %v1892
    %3184 = vmatpush.bf16.msra.mxu0 %v1888
    %3185 = vmatpush.bf16.msra.mxu0 %v1884
    %3186 = vmatpush.bf16.msra.mxu0 %v1880
    %3187 = vmatmul.bf16.gmra.mxu0 %v3177
    %v3188 = vpop.f32.mrf.mxu0
    %v3189 = vadd.f32 0.0, %v3188
    %v3190 = vpop.f32.mrf.mxu0
    %3191 = vdwg.mxu0
    %3192 = vmatpush.bf16.msra.mxu0 %v1909
    %3193 = vmatpush.bf16.msra.mxu0 %v1905
    %3194 = vmatpush.bf16.msra.mxu0 %v1901
    %3195 = vmatpush.bf16.msra.mxu0 %v1897
    %3196 = vmatpush.bf16.msra.mxu0 %v1893
    %3197 = vmatpush.bf16.msra.mxu0 %v1889
    %3198 = vmatpush.bf16.msra.mxu0 %v1885
    %3199 = vmatpush.bf16.msra.mxu0 %v1881
    %3200 = vmatmul.bf16.gmra.mxu0 %v3177
    %v3201 = vpop.f32.mrf.mxu0
    %v3202 = vadd.f32 0.0, %v3201
    %v3203 = vpop.f32.mrf.mxu0
    %3204 = vdwg.mxu0
    %3205 = vmatpush.bf16.msra.mxu0 %v1910
    %3206 = vmatpush.bf16.msra.mxu0 %v1906
    %3207 = vmatpush.bf16.msra.mxu0 %v1902
    %3208 = vmatpush.bf16.msra.mxu0 %v1898
    %3209 = vmatpush.bf16.msra.mxu0 %v1894
    %3210 = vmatpush.bf16.msra.mxu0 %v1890
    %3211 = vmatpush.bf16.msra.mxu0 %v1886
    %3212 = vmatpush.bf16.msra.mxu0 %v1882
    %3213 = vmatmul.bf16.gmra.mxu0 %v3177
    %v3214 = vpop.f32.mrf.mxu0
    %v3215 = vadd.f32 0.0, %v3214
    %v3216 = vpop.f32.mrf.mxu0
    %3217 = vdwg.mxu0
    %3218 = vmatpush.bf16.msra.mxu0 %v1911
    %3219 = vmatpush.bf16.msra.mxu0 %v1907
    %3220 = vmatpush.bf16.msra.mxu0 %v1903
    %3221 = vmatpush.bf16.msra.mxu0 %v1899
    %3222 = vmatpush.bf16.msra.mxu0 %v1895
    %3223 = vmatpush.bf16.msra.mxu0 %v1891
    %3224 = vmatpush.bf16.msra.mxu0 %v1887
    %3225 = vmatpush.bf16.msra.mxu0 %v1883
    %3226 = vmatmul.bf16.gmra.mxu0 %v3177
    %v3227 = vpop.f32.mrf.mxu0
    %v3228 = vadd.f32 0.0, %v3227
    %v3229 = vpop.f32.mrf.mxu0
    %3230 = vdwg.mxu0
    %v3231 = vadd.f32 %v1488, %v3189
    %v3232 = vadd.f32 %v1530, %v3202
    %v3233 = vadd.f32 %v1572, %v3215
    %v3234 = vadd.f32 %v1614, %v3228
    %v3235 = vpack.c.bf16 %v3172, %v3172
    %3236 = vmatpush.bf16.msra.mxu0 %v2124
    %3237 = vmatpush.bf16.msra.mxu0 %v2120
    %3238 = vmatpush.bf16.msra.mxu0 %v2116
    %3239 = vmatpush.bf16.msra.mxu0 %v2112
    %3240 = vmatpush.bf16.msra.mxu0 %v2108
    %3241 = vmatpush.bf16.msra.mxu0 %v2104
    %3242 = vmatpush.bf16.msra.mxu0 %v2100
    %3243 = vmatpush.bf16.msra.mxu0 %v2096
    %3244 = vmatmul.bf16.gmra.mxu0 %v3235
    %v3245 = vpop.f32.mrf.mxu0
    %v3246 = vadd.f32 0.0, %v3245
    %v3247 = vpop.f32.mrf.mxu0
    %3248 = vdwg.mxu0
    %3249 = vmatpush.bf16.msra.mxu0 %v2125
    %3250 = vmatpush.bf16.msra.mxu0 %v2121
    %3251 = vmatpush.bf16.msra.mxu0 %v2117
    %3252 = vmatpush.bf16.msra.mxu0 %v2113
    %3253 = vmatpush.bf16.msra.mxu0 %v2109
    %3254 = vmatpush.bf16.msra.mxu0 %v2105
    %3255 = vmatpush.bf16.msra.mxu0 %v2101
    %3256 = vmatpush.bf16.msra.mxu0 %v2097
    %3257 = vmatmul.bf16.gmra.mxu0 %v3235
    %v3258 = vpop.f32.mrf.mxu0
    %v3259 = vadd.f32 0.0, %v3258
    %v3260 = vpop.f32.mrf.mxu0
    %3261 = vdwg.mxu0
    %3262 = vmatpush.bf16.msra.mxu0 %v2126
    %3263 = vmatpush.bf16.msra.mxu0 %v2122
    %3264 = vmatpush.bf16.msra.mxu0 %v2118
    %3265 = vmatpush.bf16.msra.mxu0 %v2114
    %3266 = vmatpush.bf16.msra.mxu0 %v2110
    %3267 = vmatpush.bf16.msra.mxu0 %v2106
    %3268 = vmatpush.bf16.msra.mxu0 %v2102
    %3269 = vmatpush.bf16.msra.mxu0 %v2098
    %3270 = vmatmul.bf16.gmra.mxu0 %v3235
    %v3271 = vpop.f32.mrf.mxu0
    %v3272 = vadd.f32 0.0, %v3271
    %v3273 = vpop.f32.mrf.mxu0
    %3274 = vdwg.mxu0
    %3275 = vmatpush.bf16.msra.mxu0 %v2127
    %3276 = vmatpush.bf16.msra.mxu0 %v2123
    %3277 = vmatpush.bf16.msra.mxu0 %v2119
    %3278 = vmatpush.bf16.msra.mxu0 %v2115
    %3279 = vmatpush.bf16.msra.mxu0 %v2111
    %3280 = vmatpush.bf16.msra.mxu0 %v2107
    %3281 = vmatpush.bf16.msra.mxu0 %v2103
    %3282 = vmatpush.bf16.msra.mxu0 %v2099
    %3283 = vmatmul.bf16.gmra.mxu0 %v3235
    %v3284 = vpop.f32.mrf.mxu0
    %v3285 = vadd.f32 0.0, %v3284
    %v3286 = vpop.f32.mrf.mxu0
    %3287 = vdwg.mxu0
    %v3292 = vrot.slane %v3246, 2
    %v3293 = vrot.slane %v3259, 2
    %v3294 = vrot.slane %v3272, 2
    %v3295 = vrot.slane %v3285, 2
    %v3300 = vadd.f32 %v1654, %v3292
    %v3301 = vadd.f32 %v1696, %v3293
    %v3302 = vadd.f32 %v1738, %v3294
    %v3303 = vadd.f32 %v1780, %v3295
    %v3304 = vxor.u32 %v3231, 2147483648
    %v3305 = vmul.f32 %v3304, 1.442695
    %v3306 = vpow.pop %v3305
    %v3307 = vadd.f32 %v3306, 1.0
    %v3308 = vrcp.pop %v3307
    %v3309 = vmul.f32 %v3307, %v3308
    %v3310 = vsub.f32 1.0, %v3309
    %v3311 = vmul.f32 %v3308, %v3310
    %v3312 = vadd.f32 %v3308, %v3311
    %vm3313 = vweird.f32 %v3307
    %vm3314 = vweird.f32 %v3308
    %vm3315 = vmor %vm3313, %vm3314
    %v3316 = vsel %vm3315, %v3308, %v3312
    %v3317 = vand.u32 2147483647, %v3307
    %vm3318 = vcmp.eq.f32.partialorder %v3317, 8.507059e+37
    %v3319 = vand.u32 %v3307, 2147483648
    %v3320 = vor.u32 1.1754944e-38, %v3319
    %v3321 = vsel %vm3318, %v3320, %v3316
    %v3322 = vmul.f32 1.0, %v3321
    %v3323 = vxor.u32 %v3232, 2147483648
    %v3324 = vmul.f32 %v3323, 1.442695
    %v3325 = vpow.pop %v3324
    %v3326 = vadd.f32 %v3325, 1.0
    %v3327 = vrcp.pop %v3326
    %v3328 = vmul.f32 %v3326, %v3327
    %v3329 = vsub.f32 1.0, %v3328
    %v3330 = vmul.f32 %v3327, %v3329
    %v3331 = vadd.f32 %v3327, %v3330
    %vm3332 = vweird.f32 %v3326
    %vm3333 = vweird.f32 %v3327
    %vm3334 = vmor %vm3332, %vm3333
    %v3335 = vsel %vm3334, %v3327, %v3331
    %v3336 = vand.u32 2147483647, %v3326
    %vm3337 = vcmp.eq.f32.partialorder %v3336, 8.507059e+37
    %v3338 = vand.u32 %v3326, 2147483648
    %v3339 = vor.u32 1.1754944e-38, %v3338
    %v3340 = vsel %vm3337, %v3339, %v3335
    %v3341 = vmul.f32 1.0, %v3340
    %v3342 = vtanh.pop %v3233
    %v3343 = vxor.u32 %v3234, 2147483648
    %v3344 = vmul.f32 %v3343, 1.442695
    %v3345 = vpow.pop %v3344
    %v3346 = vadd.f32 %v3345, 1.0
    %v3347 = vrcp.pop %v3346
    %v3348 = vmul.f32 %v3346, %v3347
    %v3349 = vsub.f32 1.0, %v3348
    %v3350 = vmul.f32 %v3347, %v3349
    %v3351 = vadd.f32 %v3347, %v3350
    %vm3352 = vweird.f32 %v3346
    %vm3353 = vweird.f32 %v3347
    %vm3354 = vmor %vm3352, %vm3353
    %v3355 = vsel %vm3354, %v3347, %v3351
    %v3356 = vand.u32 2147483647, %v3346
    %vm3357 = vcmp.eq.f32.partialorder %v3356, 8.507059e+37
    %v3358 = vand.u32 %v3346, 2147483648
    %v3359 = vor.u32 1.1754944e-38, %v3358
    %v3360 = vsel %vm3357, %v3359, %v3355
    %v3361 = vmul.f32 1.0, %v3360
    %v3363 = vrot.slane %v3104, 6
    %v3365 = vmul.f32 %v3341, %v3363
    %v3366 = vmul.f32 %v3322, %v3342
    %v3367 = vadd.f32 %v3365, %v3366
    %v3368 = vtanh.pop %v3367
    %v3369 = vmul.f32 %v3361, %v3368
    %v3370 = vxor.u32 %v3300, 2147483648
    %v3371 = vmul.f32 %v3370, 1.442695
    %v3372 = vpow.pop %v3371
    %v3373 = vadd.f32 %v3372, 1.0
    %v3374 = vrcp.pop %v3373
    %v3375 = vmul.f32 %v3373, %v3374
    %v3376 = vsub.f32 1.0, %v3375
    %v3377 = vmul.f32 %v3374, %v3376
    %v3378 = vadd.f32 %v3374, %v3377
    %vm3379 = vweird.f32 %v3373
    %vm3380 = vweird.f32 %v3374
    %vm3381 = vmor %vm3379, %vm3380
    %v3382 = vsel %vm3381, %v3374, %v3378
    %v3383 = vand.u32 2147483647, %v3373
    %vm3384 = vcmp.eq.f32.partialorder %v3383, 8.507059e+37
    %v3385 = vand.u32 %v3373, 2147483648
    %v3386 = vor.u32 1.1754944e-38, %v3385
    %v3387 = vsel %vm3384, %v3386, %v3382
    %v3388 = vmul.f32 1.0, %v3387
    %v3389 = vxor.u32 %v3301, 2147483648
    %v3390 = vmul.f32 %v3389, 1.442695
    %v3391 = vpow.pop %v3390
    %v3392 = vadd.f32 %v3391, 1.0
    %v3393 = vrcp.pop %v3392
    %v3394 = vmul.f32 %v3392, %v3393
    %v3395 = vsub.f32 1.0, %v3394
    %v3396 = vmul.f32 %v3393, %v3395
    %v3397 = vadd.f32 %v3393, %v3396
    %vm3398 = vweird.f32 %v3392
    %vm3399 = vweird.f32 %v3393
    %vm3400 = vmor %vm3398, %vm3399
    %v3401 = vsel %vm3400, %v3393, %v3397
    %v3402 = vand.u32 2147483647, %v3392
    %vm3403 = vcmp.eq.f32.partialorder %v3402, 8.507059e+37
    %v3404 = vand.u32 %v3392, 2147483648
    %v3405 = vor.u32 1.1754944e-38, %v3404
    %v3406 = vsel %vm3403, %v3405, %v3401
    %v3407 = vmul.f32 1.0, %v3406
    %v3408 = vtanh.pop %v3302
    %v3409 = vxor.u32 %v3303, 2147483648
    %v3410 = vmul.f32 %v3409, 1.442695
    %v3411 = vpow.pop %v3410
    %v3412 = vadd.f32 %v3411, 1.0
    %v3413 = vrcp.pop %v3412
    %v3414 = vmul.f32 %v3412, %v3413
    %v3415 = vsub.f32 1.0, %v3414
    %v3416 = vmul.f32 %v3413, %v3415
    %v3417 = vadd.f32 %v3413, %v3416
    %vm3418 = vweird.f32 %v3412
    %vm3419 = vweird.f32 %v3413
    %vm3420 = vmor %vm3418, %vm3419
    %v3421 = vsel %vm3420, %v3413, %v3417
    %v3422 = vand.u32 2147483647, %v3412
    %vm3423 = vcmp.eq.f32.partialorder %v3422, 8.507059e+37
    %v3424 = vand.u32 %v3412, 2147483648
    %v3425 = vor.u32 1.1754944e-38, %v3424
    %v3426 = vsel %vm3423, %v3425, %v3421
    %v3427 = vmul.f32 1.0, %v3426
    %v3429 = vrot.slane %v3170, 2
    %v3431 = vmul.f32 %v3407, %v3429
    %v3432 = vmul.f32 %v3388, %v3408
    %v3433 = vadd.f32 %v3431, %v3432
    %v3434 = vtanh.pop %v3433
    %v3435 = vmul.f32 %v3427, %v3434
    %3436 = vst [vmem:[#allocation2 + $0x10] sm:$0x3] %v3369
    %3437 = vst [vmem:[#allocation2 + $0x8] sm:$0xc0] %v3435
    %v3438 = vpack.c.bf16 %v3369, %v3369
    %3439 = vmatpush.bf16.msra.mxu0 %v1908
    %3440 = vmatpush.bf16.msra.mxu0 %v1904
    %3441 = vmatpush.bf16.msra.mxu0 %v1900
    %3442 = vmatpush.bf16.msra.mxu0 %v1896
    %3443 = vmatpush.bf16.msra.mxu0 %v1892
    %3444 = vmatpush.bf16.msra.mxu0 %v1888
    %3445 = vmatpush.bf16.msra.mxu0 %v1884
    %3446 = vmatpush.bf16.msra.mxu0 %v1880
    %3447 = vmatmul.bf16.gmra.mxu0 %v3438
    %v3448 = vpop.f32.mrf.mxu0
    %v3449 = vadd.f32 0.0, %v3448
    %v3450 = vpop.f32.mrf.mxu0
    %3451 = vdwg.mxu0
    %3452 = vmatpush.bf16.msra.mxu0 %v1909
    %3453 = vmatpush.bf16.msra.mxu0 %v1905
    %3454 = vmatpush.bf16.msra.mxu0 %v1901
    %3455 = vmatpush.bf16.msra.mxu0 %v1897
    %3456 = vmatpush.bf16.msra.mxu0 %v1893
    %3457 = vmatpush.bf16.msra.mxu0 %v1889
    %3458 = vmatpush.bf16.msra.mxu0 %v1885
    %3459 = vmatpush.bf16.msra.mxu0 %v1881
    %3460 = vmatmul.bf16.gmra.mxu0 %v3438
    %v3461 = vpop.f32.mrf.mxu0
    %v3462 = vadd.f32 0.0, %v3461
    %v3463 = vpop.f32.mrf.mxu0
    %3464 = vdwg.mxu0
    %3465 = vmatpush.bf16.msra.mxu0 %v1910
    %3466 = vmatpush.bf16.msra.mxu0 %v1906
    %3467 = vmatpush.bf16.msra.mxu0 %v1902
    %3468 = vmatpush.bf16.msra.mxu0 %v1898
    %3469 = vmatpush.bf16.msra.mxu0 %v1894
    %3470 = vmatpush.bf16.msra.mxu0 %v1890
    %3471 = vmatpush.bf16.msra.mxu0 %v1886
    %3472 = vmatpush.bf16.msra.mxu0 %v1882
    %3473 = vmatmul.bf16.gmra.mxu0 %v3438
    %v3474 = vpop.f32.mrf.mxu0
    %v3475 = vadd.f32 0.0, %v3474
    %v3476 = vpop.f32.mrf.mxu0
    %3477 = vdwg.mxu0
    %3478 = vmatpush.bf16.msra.mxu0 %v1911
    %3479 = vmatpush.bf16.msra.mxu0 %v1907
    %3480 = vmatpush.bf16.msra.mxu0 %v1903
    %3481 = vmatpush.bf16.msra.mxu0 %v1899
    %3482 = vmatpush.bf16.msra.mxu0 %v1895
    %3483 = vmatpush.bf16.msra.mxu0 %v1891
    %3484 = vmatpush.bf16.msra.mxu0 %v1887
    %3485 = vmatpush.bf16.msra.mxu0 %v1883
    %3486 = vmatmul.bf16.gmra.mxu0 %v3438
    %v3487 = vpop.f32.mrf.mxu0
    %v3488 = vadd.f32 0.0, %v3487
    %v3489 = vpop.f32.mrf.mxu0
    %3490 = vdwg.mxu0
    %v3495 = vrot.slane %v3449, 6
    %v3496 = vrot.slane %v3462, 6
    %v3497 = vrot.slane %v3475, 6
    %v3498 = vrot.slane %v3488, 6
    %v3503 = vadd.f32 %v1488, %v3495
    %v3504 = vadd.f32 %v1530, %v3496
    %v3505 = vadd.f32 %v1572, %v3497
    %v3506 = vadd.f32 %v1614, %v3498
    %v3507 = vpack.c.bf16 %v3435, %v3435
    %v3509 = vrot.slane %v3507, 3
    %3511 = vmatpush.bf16.msra.mxu0 %v2124
    %3512 = vmatpush.bf16.msra.mxu0 %v2120
    %3513 = vmatpush.bf16.msra.mxu0 %v2116
    %3514 = vmatpush.bf16.msra.mxu0 %v2112
    %3515 = vmatpush.bf16.msra.mxu0 %v2108
    %3516 = vmatpush.bf16.msra.mxu0 %v2104
    %3517 = vmatpush.bf16.msra.mxu0 %v2100
    %3518 = vmatpush.bf16.msra.mxu0 %v2096
    %3519 = vmatmul.bf16.gmra.mxu0 %v3509
    %v3520 = vpop.f32.mrf.mxu0
    %v3521 = vadd.f32 0.0, %v3520
    %v3522 = vpop.f32.mrf.mxu0
    %3523 = vdwg.mxu0
    %3524 = vmatpush.bf16.msra.mxu0 %v2125
    %3525 = vmatpush.bf16.msra.mxu0 %v2121
    %3526 = vmatpush.bf16.msra.mxu0 %v2117
    %3527 = vmatpush.bf16.msra.mxu0 %v2113
    %3528 = vmatpush.bf16.msra.mxu0 %v2109
    %3529 = vmatpush.bf16.msra.mxu0 %v2105
    %3530 = vmatpush.bf16.msra.mxu0 %v2101
    %3531 = vmatpush.bf16.msra.mxu0 %v2097
    %3532 = vmatmul.bf16.gmra.mxu0 %v3509
    %v3533 = vpop.f32.mrf.mxu0
    %v3534 = vadd.f32 0.0, %v3533
    %v3535 = vpop.f32.mrf.mxu0
    %3536 = vdwg.mxu0
    %3537 = vmatpush.bf16.msra.mxu0 %v2126
    %3538 = vmatpush.bf16.msra.mxu0 %v2122
    %3539 = vmatpush.bf16.msra.mxu0 %v2118
    %3540 = vmatpush.bf16.msra.mxu0 %v2114
    %3541 = vmatpush.bf16.msra.mxu0 %v2110
    %3542 = vmatpush.bf16.msra.mxu0 %v2106
    %3543 = vmatpush.bf16.msra.mxu0 %v2102
    %3544 = vmatpush.bf16.msra.mxu0 %v2098
    %3545 = vmatmul.bf16.gmra.mxu0 %v3509
    %v3546 = vpop.f32.mrf.mxu0
    %v3547 = vadd.f32 0.0, %v3546
    %v3548 = vpop.f32.mrf.mxu0
    %3549 = vdwg.mxu0
    %3550 = vmatpush.bf16.msra.mxu0 %v2127
    %3551 = vmatpush.bf16.msra.mxu0 %v2123
    %3552 = vmatpush.bf16.msra.mxu0 %v2119
    %3553 = vmatpush.bf16.msra.mxu0 %v2115
    %3554 = vmatpush.bf16.msra.mxu0 %v2111
    %3555 = vmatpush.bf16.msra.mxu0 %v2107
    %3556 = vmatpush.bf16.msra.mxu0 %v2103
    %3557 = vmatpush.bf16.msra.mxu0 %v2099
    %3558 = vmatmul.bf16.gmra.mxu0 %v3509
    %v3559 = vpop.f32.mrf.mxu0
    %v3560 = vadd.f32 0.0, %v3559
    %v3561 = vpop.f32.mrf.mxu0
    %3562 = vdwg.mxu0
    %v3567 = vrot.slane %v3521, 4
    %v3568 = vrot.slane %v3534, 4
    %v3569 = vrot.slane %v3547, 4
    %v3570 = vrot.slane %v3560, 4
    %v3575 = vadd.f32 %v1654, %v3567
    %v3576 = vadd.f32 %v1696, %v3568
    %v3577 = vadd.f32 %v1738, %v3569
    %v3578 = vadd.f32 %v1780, %v3570
    %v3579 = vxor.u32 %v3503, 2147483648
    %v3580 = vmul.f32 %v3579, 1.442695
    %v3581 = vpow.pop %v3580
    %v3582 = vadd.f32 %v3581, 1.0
    %v3583 = vrcp.pop %v3582
    %v3584 = vmul.f32 %v3582, %v3583
    %v3585 = vsub.f32 1.0, %v3584
    %v3586 = vmul.f32 %v3583, %v3585
    %v3587 = vadd.f32 %v3583, %v3586
    %vm3588 = vweird.f32 %v3582
    %vm3589 = vweird.f32 %v3583
    %vm3590 = vmor %vm3588, %vm3589
    %v3591 = vsel %vm3590, %v3583, %v3587
    %v3592 = vand.u32 2147483647, %v3582
    %vm3593 = vcmp.eq.f32.partialorder %v3592, 8.507059e+37
    %v3594 = vand.u32 %v3582, 2147483648
    %v3595 = vor.u32 1.1754944e-38, %v3594
    %v3596 = vsel %vm3593, %v3595, %v3591
    %v3597 = vmul.f32 1.0, %v3596
    %v3598 = vxor.u32 %v3504, 2147483648
    %v3599 = vmul.f32 %v3598, 1.442695
    %v3600 = vpow.pop %v3599
    %v3601 = vadd.f32 %v3600, 1.0
    %v3602 = vrcp.pop %v3601
    %v3603 = vmul.f32 %v3601, %v3602
    %v3604 = vsub.f32 1.0, %v3603
    %v3605 = vmul.f32 %v3602, %v3604
    %v3606 = vadd.f32 %v3602, %v3605
    %vm3607 = vweird.f32 %v3601
    %vm3608 = vweird.f32 %v3602
    %vm3609 = vmor %vm3607, %vm3608
    %v3610 = vsel %vm3609, %v3602, %v3606
    %v3611 = vand.u32 2147483647, %v3601
    %vm3612 = vcmp.eq.f32.partialorder %v3611, 8.507059e+37
    %v3613 = vand.u32 %v3601, 2147483648
    %v3614 = vor.u32 1.1754944e-38, %v3613
    %v3615 = vsel %vm3612, %v3614, %v3610
    %v3616 = vmul.f32 1.0, %v3615
    %v3617 = vtanh.pop %v3505
    %v3618 = vxor.u32 %v3506, 2147483648
    %v3619 = vmul.f32 %v3618, 1.442695
    %v3620 = vpow.pop %v3619
    %v3621 = vadd.f32 %v3620, 1.0
    %v3622 = vrcp.pop %v3621
    %v3623 = vmul.f32 %v3621, %v3622
    %v3624 = vsub.f32 1.0, %v3623
    %v3625 = vmul.f32 %v3622, %v3624
    %v3626 = vadd.f32 %v3622, %v3625
    %vm3627 = vweird.f32 %v3621
    %vm3628 = vweird.f32 %v3622
    %vm3629 = vmor %vm3627, %vm3628
    %v3630 = vsel %vm3629, %v3622, %v3626
    %v3631 = vand.u32 2147483647, %v3621
    %vm3632 = vcmp.eq.f32.partialorder %v3631, 8.507059e+37
    %v3633 = vand.u32 %v3621, 2147483648
    %v3634 = vor.u32 1.1754944e-38, %v3633
    %v3635 = vsel %vm3632, %v3634, %v3630
    %v3636 = vmul.f32 1.0, %v3635
    %v3638 = vrot.slane %v3367, 6
    %v3640 = vmul.f32 %v3616, %v3638
    %v3641 = vmul.f32 %v3597, %v3617
    %v3642 = vadd.f32 %v3640, %v3641
    %v3643 = vtanh.pop %v3642
    %v3644 = vmul.f32 %v3636, %v3643
    %v3645 = vxor.u32 %v3575, 2147483648
    %v3646 = vmul.f32 %v3645, 1.442695
    %v3647 = vpow.pop %v3646
    %v3648 = vadd.f32 %v3647, 1.0
    %v3649 = vrcp.pop %v3648
    %v3650 = vmul.f32 %v3648, %v3649
    %v3651 = vsub.f32 1.0, %v3650
    %v3652 = vmul.f32 %v3649, %v3651
    %v3653 = vadd.f32 %v3649, %v3652
    %vm3654 = vweird.f32 %v3648
    %vm3655 = vweird.f32 %v3649
    %vm3656 = vmor %vm3654, %vm3655
    %v3657 = vsel %vm3656, %v3649, %v3653
    %v3658 = vand.u32 2147483647, %v3648
    %vm3659 = vcmp.eq.f32.partialorder %v3658, 8.507059e+37
    %v3660 = vand.u32 %v3648, 2147483648
    %v3661 = vor.u32 1.1754944e-38, %v3660
    %v3662 = vsel %vm3659, %v3661, %v3657
    %v3663 = vmul.f32 1.0, %v3662
    %v3664 = vxor.u32 %v3576, 2147483648
    %v3665 = vmul.f32 %v3664, 1.442695
    %v3666 = vpow.pop %v3665
    %v3667 = vadd.f32 %v3666, 1.0
    %v3668 = vrcp.pop %v3667
    %v3669 = vmul.f32 %v3667, %v3668
    %v3670 = vsub.f32 1.0, %v3669
    %v3671 = vmul.f32 %v3668, %v3670
    %v3672 = vadd.f32 %v3668, %v3671
    %vm3673 = vweird.f32 %v3667
    %vm3674 = vweird.f32 %v3668
    %vm3675 = vmor %vm3673, %vm3674
    %v3676 = vsel %vm3675, %v3668, %v3672
    %v3677 = vand.u32 2147483647, %v3667
    %vm3678 = vcmp.eq.f32.partialorder %v3677, 8.507059e+37
    %v3679 = vand.u32 %v3667, 2147483648
    %v3680 = vor.u32 1.1754944e-38, %v3679
    %v3681 = vsel %vm3678, %v3680, %v3676
    %v3682 = vmul.f32 1.0, %v3681
    %v3683 = vtanh.pop %v3577
    %v3684 = vxor.u32 %v3578, 2147483648
    %v3685 = vmul.f32 %v3684, 1.442695
    %v3686 = vpow.pop %v3685
    %v3687 = vadd.f32 %v3686, 1.0
    %v3688 = vrcp.pop %v3687
    %v3689 = vmul.f32 %v3687, %v3688
    %v3690 = vsub.f32 1.0, %v3689
    %v3691 = vmul.f32 %v3688, %v3690
    %v3692 = vadd.f32 %v3688, %v3691
    %vm3693 = vweird.f32 %v3687
    %vm3694 = vweird.f32 %v3688
    %vm3695 = vmor %vm3693, %vm3694
    %v3696 = vsel %vm3695, %v3688, %v3692
    %v3697 = vand.u32 2147483647, %v3687
    %vm3698 = vcmp.eq.f32.partialorder %v3697, 8.507059e+37
    %v3699 = vand.u32 %v3687, 2147483648
    %v3700 = vor.u32 1.1754944e-38, %v3699
    %v3701 = vsel %vm3698, %v3700, %v3696
    %v3702 = vmul.f32 1.0, %v3701
    %v3704 = vrot.slane %v3433, 2
    %v3706 = vmul.f32 %v3682, %v3704
    %v3707 = vmul.f32 %v3663, %v3683
    %v3708 = vadd.f32 %v3706, %v3707
    %v3709 = vtanh.pop %v3708
    %v3710 = vmul.f32 %v3702, %v3709
    %3711 = vst [vmem:[#allocation2 + $0x10] sm:$0xc] %v3644
    %3712 = vst [vmem:[#allocation2 + $0x8] sm:$0x30] %v3710
    %v3713 = vpack.c.bf16 %v3644, %v3644
    %v3715 = vrot.slane %v3713, 1
    %3717 = vmatpush.bf16.msra.mxu0 %v1908
    %3718 = vmatpush.bf16.msra.mxu0 %v1904
    %3719 = vmatpush.bf16.msra.mxu0 %v1900
    %3720 = vmatpush.bf16.msra.mxu0 %v1896
    %3721 = vmatpush.bf16.msra.mxu0 %v1892
    %3722 = vmatpush.bf16.msra.mxu0 %v1888
    %3723 = vmatpush.bf16.msra.mxu0 %v1884
    %3724 = vmatpush.bf16.msra.mxu0 %v1880
    %3725 = vmatmul.bf16.gmra.mxu0 %v3715
    %v3726 = vpop.f32.mrf.mxu0
    %v3727 = vadd.f32 0.0, %v3726
    %v3728 = vpop.f32.mrf.mxu0
    %3729 = vdwg.mxu0
    %3730 = vmatpush.bf16.msra.mxu0 %v1909
    %3731 = vmatpush.bf16.msra.mxu0 %v1905
    %3732 = vmatpush.bf16.msra.mxu0 %v1901
    %3733 = vmatpush.bf16.msra.mxu0 %v1897
    %3734 = vmatpush.bf16.msra.mxu0 %v1893
    %3735 = vmatpush.bf16.msra.mxu0 %v1889
    %3736 = vmatpush.bf16.msra.mxu0 %v1885
    %3737 = vmatpush.bf16.msra.mxu0 %v1881
    %3738 = vmatmul.bf16.gmra.mxu0 %v3715
    %v3739 = vpop.f32.mrf.mxu0
    %v3740 = vadd.f32 0.0, %v3739
    %v3741 = vpop.f32.mrf.mxu0
    %3742 = vdwg.mxu0
    %3743 = vmatpush.bf16.msra.mxu0 %v1910
    %3744 = vmatpush.bf16.msra.mxu0 %v1906
    %3745 = vmatpush.bf16.msra.mxu0 %v1902
    %3746 = vmatpush.bf16.msra.mxu0 %v1898
    %3747 = vmatpush.bf16.msra.mxu0 %v1894
    %3748 = vmatpush.bf16.msra.mxu0 %v1890
    %3749 = vmatpush.bf16.msra.mxu0 %v1886
    %3750 = vmatpush.bf16.msra.mxu0 %v1882
    %3751 = vmatmul.bf16.gmra.mxu0 %v3715
    %v3752 = vpop.f32.mrf.mxu0
    %v3753 = vadd.f32 0.0, %v3752
    %v3754 = vpop.f32.mrf.mxu0
    %3755 = vdwg.mxu0
    %3756 = vmatpush.bf16.msra.mxu0 %v1911
    %3757 = vmatpush.bf16.msra.mxu0 %v1907
    %3758 = vmatpush.bf16.msra.mxu0 %v1903
    %3759 = vmatpush.bf16.msra.mxu0 %v1899
    %3760 = vmatpush.bf16.msra.mxu0 %v1895
    %3761 = vmatpush.bf16.msra.mxu0 %v1891
    %3762 = vmatpush.bf16.msra.mxu0 %v1887
    %3763 = vmatpush.bf16.msra.mxu0 %v1883
    %3764 = vmatmul.bf16.gmra.mxu0 %v3715
    %v3765 = vpop.f32.mrf.mxu0
    %v3766 = vadd.f32 0.0, %v3765
    %v3767 = vpop.f32.mrf.mxu0
    %3768 = vdwg.mxu0
    %v3773 = vrot.slane %v3727, 4
    %v3774 = vrot.slane %v3740, 4
    %v3775 = vrot.slane %v3753, 4
    %v3776 = vrot.slane %v3766, 4
    %v3781 = vadd.f32 %v1488, %v3773
    %v3782 = vadd.f32 %v1530, %v3774
    %v3783 = vadd.f32 %v1572, %v3775
    %v3784 = vadd.f32 %v1614, %v3776
    %v3785 = vpack.c.bf16 %v3710, %v3710
    %v3787 = vrot.slane %v3785, 2
    %3789 = vmatpush.bf16.msra.mxu0 %v2124
    %3790 = vmatpush.bf16.msra.mxu0 %v2120
    %3791 = vmatpush.bf16.msra.mxu0 %v2116
    %3792 = vmatpush.bf16.msra.mxu0 %v2112
    %3793 = vmatpush.bf16.msra.mxu0 %v2108
    %3794 = vmatpush.bf16.msra.mxu0 %v2104
    %3795 = vmatpush.bf16.msra.mxu0 %v2100
    %3796 = vmatpush.bf16.msra.mxu0 %v2096
    %3797 = vmatmul.bf16.gmra.mxu0 %v3787
    %v3798 = vpop.f32.mrf.mxu0
    %v3799 = vadd.f32 0.0, %v3798
    %v3800 = vpop.f32.mrf.mxu0
    %3801 = vdwg.mxu0
    %3802 = vmatpush.bf16.msra.mxu0 %v2125
    %3803 = vmatpush.bf16.msra.mxu0 %v2121
    %3804 = vmatpush.bf16.msra.mxu0 %v2117
    %3805 = vmatpush.bf16.msra.mxu0 %v2113
    %3806 = vmatpush.bf16.msra.mxu0 %v2109
    %3807 = vmatpush.bf16.msra.mxu0 %v2105
    %3808 = vmatpush.bf16.msra.mxu0 %v2101
    %3809 = vmatpush.bf16.msra.mxu0 %v2097
    %3810 = vmatmul.bf16.gmra.mxu0 %v3787
    %v3811 = vpop.f32.mrf.mxu0
    %v3812 = vadd.f32 0.0, %v3811
    %v3813 = vpop.f32.mrf.mxu0
    %3814 = vdwg.mxu0
    %3815 = vmatpush.bf16.msra.mxu0 %v2126
    %3816 = vmatpush.bf16.msra.mxu0 %v2122
    %3817 = vmatpush.bf16.msra.mxu0 %v2118
    %3818 = vmatpush.bf16.msra.mxu0 %v2114
    %3819 = vmatpush.bf16.msra.mxu0 %v2110
    %3820 = vmatpush.bf16.msra.mxu0 %v2106
    %3821 = vmatpush.bf16.msra.mxu0 %v2102
    %3822 = vmatpush.bf16.msra.mxu0 %v2098
    %3823 = vmatmul.bf16.gmra.mxu0 %v3787
    %v3824 = vpop.f32.mrf.mxu0
    %v3825 = vadd.f32 0.0, %v3824
    %v3826 = vpop.f32.mrf.mxu0
    %3827 = vdwg.mxu0
    %3828 = vmatpush.bf16.msra.mxu0 %v2127
    %3829 = vmatpush.bf16.msra.mxu0 %v2123
    %3830 = vmatpush.bf16.msra.mxu0 %v2119
    %3831 = vmatpush.bf16.msra.mxu0 %v2115
    %3832 = vmatpush.bf16.msra.mxu0 %v2111
    %3833 = vmatpush.bf16.msra.mxu0 %v2107
    %3834 = vmatpush.bf16.msra.mxu0 %v2103
    %3835 = vmatpush.bf16.msra.mxu0 %v2099
    %3836 = vmatmul.bf16.gmra.mxu0 %v3787
    %v3837 = vpop.f32.mrf.mxu0
    %v3838 = vadd.f32 0.0, %v3837
    %v3839 = vpop.f32.mrf.mxu0
    %3840 = vdwg.mxu0
    %v3845 = vrot.slane %v3799, 6
    %v3846 = vrot.slane %v3812, 6
    %v3847 = vrot.slane %v3825, 6
    %v3848 = vrot.slane %v3838, 6
    %v3853 = vadd.f32 %v1654, %v3845
    %v3854 = vadd.f32 %v1696, %v3846
    %v3855 = vadd.f32 %v1738, %v3847
    %v3856 = vadd.f32 %v1780, %v3848
    %v3857 = vxor.u32 %v3781, 2147483648
    %v3858 = vmul.f32 %v3857, 1.442695
    %v3859 = vpow.pop %v3858
    %v3860 = vadd.f32 %v3859, 1.0
    %v3861 = vrcp.pop %v3860
    %v3862 = vmul.f32 %v3860, %v3861
    %v3863 = vsub.f32 1.0, %v3862
    %v3864 = vmul.f32 %v3861, %v3863
    %v3865 = vadd.f32 %v3861, %v3864
    %vm3866 = vweird.f32 %v3860
    %vm3867 = vweird.f32 %v3861
    %vm3868 = vmor %vm3866, %vm3867
    %v3869 = vsel %vm3868, %v3861, %v3865
    %v3870 = vand.u32 2147483647, %v3860
    %vm3871 = vcmp.eq.f32.partialorder %v3870, 8.507059e+37
    %v3872 = vand.u32 %v3860, 2147483648
    %v3873 = vor.u32 1.1754944e-38, %v3872
    %v3874 = vsel %vm3871, %v3873, %v3869
    %v3875 = vmul.f32 1.0, %v3874
    %v3876 = vxor.u32 %v3782, 2147483648
    %v3877 = vmul.f32 %v3876, 1.442695
    %v3878 = vpow.pop %v3877
    %v3879 = vadd.f32 %v3878, 1.0
    %v3880 = vrcp.pop %v3879
    %v3881 = vmul.f32 %v3879, %v3880
    %v3882 = vsub.f32 1.0, %v3881
    %v3883 = vmul.f32 %v3880, %v3882
    %v3884 = vadd.f32 %v3880, %v3883
    %vm3885 = vweird.f32 %v3879
    %vm3886 = vweird.f32 %v3880
    %vm3887 = vmor %vm3885, %vm3886
    %v3888 = vsel %vm3887, %v3880, %v3884
    %v3889 = vand.u32 2147483647, %v3879
    %vm3890 = vcmp.eq.f32.partialorder %v3889, 8.507059e+37
    %v3891 = vand.u32 %v3879, 2147483648
    %v3892 = vor.u32 1.1754944e-38, %v3891
    %v3893 = vsel %vm3890, %v3892, %v3888
    %v3894 = vmul.f32 1.0, %v3893
    %v3895 = vtanh.pop %v3783
    %v3896 = vxor.u32 %v3784, 2147483648
    %v3897 = vmul.f32 %v3896, 1.442695
    %v3898 = vpow.pop %v3897
    %v3899 = vadd.f32 %v3898, 1.0
    %v3900 = vrcp.pop %v3899
    %v3901 = vmul.f32 %v3899, %v3900
    %v3902 = vsub.f32 1.0, %v3901
    %v3903 = vmul.f32 %v3900, %v3902
    %v3904 = vadd.f32 %v3900, %v3903
    %vm3905 = vweird.f32 %v3899
    %vm3906 = vweird.f32 %v3900
    %vm3907 = vmor %vm3905, %vm3906
    %v3908 = vsel %vm3907, %v3900, %v3904
    %v3909 = vand.u32 2147483647, %v3899
    %vm3910 = vcmp.eq.f32.partialorder %v3909, 8.507059e+37
    %v3911 = vand.u32 %v3899, 2147483648
    %v3912 = vor.u32 1.1754944e-38, %v3911
    %v3913 = vsel %vm3910, %v3912, %v3908
    %v3914 = vmul.f32 1.0, %v3913
    %v3916 = vrot.slane %v3642, 6
    %v3918 = vmul.f32 %v3894, %v3916
    %v3919 = vmul.f32 %v3875, %v3895
    %v3920 = vadd.f32 %v3918, %v3919
    %v3921 = vtanh.pop %v3920
    %v3922 = vmul.f32 %v3914, %v3921
    %v3923 = vxor.u32 %v3853, 2147483648
    %v3924 = vmul.f32 %v3923, 1.442695
    %v3925 = vpow.pop %v3924
    %v3926 = vadd.f32 %v3925, 1.0
    %v3927 = vrcp.pop %v3926
    %v3928 = vmul.f32 %v3926, %v3927
    %v3929 = vsub.f32 1.0, %v3928
    %v3930 = vmul.f32 %v3927, %v3929
    %v3931 = vadd.f32 %v3927, %v3930
    %vm3932 = vweird.f32 %v3926
    %vm3933 = vweird.f32 %v3927
    %vm3934 = vmor %vm3932, %vm3933
    %v3935 = vsel %vm3934, %v3927, %v3931
    %v3936 = vand.u32 2147483647, %v3926
    %vm3937 = vcmp.eq.f32.partialorder %v3936, 8.507059e+37
    %v3938 = vand.u32 %v3926, 2147483648
    %v3939 = vor.u32 1.1754944e-38, %v3938
    %v3940 = vsel %vm3937, %v3939, %v3935
    %v3941 = vmul.f32 1.0, %v3940
    %v3942 = vxor.u32 %v3854, 2147483648
    %v3943 = vmul.f32 %v3942, 1.442695
    %v3944 = vpow.pop %v3943
    %v3945 = vadd.f32 %v3944, 1.0
    %v3946 = vrcp.pop %v3945
    %v3947 = vmul.f32 %v3945, %v3946
    %v3948 = vsub.f32 1.0, %v3947
    %v3949 = vmul.f32 %v3946, %v3948
    %v3950 = vadd.f32 %v3946, %v3949
    %vm3951 = vweird.f32 %v3945
    %vm3952 = vweird.f32 %v3946
    %vm3953 = vmor %vm3951, %vm3952
    %v3954 = vsel %vm3953, %v3946, %v3950
    %v3955 = vand.u32 2147483647, %v3945
    %vm3956 = vcmp.eq.f32.partialorder %v3955, 8.507059e+37
    %v3957 = vand.u32 %v3945, 2147483648
    %v3958 = vor.u32 1.1754944e-38, %v3957
    %v3959 = vsel %vm3956, %v3958, %v3954
    %v3960 = vmul.f32 1.0, %v3959
    %v3961 = vtanh.pop %v3855
    %v3962 = vxor.u32 %v3856, 2147483648
    %v3963 = vmul.f32 %v3962, 1.442695
    %v3964 = vpow.pop %v3963
    %v3965 = vadd.f32 %v3964, 1.0
    %v3966 = vrcp.pop %v3965
    %v3967 = vmul.f32 %v3965, %v3966
    %v3968 = vsub.f32 1.0, %v3967
    %v3969 = vmul.f32 %v3966, %v3968
    %v3970 = vadd.f32 %v3966, %v3969
    %vm3971 = vweird.f32 %v3965
    %vm3972 = vweird.f32 %v3966
    %vm3973 = vmor %vm3971, %vm3972
    %v3974 = vsel %vm3973, %v3966, %v3970
    %v3975 = vand.u32 2147483647, %v3965
    %vm3976 = vcmp.eq.f32.partialorder %v3975, 8.507059e+37
    %v3977 = vand.u32 %v3965, 2147483648
    %v3978 = vor.u32 1.1754944e-38, %v3977
    %v3979 = vsel %vm3976, %v3978, %v3974
    %v3980 = vmul.f32 1.0, %v3979
    %v3982 = vrot.slane %v3708, 2
    %v3984 = vmul.f32 %v3960, %v3982
    %v3985 = vmul.f32 %v3941, %v3961
    %v3986 = vadd.f32 %v3984, %v3985
    %v3987 = vtanh.pop %v3986
    %v3988 = vmul.f32 %v3980, %v3987
    %3989 = vst [vmem:[#allocation2 + $0x10] sm:$0x30] %v3922
    %3990 = vst [vmem:[#allocation2 + $0x8] sm:$0xc] %v3988
    %v3991 = vpack.c.bf16 %v3922, %v3922
    %v3993 = vrot.slane %v3991, 2
    %3995 = vmatpush.bf16.msra.mxu0 %v1908
    %3996 = vmatpush.bf16.msra.mxu0 %v1904
    %3997 = vmatpush.bf16.msra.mxu0 %v1900
    %3998 = vmatpush.bf16.msra.mxu0 %v1896
    %3999 = vmatpush.bf16.msra.mxu0 %v1892
    %4000 = vmatpush.bf16.msra.mxu0 %v1888
    %4001 = vmatpush.bf16.msra.mxu0 %v1884
    %4002 = vmatpush.bf16.msra.mxu0 %v1880
    %4003 = vmatmul.bf16.gmra.mxu0 %v3993
    %v4004 = vpop.f32.mrf.mxu0
    %v4005 = vadd.f32 0.0, %v4004
    %v4006 = vpop.f32.mrf.mxu0
    %4007 = vdwg.mxu0
    %4008 = vmatpush.bf16.msra.mxu0 %v1909
    %4009 = vmatpush.bf16.msra.mxu0 %v1905
    %4010 = vmatpush.bf16.msra.mxu0 %v1901
    %4011 = vmatpush.bf16.msra.mxu0 %v1897
    %4012 = vmatpush.bf16.msra.mxu0 %v1893
    %4013 = vmatpush.bf16.msra.mxu0 %v1889
    %4014 = vmatpush.bf16.msra.mxu0 %v1885
    %4015 = vmatpush.bf16.msra.mxu0 %v1881
    %4016 = vmatmul.bf16.gmra.mxu0 %v3993
    %v4017 = vpop.f32.mrf.mxu0
    %v4018 = vadd.f32 0.0, %v4017
    %v4019 = vpop.f32.mrf.mxu0
    %4020 = vdwg.mxu0
    %4021 = vmatpush.bf16.msra.mxu0 %v1910
    %4022 = vmatpush.bf16.msra.mxu0 %v1906
    %4023 = vmatpush.bf16.msra.mxu0 %v1902
    %4024 = vmatpush.bf16.msra.mxu0 %v1898
    %4025 = vmatpush.bf16.msra.mxu0 %v1894
    %4026 = vmatpush.bf16.msra.mxu0 %v1890
    %4027 = vmatpush.bf16.msra.mxu0 %v1886
    %4028 = vmatpush.bf16.msra.mxu0 %v1882
    %4029 = vmatmul.bf16.gmra.mxu0 %v3993
    %v4030 = vpop.f32.mrf.mxu0
    %v4031 = vadd.f32 0.0, %v4030
    %v4032 = vpop.f32.mrf.mxu0
    %4033 = vdwg.mxu0
    %4034 = vmatpush.bf16.msra.mxu0 %v1911
    %4035 = vmatpush.bf16.msra.mxu0 %v1907
    %4036 = vmatpush.bf16.msra.mxu0 %v1903
    %4037 = vmatpush.bf16.msra.mxu0 %v1899
    %4038 = vmatpush.bf16.msra.mxu0 %v1895
    %4039 = vmatpush.bf16.msra.mxu0 %v1891
    %4040 = vmatpush.bf16.msra.mxu0 %v1887
    %4041 = vmatpush.bf16.msra.mxu0 %v1883
    %4042 = vmatmul.bf16.gmra.mxu0 %v3993
    %v4043 = vpop.f32.mrf.mxu0
    %v4044 = vadd.f32 0.0, %v4043
    %v4045 = vpop.f32.mrf.mxu0
    %4046 = vdwg.mxu0
    %v4051 = vrot.slane %v4005, 2
    %v4052 = vrot.slane %v4018, 2
    %v4053 = vrot.slane %v4031, 2
    %v4054 = vrot.slane %v4044, 2
    %v4059 = vadd.f32 %v1488, %v4051
    %v4060 = vadd.f32 %v1530, %v4052
    %v4061 = vadd.f32 %v1572, %v4053
    %v4062 = vadd.f32 %v1614, %v4054
    %v4063 = vpack.c.bf16 %v3988, %v3988
    %v4065 = vrot.slane %v4063, 1
    %4067 = vmatpush.bf16.msra.mxu0 %v2124
    %4068 = vmatpush.bf16.msra.mxu0 %v2120
    %4069 = vmatpush.bf16.msra.mxu0 %v2116
    %4070 = vmatpush.bf16.msra.mxu0 %v2112
    %4071 = vmatpush.bf16.msra.mxu0 %v2108
    %4072 = vmatpush.bf16.msra.mxu0 %v2104
    %4073 = vmatpush.bf16.msra.mxu0 %v2100
    %4074 = vmatpush.bf16.msra.mxu0 %v2096
    %4075 = vmatmul.bf16.gmra.mxu0 %v4065
    %v4076 = vpop.f32.mrf.mxu0
    %v4077 = vadd.f32 0.0, %v4076
    %v4078 = vpop.f32.mrf.mxu0
    %4079 = vdwg.mxu0
    %4080 = vmatpush.bf16.msra.mxu0 %v2125
    %4081 = vmatpush.bf16.msra.mxu0 %v2121
    %4082 = vmatpush.bf16.msra.mxu0 %v2117
    %4083 = vmatpush.bf16.msra.mxu0 %v2113
    %4084 = vmatpush.bf16.msra.mxu0 %v2109
    %4085 = vmatpush.bf16.msra.mxu0 %v2105
    %4086 = vmatpush.bf16.msra.mxu0 %v2101
    %4087 = vmatpush.bf16.msra.mxu0 %v2097
    %4088 = vmatmul.bf16.gmra.mxu0 %v4065
    %v4089 = vpop.f32.mrf.mxu0
    %v4090 = vadd.f32 0.0, %v4089
    %v4091 = vpop.f32.mrf.mxu0
    %4092 = vdwg.mxu0
    %4093 = vmatpush.bf16.msra.mxu0 %v2126
    %4094 = vmatpush.bf16.msra.mxu0 %v2122
    %4095 = vmatpush.bf16.msra.mxu0 %v2118
    %4096 = vmatpush.bf16.msra.mxu0 %v2114
    %4097 = vmatpush.bf16.msra.mxu0 %v2110
    %4098 = vmatpush.bf16.msra.mxu0 %v2106
    %4099 = vmatpush.bf16.msra.mxu0 %v2102
    %4100 = vmatpush.bf16.msra.mxu0 %v2098
    %4101 = vmatmul.bf16.gmra.mxu0 %v4065
    %v4102 = vpop.f32.mrf.mxu0
    %v4103 = vadd.f32 0.0, %v4102
    %v4104 = vpop.f32.mrf.mxu0
    %4105 = vdwg.mxu0
    %4106 = vmatpush.bf16.msra.mxu0 %v2127
    %4107 = vmatpush.bf16.msra.mxu0 %v2123
    %4108 = vmatpush.bf16.msra.mxu0 %v2119
    %4109 = vmatpush.bf16.msra.mxu0 %v2115
    %4110 = vmatpush.bf16.msra.mxu0 %v2111
    %4111 = vmatpush.bf16.msra.mxu0 %v2107
    %4112 = vmatpush.bf16.msra.mxu0 %v2103
    %4113 = vmatpush.bf16.msra.mxu0 %v2099
    %4114 = vmatmul.bf16.gmra.mxu0 %v4065
    %v4115 = vpop.f32.mrf.mxu0
    %v4116 = vadd.f32 0.0, %v4115
    %v4117 = vpop.f32.mrf.mxu0
    %4118 = vdwg.mxu0
    %v4119 = vadd.f32 %v1654, %v4077
    %v4120 = vadd.f32 %v1696, %v4090
    %v4121 = vadd.f32 %v1738, %v4103
    %v4122 = vadd.f32 %v1780, %v4116
    %v4123 = vxor.u32 %v4059, 2147483648
    %v4124 = vmul.f32 %v4123, 1.442695
    %v4125 = vpow.pop %v4124
    %v4126 = vadd.f32 %v4125, 1.0
    %v4127 = vrcp.pop %v4126
    %v4128 = vmul.f32 %v4126, %v4127
    %v4129 = vsub.f32 1.0, %v4128
    %v4130 = vmul.f32 %v4127, %v4129
    %v4131 = vadd.f32 %v4127, %v4130
    %vm4132 = vweird.f32 %v4126
    %vm4133 = vweird.f32 %v4127
    %vm4134 = vmor %vm4132, %vm4133
    %v4135 = vsel %vm4134, %v4127, %v4131
    %v4136 = vand.u32 2147483647, %v4126
    %vm4137 = vcmp.eq.f32.partialorder %v4136, 8.507059e+37
    %v4138 = vand.u32 %v4126, 2147483648
    %v4139 = vor.u32 1.1754944e-38, %v4138
    %v4140 = vsel %vm4137, %v4139, %v4135
    %v4141 = vmul.f32 1.0, %v4140
    %v4142 = vxor.u32 %v4060, 2147483648
    %v4143 = vmul.f32 %v4142, 1.442695
    %v4144 = vpow.pop %v4143
    %v4145 = vadd.f32 %v4144, 1.0
    %v4146 = vrcp.pop %v4145
    %v4147 = vmul.f32 %v4145, %v4146
    %v4148 = vsub.f32 1.0, %v4147
    %v4149 = vmul.f32 %v4146, %v4148
    %v4150 = vadd.f32 %v4146, %v4149
    %vm4151 = vweird.f32 %v4145
    %vm4152 = vweird.f32 %v4146
    %vm4153 = vmor %vm4151, %vm4152
    %v4154 = vsel %vm4153, %v4146, %v4150
    %v4155 = vand.u32 2147483647, %v4145
    %vm4156 = vcmp.eq.f32.partialorder %v4155, 8.507059e+37
    %v4157 = vand.u32 %v4145, 2147483648
    %v4158 = vor.u32 1.1754944e-38, %v4157
    %v4159 = vsel %vm4156, %v4158, %v4154
    %v4160 = vmul.f32 1.0, %v4159
    %v4161 = vtanh.pop %v4061
    %v4162 = vxor.u32 %v4062, 2147483648
    %v4163 = vmul.f32 %v4162, 1.442695
    %v4164 = vpow.pop %v4163
    %v4165 = vadd.f32 %v4164, 1.0
    %v4166 = vrcp.pop %v4165
    %v4167 = vmul.f32 %v4165, %v4166
    %v4168 = vsub.f32 1.0, %v4167
    %v4169 = vmul.f32 %v4166, %v4168
    %v4170 = vadd.f32 %v4166, %v4169
    %vm4171 = vweird.f32 %v4165
    %vm4172 = vweird.f32 %v4166
    %vm4173 = vmor %vm4171, %vm4172
    %v4174 = vsel %vm4173, %v4166, %v4170
    %v4175 = vand.u32 2147483647, %v4165
    %vm4176 = vcmp.eq.f32.partialorder %v4175, 8.507059e+37
    %v4177 = vand.u32 %v4165, 2147483648
    %v4178 = vor.u32 1.1754944e-38, %v4177
    %v4179 = vsel %vm4176, %v4178, %v4174
    %v4180 = vmul.f32 1.0, %v4179
    %v4182 = vrot.slane %v3920, 6
    %v4184 = vmul.f32 %v4160, %v4182
    %v4185 = vmul.f32 %v4141, %v4161
    %v4186 = vadd.f32 %v4184, %v4185
    %v4187 = vtanh.pop %v4186
    %v4188 = vmul.f32 %v4180, %v4187
    %v4189 = vxor.u32 %v4119, 2147483648
    %v4190 = vmul.f32 %v4189, 1.442695
    %v4191 = vpow.pop %v4190
    %v4192 = vadd.f32 %v4191, 1.0
    %v4193 = vrcp.pop %v4192
    %v4194 = vmul.f32 %v4192, %v4193
    %v4195 = vsub.f32 1.0, %v4194
    %v4196 = vmul.f32 %v4193, %v4195
    %v4197 = vadd.f32 %v4193, %v4196
    %vm4198 = vweird.f32 %v4192
    %vm4199 = vweird.f32 %v4193
    %vm4200 = vmor %vm4198, %vm4199
    %v4201 = vsel %vm4200, %v4193, %v4197
    %v4202 = vand.u32 2147483647, %v4192
    %vm4203 = vcmp.eq.f32.partialorder %v4202, 8.507059e+37
    %v4204 = vand.u32 %v4192, 2147483648
    %v4205 = vor.u32 1.1754944e-38, %v4204
    %v4206 = vsel %vm4203, %v4205, %v4201
    %v4207 = vmul.f32 1.0, %v4206
    %v4208 = vxor.u32 %v4120, 2147483648
    %v4209 = vmul.f32 %v4208, 1.442695
    %v4210 = vpow.pop %v4209
    %v4211 = vadd.f32 %v4210, 1.0
    %v4212 = vrcp.pop %v4211
    %v4213 = vmul.f32 %v4211, %v4212
    %v4214 = vsub.f32 1.0, %v4213
    %v4215 = vmul.f32 %v4212, %v4214
    %v4216 = vadd.f32 %v4212, %v4215
    %vm4217 = vweird.f32 %v4211
    %vm4218 = vweird.f32 %v4212
    %vm4219 = vmor %vm4217, %vm4218
    %v4220 = vsel %vm4219, %v4212, %v4216
    %v4221 = vand.u32 2147483647, %v4211
    %vm4222 = vcmp.eq.f32.partialorder %v4221, 8.507059e+37
    %v4223 = vand.u32 %v4211, 2147483648
    %v4224 = vor.u32 1.1754944e-38, %v4223
    %v4225 = vsel %vm4222, %v4224, %v4220
    %v4226 = vmul.f32 1.0, %v4225
    %v4227 = vtanh.pop %v4121
    %v4228 = vxor.u32 %v4122, 2147483648
    %v4229 = vmul.f32 %v4228, 1.442695
    %v4230 = vpow.pop %v4229
    %v4231 = vadd.f32 %v4230, 1.0
    %v4232 = vrcp.pop %v4231
    %v4233 = vmul.f32 %v4231, %v4232
    %v4234 = vsub.f32 1.0, %v4233
    %v4235 = vmul.f32 %v4232, %v4234
    %v4236 = vadd.f32 %v4232, %v4235
    %vm4237 = vweird.f32 %v4231
    %vm4238 = vweird.f32 %v4232
    %vm4239 = vmor %vm4237, %vm4238
    %v4240 = vsel %vm4239, %v4232, %v4236
    %v4241 = vand.u32 2147483647, %v4231
    %vm4242 = vcmp.eq.f32.partialorder %v4241, 8.507059e+37
    %v4243 = vand.u32 %v4231, 2147483648
    %v4244 = vor.u32 1.1754944e-38, %v4243
    %v4245 = vsel %vm4242, %v4244, %v4240
    %v4246 = vmul.f32 1.0, %v4245
    %v4248 = vrot.slane %v3986, 2
    %v4250 = vmul.f32 %v4226, %v4248
    %v4251 = vmul.f32 %v4207, %v4227
    %v4252 = vadd.f32 %v4250, %v4251
    %v4253 = vtanh.pop %v4252
    %v4254 = vmul.f32 %v4246, %v4253
    %4255 = vst [vmem:[#allocation2 + $0x10] sm:$0xc0] %v4188
    %4256 = vst [vmem:[#allocation2 + $0x8] sm:$0x3] %v4254
    %v4257 = vld [vmem:[#allocation2] sm:$0xff]
    %v4258 = vld [vmem:[#allocation2 + $0x8] sm:$0xff]
    %v4259 = vld [vmem:[#allocation2 + $0x10] sm:$0xff]
    %v4260 = vld [vmem:[#allocation2 + $0x18] sm:$0xff]
    %v4261 = vpack.c.bf16 %v4259, %v4257
    %v4262 = vpack.c.bf16 %v4260, %v4258
    %v4263 = vld [vmem:[#allocation9] sm:$0xff]
    %v4264 = vld [vmem:[#allocation9 + $0x8] sm:$0xff]
    %v4265 = vld [vmem:[#allocation9 + $0x10] sm:$0xff]
    %v4266 = vld [vmem:[#allocation9 + $0x18] sm:$0xff]
    %v4267 = vld [vmem:[#allocation9 + $0x20] sm:$0xff]
    %v4268 = vld [vmem:[#allocation9 + $0x28] sm:$0xff]
    %v4269 = vld [vmem:[#allocation9 + $0x30] sm:$0xff]
    %v4270 = vld [vmem:[#allocation9 + $0x38] sm:$0xff]
    %v4271 = vld [vmem:[#allocation9 + $0x40] sm:$0xff]
    %v4272 = vld [vmem:[#allocation9 + $0x48] sm:$0xff]
    %v4273 = vld [vmem:[#allocation9 + $0x50] sm:$0xff]
    %v4274 = vld [vmem:[#allocation9 + $0x58] sm:$0xff]
    %v4275 = vld [vmem:[#allocation9 + $0x60] sm:$0xff]
    %v4276 = vld [vmem:[#allocation9 + $0x68] sm:$0xff]
    %v4277 = vld [vmem:[#allocation9 + $0x70] sm:$0xff]
    %v4278 = vld [vmem:[#allocation9 + $0x78] sm:$0xff]
    %v4279 = vld [vmem:[#allocation9 + $0x80] sm:$0xff]
    %v4280 = vld [vmem:[#allocation9 + $0x88] sm:$0xff]
    %v4281 = vld [vmem:[#allocation9 + $0x90] sm:$0xff]
    %v4282 = vld [vmem:[#allocation9 + $0x98] sm:$0xff]
    %v4283 = vld [vmem:[#allocation9 + $0xa0] sm:$0xff]
    %v4284 = vld [vmem:[#allocation9 + $0xa8] sm:$0xff]
    %v4285 = vld [vmem:[#allocation9 + $0xb0] sm:$0xff]
    %v4286 = vld [vmem:[#allocation9 + $0xb8] sm:$0xff]
    %v4287 = vld [vmem:[#allocation9 + $0xc0] sm:$0xff]
    %v4288 = vld [vmem:[#allocation9 + $0xc8] sm:$0xff]
    %v4289 = vld [vmem:[#allocation9 + $0xd0] sm:$0xff]
    %v4290 = vld [vmem:[#allocation9 + $0xd8] sm:$0xff]
    %v4291 = vld [vmem:[#allocation9 + $0xe0] sm:$0xff]
    %v4292 = vld [vmem:[#allocation9 + $0xe8] sm:$0xff]
    %v4293 = vld [vmem:[#allocation9 + $0xf0] sm:$0xff]
    %v4294 = vld [vmem:[#allocation9 + $0xf8] sm:$0xff]
    %v4295 = vld [vmem:[#allocation9 + $0x100] sm:$0xff]
    %v4296 = vld [vmem:[#allocation9 + $0x108] sm:$0xff]
    %v4297 = vld [vmem:[#allocation9 + $0x110] sm:$0xff]
    %v4298 = vld [vmem:[#allocation9 + $0x118] sm:$0xff]
    %v4299 = vld [vmem:[#allocation9 + $0x120] sm:$0xff]
    %v4300 = vld [vmem:[#allocation9 + $0x128] sm:$0xff]
    %v4301 = vld [vmem:[#allocation9 + $0x130] sm:$0xff]
    %v4302 = vld [vmem:[#allocation9 + $0x138] sm:$0xff]
    %v4303 = vld [vmem:[#allocation9 + $0x140] sm:$0xff]
    %v4304 = vld [vmem:[#allocation9 + $0x148] sm:$0xff]
    %v4305 = vld [vmem:[#allocation9 + $0x150] sm:$0xff]
    %v4306 = vld [vmem:[#allocation9 + $0x158] sm:$0xff]
    %v4307 = vld [vmem:[#allocation9 + $0x160] sm:$0xff]
    %v4308 = vld [vmem:[#allocation9 + $0x168] sm:$0xff]
    %v4309 = vld [vmem:[#allocation9 + $0x170] sm:$0xff]
    %v4310 = vld [vmem:[#allocation9 + $0x178] sm:$0xff]
    %v4311 = vld [vmem:[#allocation9 + $0x180] sm:$0xff]
    %v4312 = vld [vmem:[#allocation9 + $0x188] sm:$0xff]
    %v4313 = vld [vmem:[#allocation9 + $0x190] sm:$0xff]
    %v4314 = vld [vmem:[#allocation9 + $0x198] sm:$0xff]
    %v4315 = vld [vmem:[#allocation9 + $0x1a0] sm:$0xff]
    %v4316 = vld [vmem:[#allocation9 + $0x1a8] sm:$0xff]
    %v4317 = vld [vmem:[#allocation9 + $0x1b0] sm:$0xff]
    %v4318 = vld [vmem:[#allocation9 + $0x1b8] sm:$0xff]
    %v4319 = vld [vmem:[#allocation9 + $0x1c0] sm:$0xff]
    %v4320 = vld [vmem:[#allocation9 + $0x1c8] sm:$0xff]
    %v4321 = vld [vmem:[#allocation9 + $0x1d0] sm:$0xff]
    %v4322 = vld [vmem:[#allocation9 + $0x1d8] sm:$0xff]
    %v4323 = vld [vmem:[#allocation9 + $0x1e0] sm:$0xff]
    %v4324 = vld [vmem:[#allocation9 + $0x1e8] sm:$0xff]
    %v4325 = vld [vmem:[#allocation9 + $0x1f0] sm:$0xff]
    %v4326 = vld [vmem:[#allocation9 + $0x1f8] sm:$0xff]
    %v4327 = vld [vmem:[#allocation9 + $0x200] sm:$0xff]
    %v4328 = vld [vmem:[#allocation9 + $0x208] sm:$0xff]
    %v4329 = vld [vmem:[#allocation9 + $0x210] sm:$0xff]
    %v4330 = vld [vmem:[#allocation9 + $0x218] sm:$0xff]
    %v4331 = vld [vmem:[#allocation9 + $0x220] sm:$0xff]
    %v4332 = vld [vmem:[#allocation9 + $0x228] sm:$0xff]
    %v4333 = vld [vmem:[#allocation9 + $0x230] sm:$0xff]
    %v4334 = vld [vmem:[#allocation9 + $0x238] sm:$0xff]
    %v4335 = vld [vmem:[#allocation9 + $0x240] sm:$0xff]
    %v4336 = vld [vmem:[#allocation9 + $0x248] sm:$0xff]
    %v4337 = vld [vmem:[#allocation9 + $0x250] sm:$0xff]
    %v4338 = vld [vmem:[#allocation9 + $0x258] sm:$0xff]
    %v4339 = vld [vmem:[#allocation9 + $0x260] sm:$0xff]
    %v4340 = vld [vmem:[#allocation9 + $0x268] sm:$0xff]
    %v4341 = vld [vmem:[#allocation9 + $0x270] sm:$0xff]
    %v4342 = vld [vmem:[#allocation9 + $0x278] sm:$0xff]
    %v4343 = vld [vmem:[#allocation9 + $0x280] sm:$0xff]
    %v4344 = vld [vmem:[#allocation9 + $0x288] sm:$0xff]
    %v4345 = vld [vmem:[#allocation9 + $0x290] sm:$0xff]
    %v4346 = vld [vmem:[#allocation9 + $0x298] sm:$0xff]
    %v4347 = vld [vmem:[#allocation9 + $0x2a0] sm:$0xff]
    %v4348 = vld [vmem:[#allocation9 + $0x2a8] sm:$0xff]
    %v4349 = vld [vmem:[#allocation9 + $0x2b0] sm:$0xff]
    %v4350 = vld [vmem:[#allocation9 + $0x2b8] sm:$0xff]
    %v4351 = vld [vmem:[#allocation9 + $0x2c0] sm:$0xff]
    %v4352 = vld [vmem:[#allocation9 + $0x2c8] sm:$0xff]
    %v4353 = vld [vmem:[#allocation9 + $0x2d0] sm:$0xff]
    %v4354 = vld [vmem:[#allocation9 + $0x2d8] sm:$0xff]
    %v4355 = vld [vmem:[#allocation9 + $0x2e0] sm:$0xff]
    %v4356 = vld [vmem:[#allocation9 + $0x2e8] sm:$0xff]
    %v4357 = vld [vmem:[#allocation9 + $0x2f0] sm:$0xff]
    %v4358 = vld [vmem:[#allocation9 + $0x2f8] sm:$0xff]
    %v4359 = vld [vmem:[#allocation9 + $0x300] sm:$0xff]
    %v4360 = vld [vmem:[#allocation9 + $0x308] sm:$0xff]
    %v4361 = vld [vmem:[#allocation9 + $0x310] sm:$0xff]
    %v4362 = vld [vmem:[#allocation9 + $0x318] sm:$0xff]
    %v4363 = vld [vmem:[#allocation9 + $0x320] sm:$0xff]
    %v4364 = vld [vmem:[#allocation9 + $0x328] sm:$0xff]
    %v4365 = vld [vmem:[#allocation9 + $0x330] sm:$0xff]
    %v4366 = vld [vmem:[#allocation9 + $0x338] sm:$0xff]
    %v4367 = vld [vmem:[#allocation9 + $0x340] sm:$0xff]
    %v4368 = vld [vmem:[#allocation9 + $0x348] sm:$0xff]
    %v4369 = vld [vmem:[#allocation9 + $0x350] sm:$0xff]
    %v4370 = vld [vmem:[#allocation9 + $0x358] sm:$0xff]
    %v4371 = vld [vmem:[#allocation9 + $0x360] sm:$0xff]
    %v4372 = vld [vmem:[#allocation9 + $0x368] sm:$0xff]
    %v4373 = vld [vmem:[#allocation9 + $0x370] sm:$0xff]
    %v4374 = vld [vmem:[#allocation9 + $0x378] sm:$0xff]
    %v4375 = vld [vmem:[#allocation9 + $0x380] sm:$0xff]
    %v4376 = vld [vmem:[#allocation9 + $0x388] sm:$0xff]
    %v4377 = vld [vmem:[#allocation9 + $0x390] sm:$0xff]
    %v4378 = vld [vmem:[#allocation9 + $0x398] sm:$0xff]
    %v4379 = vld [vmem:[#allocation9 + $0x3a0] sm:$0xff]
    %v4380 = vld [vmem:[#allocation9 + $0x3a8] sm:$0xff]
    %v4381 = vld [vmem:[#allocation9 + $0x3b0] sm:$0xff]
    %v4382 = vld [vmem:[#allocation9 + $0x3b8] sm:$0xff]
    %v4383 = vld [vmem:[#allocation9 + $0x3c0] sm:$0xff]
    %v4384 = vld [vmem:[#allocation9 + $0x3c8] sm:$0xff]
    %v4385 = vld [vmem:[#allocation9 + $0x3d0] sm:$0xff]
    %v4386 = vld [vmem:[#allocation9 + $0x3d8] sm:$0xff]
    %v4387 = vld [vmem:[#allocation9 + $0x3e0] sm:$0xff]
    %v4388 = vld [vmem:[#allocation9 + $0x3e8] sm:$0xff]
    %v4389 = vld [vmem:[#allocation9 + $0x3f0] sm:$0xff]
    %v4390 = vld [vmem:[#allocation9 + $0x3f8] sm:$0xff]
    %v4391 = vld [vmem:[#allocation11] sm:$0xff]
    %v4392 = vld [vmem:[#allocation11 + $0x8] sm:$0xff]
    %v4393 = vld [vmem:[#allocation11 + $0x10] sm:$0xff]
    %v4394 = vld [vmem:[#allocation11 + $0x18] sm:$0xff]
    %v4395 = vld [vmem:[#allocation11 + $0x20] sm:$0xff]
    %v4396 = vld [vmem:[#allocation11 + $0x28] sm:$0xff]
    %v4397 = vld [vmem:[#allocation11 + $0x30] sm:$0xff]
    %v4398 = vld [vmem:[#allocation11 + $0x38] sm:$0xff]
    %v4399 = vld [vmem:[#allocation11 + $0x40] sm:$0xff]
    %v4400 = vld [vmem:[#allocation11 + $0x48] sm:$0xff]
    %v4401 = vld [vmem:[#allocation11 + $0x50] sm:$0xff]
    %v4402 = vld [vmem:[#allocation11 + $0x58] sm:$0xff]
    %v4403 = vld [vmem:[#allocation11 + $0x60] sm:$0xff]
    %v4404 = vld [vmem:[#allocation11 + $0x68] sm:$0xff]
    %v4405 = vld [vmem:[#allocation11 + $0x70] sm:$0xff]
    %v4406 = vld [vmem:[#allocation11 + $0x78] sm:$0xff]
    %v4407 = vld [vmem:[#allocation11 + $0x80] sm:$0xff]
    %v4408 = vld [vmem:[#allocation11 + $0x88] sm:$0xff]
    %v4409 = vld [vmem:[#allocation11 + $0x90] sm:$0xff]
    %v4410 = vld [vmem:[#allocation11 + $0x98] sm:$0xff]
    %v4411 = vld [vmem:[#allocation11 + $0xa0] sm:$0xff]
    %v4412 = vld [vmem:[#allocation11 + $0xa8] sm:$0xff]
    %v4413 = vld [vmem:[#allocation11 + $0xb0] sm:$0xff]
    %v4414 = vld [vmem:[#allocation11 + $0xb8] sm:$0xff]
    %v4415 = vld [vmem:[#allocation11 + $0xc0] sm:$0xff]
    %v4416 = vld [vmem:[#allocation11 + $0xc8] sm:$0xff]
    %v4417 = vld [vmem:[#allocation11 + $0xd0] sm:$0xff]
    %v4418 = vld [vmem:[#allocation11 + $0xd8] sm:$0xff]
    %v4419 = vld [vmem:[#allocation11 + $0xe0] sm:$0xff]
    %v4420 = vld [vmem:[#allocation11 + $0xe8] sm:$0xff]
    %v4421 = vld [vmem:[#allocation11 + $0xf0] sm:$0xff]
    %v4422 = vld [vmem:[#allocation11 + $0xf8] sm:$0xff]
    %v4423 = vld [vmem:[#allocation12] sm:$0xff]
    %v4424 = vld [vmem:[#allocation12 + $0x8] sm:$0xff]
    %v4425 = vld [vmem:[#allocation12 + $0x10] sm:$0xff]
    %v4426 = vld [vmem:[#allocation12 + $0x18] sm:$0xff]
    %v4427 = vld [vmem:[#allocation12 + $0x20] sm:$0xff]
    %v4428 = vld [vmem:[#allocation12 + $0x28] sm:$0xff]
    %v4429 = vld [vmem:[#allocation12 + $0x30] sm:$0xff]
    %v4430 = vld [vmem:[#allocation12 + $0x38] sm:$0xff]
    %v4431 = vld [vmem:[#allocation12 + $0x40] sm:$0xff]
    %v4432 = vld [vmem:[#allocation12 + $0x48] sm:$0xff]
    %v4433 = vld [vmem:[#allocation12 + $0x50] sm:$0xff]
    %v4434 = vld [vmem:[#allocation12 + $0x58] sm:$0xff]
    %v4435 = vld [vmem:[#allocation12 + $0x60] sm:$0xff]
    %v4436 = vld [vmem:[#allocation12 + $0x68] sm:$0xff]
    %v4437 = vld [vmem:[#allocation12 + $0x70] sm:$0xff]
    %v4438 = vld [vmem:[#allocation12 + $0x78] sm:$0xff]
    %v4439 = vld [vmem:[#allocation12 + $0x80] sm:$0xff]
    %v4440 = vld [vmem:[#allocation12 + $0x88] sm:$0xff]
    %v4441 = vld [vmem:[#allocation12 + $0x90] sm:$0xff]
    %v4442 = vld [vmem:[#allocation12 + $0x98] sm:$0xff]
    %v4443 = vld [vmem:[#allocation12 + $0xa0] sm:$0xff]
    %v4444 = vld [vmem:[#allocation12 + $0xa8] sm:$0xff]
    %v4445 = vld [vmem:[#allocation12 + $0xb0] sm:$0xff]
    %v4446 = vld [vmem:[#allocation12 + $0xb8] sm:$0xff]
    %v4447 = vld [vmem:[#allocation12 + $0xc0] sm:$0xff]
    %v4448 = vld [vmem:[#allocation12 + $0xc8] sm:$0xff]
    %v4449 = vld [vmem:[#allocation12 + $0xd0] sm:$0xff]
    %v4450 = vld [vmem:[#allocation12 + $0xd8] sm:$0xff]
    %v4451 = vld [vmem:[#allocation12 + $0xe0] sm:$0xff]
    %v4452 = vld [vmem:[#allocation12 + $0xe8] sm:$0xff]
    %v4453 = vld [vmem:[#allocation12 + $0xf0] sm:$0xff]
    %v4454 = vld [vmem:[#allocation12 + $0xf8] sm:$0xff]
    %v4455 = vld [vmem:[%s8] sm:$0xff]
    %v4457 = vperm.slane %v4455, 0
    %v4458 = vperm.slane %v4455, 1
    %v4459 = vperm.slane %v4455, 2
    %v4460 = vperm.slane %v4455, 3
    %v4461 = vperm.slane %v4455, 4
    %v4462 = vperm.slane %v4455, 5
    %v4463 = vperm.slane %v4455, 6
    %v4464 = vperm.slane %v4455, 7
    %v4601 = vunpack.c.l.b16 %v4263
    %v4602 = vunpack.c.h.b16 %v4263
    %v4603 = vunpack.c.l.b16 %v4264
    %v4604 = vunpack.c.h.b16 %v4264
    %v4605 = vunpack.c.l.b16 %v4265
    %v4606 = vunpack.c.h.b16 %v4265
    %v4607 = vunpack.c.l.b16 %v4266
    %v4608 = vunpack.c.h.b16 %v4266
    %v4609 = vunpack.c.l.b16 %v4267
    %v4610 = vunpack.c.h.b16 %v4267
    %v4611 = vunpack.c.l.b16 %v4268
    %v4612 = vunpack.c.h.b16 %v4268
    %v4613 = vunpack.c.l.b16 %v4269
    %v4614 = vunpack.c.h.b16 %v4269
    %v4615 = vunpack.c.l.b16 %v4270
    %v4616 = vunpack.c.h.b16 %v4270
    %v4617 = vunpack.c.l.b16 %v4271
    %v4618 = vunpack.c.h.b16 %v4271
    %v4619 = vunpack.c.l.b16 %v4272
    %v4620 = vunpack.c.h.b16 %v4272
    %v4621 = vunpack.c.l.b16 %v4273
    %v4622 = vunpack.c.h.b16 %v4273
    %v4623 = vunpack.c.l.b16 %v4274
    %v4624 = vunpack.c.h.b16 %v4274
    %v4625 = vunpack.c.l.b16 %v4275
    %v4626 = vunpack.c.h.b16 %v4275
    %v4627 = vunpack.c.l.b16 %v4276
    %v4628 = vunpack.c.h.b16 %v4276
    %v4629 = vunpack.c.l.b16 %v4277
    %v4630 = vunpack.c.h.b16 %v4277
    %v4631 = vunpack.c.l.b16 %v4278
    %v4632 = vunpack.c.h.b16 %v4278
    %v4633 = vunpack.c.l.b16 %v4279
    %v4634 = vunpack.c.h.b16 %v4279
    %v4635 = vunpack.c.l.b16 %v4280
    %v4636 = vunpack.c.h.b16 %v4280
    %v4637 = vunpack.c.l.b16 %v4281
    %v4638 = vunpack.c.h.b16 %v4281
    %v4639 = vunpack.c.l.b16 %v4282
    %v4640 = vunpack.c.h.b16 %v4282
    %v4641 = vunpack.c.l.b16 %v4283
    %v4642 = vunpack.c.h.b16 %v4283
    %v4643 = vunpack.c.l.b16 %v4284
    %v4644 = vunpack.c.h.b16 %v4284
    %v4645 = vunpack.c.l.b16 %v4285
    %v4646 = vunpack.c.h.b16 %v4285
    %v4647 = vunpack.c.l.b16 %v4286
    %v4648 = vunpack.c.h.b16 %v4286
    %v4649 = vunpack.c.l.b16 %v4287
    %v4650 = vunpack.c.h.b16 %v4287
    %v4651 = vunpack.c.l.b16 %v4288
    %v4652 = vunpack.c.h.b16 %v4288
    %v4653 = vunpack.c.l.b16 %v4289
    %v4654 = vunpack.c.h.b16 %v4289
    %v4655 = vunpack.c.l.b16 %v4290
    %v4656 = vunpack.c.h.b16 %v4290
    %v4657 = vunpack.c.l.b16 %v4291
    %v4658 = vunpack.c.h.b16 %v4291
    %v4659 = vunpack.c.l.b16 %v4292
    %v4660 = vunpack.c.h.b16 %v4292
    %v4661 = vunpack.c.l.b16 %v4293
    %v4662 = vunpack.c.h.b16 %v4293
    %v4663 = vunpack.c.l.b16 %v4294
    %v4664 = vunpack.c.h.b16 %v4294
    %v4665 = vunpack.c.l.b16 %v4295
    %v4666 = vunpack.c.h.b16 %v4295
    %v4667 = vunpack.c.l.b16 %v4296
    %v4668 = vunpack.c.h.b16 %v4296
    %v4669 = vunpack.c.l.b16 %v4297
    %v4670 = vunpack.c.h.b16 %v4297
    %v4671 = vunpack.c.l.b16 %v4298
    %v4672 = vunpack.c.h.b16 %v4298
    %v4673 = vunpack.c.l.b16 %v4299
    %v4674 = vunpack.c.h.b16 %v4299
    %v4675 = vunpack.c.l.b16 %v4300
    %v4676 = vunpack.c.h.b16 %v4300
    %v4677 = vunpack.c.l.b16 %v4301
    %v4678 = vunpack.c.h.b16 %v4301
    %v4679 = vunpack.c.l.b16 %v4302
    %v4680 = vunpack.c.h.b16 %v4302
    %v4681 = vunpack.c.l.b16 %v4303
    %v4682 = vunpack.c.h.b16 %v4303
    %v4683 = vunpack.c.l.b16 %v4304
    %v4684 = vunpack.c.h.b16 %v4304
    %v4685 = vunpack.c.l.b16 %v4305
    %v4686 = vunpack.c.h.b16 %v4305
    %v4687 = vunpack.c.l.b16 %v4306
    %v4688 = vunpack.c.h.b16 %v4306
    %v4689 = vunpack.c.l.b16 %v4307
    %v4690 = vunpack.c.h.b16 %v4307
    %v4691 = vunpack.c.l.b16 %v4308
    %v4692 = vunpack.c.h.b16 %v4308
    %v4693 = vunpack.c.l.b16 %v4309
    %v4694 = vunpack.c.h.b16 %v4309
    %v4695 = vunpack.c.l.b16 %v4310
    %v4696 = vunpack.c.h.b16 %v4310
    %v4697 = vunpack.c.l.b16 %v4311
    %v4698 = vunpack.c.h.b16 %v4311
    %v4699 = vunpack.c.l.b16 %v4312
    %v4700 = vunpack.c.h.b16 %v4312
    %v4701 = vunpack.c.l.b16 %v4313
    %v4702 = vunpack.c.h.b16 %v4313
    %v4703 = vunpack.c.l.b16 %v4314
    %v4704 = vunpack.c.h.b16 %v4314
    %v4705 = vunpack.c.l.b16 %v4315
    %v4706 = vunpack.c.h.b16 %v4315
    %v4707 = vunpack.c.l.b16 %v4316
    %v4708 = vunpack.c.h.b16 %v4316
    %v4709 = vunpack.c.l.b16 %v4317
    %v4710 = vunpack.c.h.b16 %v4317
    %v4711 = vunpack.c.l.b16 %v4318
    %v4712 = vunpack.c.h.b16 %v4318
    %v4713 = vunpack.c.l.b16 %v4319
    %v4714 = vunpack.c.h.b16 %v4319
    %v4715 = vunpack.c.l.b16 %v4320
    %v4716 = vunpack.c.h.b16 %v4320
    %v4717 = vunpack.c.l.b16 %v4321
    %v4718 = vunpack.c.h.b16 %v4321
    %v4719 = vunpack.c.l.b16 %v4322
    %v4720 = vunpack.c.h.b16 %v4322
    %v4721 = vunpack.c.l.b16 %v4323
    %v4722 = vunpack.c.h.b16 %v4323
    %v4723 = vunpack.c.l.b16 %v4324
    %v4724 = vunpack.c.h.b16 %v4324
    %v4725 = vunpack.c.l.b16 %v4325
    %v4726 = vunpack.c.h.b16 %v4325
    %v4727 = vunpack.c.l.b16 %v4326
    %v4728 = vunpack.c.h.b16 %v4326
    %v4729 = vunpack.c.l.b16 %v4327
    %v4730 = vunpack.c.h.b16 %v4327
    %v4731 = vunpack.c.l.b16 %v4328
    %v4732 = vunpack.c.h.b16 %v4328
    %v4733 = vunpack.c.l.b16 %v4329
    %v4734 = vunpack.c.h.b16 %v4329
    %v4735 = vunpack.c.l.b16 %v4330
    %v4736 = vunpack.c.h.b16 %v4330
    %v4737 = vunpack.c.l.b16 %v4331
    %v4738 = vunpack.c.h.b16 %v4331
    %v4739 = vunpack.c.l.b16 %v4332
    %v4740 = vunpack.c.h.b16 %v4332
    %v4741 = vunpack.c.l.b16 %v4333
    %v4742 = vunpack.c.h.b16 %v4333
    %v4743 = vunpack.c.l.b16 %v4334
    %v4744 = vunpack.c.h.b16 %v4334
    %v4745 = vunpack.c.l.b16 %v4335
    %v4746 = vunpack.c.h.b16 %v4335
    %v4747 = vunpack.c.l.b16 %v4336
    %v4748 = vunpack.c.h.b16 %v4336
    %v4749 = vunpack.c.l.b16 %v4337
    %v4750 = vunpack.c.h.b16 %v4337
    %v4751 = vunpack.c.l.b16 %v4338
    %v4752 = vunpack.c.h.b16 %v4338
    %v4753 = vunpack.c.l.b16 %v4339
    %v4754 = vunpack.c.h.b16 %v4339
    %v4755 = vunpack.c.l.b16 %v4340
    %v4756 = vunpack.c.h.b16 %v4340
    %v4757 = vunpack.c.l.b16 %v4341
    %v4758 = vunpack.c.h.b16 %v4341
    %v4759 = vunpack.c.l.b16 %v4342
    %v4760 = vunpack.c.h.b16 %v4342
    %v4761 = vunpack.c.l.b16 %v4343
    %v4762 = vunpack.c.h.b16 %v4343
    %v4763 = vunpack.c.l.b16 %v4344
    %v4764 = vunpack.c.h.b16 %v4344
    %v4765 = vunpack.c.l.b16 %v4345
    %v4766 = vunpack.c.h.b16 %v4345
    %v4767 = vunpack.c.l.b16 %v4346
    %v4768 = vunpack.c.h.b16 %v4346
    %v4769 = vunpack.c.l.b16 %v4347
    %v4770 = vunpack.c.h.b16 %v4347
    %v4771 = vunpack.c.l.b16 %v4348
    %v4772 = vunpack.c.h.b16 %v4348
    %v4773 = vunpack.c.l.b16 %v4349
    %v4774 = vunpack.c.h.b16 %v4349
    %v4775 = vunpack.c.l.b16 %v4350
    %v4776 = vunpack.c.h.b16 %v4350
    %v4777 = vunpack.c.l.b16 %v4351
    %v4778 = vunpack.c.h.b16 %v4351
    %v4779 = vunpack.c.l.b16 %v4352
    %v4780 = vunpack.c.h.b16 %v4352
    %v4781 = vunpack.c.l.b16 %v4353
    %v4782 = vunpack.c.h.b16 %v4353
    %v4783 = vunpack.c.l.b16 %v4354
    %v4784 = vunpack.c.h.b16 %v4354
    %v4785 = vunpack.c.l.b16 %v4355
    %v4786 = vunpack.c.h.b16 %v4355
    %v4787 = vunpack.c.l.b16 %v4356
    %v4788 = vunpack.c.h.b16 %v4356
    %v4789 = vunpack.c.l.b16 %v4357
    %v4790 = vunpack.c.h.b16 %v4357
    %v4791 = vunpack.c.l.b16 %v4358
    %v4792 = vunpack.c.h.b16 %v4358
    %v4793 = vunpack.c.l.b16 %v4359
    %v4794 = vunpack.c.h.b16 %v4359
    %v4795 = vunpack.c.l.b16 %v4360
    %v4796 = vunpack.c.h.b16 %v4360
    %v4797 = vunpack.c.l.b16 %v4361
    %v4798 = vunpack.c.h.b16 %v4361
    %v4799 = vunpack.c.l.b16 %v4362
    %v4800 = vunpack.c.h.b16 %v4362
    %v4801 = vunpack.c.l.b16 %v4363
    %v4802 = vunpack.c.h.b16 %v4363
    %v4803 = vunpack.c.l.b16 %v4364
    %v4804 = vunpack.c.h.b16 %v4364
    %v4805 = vunpack.c.l.b16 %v4365
    %v4806 = vunpack.c.h.b16 %v4365
    %v4807 = vunpack.c.l.b16 %v4366
    %v4808 = vunpack.c.h.b16 %v4366
    %v4809 = vunpack.c.l.b16 %v4367
    %v4810 = vunpack.c.h.b16 %v4367
    %v4811 = vunpack.c.l.b16 %v4368
    %v4812 = vunpack.c.h.b16 %v4368
    %v4813 = vunpack.c.l.b16 %v4369
    %v4814 = vunpack.c.h.b16 %v4369
    %v4815 = vunpack.c.l.b16 %v4370
    %v4816 = vunpack.c.h.b16 %v4370
    %v4817 = vunpack.c.l.b16 %v4371
    %v4818 = vunpack.c.h.b16 %v4371
    %v4819 = vunpack.c.l.b16 %v4372
    %v4820 = vunpack.c.h.b16 %v4372
    %v4821 = vunpack.c.l.b16 %v4373
    %v4822 = vunpack.c.h.b16 %v4373
    %v4823 = vunpack.c.l.b16 %v4374
    %v4824 = vunpack.c.h.b16 %v4374
    %v4825 = vunpack.c.l.b16 %v4375
    %v4826 = vunpack.c.h.b16 %v4375
    %v4827 = vunpack.c.l.b16 %v4376
    %v4828 = vunpack.c.h.b16 %v4376
    %v4829 = vunpack.c.l.b16 %v4377
    %v4830 = vunpack.c.h.b16 %v4377
    %v4831 = vunpack.c.l.b16 %v4378
    %v4832 = vunpack.c.h.b16 %v4378
    %v4833 = vunpack.c.l.b16 %v4379
    %v4834 = vunpack.c.h.b16 %v4379
    %v4835 = vunpack.c.l.b16 %v4380
    %v4836 = vunpack.c.h.b16 %v4380
    %v4837 = vunpack.c.l.b16 %v4381
    %v4838 = vunpack.c.h.b16 %v4381
    %v4839 = vunpack.c.l.b16 %v4382
    %v4840 = vunpack.c.h.b16 %v4382
    %v4841 = vunpack.c.l.b16 %v4383
    %v4842 = vunpack.c.h.b16 %v4383
    %v4843 = vunpack.c.l.b16 %v4384
    %v4844 = vunpack.c.h.b16 %v4384
    %v4845 = vunpack.c.l.b16 %v4385
    %v4846 = vunpack.c.h.b16 %v4385
    %v4847 = vunpack.c.l.b16 %v4386
    %v4848 = vunpack.c.h.b16 %v4386
    %v4849 = vunpack.c.l.b16 %v4387
    %v4850 = vunpack.c.h.b16 %v4387
    %v4851 = vunpack.c.l.b16 %v4388
    %v4852 = vunpack.c.h.b16 %v4388
    %v4853 = vunpack.c.l.b16 %v4389
    %v4854 = vunpack.c.h.b16 %v4389
    %v4855 = vunpack.c.l.b16 %v4390
    %v4856 = vunpack.c.h.b16 %v4390
    %v4857 = vpack.c.b16 %v4609, %v4601
    %v4858 = vpack.c.b16 %v4610, %v4602
    %v4859 = vpack.c.b16 %v4611, %v4603
    %v4860 = vpack.c.b16 %v4612, %v4604
    %v4861 = vpack.c.b16 %v4613, %v4605
    %v4862 = vpack.c.b16 %v4614, %v4606
    %v4863 = vpack.c.b16 %v4615, %v4607
    %v4864 = vpack.c.b16 %v4616, %v4608
    %v4865 = vpack.c.b16 %v4625, %v4617
    %v4866 = vpack.c.b16 %v4626, %v4618
    %v4867 = vpack.c.b16 %v4627, %v4619
    %v4868 = vpack.c.b16 %v4628, %v4620
    %v4869 = vpack.c.b16 %v4629, %v4621
    %v4870 = vpack.c.b16 %v4630, %v4622
    %v4871 = vpack.c.b16 %v4631, %v4623
    %v4872 = vpack.c.b16 %v4632, %v4624
    %v4873 = vpack.c.b16 %v4641, %v4633
    %v4874 = vpack.c.b16 %v4642, %v4634
    %v4875 = vpack.c.b16 %v4643, %v4635
    %v4876 = vpack.c.b16 %v4644, %v4636
    %v4877 = vpack.c.b16 %v4645, %v4637
    %v4878 = vpack.c.b16 %v4646, %v4638
    %v4879 = vpack.c.b16 %v4647, %v4639
    %v4880 = vpack.c.b16 %v4648, %v4640
    %v4881 = vpack.c.b16 %v4657, %v4649
    %v4882 = vpack.c.b16 %v4658, %v4650
    %v4883 = vpack.c.b16 %v4659, %v4651
    %v4884 = vpack.c.b16 %v4660, %v4652
    %v4885 = vpack.c.b16 %v4661, %v4653
    %v4886 = vpack.c.b16 %v4662, %v4654
    %v4887 = vpack.c.b16 %v4663, %v4655
    %v4888 = vpack.c.b16 %v4664, %v4656
    %v4889 = vpack.c.b16 %v4673, %v4665
    %v4890 = vpack.c.b16 %v4674, %v4666
    %v4891 = vpack.c.b16 %v4675, %v4667
    %v4892 = vpack.c.b16 %v4676, %v4668
    %v4893 = vpack.c.b16 %v4677, %v4669
    %v4894 = vpack.c.b16 %v4678, %v4670
    %v4895 = vpack.c.b16 %v4679, %v4671
    %v4896 = vpack.c.b16 %v4680, %v4672
    %v4897 = vpack.c.b16 %v4689, %v4681
    %v4898 = vpack.c.b16 %v4690, %v4682
    %v4899 = vpack.c.b16 %v4691, %v4683
    %v4900 = vpack.c.b16 %v4692, %v4684
    %v4901 = vpack.c.b16 %v4693, %v4685
    %v4902 = vpack.c.b16 %v4694, %v4686
    %v4903 = vpack.c.b16 %v4695, %v4687
    %v4904 = vpack.c.b16 %v4696, %v4688
    %v4905 = vpack.c.b16 %v4705, %v4697
    %v4906 = vpack.c.b16 %v4706, %v4698
    %v4907 = vpack.c.b16 %v4707, %v4699
    %v4908 = vpack.c.b16 %v4708, %v4700
    %v4909 = vpack.c.b16 %v4709, %v4701
    %v4910 = vpack.c.b16 %v4710, %v4702
    %v4911 = vpack.c.b16 %v4711, %v4703
    %v4912 = vpack.c.b16 %v4712, %v4704
    %v4913 = vpack.c.b16 %v4721, %v4713
    %v4914 = vpack.c.b16 %v4722, %v4714
    %v4915 = vpack.c.b16 %v4723, %v4715
    %v4916 = vpack.c.b16 %v4724, %v4716
    %v4917 = vpack.c.b16 %v4725, %v4717
    %v4918 = vpack.c.b16 %v4726, %v4718
    %v4919 = vpack.c.b16 %v4727, %v4719
    %v4920 = vpack.c.b16 %v4728, %v4720
    %v4921 = vpack.c.b16 %v4737, %v4729
    %v4922 = vpack.c.b16 %v4738, %v4730
    %v4923 = vpack.c.b16 %v4739, %v4731
    %v4924 = vpack.c.b16 %v4740, %v4732
    %v4925 = vpack.c.b16 %v4741, %v4733
    %v4926 = vpack.c.b16 %v4742, %v4734
    %v4927 = vpack.c.b16 %v4743, %v4735
    %v4928 = vpack.c.b16 %v4744, %v4736
    %v4929 = vpack.c.b16 %v4753, %v4745
    %v4930 = vpack.c.b16 %v4754, %v4746
    %v4931 = vpack.c.b16 %v4755, %v4747
    %v4932 = vpack.c.b16 %v4756, %v4748
    %v4933 = vpack.c.b16 %v4757, %v4749
    %v4934 = vpack.c.b16 %v4758, %v4750
    %v4935 = vpack.c.b16 %v4759, %v4751
    %v4936 = vpack.c.b16 %v4760, %v4752
    %v4937 = vpack.c.b16 %v4769, %v4761
    %v4938 = vpack.c.b16 %v4770, %v4762
    %v4939 = vpack.c.b16 %v4771, %v4763
    %v4940 = vpack.c.b16 %v4772, %v4764
    %v4941 = vpack.c.b16 %v4773, %v4765
    %v4942 = vpack.c.b16 %v4774, %v4766
    %v4943 = vpack.c.b16 %v4775, %v4767
    %v4944 = vpack.c.b16 %v4776, %v4768
    %v4945 = vpack.c.b16 %v4785, %v4777
    %v4946 = vpack.c.b16 %v4786, %v4778
    %v4947 = vpack.c.b16 %v4787, %v4779
    %v4948 = vpack.c.b16 %v4788, %v4780
    %v4949 = vpack.c.b16 %v4789, %v4781
    %v4950 = vpack.c.b16 %v4790, %v4782
    %v4951 = vpack.c.b16 %v4791, %v4783
    %v4952 = vpack.c.b16 %v4792, %v4784
    %v4953 = vpack.c.b16 %v4801, %v4793
    %v4954 = vpack.c.b16 %v4802, %v4794
    %v4955 = vpack.c.b16 %v4803, %v4795
    %v4956 = vpack.c.b16 %v4804, %v4796
    %v4957 = vpack.c.b16 %v4805, %v4797
    %v4958 = vpack.c.b16 %v4806, %v4798
    %v4959 = vpack.c.b16 %v4807, %v4799
    %v4960 = vpack.c.b16 %v4808, %v4800
    %v4961 = vpack.c.b16 %v4817, %v4809
    %v4962 = vpack.c.b16 %v4818, %v4810
    %v4963 = vpack.c.b16 %v4819, %v4811
    %v4964 = vpack.c.b16 %v4820, %v4812
    %v4965 = vpack.c.b16 %v4821, %v4813
    %v4966 = vpack.c.b16 %v4822, %v4814
    %v4967 = vpack.c.b16 %v4823, %v4815
    %v4968 = vpack.c.b16 %v4824, %v4816
    %v4969 = vpack.c.b16 %v4833, %v4825
    %v4970 = vpack.c.b16 %v4834, %v4826
    %v4971 = vpack.c.b16 %v4835, %v4827
    %v4972 = vpack.c.b16 %v4836, %v4828
    %v4973 = vpack.c.b16 %v4837, %v4829
    %v4974 = vpack.c.b16 %v4838, %v4830
    %v4975 = vpack.c.b16 %v4839, %v4831
    %v4976 = vpack.c.b16 %v4840, %v4832
    %v4977 = vpack.c.b16 %v4849, %v4841
    %v4978 = vpack.c.b16 %v4850, %v4842
    %v4979 = vpack.c.b16 %v4851, %v4843
    %v4980 = vpack.c.b16 %v4852, %v4844
    %v4981 = vpack.c.b16 %v4853, %v4845
    %v4982 = vpack.c.b16 %v4854, %v4846
    %v4983 = vpack.c.b16 %v4855, %v4847
    %v4984 = vpack.c.b16 %v4856, %v4848
    %5113 = vmatpush.bf16.msra.mxu0 %v4913
    %5114 = vmatpush.bf16.msra.mxu0 %v4905
    %5115 = vmatpush.bf16.msra.mxu0 %v4897
    %5116 = vmatpush.bf16.msra.mxu0 %v4889
    %5117 = vmatpush.bf16.msra.mxu0 %v4881
    %5118 = vmatpush.bf16.msra.mxu0 %v4873
    %5119 = vmatpush.bf16.msra.mxu0 %v4865
    %5120 = vmatpush.bf16.msra.mxu0 %v4857
    %5121 = vmatmul.bf16.gmra.mxu0 %v4261
    %v5122 = vpop.f32.mrf.mxu0
    %v5123 = vadd.f32 %v4457, %v5122
    %v5124 = vpop.f32.mrf.mxu0
    %v5125 = vadd.f32 %v4457, %v5124
    %5126 = vdwg.mxu0
    %5127 = vmatpush.bf16.msra.mxu0 %v4977
    %5128 = vmatpush.bf16.msra.mxu0 %v4969
    %5129 = vmatpush.bf16.msra.mxu0 %v4961
    %5130 = vmatpush.bf16.msra.mxu0 %v4953
    %5131 = vmatpush.bf16.msra.mxu0 %v4945
    %5132 = vmatpush.bf16.msra.mxu0 %v4937
    %5133 = vmatpush.bf16.msra.mxu0 %v4929
    %5134 = vmatpush.bf16.msra.mxu0 %v4921
    %5135 = vmatmul.bf16.gmra.mxu0 %v4262
    %v5136 = vpop.f32.mrf.mxu0
    %v5137 = vadd.f32 %v5123, %v5136
    %v5138 = vpop.f32.mrf.mxu0
    %v5139 = vadd.f32 %v5125, %v5138
    %5140 = vdwg.mxu0
    %5141 = vmatpush.bf16.msra.mxu0 %v4914
    %5142 = vmatpush.bf16.msra.mxu0 %v4906
    %5143 = vmatpush.bf16.msra.mxu0 %v4898
    %5144 = vmatpush.bf16.msra.mxu0 %v4890
    %5145 = vmatpush.bf16.msra.mxu0 %v4882
    %5146 = vmatpush.bf16.msra.mxu0 %v4874
    %5147 = vmatpush.bf16.msra.mxu0 %v4866
    %5148 = vmatpush.bf16.msra.mxu0 %v4858
    %5149 = vmatmul.bf16.gmra.mxu0 %v4261
    %v5150 = vpop.f32.mrf.mxu0
    %v5151 = vadd.f32 %v4458, %v5150
    %v5152 = vpop.f32.mrf.mxu0
    %v5153 = vadd.f32 %v4458, %v5152
    %5154 = vdwg.mxu0
    %5155 = vmatpush.bf16.msra.mxu0 %v4978
    %5156 = vmatpush.bf16.msra.mxu0 %v4970
    %5157 = vmatpush.bf16.msra.mxu0 %v4962
    %5158 = vmatpush.bf16.msra.mxu0 %v4954
    %5159 = vmatpush.bf16.msra.mxu0 %v4946
    %5160 = vmatpush.bf16.msra.mxu0 %v4938
    %5161 = vmatpush.bf16.msra.mxu0 %v4930
    %5162 = vmatpush.bf16.msra.mxu0 %v4922
    %5163 = vmatmul.bf16.gmra.mxu0 %v4262
    %v5164 = vpop.f32.mrf.mxu0
    %v5165 = vadd.f32 %v5151, %v5164
    %v5166 = vpop.f32.mrf.mxu0
    %v5167 = vadd.f32 %v5153, %v5166
    %5168 = vdwg.mxu0
    %5169 = vmatpush.bf16.msra.mxu0 %v4915
    %5170 = vmatpush.bf16.msra.mxu0 %v4907
    %5171 = vmatpush.bf16.msra.mxu0 %v4899
    %5172 = vmatpush.bf16.msra.mxu0 %v4891
    %5173 = vmatpush.bf16.msra.mxu0 %v4883
    %5174 = vmatpush.bf16.msra.mxu0 %v4875
    %5175 = vmatpush.bf16.msra.mxu0 %v4867
    %5176 = vmatpush.bf16.msra.mxu0 %v4859
    %5177 = vmatmul.bf16.gmra.mxu0 %v4261
    %v5178 = vpop.f32.mrf.mxu0
    %v5179 = vadd.f32 %v4459, %v5178
    %v5180 = vpop.f32.mrf.mxu0
    %v5181 = vadd.f32 %v4459, %v5180
    %5182 = vdwg.mxu0
    %5183 = vmatpush.bf16.msra.mxu0 %v4979
    %5184 = vmatpush.bf16.msra.mxu0 %v4971
    %5185 = vmatpush.bf16.msra.mxu0 %v4963
    %5186 = vmatpush.bf16.msra.mxu0 %v4955
    %5187 = vmatpush.bf16.msra.mxu0 %v4947
    %5188 = vmatpush.bf16.msra.mxu0 %v4939
    %5189 = vmatpush.bf16.msra.mxu0 %v4931
    %5190 = vmatpush.bf16.msra.mxu0 %v4923
    %5191 = vmatmul.bf16.gmra.mxu0 %v4262
    %v5192 = vpop.f32.mrf.mxu0
    %v5193 = vadd.f32 %v5179, %v5192
    %v5194 = vpop.f32.mrf.mxu0
    %v5195 = vadd.f32 %v5181, %v5194
    %5196 = vdwg.mxu0
    %5197 = vmatpush.bf16.msra.mxu0 %v4916
    %5198 = vmatpush.bf16.msra.mxu0 %v4908
    %5199 = vmatpush.bf16.msra.mxu0 %v4900
    %5200 = vmatpush.bf16.msra.mxu0 %v4892
    %5201 = vmatpush.bf16.msra.mxu0 %v4884
    %5202 = vmatpush.bf16.msra.mxu0 %v4876
    %5203 = vmatpush.bf16.msra.mxu0 %v4868
    %5204 = vmatpush.bf16.msra.mxu0 %v4860
    %5205 = vmatmul.bf16.gmra.mxu0 %v4261
    %v5206 = vpop.f32.mrf.mxu0
    %v5207 = vadd.f32 %v4460, %v5206
    %v5208 = vpop.f32.mrf.mxu0
    %v5209 = vadd.f32 %v4460, %v5208
    %5210 = vdwg.mxu0
    %5211 = vmatpush.bf16.msra.mxu0 %v4980
    %5212 = vmatpush.bf16.msra.mxu0 %v4972
    %5213 = vmatpush.bf16.msra.mxu0 %v4964
    %5214 = vmatpush.bf16.msra.mxu0 %v4956
    %5215 = vmatpush.bf16.msra.mxu0 %v4948
    %5216 = vmatpush.bf16.msra.mxu0 %v4940
    %5217 = vmatpush.bf16.msra.mxu0 %v4932
    %5218 = vmatpush.bf16.msra.mxu0 %v4924
    %5219 = vmatmul.bf16.gmra.mxu0 %v4262
    %v5220 = vpop.f32.mrf.mxu0
    %v5221 = vadd.f32 %v5207, %v5220
    %v5222 = vpop.f32.mrf.mxu0
    %v5223 = vadd.f32 %v5209, %v5222
    %5224 = vdwg.mxu0
    %5225 = vmatpush.bf16.msra.mxu0 %v4917
    %5226 = vmatpush.bf16.msra.mxu0 %v4909
    %5227 = vmatpush.bf16.msra.mxu0 %v4901
    %5228 = vmatpush.bf16.msra.mxu0 %v4893
    %5229 = vmatpush.bf16.msra.mxu0 %v4885
    %5230 = vmatpush.bf16.msra.mxu0 %v4877
    %5231 = vmatpush.bf16.msra.mxu0 %v4869
    %5232 = vmatpush.bf16.msra.mxu0 %v4861
    %5233 = vmatmul.bf16.gmra.mxu0 %v4261
    %v5234 = vpop.f32.mrf.mxu0
    %v5235 = vadd.f32 %v4461, %v5234
    %v5236 = vpop.f32.mrf.mxu0
    %v5237 = vadd.f32 %v4461, %v5236
    %5238 = vdwg.mxu0
    %5239 = vmatpush.bf16.msra.mxu0 %v4981
    %5240 = vmatpush.bf16.msra.mxu0 %v4973
    %5241 = vmatpush.bf16.msra.mxu0 %v4965
    %5242 = vmatpush.bf16.msra.mxu0 %v4957
    %5243 = vmatpush.bf16.msra.mxu0 %v4949
    %5244 = vmatpush.bf16.msra.mxu0 %v4941
    %5245 = vmatpush.bf16.msra.mxu0 %v4933
    %5246 = vmatpush.bf16.msra.mxu0 %v4925
    %5247 = vmatmul.bf16.gmra.mxu0 %v4262
    %v5248 = vpop.f32.mrf.mxu0
    %v5249 = vadd.f32 %v5235, %v5248
    %v5250 = vpop.f32.mrf.mxu0
    %v5251 = vadd.f32 %v5237, %v5250
    %5252 = vdwg.mxu0
    %5253 = vmatpush.bf16.msra.mxu0 %v4918
    %5254 = vmatpush.bf16.msra.mxu0 %v4910
    %5255 = vmatpush.bf16.msra.mxu0 %v4902
    %5256 = vmatpush.bf16.msra.mxu0 %v4894
    %5257 = vmatpush.bf16.msra.mxu0 %v4886
    %5258 = vmatpush.bf16.msra.mxu0 %v4878
    %5259 = vmatpush.bf16.msra.mxu0 %v4870
    %5260 = vmatpush.bf16.msra.mxu0 %v4862
    %5261 = vmatmul.bf16.gmra.mxu0 %v4261
    %v5262 = vpop.f32.mrf.mxu0
    %v5263 = vadd.f32 %v4462, %v5262
    %v5264 = vpop.f32.mrf.mxu0
    %v5265 = vadd.f32 %v4462, %v5264
    %5266 = vdwg.mxu0
    %5267 = vmatpush.bf16.msra.mxu0 %v4982
    %5268 = vmatpush.bf16.msra.mxu0 %v4974
    %5269 = vmatpush.bf16.msra.mxu0 %v4966
    %5270 = vmatpush.bf16.msra.mxu0 %v4958
    %5271 = vmatpush.bf16.msra.mxu0 %v4950
    %5272 = vmatpush.bf16.msra.mxu0 %v4942
    %5273 = vmatpush.bf16.msra.mxu0 %v4934
    %5274 = vmatpush.bf16.msra.mxu0 %v4926
    %5275 = vmatmul.bf16.gmra.mxu0 %v4262
    %v5276 = vpop.f32.mrf.mxu0
    %v5277 = vadd.f32 %v5263, %v5276
    %v5278 = vpop.f32.mrf.mxu0
    %v5279 = vadd.f32 %v5265, %v5278
    %5280 = vdwg.mxu0
    %5281 = vmatpush.bf16.msra.mxu0 %v4919
    %5282 = vmatpush.bf16.msra.mxu0 %v4911
    %5283 = vmatpush.bf16.msra.mxu0 %v4903
    %5284 = vmatpush.bf16.msra.mxu0 %v4895
    %5285 = vmatpush.bf16.msra.mxu0 %v4887
    %5286 = vmatpush.bf16.msra.mxu0 %v4879
    %5287 = vmatpush.bf16.msra.mxu0 %v4871
    %5288 = vmatpush.bf16.msra.mxu0 %v4863
    %5289 = vmatmul.bf16.gmra.mxu0 %v4261
    %v5290 = vpop.f32.mrf.mxu0
    %v5291 = vadd.f32 %v4463, %v5290
    %v5292 = vpop.f32.mrf.mxu0
    %v5293 = vadd.f32 %v4463, %v5292
    %5294 = vdwg.mxu0
    %5295 = vmatpush.bf16.msra.mxu0 %v4983
    %5296 = vmatpush.bf16.msra.mxu0 %v4975
    %5297 = vmatpush.bf16.msra.mxu0 %v4967
    %5298 = vmatpush.bf16.msra.mxu0 %v4959
    %5299 = vmatpush.bf16.msra.mxu0 %v4951
    %5300 = vmatpush.bf16.msra.mxu0 %v4943
    %5301 = vmatpush.bf16.msra.mxu0 %v4935
    %5302 = vmatpush.bf16.msra.mxu0 %v4927
    %5303 = vmatmul.bf16.gmra.mxu0 %v4262
    %v5304 = vpop.f32.mrf.mxu0
    %v5305 = vadd.f32 %v5291, %v5304
    %v5306 = vpop.f32.mrf.mxu0
    %v5307 = vadd.f32 %v5293, %v5306
    %5308 = vdwg.mxu0
    %5309 = vmatpush.bf16.msra.mxu0 %v4920
    %5310 = vmatpush.bf16.msra.mxu0 %v4912
    %5311 = vmatpush.bf16.msra.mxu0 %v4904
    %5312 = vmatpush.bf16.msra.mxu0 %v4896
    %5313 = vmatpush.bf16.msra.mxu0 %v4888
    %5314 = vmatpush.bf16.msra.mxu0 %v4880
    %5315 = vmatpush.bf16.msra.mxu0 %v4872
    %5316 = vmatpush.bf16.msra.mxu0 %v4864
    %5317 = vmatmul.bf16.gmra.mxu0 %v4261
    %v5318 = vpop.f32.mrf.mxu0
    %v5319 = vadd.f32 %v4464, %v5318
    %v5320 = vpop.f32.mrf.mxu0
    %v5321 = vadd.f32 %v4464, %v5320
    %5322 = vdwg.mxu0
    %5323 = vmatpush.bf16.msra.mxu0 %v4984
    %5324 = vmatpush.bf16.msra.mxu0 %v4976
    %5325 = vmatpush.bf16.msra.mxu0 %v4968
    %5326 = vmatpush.bf16.msra.mxu0 %v4960
    %5327 = vmatpush.bf16.msra.mxu0 %v4952
    %5328 = vmatpush.bf16.msra.mxu0 %v4944
    %5329 = vmatpush.bf16.msra.mxu0 %v4936
    %5330 = vmatpush.bf16.msra.mxu0 %v4928
    %5331 = vmatmul.bf16.gmra.mxu0 %v4262
    %v5332 = vpop.f32.mrf.mxu0
    %v5333 = vadd.f32 %v5319, %v5332
    %v5334 = vpop.f32.mrf.mxu0
    %v5335 = vadd.f32 %v5321, %v5334
    %5336 = vdwg.mxu0
    %v5369 = vunpack.c.l.b16 %v4391
    %v5370 = vunpack.c.h.b16 %v4391
    %v5371 = vunpack.c.l.b16 %v4392
    %v5372 = vunpack.c.h.b16 %v4392
    %v5373 = vunpack.c.l.b16 %v4393
    %v5374 = vunpack.c.h.b16 %v4393
    %v5375 = vunpack.c.l.b16 %v4394
    %v5376 = vunpack.c.h.b16 %v4394
    %v5377 = vunpack.c.l.b16 %v4395
    %v5378 = vunpack.c.h.b16 %v4395
    %v5379 = vunpack.c.l.b16 %v4396
    %v5380 = vunpack.c.h.b16 %v4396
    %v5381 = vunpack.c.l.b16 %v4397
    %v5382 = vunpack.c.h.b16 %v4397
    %v5383 = vunpack.c.l.b16 %v4398
    %v5384 = vunpack.c.h.b16 %v4398
    %v5385 = vunpack.c.l.b16 %v4399
    %v5386 = vunpack.c.h.b16 %v4399
    %v5387 = vunpack.c.l.b16 %v4400
    %v5388 = vunpack.c.h.b16 %v4400
    %v5389 = vunpack.c.l.b16 %v4401
    %v5390 = vunpack.c.h.b16 %v4401
    %v5391 = vunpack.c.l.b16 %v4402
    %v5392 = vunpack.c.h.b16 %v4402
    %v5393 = vunpack.c.l.b16 %v4403
    %v5394 = vunpack.c.h.b16 %v4403
    %v5395 = vunpack.c.l.b16 %v4404
    %v5396 = vunpack.c.h.b16 %v4404
    %v5397 = vunpack.c.l.b16 %v4405
    %v5398 = vunpack.c.h.b16 %v4405
    %v5399 = vunpack.c.l.b16 %v4406
    %v5400 = vunpack.c.h.b16 %v4406
    %v5401 = vunpack.c.l.b16 %v4407
    %v5402 = vunpack.c.h.b16 %v4407
    %v5403 = vunpack.c.l.b16 %v4408
    %v5404 = vunpack.c.h.b16 %v4408
    %v5405 = vunpack.c.l.b16 %v4409
    %v5406 = vunpack.c.h.b16 %v4409
    %v5407 = vunpack.c.l.b16 %v4410
    %v5408 = vunpack.c.h.b16 %v4410
    %v5409 = vunpack.c.l.b16 %v4411
    %v5410 = vunpack.c.h.b16 %v4411
    %v5411 = vunpack.c.l.b16 %v4412
    %v5412 = vunpack.c.h.b16 %v4412
    %v5413 = vunpack.c.l.b16 %v4413
    %v5414 = vunpack.c.h.b16 %v4413
    %v5415 = vunpack.c.l.b16 %v4414
    %v5416 = vunpack.c.h.b16 %v4414
    %v5417 = vunpack.c.l.b16 %v4415
    %v5418 = vunpack.c.h.b16 %v4415
    %v5419 = vunpack.c.l.b16 %v4416
    %v5420 = vunpack.c.h.b16 %v4416
    %v5421 = vunpack.c.l.b16 %v4417
    %v5422 = vunpack.c.h.b16 %v4417
    %v5423 = vunpack.c.l.b16 %v4418
    %v5424 = vunpack.c.h.b16 %v4418
    %v5425 = vunpack.c.l.b16 %v4419
    %v5426 = vunpack.c.h.b16 %v4419
    %v5427 = vunpack.c.l.b16 %v4420
    %v5428 = vunpack.c.h.b16 %v4420
    %v5429 = vunpack.c.l.b16 %v4421
    %v5430 = vunpack.c.h.b16 %v4421
    %v5431 = vunpack.c.l.b16 %v4422
    %v5432 = vunpack.c.h.b16 %v4422
    %v5433 = vpack.c.b16 %v5373, %v5369
    %v5434 = vpack.c.b16 %v5374, %v5370
    %v5435 = vpack.c.b16 %v5375, %v5371
    %v5436 = vpack.c.b16 %v5376, %v5372
    %v5437 = vpack.c.b16 %v5381, %v5377
    %v5438 = vpack.c.b16 %v5382, %v5378
    %v5439 = vpack.c.b16 %v5383, %v5379
    %v5440 = vpack.c.b16 %v5384, %v5380
    %v5441 = vpack.c.b16 %v5389, %v5385
    %v5442 = vpack.c.b16 %v5390, %v5386
    %v5443 = vpack.c.b16 %v5391, %v5387
    %v5444 = vpack.c.b16 %v5392, %v5388
    %v5445 = vpack.c.b16 %v5397, %v5393
    %v5446 = vpack.c.b16 %v5398, %v5394
    %v5447 = vpack.c.b16 %v5399, %v5395
    %v5448 = vpack.c.b16 %v5400, %v5396
    %v5449 = vpack.c.b16 %v5405, %v5401
    %v5450 = vpack.c.b16 %v5406, %v5402
    %v5451 = vpack.c.b16 %v5407, %v5403
    %v5452 = vpack.c.b16 %v5408, %v5404
    %v5453 = vpack.c.b16 %v5413, %v5409
    %v5454 = vpack.c.b16 %v5414, %v5410
    %v5455 = vpack.c.b16 %v5415, %v5411
    %v5456 = vpack.c.b16 %v5416, %v5412
    %v5457 = vpack.c.b16 %v5421, %v5417
    %v5458 = vpack.c.b16 %v5422, %v5418
    %v5459 = vpack.c.b16 %v5423, %v5419
    %v5460 = vpack.c.b16 %v5424, %v5420
    %v5461 = vpack.c.b16 %v5429, %v5425
    %v5462 = vpack.c.b16 %v5430, %v5426
    %v5463 = vpack.c.b16 %v5431, %v5427
    %v5464 = vpack.c.b16 %v5432, %v5428
    %5497 = vmatpush.bf16.msra.mxu0 %v5461
    %5498 = vmatpush.bf16.msra.mxu0 %v5457
    %5499 = vmatpush.bf16.msra.mxu0 %v5453
    %5500 = vmatpush.bf16.msra.mxu0 %v5449
    %5501 = vmatpush.bf16.msra.mxu0 %v5445
    %5502 = vmatpush.bf16.msra.mxu0 %v5441
    %5503 = vmatpush.bf16.msra.mxu0 %v5437
    %5504 = vmatpush.bf16.msra.mxu0 %v5433
    %5505 = vmatmul.bf16.gmra.mxu0 0
    %v5506 = vpop.f32.mrf.mxu0
    %v5507 = vadd.f32 0.0, %v5506
    %v5508 = vpop.f32.mrf.mxu0
    %5509 = vdwg.mxu0
    %5510 = vmatpush.bf16.msra.mxu0 %v5462
    %5511 = vmatpush.bf16.msra.mxu0 %v5458
    %5512 = vmatpush.bf16.msra.mxu0 %v5454
    %5513 = vmatpush.bf16.msra.mxu0 %v5450
    %5514 = vmatpush.bf16.msra.mxu0 %v5446
    %5515 = vmatpush.bf16.msra.mxu0 %v5442
    %5516 = vmatpush.bf16.msra.mxu0 %v5438
    %5517 = vmatpush.bf16.msra.mxu0 %v5434
    %5518 = vmatmul.bf16.gmra.mxu0 0
    %v5519 = vpop.f32.mrf.mxu0
    %v5520 = vadd.f32 0.0, %v5519
    %v5521 = vpop.f32.mrf.mxu0
    %5522 = vdwg.mxu0
    %5523 = vmatpush.bf16.msra.mxu0 %v5463
    %5524 = vmatpush.bf16.msra.mxu0 %v5459
    %5525 = vmatpush.bf16.msra.mxu0 %v5455
    %5526 = vmatpush.bf16.msra.mxu0 %v5451
    %5527 = vmatpush.bf16.msra.mxu0 %v5447
    %5528 = vmatpush.bf16.msra.mxu0 %v5443
    %5529 = vmatpush.bf16.msra.mxu0 %v5439
    %5530 = vmatpush.bf16.msra.mxu0 %v5435
    %5531 = vmatmul.bf16.gmra.mxu0 0
    %v5532 = vpop.f32.mrf.mxu0
    %v5533 = vadd.f32 0.0, %v5532
    %v5534 = vpop.f32.mrf.mxu0
    %5535 = vdwg.mxu0
    %5536 = vmatpush.bf16.msra.mxu0 %v5464
    %5537 = vmatpush.bf16.msra.mxu0 %v5460
    %5538 = vmatpush.bf16.msra.mxu0 %v5456
    %5539 = vmatpush.bf16.msra.mxu0 %v5452
    %5540 = vmatpush.bf16.msra.mxu0 %v5448
    %5541 = vmatpush.bf16.msra.mxu0 %v5444
    %5542 = vmatpush.bf16.msra.mxu0 %v5440
    %5543 = vmatpush.bf16.msra.mxu0 %v5436
    %5544 = vmatmul.bf16.gmra.mxu0 0
    %v5545 = vpop.f32.mrf.mxu0
    %v5546 = vadd.f32 0.0, %v5545
    %v5547 = vpop.f32.mrf.mxu0
    %5548 = vdwg.mxu0
    %v5549 = vadd.f32 %v5137, %v5507
    %v5550 = vadd.f32 %v5165, %v5520
    %v5551 = vadd.f32 %v5193, %v5533
    %v5552 = vadd.f32 %v5221, %v5546
    %v5585 = vunpack.c.l.b16 %v4423
    %v5586 = vunpack.c.h.b16 %v4423
    %v5587 = vunpack.c.l.b16 %v4424
    %v5588 = vunpack.c.h.b16 %v4424
    %v5589 = vunpack.c.l.b16 %v4425
    %v5590 = vunpack.c.h.b16 %v4425
    %v5591 = vunpack.c.l.b16 %v4426
    %v5592 = vunpack.c.h.b16 %v4426
    %v5593 = vunpack.c.l.b16 %v4427
    %v5594 = vunpack.c.h.b16 %v4427
    %v5595 = vunpack.c.l.b16 %v4428
    %v5596 = vunpack.c.h.b16 %v4428
    %v5597 = vunpack.c.l.b16 %v4429
    %v5598 = vunpack.c.h.b16 %v4429
    %v5599 = vunpack.c.l.b16 %v4430
    %v5600 = vunpack.c.h.b16 %v4430
    %v5601 = vunpack.c.l.b16 %v4431
    %v5602 = vunpack.c.h.b16 %v4431
    %v5603 = vunpack.c.l.b16 %v4432
    %v5604 = vunpack.c.h.b16 %v4432
    %v5605 = vunpack.c.l.b16 %v4433
    %v5606 = vunpack.c.h.b16 %v4433
    %v5607 = vunpack.c.l.b16 %v4434
    %v5608 = vunpack.c.h.b16 %v4434
    %v5609 = vunpack.c.l.b16 %v4435
    %v5610 = vunpack.c.h.b16 %v4435
    %v5611 = vunpack.c.l.b16 %v4436
    %v5612 = vunpack.c.h.b16 %v4436
    %v5613 = vunpack.c.l.b16 %v4437
    %v5614 = vunpack.c.h.b16 %v4437
    %v5615 = vunpack.c.l.b16 %v4438
    %v5616 = vunpack.c.h.b16 %v4438
    %v5617 = vunpack.c.l.b16 %v4439
    %v5618 = vunpack.c.h.b16 %v4439
    %v5619 = vunpack.c.l.b16 %v4440
    %v5620 = vunpack.c.h.b16 %v4440
    %v5621 = vunpack.c.l.b16 %v4441
    %v5622 = vunpack.c.h.b16 %v4441
    %v5623 = vunpack.c.l.b16 %v4442
    %v5624 = vunpack.c.h.b16 %v4442
    %v5625 = vunpack.c.l.b16 %v4443
    %v5626 = vunpack.c.h.b16 %v4443
    %v5627 = vunpack.c.l.b16 %v4444
    %v5628 = vunpack.c.h.b16 %v4444
    %v5629 = vunpack.c.l.b16 %v4445
    %v5630 = vunpack.c.h.b16 %v4445
    %v5631 = vunpack.c.l.b16 %v4446
    %v5632 = vunpack.c.h.b16 %v4446
    %v5633 = vunpack.c.l.b16 %v4447
    %v5634 = vunpack.c.h.b16 %v4447
    %v5635 = vunpack.c.l.b16 %v4448
    %v5636 = vunpack.c.h.b16 %v4448
    %v5637 = vunpack.c.l.b16 %v4449
    %v5638 = vunpack.c.h.b16 %v4449
    %v5639 = vunpack.c.l.b16 %v4450
    %v5640 = vunpack.c.h.b16 %v4450
    %v5641 = vunpack.c.l.b16 %v4451
    %v5642 = vunpack.c.h.b16 %v4451
    %v5643 = vunpack.c.l.b16 %v4452
    %v5644 = vunpack.c.h.b16 %v4452
    %v5645 = vunpack.c.l.b16 %v4453
    %v5646 = vunpack.c.h.b16 %v4453
    %v5647 = vunpack.c.l.b16 %v4454
    %v5648 = vunpack.c.h.b16 %v4454
    %v5649 = vpack.c.b16 %v5589, %v5585
    %v5650 = vpack.c.b16 %v5590, %v5586
    %v5651 = vpack.c.b16 %v5591, %v5587
    %v5652 = vpack.c.b16 %v5592, %v5588
    %v5653 = vpack.c.b16 %v5597, %v5593
    %v5654 = vpack.c.b16 %v5598, %v5594
    %v5655 = vpack.c.b16 %v5599, %v5595
    %v5656 = vpack.c.b16 %v5600, %v5596
    %v5657 = vpack.c.b16 %v5605, %v5601
    %v5658 = vpack.c.b16 %v5606, %v5602
    %v5659 = vpack.c.b16 %v5607, %v5603
    %v5660 = vpack.c.b16 %v5608, %v5604
    %v5661 = vpack.c.b16 %v5613, %v5609
    %v5662 = vpack.c.b16 %v5614, %v5610
    %v5663 = vpack.c.b16 %v5615, %v5611
    %v5664 = vpack.c.b16 %v5616, %v5612
    %v5665 = vpack.c.b16 %v5621, %v5617
    %v5666 = vpack.c.b16 %v5622, %v5618
    %v5667 = vpack.c.b16 %v5623, %v5619
    %v5668 = vpack.c.b16 %v5624, %v5620
    %v5669 = vpack.c.b16 %v5629, %v5625
    %v5670 = vpack.c.b16 %v5630, %v5626
    %v5671 = vpack.c.b16 %v5631, %v5627
    %v5672 = vpack.c.b16 %v5632, %v5628
    %v5673 = vpack.c.b16 %v5637, %v5633
    %v5674 = vpack.c.b16 %v5638, %v5634
    %v5675 = vpack.c.b16 %v5639, %v5635
    %v5676 = vpack.c.b16 %v5640, %v5636
    %v5677 = vpack.c.b16 %v5645, %v5641
    %v5678 = vpack.c.b16 %v5646, %v5642
    %v5679 = vpack.c.b16 %v5647, %v5643
    %v5680 = vpack.c.b16 %v5648, %v5644
    %5713 = vmatpush.bf16.msra.mxu0 %v5677
    %5714 = vmatpush.bf16.msra.mxu0 %v5673
    %5715 = vmatpush.bf16.msra.mxu0 %v5669
    %5716 = vmatpush.bf16.msra.mxu0 %v5665
    %5717 = vmatpush.bf16.msra.mxu0 %v5661
    %5718 = vmatpush.bf16.msra.mxu0 %v5657
    %5719 = vmatpush.bf16.msra.mxu0 %v5653
    %5720 = vmatpush.bf16.msra.mxu0 %v5649
    %5721 = vmatmul.bf16.gmra.mxu0 0
    %v5722 = vpop.f32.mrf.mxu0
    %v5723 = vadd.f32 0.0, %v5722
    %v5724 = vpop.f32.mrf.mxu0
    %5725 = vdwg.mxu0
    %5726 = vmatpush.bf16.msra.mxu0 %v5678
    %5727 = vmatpush.bf16.msra.mxu0 %v5674
    %5728 = vmatpush.bf16.msra.mxu0 %v5670
    %5729 = vmatpush.bf16.msra.mxu0 %v5666
    %5730 = vmatpush.bf16.msra.mxu0 %v5662
    %5731 = vmatpush.bf16.msra.mxu0 %v5658
    %5732 = vmatpush.bf16.msra.mxu0 %v5654
    %5733 = vmatpush.bf16.msra.mxu0 %v5650
    %5734 = vmatmul.bf16.gmra.mxu0 0
    %v5735 = vpop.f32.mrf.mxu0
    %v5736 = vadd.f32 0.0, %v5735
    %v5737 = vpop.f32.mrf.mxu0
    %5738 = vdwg.mxu0
    %5739 = vmatpush.bf16.msra.mxu0 %v5679
    %5740 = vmatpush.bf16.msra.mxu0 %v5675
    %5741 = vmatpush.bf16.msra.mxu0 %v5671
    %5742 = vmatpush.bf16.msra.mxu0 %v5667
    %5743 = vmatpush.bf16.msra.mxu0 %v5663
    %5744 = vmatpush.bf16.msra.mxu0 %v5659
    %5745 = vmatpush.bf16.msra.mxu0 %v5655
    %5746 = vmatpush.bf16.msra.mxu0 %v5651
    %5747 = vmatmul.bf16.gmra.mxu0 0
    %v5748 = vpop.f32.mrf.mxu0
    %v5749 = vadd.f32 0.0, %v5748
    %v5750 = vpop.f32.mrf.mxu0
    %5751 = vdwg.mxu0
    %5752 = vmatpush.bf16.msra.mxu0 %v5680
    %5753 = vmatpush.bf16.msra.mxu0 %v5676
    %5754 = vmatpush.bf16.msra.mxu0 %v5672
    %5755 = vmatpush.bf16.msra.mxu0 %v5668
    %5756 = vmatpush.bf16.msra.mxu0 %v5664
    %5757 = vmatpush.bf16.msra.mxu0 %v5660
    %5758 = vmatpush.bf16.msra.mxu0 %v5656
    %5759 = vmatpush.bf16.msra.mxu0 %v5652
    %5760 = vmatmul.bf16.gmra.mxu0 0
    %v5761 = vpop.f32.mrf.mxu0
    %v5762 = vadd.f32 0.0, %v5761
    %v5763 = vpop.f32.mrf.mxu0
    %5764 = vdwg.mxu0
    %v5769 = vrot.slane %v5723, 2
    %v5770 = vrot.slane %v5736, 2
    %v5771 = vrot.slane %v5749, 2
    %v5772 = vrot.slane %v5762, 2
    %v5777 = vadd.f32 %v5251, %v5769
    %v5778 = vadd.f32 %v5279, %v5770
    %v5779 = vadd.f32 %v5307, %v5771
    %v5780 = vadd.f32 %v5335, %v5772
    %v5781 = vxor.u32 %v5549, 2147483648
    %v5782 = vmul.f32 %v5781, 1.442695
    %v5783 = vpow.pop %v5782
    %v5784 = vadd.f32 %v5783, 1.0
    %v5785 = vrcp.pop %v5784
    %v5786 = vmul.f32 %v5784, %v5785
    %v5787 = vsub.f32 1.0, %v5786
    %v5788 = vmul.f32 %v5785, %v5787
    %v5789 = vadd.f32 %v5785, %v5788
    %vm5790 = vweird.f32 %v5784
    %vm5791 = vweird.f32 %v5785
    %vm5792 = vmor %vm5790, %vm5791
    %v5793 = vsel %vm5792, %v5785, %v5789
    %v5794 = vand.u32 2147483647, %v5784
    %vm5795 = vcmp.eq.f32.partialorder %v5794, 8.507059e+37
    %v5796 = vand.u32 %v5784, 2147483648
    %v5797 = vor.u32 1.1754944e-38, %v5796
    %v5798 = vsel %vm5795, %v5797, %v5793
    %v5799 = vmul.f32 1.0, %v5798
    %v5800 = vxor.u32 %v5550, 2147483648
    %v5801 = vmul.f32 %v5800, 1.442695
    %v5802 = vpow.pop %v5801
    %v5803 = vadd.f32 %v5802, 1.0
    %v5804 = vrcp.pop %v5803
    %v5805 = vmul.f32 %v5803, %v5804
    %v5806 = vsub.f32 1.0, %v5805
    %v5807 = vmul.f32 %v5804, %v5806
    %v5808 = vadd.f32 %v5804, %v5807
    %vm5809 = vweird.f32 %v5803
    %vm5810 = vweird.f32 %v5804
    %vm5811 = vmor %vm5809, %vm5810
    %v5812 = vsel %vm5811, %v5804, %v5808
    %v5813 = vand.u32 2147483647, %v5803
    %vm5814 = vcmp.eq.f32.partialorder %v5813, 8.507059e+37
    %v5815 = vand.u32 %v5803, 2147483648
    %v5816 = vor.u32 1.1754944e-38, %v5815
    %v5817 = vsel %vm5814, %v5816, %v5812
    %v5818 = vmul.f32 1.0, %v5817
    %v5819 = vtanh.pop %v5551
    %v5820 = vxor.u32 %v5552, 2147483648
    %v5821 = vmul.f32 %v5820, 1.442695
    %v5822 = vpow.pop %v5821
    %v5823 = vadd.f32 %v5822, 1.0
    %v5824 = vrcp.pop %v5823
    %v5825 = vmul.f32 %v5823, %v5824
    %v5826 = vsub.f32 1.0, %v5825
    %v5827 = vmul.f32 %v5824, %v5826
    %v5828 = vadd.f32 %v5824, %v5827
    %vm5829 = vweird.f32 %v5823
    %vm5830 = vweird.f32 %v5824
    %vm5831 = vmor %vm5829, %vm5830
    %v5832 = vsel %vm5831, %v5824, %v5828
    %v5833 = vand.u32 2147483647, %v5823
    %vm5834 = vcmp.eq.f32.partialorder %v5833, 8.507059e+37
    %v5835 = vand.u32 %v5823, 2147483648
    %v5836 = vor.u32 1.1754944e-38, %v5835
    %v5837 = vsel %vm5834, %v5836, %v5832
    %v5838 = vmul.f32 1.0, %v5837
    %v5839 = vmul.f32 %v5818, 0.0
    %v5840 = vmul.f32 %v5799, %v5819
    %v5841 = vadd.f32 %v5839, %v5840
    %v5842 = vtanh.pop %v5841
    %v5843 = vmul.f32 %v5838, %v5842
    %v5844 = vxor.u32 %v5777, 2147483648
    %v5845 = vmul.f32 %v5844, 1.442695
    %v5846 = vpow.pop %v5845
    %v5847 = vadd.f32 %v5846, 1.0
    %v5848 = vrcp.pop %v5847
    %v5849 = vmul.f32 %v5847, %v5848
    %v5850 = vsub.f32 1.0, %v5849
    %v5851 = vmul.f32 %v5848, %v5850
    %v5852 = vadd.f32 %v5848, %v5851
    %vm5853 = vweird.f32 %v5847
    %vm5854 = vweird.f32 %v5848
    %vm5855 = vmor %vm5853, %vm5854
    %v5856 = vsel %vm5855, %v5848, %v5852
    %v5857 = vand.u32 2147483647, %v5847
    %vm5858 = vcmp.eq.f32.partialorder %v5857, 8.507059e+37
    %v5859 = vand.u32 %v5847, 2147483648
    %v5860 = vor.u32 1.1754944e-38, %v5859
    %v5861 = vsel %vm5858, %v5860, %v5856
    %v5862 = vmul.f32 1.0, %v5861
    %v5863 = vxor.u32 %v5778, 2147483648
    %v5864 = vmul.f32 %v5863, 1.442695
    %v5865 = vpow.pop %v5864
    %v5866 = vadd.f32 %v5865, 1.0
    %v5867 = vrcp.pop %v5866
    %v5868 = vmul.f32 %v5866, %v5867
    %v5869 = vsub.f32 1.0, %v5868
    %v5870 = vmul.f32 %v5867, %v5869
    %v5871 = vadd.f32 %v5867, %v5870
    %vm5872 = vweird.f32 %v5866
    %vm5873 = vweird.f32 %v5867
    %vm5874 = vmor %vm5872, %vm5873
    %v5875 = vsel %vm5874, %v5867, %v5871
    %v5876 = vand.u32 2147483647, %v5866
    %vm5877 = vcmp.eq.f32.partialorder %v5876, 8.507059e+37
    %v5878 = vand.u32 %v5866, 2147483648
    %v5879 = vor.u32 1.1754944e-38, %v5878
    %v5880 = vsel %vm5877, %v5879, %v5875
    %v5881 = vmul.f32 1.0, %v5880
    %v5882 = vtanh.pop %v5779
    %v5883 = vxor.u32 %v5780, 2147483648
    %v5884 = vmul.f32 %v5883, 1.442695
    %v5885 = vpow.pop %v5884
    %v5886 = vadd.f32 %v5885, 1.0
    %v5887 = vrcp.pop %v5886
    %v5888 = vmul.f32 %v5886, %v5887
    %v5889 = vsub.f32 1.0, %v5888
    %v5890 = vmul.f32 %v5887, %v5889
    %v5891 = vadd.f32 %v5887, %v5890
    %vm5892 = vweird.f32 %v5886
    %vm5893 = vweird.f32 %v5887
    %vm5894 = vmor %vm5892, %vm5893
    %v5895 = vsel %vm5894, %v5887, %v5891
    %v5896 = vand.u32 2147483647, %v5886
    %vm5897 = vcmp.eq.f32.partialorder %v5896, 8.507059e+37
    %v5898 = vand.u32 %v5886, 2147483648
    %v5899 = vor.u32 1.1754944e-38, %v5898
    %v5900 = vsel %vm5897, %v5899, %v5895
    %v5901 = vmul.f32 1.0, %v5900
    %v5902 = vmul.f32 %v5881, 0.0
    %v5903 = vmul.f32 %v5862, %v5882
    %v5904 = vadd.f32 %v5902, %v5903
    %v5905 = vtanh.pop %v5904
    %v5906 = vmul.f32 %v5901, %v5905
    %5907 = vst [vmem:[#allocation3] sm:$0x3] %v5843
    %5908 = vst [vmem:[#allocation3 + $0x18] sm:$0xc0] %v5906
    %v5909 = vpack.c.bf16 %v5843, %v5843
    %5910 = vmatpush.bf16.msra.mxu0 %v5461
    %5911 = vmatpush.bf16.msra.mxu0 %v5457
    %5912 = vmatpush.bf16.msra.mxu0 %v5453
    %5913 = vmatpush.bf16.msra.mxu0 %v5449
    %5914 = vmatpush.bf16.msra.mxu0 %v5445
    %5915 = vmatpush.bf16.msra.mxu0 %v5441
    %5916 = vmatpush.bf16.msra.mxu0 %v5437
    %5917 = vmatpush.bf16.msra.mxu0 %v5433
    %5918 = vmatmul.bf16.gmra.mxu0 %v5909
    %v5919 = vpop.f32.mrf.mxu0
    %v5920 = vadd.f32 0.0, %v5919
    %v5921 = vpop.f32.mrf.mxu0
    %5922 = vdwg.mxu0
    %5923 = vmatpush.bf16.msra.mxu0 %v5462
    %5924 = vmatpush.bf16.msra.mxu0 %v5458
    %5925 = vmatpush.bf16.msra.mxu0 %v5454
    %5926 = vmatpush.bf16.msra.mxu0 %v5450
    %5927 = vmatpush.bf16.msra.mxu0 %v5446
    %5928 = vmatpush.bf16.msra.mxu0 %v5442
    %5929 = vmatpush.bf16.msra.mxu0 %v5438
    %5930 = vmatpush.bf16.msra.mxu0 %v5434
    %5931 = vmatmul.bf16.gmra.mxu0 %v5909
    %v5932 = vpop.f32.mrf.mxu0
    %v5933 = vadd.f32 0.0, %v5932
    %v5934 = vpop.f32.mrf.mxu0
    %5935 = vdwg.mxu0
    %5936 = vmatpush.bf16.msra.mxu0 %v5463
    %5937 = vmatpush.bf16.msra.mxu0 %v5459
    %5938 = vmatpush.bf16.msra.mxu0 %v5455
    %5939 = vmatpush.bf16.msra.mxu0 %v5451
    %5940 = vmatpush.bf16.msra.mxu0 %v5447
    %5941 = vmatpush.bf16.msra.mxu0 %v5443
    %5942 = vmatpush.bf16.msra.mxu0 %v5439
    %5943 = vmatpush.bf16.msra.mxu0 %v5435
    %5944 = vmatmul.bf16.gmra.mxu0 %v5909
    %v5945 = vpop.f32.mrf.mxu0
    %v5946 = vadd.f32 0.0, %v5945
    %v5947 = vpop.f32.mrf.mxu0
    %5948 = vdwg.mxu0
    %5949 = vmatpush.bf16.msra.mxu0 %v5464
    %5950 = vmatpush.bf16.msra.mxu0 %v5460
    %5951 = vmatpush.bf16.msra.mxu0 %v5456
    %5952 = vmatpush.bf16.msra.mxu0 %v5452
    %5953 = vmatpush.bf16.msra.mxu0 %v5448
    %5954 = vmatpush.bf16.msra.mxu0 %v5444
    %5955 = vmatpush.bf16.msra.mxu0 %v5440
    %5956 = vmatpush.bf16.msra.mxu0 %v5436
    %5957 = vmatmul.bf16.gmra.mxu0 %v5909
    %v5958 = vpop.f32.mrf.mxu0
    %v5959 = vadd.f32 0.0, %v5958
    %v5960 = vpop.f32.mrf.mxu0
    %5961 = vdwg.mxu0
    %v5966 = vrot.slane %v5920, 6
    %v5967 = vrot.slane %v5933, 6
    %v5968 = vrot.slane %v5946, 6
    %v5969 = vrot.slane %v5959, 6
    %v5974 = vadd.f32 %v5137, %v5966
    %v5975 = vadd.f32 %v5165, %v5967
    %v5976 = vadd.f32 %v5193, %v5968
    %v5977 = vadd.f32 %v5221, %v5969
    %v5978 = vpack.c.bf16 %v5906, %v5906
    %v5980 = vrot.slane %v5978, 3
    %5982 = vmatpush.bf16.msra.mxu0 %v5677
    %5983 = vmatpush.bf16.msra.mxu0 %v5673
    %5984 = vmatpush.bf16.msra.mxu0 %v5669
    %5985 = vmatpush.bf16.msra.mxu0 %v5665
    %5986 = vmatpush.bf16.msra.mxu0 %v5661
    %5987 = vmatpush.bf16.msra.mxu0 %v5657
    %5988 = vmatpush.bf16.msra.mxu0 %v5653
    %5989 = vmatpush.bf16.msra.mxu0 %v5649
    %5990 = vmatmul.bf16.gmra.mxu0 %v5980
    %v5991 = vpop.f32.mrf.mxu0
    %v5992 = vadd.f32 0.0, %v5991
    %v5993 = vpop.f32.mrf.mxu0
    %5994 = vdwg.mxu0
    %5995 = vmatpush.bf16.msra.mxu0 %v5678
    %5996 = vmatpush.bf16.msra.mxu0 %v5674
    %5997 = vmatpush.bf16.msra.mxu0 %v5670
    %5998 = vmatpush.bf16.msra.mxu0 %v5666
    %5999 = vmatpush.bf16.msra.mxu0 %v5662
    %6000 = vmatpush.bf16.msra.mxu0 %v5658
    %6001 = vmatpush.bf16.msra.mxu0 %v5654
    %6002 = vmatpush.bf16.msra.mxu0 %v5650
    %6003 = vmatmul.bf16.gmra.mxu0 %v5980
    %v6004 = vpop.f32.mrf.mxu0
    %v6005 = vadd.f32 0.0, %v6004
    %v6006 = vpop.f32.mrf.mxu0
    %6007 = vdwg.mxu0
    %6008 = vmatpush.bf16.msra.mxu0 %v5679
    %6009 = vmatpush.bf16.msra.mxu0 %v5675
    %6010 = vmatpush.bf16.msra.mxu0 %v5671
    %6011 = vmatpush.bf16.msra.mxu0 %v5667
    %6012 = vmatpush.bf16.msra.mxu0 %v5663
    %6013 = vmatpush.bf16.msra.mxu0 %v5659
    %6014 = vmatpush.bf16.msra.mxu0 %v5655
    %6015 = vmatpush.bf16.msra.mxu0 %v5651
    %6016 = vmatmul.bf16.gmra.mxu0 %v5980
    %v6017 = vpop.f32.mrf.mxu0
    %v6018 = vadd.f32 0.0, %v6017
    %v6019 = vpop.f32.mrf.mxu0
    %6020 = vdwg.mxu0
    %6021 = vmatpush.bf16.msra.mxu0 %v5680
    %6022 = vmatpush.bf16.msra.mxu0 %v5676
    %6023 = vmatpush.bf16.msra.mxu0 %v5672
    %6024 = vmatpush.bf16.msra.mxu0 %v5668
    %6025 = vmatpush.bf16.msra.mxu0 %v5664
    %6026 = vmatpush.bf16.msra.mxu0 %v5660
    %6027 = vmatpush.bf16.msra.mxu0 %v5656
    %6028 = vmatpush.bf16.msra.mxu0 %v5652
    %6029 = vmatmul.bf16.gmra.mxu0 %v5980
    %v6030 = vpop.f32.mrf.mxu0
    %v6031 = vadd.f32 0.0, %v6030
    %v6032 = vpop.f32.mrf.mxu0
    %6033 = vdwg.mxu0
    %v6038 = vrot.slane %v5992, 4
    %v6039 = vrot.slane %v6005, 4
    %v6040 = vrot.slane %v6018, 4
    %v6041 = vrot.slane %v6031, 4
    %v6046 = vadd.f32 %v5251, %v6038
    %v6047 = vadd.f32 %v5279, %v6039
    %v6048 = vadd.f32 %v5307, %v6040
    %v6049 = vadd.f32 %v5335, %v6041
    %v6050 = vxor.u32 %v5974, 2147483648
    %v6051 = vmul.f32 %v6050, 1.442695
    %v6052 = vpow.pop %v6051
    %v6053 = vadd.f32 %v6052, 1.0
    %v6054 = vrcp.pop %v6053
    %v6055 = vmul.f32 %v6053, %v6054
    %v6056 = vsub.f32 1.0, %v6055
    %v6057 = vmul.f32 %v6054, %v6056
    %v6058 = vadd.f32 %v6054, %v6057
    %vm6059 = vweird.f32 %v6053
    %vm6060 = vweird.f32 %v6054
    %vm6061 = vmor %vm6059, %vm6060
    %v6062 = vsel %vm6061, %v6054, %v6058
    %v6063 = vand.u32 2147483647, %v6053
    %vm6064 = vcmp.eq.f32.partialorder %v6063, 8.507059e+37
    %v6065 = vand.u32 %v6053, 2147483648
    %v6066 = vor.u32 1.1754944e-38, %v6065
    %v6067 = vsel %vm6064, %v6066, %v6062
    %v6068 = vmul.f32 1.0, %v6067
    %v6069 = vxor.u32 %v5975, 2147483648
    %v6070 = vmul.f32 %v6069, 1.442695
    %v6071 = vpow.pop %v6070
    %v6072 = vadd.f32 %v6071, 1.0
    %v6073 = vrcp.pop %v6072
    %v6074 = vmul.f32 %v6072, %v6073
    %v6075 = vsub.f32 1.0, %v6074
    %v6076 = vmul.f32 %v6073, %v6075
    %v6077 = vadd.f32 %v6073, %v6076
    %vm6078 = vweird.f32 %v6072
    %vm6079 = vweird.f32 %v6073
    %vm6080 = vmor %vm6078, %vm6079
    %v6081 = vsel %vm6080, %v6073, %v6077
    %v6082 = vand.u32 2147483647, %v6072
    %vm6083 = vcmp.eq.f32.partialorder %v6082, 8.507059e+37
    %v6084 = vand.u32 %v6072, 2147483648
    %v6085 = vor.u32 1.1754944e-38, %v6084
    %v6086 = vsel %vm6083, %v6085, %v6081
    %v6087 = vmul.f32 1.0, %v6086
    %v6088 = vtanh.pop %v5976
    %v6089 = vxor.u32 %v5977, 2147483648
    %v6090 = vmul.f32 %v6089, 1.442695
    %v6091 = vpow.pop %v6090
    %v6092 = vadd.f32 %v6091, 1.0
    %v6093 = vrcp.pop %v6092
    %v6094 = vmul.f32 %v6092, %v6093
    %v6095 = vsub.f32 1.0, %v6094
    %v6096 = vmul.f32 %v6093, %v6095
    %v6097 = vadd.f32 %v6093, %v6096
    %vm6098 = vweird.f32 %v6092
    %vm6099 = vweird.f32 %v6093
    %vm6100 = vmor %vm6098, %vm6099
    %v6101 = vsel %vm6100, %v6093, %v6097
    %v6102 = vand.u32 2147483647, %v6092
    %vm6103 = vcmp.eq.f32.partialorder %v6102, 8.507059e+37
    %v6104 = vand.u32 %v6092, 2147483648
    %v6105 = vor.u32 1.1754944e-38, %v6104
    %v6106 = vsel %vm6103, %v6105, %v6101
    %v6107 = vmul.f32 1.0, %v6106
    %v6109 = vrot.slane %v5841, 6
    %v6111 = vmul.f32 %v6087, %v6109
    %v6112 = vmul.f32 %v6068, %v6088
    %v6113 = vadd.f32 %v6111, %v6112
    %v6114 = vtanh.pop %v6113
    %v6115 = vmul.f32 %v6107, %v6114
    %v6116 = vxor.u32 %v6046, 2147483648
    %v6117 = vmul.f32 %v6116, 1.442695
    %v6118 = vpow.pop %v6117
    %v6119 = vadd.f32 %v6118, 1.0
    %v6120 = vrcp.pop %v6119
    %v6121 = vmul.f32 %v6119, %v6120
    %v6122 = vsub.f32 1.0, %v6121
    %v6123 = vmul.f32 %v6120, %v6122
    %v6124 = vadd.f32 %v6120, %v6123
    %vm6125 = vweird.f32 %v6119
    %vm6126 = vweird.f32 %v6120
    %vm6127 = vmor %vm6125, %vm6126
    %v6128 = vsel %vm6127, %v6120, %v6124
    %v6129 = vand.u32 2147483647, %v6119
    %vm6130 = vcmp.eq.f32.partialorder %v6129, 8.507059e+37
    %v6131 = vand.u32 %v6119, 2147483648
    %v6132 = vor.u32 1.1754944e-38, %v6131
    %v6133 = vsel %vm6130, %v6132, %v6128
    %v6134 = vmul.f32 1.0, %v6133
    %v6135 = vxor.u32 %v6047, 2147483648
    %v6136 = vmul.f32 %v6135, 1.442695
    %v6137 = vpow.pop %v6136
    %v6138 = vadd.f32 %v6137, 1.0
    %v6139 = vrcp.pop %v6138
    %v6140 = vmul.f32 %v6138, %v6139
    %v6141 = vsub.f32 1.0, %v6140
    %v6142 = vmul.f32 %v6139, %v6141
    %v6143 = vadd.f32 %v6139, %v6142
    %vm6144 = vweird.f32 %v6138
    %vm6145 = vweird.f32 %v6139
    %vm6146 = vmor %vm6144, %vm6145
    %v6147 = vsel %vm6146, %v6139, %v6143
    %v6148 = vand.u32 2147483647, %v6138
    %vm6149 = vcmp.eq.f32.partialorder %v6148, 8.507059e+37
    %v6150 = vand.u32 %v6138, 2147483648
    %v6151 = vor.u32 1.1754944e-38, %v6150
    %v6152 = vsel %vm6149, %v6151, %v6147
    %v6153 = vmul.f32 1.0, %v6152
    %v6154 = vtanh.pop %v6048
    %v6155 = vxor.u32 %v6049, 2147483648
    %v6156 = vmul.f32 %v6155, 1.442695
    %v6157 = vpow.pop %v6156
    %v6158 = vadd.f32 %v6157, 1.0
    %v6159 = vrcp.pop %v6158
    %v6160 = vmul.f32 %v6158, %v6159
    %v6161 = vsub.f32 1.0, %v6160
    %v6162 = vmul.f32 %v6159, %v6161
    %v6163 = vadd.f32 %v6159, %v6162
    %vm6164 = vweird.f32 %v6158
    %vm6165 = vweird.f32 %v6159
    %vm6166 = vmor %vm6164, %vm6165
    %v6167 = vsel %vm6166, %v6159, %v6163
    %v6168 = vand.u32 2147483647, %v6158
    %vm6169 = vcmp.eq.f32.partialorder %v6168, 8.507059e+37
    %v6170 = vand.u32 %v6158, 2147483648
    %v6171 = vor.u32 1.1754944e-38, %v6170
    %v6172 = vsel %vm6169, %v6171, %v6167
    %v6173 = vmul.f32 1.0, %v6172
    %v6175 = vrot.slane %v5904, 2
    %v6177 = vmul.f32 %v6153, %v6175
    %v6178 = vmul.f32 %v6134, %v6154
    %v6179 = vadd.f32 %v6177, %v6178
    %v6180 = vtanh.pop %v6179
    %v6181 = vmul.f32 %v6173, %v6180
    %6182 = vst [vmem:[#allocation3] sm:$0xc] %v6115
    %6183 = vst [vmem:[#allocation3 + $0x18] sm:$0x30] %v6181
    %v6184 = vpack.c.bf16 %v6115, %v6115
    %v6186 = vrot.slane %v6184, 1
    %6188 = vmatpush.bf16.msra.mxu0 %v5461
    %6189 = vmatpush.bf16.msra.mxu0 %v5457
    %6190 = vmatpush.bf16.msra.mxu0 %v5453
    %6191 = vmatpush.bf16.msra.mxu0 %v5449
    %6192 = vmatpush.bf16.msra.mxu0 %v5445
    %6193 = vmatpush.bf16.msra.mxu0 %v5441
    %6194 = vmatpush.bf16.msra.mxu0 %v5437
    %6195 = vmatpush.bf16.msra.mxu0 %v5433
    %6196 = vmatmul.bf16.gmra.mxu0 %v6186
    %v6197 = vpop.f32.mrf.mxu0
    %v6198 = vadd.f32 0.0, %v6197
    %v6199 = vpop.f32.mrf.mxu0
    %6200 = vdwg.mxu0
    %6201 = vmatpush.bf16.msra.mxu0 %v5462
    %6202 = vmatpush.bf16.msra.mxu0 %v5458
    %6203 = vmatpush.bf16.msra.mxu0 %v5454
    %6204 = vmatpush.bf16.msra.mxu0 %v5450
    %6205 = vmatpush.bf16.msra.mxu0 %v5446
    %6206 = vmatpush.bf16.msra.mxu0 %v5442
    %6207 = vmatpush.bf16.msra.mxu0 %v5438
    %6208 = vmatpush.bf16.msra.mxu0 %v5434
    %6209 = vmatmul.bf16.gmra.mxu0 %v6186
    %v6210 = vpop.f32.mrf.mxu0
    %v6211 = vadd.f32 0.0, %v6210
    %v6212 = vpop.f32.mrf.mxu0
    %6213 = vdwg.mxu0
    %6214 = vmatpush.bf16.msra.mxu0 %v5463
    %6215 = vmatpush.bf16.msra.mxu0 %v5459
    %6216 = vmatpush.bf16.msra.mxu0 %v5455
    %6217 = vmatpush.bf16.msra.mxu0 %v5451
    %6218 = vmatpush.bf16.msra.mxu0 %v5447
    %6219 = vmatpush.bf16.msra.mxu0 %v5443
    %6220 = vmatpush.bf16.msra.mxu0 %v5439
    %6221 = vmatpush.bf16.msra.mxu0 %v5435
    %6222 = vmatmul.bf16.gmra.mxu0 %v6186
    %v6223 = vpop.f32.mrf.mxu0
    %v6224 = vadd.f32 0.0, %v6223
    %v6225 = vpop.f32.mrf.mxu0
    %6226 = vdwg.mxu0
    %6227 = vmatpush.bf16.msra.mxu0 %v5464
    %6228 = vmatpush.bf16.msra.mxu0 %v5460
    %6229 = vmatpush.bf16.msra.mxu0 %v5456
    %6230 = vmatpush.bf16.msra.mxu0 %v5452
    %6231 = vmatpush.bf16.msra.mxu0 %v5448
    %6232 = vmatpush.bf16.msra.mxu0 %v5444
    %6233 = vmatpush.bf16.msra.mxu0 %v5440
    %6234 = vmatpush.bf16.msra.mxu0 %v5436
    %6235 = vmatmul.bf16.gmra.mxu0 %v6186
    %v6236 = vpop.f32.mrf.mxu0
    %v6237 = vadd.f32 0.0, %v6236
    %v6238 = vpop.f32.mrf.mxu0
    %6239 = vdwg.mxu0
    %v6244 = vrot.slane %v6198, 4
    %v6245 = vrot.slane %v6211, 4
    %v6246 = vrot.slane %v6224, 4
    %v6247 = vrot.slane %v6237, 4
    %v6252 = vadd.f32 %v5137, %v6244
    %v6253 = vadd.f32 %v5165, %v6245
    %v6254 = vadd.f32 %v5193, %v6246
    %v6255 = vadd.f32 %v5221, %v6247
    %v6256 = vpack.c.bf16 %v6181, %v6181
    %v6258 = vrot.slane %v6256, 2
    %6260 = vmatpush.bf16.msra.mxu0 %v5677
    %6261 = vmatpush.bf16.msra.mxu0 %v5673
    %6262 = vmatpush.bf16.msra.mxu0 %v5669
    %6263 = vmatpush.bf16.msra.mxu0 %v5665
    %6264 = vmatpush.bf16.msra.mxu0 %v5661
    %6265 = vmatpush.bf16.msra.mxu0 %v5657
    %6266 = vmatpush.bf16.msra.mxu0 %v5653
    %6267 = vmatpush.bf16.msra.mxu0 %v5649
    %6268 = vmatmul.bf16.gmra.mxu0 %v6258
    %v6269 = vpop.f32.mrf.mxu0
    %v6270 = vadd.f32 0.0, %v6269
    %v6271 = vpop.f32.mrf.mxu0
    %6272 = vdwg.mxu0
    %6273 = vmatpush.bf16.msra.mxu0 %v5678
    %6274 = vmatpush.bf16.msra.mxu0 %v5674
    %6275 = vmatpush.bf16.msra.mxu0 %v5670
    %6276 = vmatpush.bf16.msra.mxu0 %v5666
    %6277 = vmatpush.bf16.msra.mxu0 %v5662
    %6278 = vmatpush.bf16.msra.mxu0 %v5658
    %6279 = vmatpush.bf16.msra.mxu0 %v5654
    %6280 = vmatpush.bf16.msra.mxu0 %v5650
    %6281 = vmatmul.bf16.gmra.mxu0 %v6258
    %v6282 = vpop.f32.mrf.mxu0
    %v6283 = vadd.f32 0.0, %v6282
    %v6284 = vpop.f32.mrf.mxu0
    %6285 = vdwg.mxu0
    %6286 = vmatpush.bf16.msra.mxu0 %v5679
    %6287 = vmatpush.bf16.msra.mxu0 %v5675
    %6288 = vmatpush.bf16.msra.mxu0 %v5671
    %6289 = vmatpush.bf16.msra.mxu0 %v5667
    %6290 = vmatpush.bf16.msra.mxu0 %v5663
    %6291 = vmatpush.bf16.msra.mxu0 %v5659
    %6292 = vmatpush.bf16.msra.mxu0 %v5655
    %6293 = vmatpush.bf16.msra.mxu0 %v5651
    %6294 = vmatmul.bf16.gmra.mxu0 %v6258
    %v6295 = vpop.f32.mrf.mxu0
    %v6296 = vadd.f32 0.0, %v6295
    %v6297 = vpop.f32.mrf.mxu0
    %6298 = vdwg.mxu0
    %6299 = vmatpush.bf16.msra.mxu0 %v5680
    %6300 = vmatpush.bf16.msra.mxu0 %v5676
    %6301 = vmatpush.bf16.msra.mxu0 %v5672
    %6302 = vmatpush.bf16.msra.mxu0 %v5668
    %6303 = vmatpush.bf16.msra.mxu0 %v5664
    %6304 = vmatpush.bf16.msra.mxu0 %v5660
    %6305 = vmatpush.bf16.msra.mxu0 %v5656
    %6306 = vmatpush.bf16.msra.mxu0 %v5652
    %6307 = vmatmul.bf16.gmra.mxu0 %v6258
    %v6308 = vpop.f32.mrf.mxu0
    %v6309 = vadd.f32 0.0, %v6308
    %v6310 = vpop.f32.mrf.mxu0
    %6311 = vdwg.mxu0
    %v6316 = vrot.slane %v6270, 6
    %v6317 = vrot.slane %v6283, 6
    %v6318 = vrot.slane %v6296, 6
    %v6319 = vrot.slane %v6309, 6
    %v6324 = vadd.f32 %v5251, %v6316
    %v6325 = vadd.f32 %v5279, %v6317
    %v6326 = vadd.f32 %v5307, %v6318
    %v6327 = vadd.f32 %v5335, %v6319
    %v6328 = vxor.u32 %v6252, 2147483648
    %v6329 = vmul.f32 %v6328, 1.442695
    %v6330 = vpow.pop %v6329
    %v6331 = vadd.f32 %v6330, 1.0
    %v6332 = vrcp.pop %v6331
    %v6333 = vmul.f32 %v6331, %v6332
    %v6334 = vsub.f32 1.0, %v6333
    %v6335 = vmul.f32 %v6332, %v6334
    %v6336 = vadd.f32 %v6332, %v6335
    %vm6337 = vweird.f32 %v6331
    %vm6338 = vweird.f32 %v6332
    %vm6339 = vmor %vm6337, %vm6338
    %v6340 = vsel %vm6339, %v6332, %v6336
    %v6341 = vand.u32 2147483647, %v6331
    %vm6342 = vcmp.eq.f32.partialorder %v6341, 8.507059e+37
    %v6343 = vand.u32 %v6331, 2147483648
    %v6344 = vor.u32 1.1754944e-38, %v6343
    %v6345 = vsel %vm6342, %v6344, %v6340
    %v6346 = vmul.f32 1.0, %v6345
    %v6347 = vxor.u32 %v6253, 2147483648
    %v6348 = vmul.f32 %v6347, 1.442695
    %v6349 = vpow.pop %v6348
    %v6350 = vadd.f32 %v6349, 1.0
    %v6351 = vrcp.pop %v6350
    %v6352 = vmul.f32 %v6350, %v6351
    %v6353 = vsub.f32 1.0, %v6352
    %v6354 = vmul.f32 %v6351, %v6353
    %v6355 = vadd.f32 %v6351, %v6354
    %vm6356 = vweird.f32 %v6350
    %vm6357 = vweird.f32 %v6351
    %vm6358 = vmor %vm6356, %vm6357
    %v6359 = vsel %vm6358, %v6351, %v6355
    %v6360 = vand.u32 2147483647, %v6350
    %vm6361 = vcmp.eq.f32.partialorder %v6360, 8.507059e+37
    %v6362 = vand.u32 %v6350, 2147483648
    %v6363 = vor.u32 1.1754944e-38, %v6362
    %v6364 = vsel %vm6361, %v6363, %v6359
    %v6365 = vmul.f32 1.0, %v6364
    %v6366 = vtanh.pop %v6254
    %v6367 = vxor.u32 %v6255, 2147483648
    %v6368 = vmul.f32 %v6367, 1.442695
    %v6369 = vpow.pop %v6368
    %v6370 = vadd.f32 %v6369, 1.0
    %v6371 = vrcp.pop %v6370
    %v6372 = vmul.f32 %v6370, %v6371
    %v6373 = vsub.f32 1.0, %v6372
    %v6374 = vmul.f32 %v6371, %v6373
    %v6375 = vadd.f32 %v6371, %v6374
    %vm6376 = vweird.f32 %v6370
    %vm6377 = vweird.f32 %v6371
    %vm6378 = vmor %vm6376, %vm6377
    %v6379 = vsel %vm6378, %v6371, %v6375
    %v6380 = vand.u32 2147483647, %v6370
    %vm6381 = vcmp.eq.f32.partialorder %v6380, 8.507059e+37
    %v6382 = vand.u32 %v6370, 2147483648
    %v6383 = vor.u32 1.1754944e-38, %v6382
    %v6384 = vsel %vm6381, %v6383, %v6379
    %v6385 = vmul.f32 1.0, %v6384
    %v6387 = vrot.slane %v6113, 6
    %v6389 = vmul.f32 %v6365, %v6387
    %v6390 = vmul.f32 %v6346, %v6366
    %v6391 = vadd.f32 %v6389, %v6390
    %v6392 = vtanh.pop %v6391
    %v6393 = vmul.f32 %v6385, %v6392
    %v6394 = vxor.u32 %v6324, 2147483648
    %v6395 = vmul.f32 %v6394, 1.442695
    %v6396 = vpow.pop %v6395
    %v6397 = vadd.f32 %v6396, 1.0
    %v6398 = vrcp.pop %v6397
    %v6399 = vmul.f32 %v6397, %v6398
    %v6400 = vsub.f32 1.0, %v6399
    %v6401 = vmul.f32 %v6398, %v6400
    %v6402 = vadd.f32 %v6398, %v6401
    %vm6403 = vweird.f32 %v6397
    %vm6404 = vweird.f32 %v6398
    %vm6405 = vmor %vm6403, %vm6404
    %v6406 = vsel %vm6405, %v6398, %v6402
    %v6407 = vand.u32 2147483647, %v6397
    %vm6408 = vcmp.eq.f32.partialorder %v6407, 8.507059e+37
    %v6409 = vand.u32 %v6397, 2147483648
    %v6410 = vor.u32 1.1754944e-38, %v6409
    %v6411 = vsel %vm6408, %v6410, %v6406
    %v6412 = vmul.f32 1.0, %v6411
    %v6413 = vxor.u32 %v6325, 2147483648
    %v6414 = vmul.f32 %v6413, 1.442695
    %v6415 = vpow.pop %v6414
    %v6416 = vadd.f32 %v6415, 1.0
    %v6417 = vrcp.pop %v6416
    %v6418 = vmul.f32 %v6416, %v6417
    %v6419 = vsub.f32 1.0, %v6418
    %v6420 = vmul.f32 %v6417, %v6419
    %v6421 = vadd.f32 %v6417, %v6420
    %vm6422 = vweird.f32 %v6416
    %vm6423 = vweird.f32 %v6417
    %vm6424 = vmor %vm6422, %vm6423
    %v6425 = vsel %vm6424, %v6417, %v6421
    %v6426 = vand.u32 2147483647, %v6416
    %vm6427 = vcmp.eq.f32.partialorder %v6426, 8.507059e+37
    %v6428 = vand.u32 %v6416, 2147483648
    %v6429 = vor.u32 1.1754944e-38, %v6428
    %v6430 = vsel %vm6427, %v6429, %v6425
    %v6431 = vmul.f32 1.0, %v6430
    %v6432 = vtanh.pop %v6326
    %v6433 = vxor.u32 %v6327, 2147483648
    %v6434 = vmul.f32 %v6433, 1.442695
    %v6435 = vpow.pop %v6434
    %v6436 = vadd.f32 %v6435, 1.0
    %v6437 = vrcp.pop %v6436
    %v6438 = vmul.f32 %v6436, %v6437
    %v6439 = vsub.f32 1.0, %v6438
    %v6440 = vmul.f32 %v6437, %v6439
    %v6441 = vadd.f32 %v6437, %v6440
    %vm6442 = vweird.f32 %v6436
    %vm6443 = vweird.f32 %v6437
    %vm6444 = vmor %vm6442, %vm6443
    %v6445 = vsel %vm6444, %v6437, %v6441
    %v6446 = vand.u32 2147483647, %v6436
    %vm6447 = vcmp.eq.f32.partialorder %v6446, 8.507059e+37
    %v6448 = vand.u32 %v6436, 2147483648
    %v6449 = vor.u32 1.1754944e-38, %v6448
    %v6450 = vsel %vm6447, %v6449, %v6445
    %v6451 = vmul.f32 1.0, %v6450
    %v6453 = vrot.slane %v6179, 2
    %v6455 = vmul.f32 %v6431, %v6453
    %v6456 = vmul.f32 %v6412, %v6432
    %v6457 = vadd.f32 %v6455, %v6456
    %v6458 = vtanh.pop %v6457
    %v6459 = vmul.f32 %v6451, %v6458
    %6460 = vst [vmem:[#allocation3] sm:$0x30] %v6393
    %6461 = vst [vmem:[#allocation3 + $0x18] sm:$0xc] %v6459
    %v6462 = vpack.c.bf16 %v6393, %v6393
    %v6464 = vrot.slane %v6462, 2
    %6466 = vmatpush.bf16.msra.mxu0 %v5461
    %6467 = vmatpush.bf16.msra.mxu0 %v5457
    %6468 = vmatpush.bf16.msra.mxu0 %v5453
    %6469 = vmatpush.bf16.msra.mxu0 %v5449
    %6470 = vmatpush.bf16.msra.mxu0 %v5445
    %6471 = vmatpush.bf16.msra.mxu0 %v5441
    %6472 = vmatpush.bf16.msra.mxu0 %v5437
    %6473 = vmatpush.bf16.msra.mxu0 %v5433
    %6474 = vmatmul.bf16.gmra.mxu0 %v6464
    %v6475 = vpop.f32.mrf.mxu0
    %v6476 = vadd.f32 0.0, %v6475
    %v6477 = vpop.f32.mrf.mxu0
    %6478 = vdwg.mxu0
    %6479 = vmatpush.bf16.msra.mxu0 %v5462
    %6480 = vmatpush.bf16.msra.mxu0 %v5458
    %6481 = vmatpush.bf16.msra.mxu0 %v5454
    %6482 = vmatpush.bf16.msra.mxu0 %v5450
    %6483 = vmatpush.bf16.msra.mxu0 %v5446
    %6484 = vmatpush.bf16.msra.mxu0 %v5442
    %6485 = vmatpush.bf16.msra.mxu0 %v5438
    %6486 = vmatpush.bf16.msra.mxu0 %v5434
    %6487 = vmatmul.bf16.gmra.mxu0 %v6464
    %v6488 = vpop.f32.mrf.mxu0
    %v6489 = vadd.f32 0.0, %v6488
    %v6490 = vpop.f32.mrf.mxu0
    %6491 = vdwg.mxu0
    %6492 = vmatpush.bf16.msra.mxu0 %v5463
    %6493 = vmatpush.bf16.msra.mxu0 %v5459
    %6494 = vmatpush.bf16.msra.mxu0 %v5455
    %6495 = vmatpush.bf16.msra.mxu0 %v5451
    %6496 = vmatpush.bf16.msra.mxu0 %v5447
    %6497 = vmatpush.bf16.msra.mxu0 %v5443
    %6498 = vmatpush.bf16.msra.mxu0 %v5439
    %6499 = vmatpush.bf16.msra.mxu0 %v5435
    %6500 = vmatmul.bf16.gmra.mxu0 %v6464
    %v6501 = vpop.f32.mrf.mxu0
    %v6502 = vadd.f32 0.0, %v6501
    %v6503 = vpop.f32.mrf.mxu0
    %6504 = vdwg.mxu0
    %6505 = vmatpush.bf16.msra.mxu0 %v5464
    %6506 = vmatpush.bf16.msra.mxu0 %v5460
    %6507 = vmatpush.bf16.msra.mxu0 %v5456
    %6508 = vmatpush.bf16.msra.mxu0 %v5452
    %6509 = vmatpush.bf16.msra.mxu0 %v5448
    %6510 = vmatpush.bf16.msra.mxu0 %v5444
    %6511 = vmatpush.bf16.msra.mxu0 %v5440
    %6512 = vmatpush.bf16.msra.mxu0 %v5436
    %6513 = vmatmul.bf16.gmra.mxu0 %v6464
    %v6514 = vpop.f32.mrf.mxu0
    %v6515 = vadd.f32 0.0, %v6514
    %v6516 = vpop.f32.mrf.mxu0
    %6517 = vdwg.mxu0
    %v6522 = vrot.slane %v6476, 2
    %v6523 = vrot.slane %v6489, 2
    %v6524 = vrot.slane %v6502, 2
    %v6525 = vrot.slane %v6515, 2
    %v6530 = vadd.f32 %v5137, %v6522
    %v6531 = vadd.f32 %v5165, %v6523
    %v6532 = vadd.f32 %v5193, %v6524
    %v6533 = vadd.f32 %v5221, %v6525
    %v6534 = vpack.c.bf16 %v6459, %v6459
    %v6536 = vrot.slane %v6534, 1
    %6538 = vmatpush.bf16.msra.mxu0 %v5677
    %6539 = vmatpush.bf16.msra.mxu0 %v5673
    %6540 = vmatpush.bf16.msra.mxu0 %v5669
    %6541 = vmatpush.bf16.msra.mxu0 %v5665
    %6542 = vmatpush.bf16.msra.mxu0 %v5661
    %6543 = vmatpush.bf16.msra.mxu0 %v5657
    %6544 = vmatpush.bf16.msra.mxu0 %v5653
    %6545 = vmatpush.bf16.msra.mxu0 %v5649
    %6546 = vmatmul.bf16.gmra.mxu0 %v6536
    %v6547 = vpop.f32.mrf.mxu0
    %v6548 = vadd.f32 0.0, %v6547
    %v6549 = vpop.f32.mrf.mxu0
    %6550 = vdwg.mxu0
    %6551 = vmatpush.bf16.msra.mxu0 %v5678
    %6552 = vmatpush.bf16.msra.mxu0 %v5674
    %6553 = vmatpush.bf16.msra.mxu0 %v5670
    %6554 = vmatpush.bf16.msra.mxu0 %v5666
    %6555 = vmatpush.bf16.msra.mxu0 %v5662
    %6556 = vmatpush.bf16.msra.mxu0 %v5658
    %6557 = vmatpush.bf16.msra.mxu0 %v5654
    %6558 = vmatpush.bf16.msra.mxu0 %v5650
    %6559 = vmatmul.bf16.gmra.mxu0 %v6536
    %v6560 = vpop.f32.mrf.mxu0
    %v6561 = vadd.f32 0.0, %v6560
    %v6562 = vpop.f32.mrf.mxu0
    %6563 = vdwg.mxu0
    %6564 = vmatpush.bf16.msra.mxu0 %v5679
    %6565 = vmatpush.bf16.msra.mxu0 %v5675
    %6566 = vmatpush.bf16.msra.mxu0 %v5671
    %6567 = vmatpush.bf16.msra.mxu0 %v5667
    %6568 = vmatpush.bf16.msra.mxu0 %v5663
    %6569 = vmatpush.bf16.msra.mxu0 %v5659
    %6570 = vmatpush.bf16.msra.mxu0 %v5655
    %6571 = vmatpush.bf16.msra.mxu0 %v5651
    %6572 = vmatmul.bf16.gmra.mxu0 %v6536
    %v6573 = vpop.f32.mrf.mxu0
    %v6574 = vadd.f32 0.0, %v6573
    %v6575 = vpop.f32.mrf.mxu0
    %6576 = vdwg.mxu0
    %6577 = vmatpush.bf16.msra.mxu0 %v5680
    %6578 = vmatpush.bf16.msra.mxu0 %v5676
    %6579 = vmatpush.bf16.msra.mxu0 %v5672
    %6580 = vmatpush.bf16.msra.mxu0 %v5668
    %6581 = vmatpush.bf16.msra.mxu0 %v5664
    %6582 = vmatpush.bf16.msra.mxu0 %v5660
    %6583 = vmatpush.bf16.msra.mxu0 %v5656
    %6584 = vmatpush.bf16.msra.mxu0 %v5652
    %6585 = vmatmul.bf16.gmra.mxu0 %v6536
    %v6586 = vpop.f32.mrf.mxu0
    %v6587 = vadd.f32 0.0, %v6586
    %v6588 = vpop.f32.mrf.mxu0
    %6589 = vdwg.mxu0
    %v6590 = vadd.f32 %v5251, %v6548
    %v6591 = vadd.f32 %v5279, %v6561
    %v6592 = vadd.f32 %v5307, %v6574
    %v6593 = vadd.f32 %v5335, %v6587
    %v6594 = vxor.u32 %v6530, 2147483648
    %v6595 = vmul.f32 %v6594, 1.442695
    %v6596 = vpow.pop %v6595
    %v6597 = vadd.f32 %v6596, 1.0
    %v6598 = vrcp.pop %v6597
    %v6599 = vmul.f32 %v6597, %v6598
    %v6600 = vsub.f32 1.0, %v6599
    %v6601 = vmul.f32 %v6598, %v6600
    %v6602 = vadd.f32 %v6598, %v6601
    %vm6603 = vweird.f32 %v6597
    %vm6604 = vweird.f32 %v6598
    %vm6605 = vmor %vm6603, %vm6604
    %v6606 = vsel %vm6605, %v6598, %v6602
    %v6607 = vand.u32 2147483647, %v6597
    %vm6608 = vcmp.eq.f32.partialorder %v6607, 8.507059e+37
    %v6609 = vand.u32 %v6597, 2147483648
    %v6610 = vor.u32 1.1754944e-38, %v6609
    %v6611 = vsel %vm6608, %v6610, %v6606
    %v6612 = vmul.f32 1.0, %v6611
    %v6613 = vxor.u32 %v6531, 2147483648
    %v6614 = vmul.f32 %v6613, 1.442695
    %v6615 = vpow.pop %v6614
    %v6616 = vadd.f32 %v6615, 1.0
    %v6617 = vrcp.pop %v6616
    %v6618 = vmul.f32 %v6616, %v6617
    %v6619 = vsub.f32 1.0, %v6618
    %v6620 = vmul.f32 %v6617, %v6619
    %v6621 = vadd.f32 %v6617, %v6620
    %vm6622 = vweird.f32 %v6616
    %vm6623 = vweird.f32 %v6617
    %vm6624 = vmor %vm6622, %vm6623
    %v6625 = vsel %vm6624, %v6617, %v6621
    %v6626 = vand.u32 2147483647, %v6616
    %vm6627 = vcmp.eq.f32.partialorder %v6626, 8.507059e+37
    %v6628 = vand.u32 %v6616, 2147483648
    %v6629 = vor.u32 1.1754944e-38, %v6628
    %v6630 = vsel %vm6627, %v6629, %v6625
    %v6631 = vmul.f32 1.0, %v6630
    %v6632 = vtanh.pop %v6532
    %v6633 = vxor.u32 %v6533, 2147483648
    %v6634 = vmul.f32 %v6633, 1.442695
    %v6635 = vpow.pop %v6634
    %v6636 = vadd.f32 %v6635, 1.0
    %v6637 = vrcp.pop %v6636
    %v6638 = vmul.f32 %v6636, %v6637
    %v6639 = vsub.f32 1.0, %v6638
    %v6640 = vmul.f32 %v6637, %v6639
    %v6641 = vadd.f32 %v6637, %v6640
    %vm6642 = vweird.f32 %v6636
    %vm6643 = vweird.f32 %v6637
    %vm6644 = vmor %vm6642, %vm6643
    %v6645 = vsel %vm6644, %v6637, %v6641
    %v6646 = vand.u32 2147483647, %v6636
    %vm6647 = vcmp.eq.f32.partialorder %v6646, 8.507059e+37
    %v6648 = vand.u32 %v6636, 2147483648
    %v6649 = vor.u32 1.1754944e-38, %v6648
    %v6650 = vsel %vm6647, %v6649, %v6645
    %v6651 = vmul.f32 1.0, %v6650
    %v6653 = vrot.slane %v6391, 6
    %v6655 = vmul.f32 %v6631, %v6653
    %v6656 = vmul.f32 %v6612, %v6632
    %v6657 = vadd.f32 %v6655, %v6656
    %v6658 = vtanh.pop %v6657
    %v6659 = vmul.f32 %v6651, %v6658
    %v6660 = vxor.u32 %v6590, 2147483648
    %v6661 = vmul.f32 %v6660, 1.442695
    %v6662 = vpow.pop %v6661
    %v6663 = vadd.f32 %v6662, 1.0
    %v6664 = vrcp.pop %v6663
    %v6665 = vmul.f32 %v6663, %v6664
    %v6666 = vsub.f32 1.0, %v6665
    %v6667 = vmul.f32 %v6664, %v6666
    %v6668 = vadd.f32 %v6664, %v6667
    %vm6669 = vweird.f32 %v6663
    %vm6670 = vweird.f32 %v6664
    %vm6671 = vmor %vm6669, %vm6670
    %v6672 = vsel %vm6671, %v6664, %v6668
    %v6673 = vand.u32 2147483647, %v6663
    %vm6674 = vcmp.eq.f32.partialorder %v6673, 8.507059e+37
    %v6675 = vand.u32 %v6663, 2147483648
    %v6676 = vor.u32 1.1754944e-38, %v6675
    %v6677 = vsel %vm6674, %v6676, %v6672
    %v6678 = vmul.f32 1.0, %v6677
    %v6679 = vxor.u32 %v6591, 2147483648
    %v6680 = vmul.f32 %v6679, 1.442695
    %v6681 = vpow.pop %v6680
    %v6682 = vadd.f32 %v6681, 1.0
    %v6683 = vrcp.pop %v6682
    %v6684 = vmul.f32 %v6682, %v6683
    %v6685 = vsub.f32 1.0, %v6684
    %v6686 = vmul.f32 %v6683, %v6685
    %v6687 = vadd.f32 %v6683, %v6686
    %vm6688 = vweird.f32 %v6682
    %vm6689 = vweird.f32 %v6683
    %vm6690 = vmor %vm6688, %vm6689
    %v6691 = vsel %vm6690, %v6683, %v6687
    %v6692 = vand.u32 2147483647, %v6682
    %vm6693 = vcmp.eq.f32.partialorder %v6692, 8.507059e+37
    %v6694 = vand.u32 %v6682, 2147483648
    %v6695 = vor.u32 1.1754944e-38, %v6694
    %v6696 = vsel %vm6693, %v6695, %v6691
    %v6697 = vmul.f32 1.0, %v6696
    %v6698 = vtanh.pop %v6592
    %v6699 = vxor.u32 %v6593, 2147483648
    %v6700 = vmul.f32 %v6699, 1.442695
    %v6701 = vpow.pop %v6700
    %v6702 = vadd.f32 %v6701, 1.0
    %v6703 = vrcp.pop %v6702
    %v6704 = vmul.f32 %v6702, %v6703
    %v6705 = vsub.f32 1.0, %v6704
    %v6706 = vmul.f32 %v6703, %v6705
    %v6707 = vadd.f32 %v6703, %v6706
    %vm6708 = vweird.f32 %v6702
    %vm6709 = vweird.f32 %v6703
    %vm6710 = vmor %vm6708, %vm6709
    %v6711 = vsel %vm6710, %v6703, %v6707
    %v6712 = vand.u32 2147483647, %v6702
    %vm6713 = vcmp.eq.f32.partialorder %v6712, 8.507059e+37
    %v6714 = vand.u32 %v6702, 2147483648
    %v6715 = vor.u32 1.1754944e-38, %v6714
    %v6716 = vsel %vm6713, %v6715, %v6711
    %v6717 = vmul.f32 1.0, %v6716
    %v6719 = vrot.slane %v6457, 2
    %v6721 = vmul.f32 %v6697, %v6719
    %v6722 = vmul.f32 %v6678, %v6698
    %v6723 = vadd.f32 %v6721, %v6722
    %v6724 = vtanh.pop %v6723
    %v6725 = vmul.f32 %v6717, %v6724
    %6726 = vst [vmem:[#allocation3] sm:$0xc0] %v6659
    %6727 = vst [vmem:[#allocation3 + $0x18] sm:$0x3] %v6725
    %v6728 = vpack.c.bf16 %v6659, %v6659
    %v6730 = vrot.slane %v6728, 3
    %6732 = vmatpush.bf16.msra.mxu0 %v5461
    %6733 = vmatpush.bf16.msra.mxu0 %v5457
    %6734 = vmatpush.bf16.msra.mxu0 %v5453
    %6735 = vmatpush.bf16.msra.mxu0 %v5449
    %6736 = vmatpush.bf16.msra.mxu0 %v5445
    %6737 = vmatpush.bf16.msra.mxu0 %v5441
    %6738 = vmatpush.bf16.msra.mxu0 %v5437
    %6739 = vmatpush.bf16.msra.mxu0 %v5433
    %6740 = vmatmul.bf16.gmra.mxu0 %v6730
    %v6741 = vpop.f32.mrf.mxu0
    %v6742 = vadd.f32 0.0, %v6741
    %v6743 = vpop.f32.mrf.mxu0
    %6744 = vdwg.mxu0
    %6745 = vmatpush.bf16.msra.mxu0 %v5462
    %6746 = vmatpush.bf16.msra.mxu0 %v5458
    %6747 = vmatpush.bf16.msra.mxu0 %v5454
    %6748 = vmatpush.bf16.msra.mxu0 %v5450
    %6749 = vmatpush.bf16.msra.mxu0 %v5446
    %6750 = vmatpush.bf16.msra.mxu0 %v5442
    %6751 = vmatpush.bf16.msra.mxu0 %v5438
    %6752 = vmatpush.bf16.msra.mxu0 %v5434
    %6753 = vmatmul.bf16.gmra.mxu0 %v6730
    %v6754 = vpop.f32.mrf.mxu0
    %v6755 = vadd.f32 0.0, %v6754
    %v6756 = vpop.f32.mrf.mxu0
    %6757 = vdwg.mxu0
    %6758 = vmatpush.bf16.msra.mxu0 %v5463
    %6759 = vmatpush.bf16.msra.mxu0 %v5459
    %6760 = vmatpush.bf16.msra.mxu0 %v5455
    %6761 = vmatpush.bf16.msra.mxu0 %v5451
    %6762 = vmatpush.bf16.msra.mxu0 %v5447
    %6763 = vmatpush.bf16.msra.mxu0 %v5443
    %6764 = vmatpush.bf16.msra.mxu0 %v5439
    %6765 = vmatpush.bf16.msra.mxu0 %v5435
    %6766 = vmatmul.bf16.gmra.mxu0 %v6730
    %v6767 = vpop.f32.mrf.mxu0
    %v6768 = vadd.f32 0.0, %v6767
    %v6769 = vpop.f32.mrf.mxu0
    %6770 = vdwg.mxu0
    %6771 = vmatpush.bf16.msra.mxu0 %v5464
    %6772 = vmatpush.bf16.msra.mxu0 %v5460
    %6773 = vmatpush.bf16.msra.mxu0 %v5456
    %6774 = vmatpush.bf16.msra.mxu0 %v5452
    %6775 = vmatpush.bf16.msra.mxu0 %v5448
    %6776 = vmatpush.bf16.msra.mxu0 %v5444
    %6777 = vmatpush.bf16.msra.mxu0 %v5440
    %6778 = vmatpush.bf16.msra.mxu0 %v5436
    %6779 = vmatmul.bf16.gmra.mxu0 %v6730
    %v6780 = vpop.f32.mrf.mxu0
    %v6781 = vadd.f32 0.0, %v6780
    %v6782 = vpop.f32.mrf.mxu0
    %6783 = vdwg.mxu0
    %v6784 = vadd.f32 %v5139, %v6742
    %v6785 = vadd.f32 %v5167, %v6755
    %v6786 = vadd.f32 %v5195, %v6768
    %v6787 = vadd.f32 %v5223, %v6781
    %v6788 = vpack.c.bf16 %v6725, %v6725
    %6789 = vmatpush.bf16.msra.mxu0 %v5677
    %6790 = vmatpush.bf16.msra.mxu0 %v5673
    %6791 = vmatpush.bf16.msra.mxu0 %v5669
    %6792 = vmatpush.bf16.msra.mxu0 %v5665
    %6793 = vmatpush.bf16.msra.mxu0 %v5661
    %6794 = vmatpush.bf16.msra.mxu0 %v5657
    %6795 = vmatpush.bf16.msra.mxu0 %v5653
    %6796 = vmatpush.bf16.msra.mxu0 %v5649
    %6797 = vmatmul.bf16.gmra.mxu0 %v6788
    %v6798 = vpop.f32.mrf.mxu0
    %v6799 = vadd.f32 0.0, %v6798
    %v6800 = vpop.f32.mrf.mxu0
    %6801 = vdwg.mxu0
    %6802 = vmatpush.bf16.msra.mxu0 %v5678
    %6803 = vmatpush.bf16.msra.mxu0 %v5674
    %6804 = vmatpush.bf16.msra.mxu0 %v5670
    %6805 = vmatpush.bf16.msra.mxu0 %v5666
    %6806 = vmatpush.bf16.msra.mxu0 %v5662
    %6807 = vmatpush.bf16.msra.mxu0 %v5658
    %6808 = vmatpush.bf16.msra.mxu0 %v5654
    %6809 = vmatpush.bf16.msra.mxu0 %v5650
    %6810 = vmatmul.bf16.gmra.mxu0 %v6788
    %v6811 = vpop.f32.mrf.mxu0
    %v6812 = vadd.f32 0.0, %v6811
    %v6813 = vpop.f32.mrf.mxu0
    %6814 = vdwg.mxu0
    %6815 = vmatpush.bf16.msra.mxu0 %v5679
    %6816 = vmatpush.bf16.msra.mxu0 %v5675
    %6817 = vmatpush.bf16.msra.mxu0 %v5671
    %6818 = vmatpush.bf16.msra.mxu0 %v5667
    %6819 = vmatpush.bf16.msra.mxu0 %v5663
    %6820 = vmatpush.bf16.msra.mxu0 %v5659
    %6821 = vmatpush.bf16.msra.mxu0 %v5655
    %6822 = vmatpush.bf16.msra.mxu0 %v5651
    %6823 = vmatmul.bf16.gmra.mxu0 %v6788
    %v6824 = vpop.f32.mrf.mxu0
    %v6825 = vadd.f32 0.0, %v6824
    %v6826 = vpop.f32.mrf.mxu0
    %6827 = vdwg.mxu0
    %6828 = vmatpush.bf16.msra.mxu0 %v5680
    %6829 = vmatpush.bf16.msra.mxu0 %v5676
    %6830 = vmatpush.bf16.msra.mxu0 %v5672
    %6831 = vmatpush.bf16.msra.mxu0 %v5668
    %6832 = vmatpush.bf16.msra.mxu0 %v5664
    %6833 = vmatpush.bf16.msra.mxu0 %v5660
    %6834 = vmatpush.bf16.msra.mxu0 %v5656
    %6835 = vmatpush.bf16.msra.mxu0 %v5652
    %6836 = vmatmul.bf16.gmra.mxu0 %v6788
    %v6837 = vpop.f32.mrf.mxu0
    %v6838 = vadd.f32 0.0, %v6837
    %v6839 = vpop.f32.mrf.mxu0
    %6840 = vdwg.mxu0
    %v6845 = vrot.slane %v6799, 2
    %v6846 = vrot.slane %v6812, 2
    %v6847 = vrot.slane %v6825, 2
    %v6848 = vrot.slane %v6838, 2
    %v6853 = vadd.f32 %v5249, %v6845
    %v6854 = vadd.f32 %v5277, %v6846
    %v6855 = vadd.f32 %v5305, %v6847
    %v6856 = vadd.f32 %v5333, %v6848
    %v6857 = vxor.u32 %v6784, 2147483648
    %v6858 = vmul.f32 %v6857, 1.442695
    %v6859 = vpow.pop %v6858
    %v6860 = vadd.f32 %v6859, 1.0
    %v6861 = vrcp.pop %v6860
    %v6862 = vmul.f32 %v6860, %v6861
    %v6863 = vsub.f32 1.0, %v6862
    %v6864 = vmul.f32 %v6861, %v6863
    %v6865 = vadd.f32 %v6861, %v6864
    %vm6866 = vweird.f32 %v6860
    %vm6867 = vweird.f32 %v6861
    %vm6868 = vmor %vm6866, %vm6867
    %v6869 = vsel %vm6868, %v6861, %v6865
    %v6870 = vand.u32 2147483647, %v6860
    %vm6871 = vcmp.eq.f32.partialorder %v6870, 8.507059e+37
    %v6872 = vand.u32 %v6860, 2147483648
    %v6873 = vor.u32 1.1754944e-38, %v6872
    %v6874 = vsel %vm6871, %v6873, %v6869
    %v6875 = vmul.f32 1.0, %v6874
    %v6876 = vxor.u32 %v6785, 2147483648
    %v6877 = vmul.f32 %v6876, 1.442695
    %v6878 = vpow.pop %v6877
    %v6879 = vadd.f32 %v6878, 1.0
    %v6880 = vrcp.pop %v6879
    %v6881 = vmul.f32 %v6879, %v6880
    %v6882 = vsub.f32 1.0, %v6881
    %v6883 = vmul.f32 %v6880, %v6882
    %v6884 = vadd.f32 %v6880, %v6883
    %vm6885 = vweird.f32 %v6879
    %vm6886 = vweird.f32 %v6880
    %vm6887 = vmor %vm6885, %vm6886
    %v6888 = vsel %vm6887, %v6880, %v6884
    %v6889 = vand.u32 2147483647, %v6879
    %vm6890 = vcmp.eq.f32.partialorder %v6889, 8.507059e+37
    %v6891 = vand.u32 %v6879, 2147483648
    %v6892 = vor.u32 1.1754944e-38, %v6891
    %v6893 = vsel %vm6890, %v6892, %v6888
    %v6894 = vmul.f32 1.0, %v6893
    %v6895 = vtanh.pop %v6786
    %v6896 = vxor.u32 %v6787, 2147483648
    %v6897 = vmul.f32 %v6896, 1.442695
    %v6898 = vpow.pop %v6897
    %v6899 = vadd.f32 %v6898, 1.0
    %v6900 = vrcp.pop %v6899
    %v6901 = vmul.f32 %v6899, %v6900
    %v6902 = vsub.f32 1.0, %v6901
    %v6903 = vmul.f32 %v6900, %v6902
    %v6904 = vadd.f32 %v6900, %v6903
    %vm6905 = vweird.f32 %v6899
    %vm6906 = vweird.f32 %v6900
    %vm6907 = vmor %vm6905, %vm6906
    %v6908 = vsel %vm6907, %v6900, %v6904
    %v6909 = vand.u32 2147483647, %v6899
    %vm6910 = vcmp.eq.f32.partialorder %v6909, 8.507059e+37
    %v6911 = vand.u32 %v6899, 2147483648
    %v6912 = vor.u32 1.1754944e-38, %v6911
    %v6913 = vsel %vm6910, %v6912, %v6908
    %v6914 = vmul.f32 1.0, %v6913
    %v6916 = vrot.slane %v6657, 6
    %v6918 = vmul.f32 %v6894, %v6916
    %v6919 = vmul.f32 %v6875, %v6895
    %v6920 = vadd.f32 %v6918, %v6919
    %v6921 = vtanh.pop %v6920
    %v6922 = vmul.f32 %v6914, %v6921
    %v6923 = vxor.u32 %v6853, 2147483648
    %v6924 = vmul.f32 %v6923, 1.442695
    %v6925 = vpow.pop %v6924
    %v6926 = vadd.f32 %v6925, 1.0
    %v6927 = vrcp.pop %v6926
    %v6928 = vmul.f32 %v6926, %v6927
    %v6929 = vsub.f32 1.0, %v6928
    %v6930 = vmul.f32 %v6927, %v6929
    %v6931 = vadd.f32 %v6927, %v6930
    %vm6932 = vweird.f32 %v6926
    %vm6933 = vweird.f32 %v6927
    %vm6934 = vmor %vm6932, %vm6933
    %v6935 = vsel %vm6934, %v6927, %v6931
    %v6936 = vand.u32 2147483647, %v6926
    %vm6937 = vcmp.eq.f32.partialorder %v6936, 8.507059e+37
    %v6938 = vand.u32 %v6926, 2147483648
    %v6939 = vor.u32 1.1754944e-38, %v6938
    %v6940 = vsel %vm6937, %v6939, %v6935
    %v6941 = vmul.f32 1.0, %v6940
    %v6942 = vxor.u32 %v6854, 2147483648
    %v6943 = vmul.f32 %v6942, 1.442695
    %v6944 = vpow.pop %v6943
    %v6945 = vadd.f32 %v6944, 1.0
    %v6946 = vrcp.pop %v6945
    %v6947 = vmul.f32 %v6945, %v6946
    %v6948 = vsub.f32 1.0, %v6947
    %v6949 = vmul.f32 %v6946, %v6948
    %v6950 = vadd.f32 %v6946, %v6949
    %vm6951 = vweird.f32 %v6945
    %vm6952 = vweird.f32 %v6946
    %vm6953 = vmor %vm6951, %vm6952
    %v6954 = vsel %vm6953, %v6946, %v6950
    %v6955 = vand.u32 2147483647, %v6945
    %vm6956 = vcmp.eq.f32.partialorder %v6955, 8.507059e+37
    %v6957 = vand.u32 %v6945, 2147483648
    %v6958 = vor.u32 1.1754944e-38, %v6957
    %v6959 = vsel %vm6956, %v6958, %v6954
    %v6960 = vmul.f32 1.0, %v6959
    %v6961 = vtanh.pop %v6855
    %v6962 = vxor.u32 %v6856, 2147483648
    %v6963 = vmul.f32 %v6962, 1.442695
    %v6964 = vpow.pop %v6963
    %v6965 = vadd.f32 %v6964, 1.0
    %v6966 = vrcp.pop %v6965
    %v6967 = vmul.f32 %v6965, %v6966
    %v6968 = vsub.f32 1.0, %v6967
    %v6969 = vmul.f32 %v6966, %v6968
    %v6970 = vadd.f32 %v6966, %v6969
    %vm6971 = vweird.f32 %v6965
    %vm6972 = vweird.f32 %v6966
    %vm6973 = vmor %vm6971, %vm6972
    %v6974 = vsel %vm6973, %v6966, %v6970
    %v6975 = vand.u32 2147483647, %v6965
    %vm6976 = vcmp.eq.f32.partialorder %v6975, 8.507059e+37
    %v6977 = vand.u32 %v6965, 2147483648
    %v6978 = vor.u32 1.1754944e-38, %v6977
    %v6979 = vsel %vm6976, %v6978, %v6974
    %v6980 = vmul.f32 1.0, %v6979
    %v6982 = vrot.slane %v6723, 2
    %v6984 = vmul.f32 %v6960, %v6982
    %v6985 = vmul.f32 %v6941, %v6961
    %v6986 = vadd.f32 %v6984, %v6985
    %v6987 = vtanh.pop %v6986
    %v6988 = vmul.f32 %v6980, %v6987
    %6989 = vst [vmem:[#allocation3 + $0x10] sm:$0x3] %v6922
    %6990 = vst [vmem:[#allocation3 + $0x8] sm:$0xc0] %v6988
    %v6991 = vpack.c.bf16 %v6922, %v6922
    %6992 = vmatpush.bf16.msra.mxu0 %v5461
    %6993 = vmatpush.bf16.msra.mxu0 %v5457
    %6994 = vmatpush.bf16.msra.mxu0 %v5453
    %6995 = vmatpush.bf16.msra.mxu0 %v5449
    %6996 = vmatpush.bf16.msra.mxu0 %v5445
    %6997 = vmatpush.bf16.msra.mxu0 %v5441
    %6998 = vmatpush.bf16.msra.mxu0 %v5437
    %6999 = vmatpush.bf16.msra.mxu0 %v5433
    %7000 = vmatmul.bf16.gmra.mxu0 %v6991
    %v7001 = vpop.f32.mrf.mxu0
    %v7002 = vadd.f32 0.0, %v7001
    %v7003 = vpop.f32.mrf.mxu0
    %7004 = vdwg.mxu0
    %7005 = vmatpush.bf16.msra.mxu0 %v5462
    %7006 = vmatpush.bf16.msra.mxu0 %v5458
    %7007 = vmatpush.bf16.msra.mxu0 %v5454
    %7008 = vmatpush.bf16.msra.mxu0 %v5450
    %7009 = vmatpush.bf16.msra.mxu0 %v5446
    %7010 = vmatpush.bf16.msra.mxu0 %v5442
    %7011 = vmatpush.bf16.msra.mxu0 %v5438
    %7012 = vmatpush.bf16.msra.mxu0 %v5434
    %7013 = vmatmul.bf16.gmra.mxu0 %v6991
    %v7014 = vpop.f32.mrf.mxu0
    %v7015 = vadd.f32 0.0, %v7014
    %v7016 = vpop.f32.mrf.mxu0
    %7017 = vdwg.mxu0
    %7018 = vmatpush.bf16.msra.mxu0 %v5463
    %7019 = vmatpush.bf16.msra.mxu0 %v5459
    %7020 = vmatpush.bf16.msra.mxu0 %v5455
    %7021 = vmatpush.bf16.msra.mxu0 %v5451
    %7022 = vmatpush.bf16.msra.mxu0 %v5447
    %7023 = vmatpush.bf16.msra.mxu0 %v5443
    %7024 = vmatpush.bf16.msra.mxu0 %v5439
    %7025 = vmatpush.bf16.msra.mxu0 %v5435
    %7026 = vmatmul.bf16.gmra.mxu0 %v6991
    %v7027 = vpop.f32.mrf.mxu0
    %v7028 = vadd.f32 0.0, %v7027
    %v7029 = vpop.f32.mrf.mxu0
    %7030 = vdwg.mxu0
    %7031 = vmatpush.bf16.msra.mxu0 %v5464
    %7032 = vmatpush.bf16.msra.mxu0 %v5460
    %7033 = vmatpush.bf16.msra.mxu0 %v5456
    %7034 = vmatpush.bf16.msra.mxu0 %v5452
    %7035 = vmatpush.bf16.msra.mxu0 %v5448
    %7036 = vmatpush.bf16.msra.mxu0 %v5444
    %7037 = vmatpush.bf16.msra.mxu0 %v5440
    %7038 = vmatpush.bf16.msra.mxu0 %v5436
    %7039 = vmatmul.bf16.gmra.mxu0 %v6991
    %v7040 = vpop.f32.mrf.mxu0
    %v7041 = vadd.f32 0.0, %v7040
    %v7042 = vpop.f32.mrf.mxu0
    %7043 = vdwg.mxu0
    %v7048 = vrot.slane %v7002, 6
    %v7049 = vrot.slane %v7015, 6
    %v7050 = vrot.slane %v7028, 6
    %v7051 = vrot.slane %v7041, 6
    %v7056 = vadd.f32 %v5139, %v7048
    %v7057 = vadd.f32 %v5167, %v7049
    %v7058 = vadd.f32 %v5195, %v7050
    %v7059 = vadd.f32 %v5223, %v7051
    %v7060 = vpack.c.bf16 %v6988, %v6988
    %v7062 = vrot.slane %v7060, 3
    %7064 = vmatpush.bf16.msra.mxu0 %v5677
    %7065 = vmatpush.bf16.msra.mxu0 %v5673
    %7066 = vmatpush.bf16.msra.mxu0 %v5669
    %7067 = vmatpush.bf16.msra.mxu0 %v5665
    %7068 = vmatpush.bf16.msra.mxu0 %v5661
    %7069 = vmatpush.bf16.msra.mxu0 %v5657
    %7070 = vmatpush.bf16.msra.mxu0 %v5653
    %7071 = vmatpush.bf16.msra.mxu0 %v5649
    %7072 = vmatmul.bf16.gmra.mxu0 %v7062
    %v7073 = vpop.f32.mrf.mxu0
    %v7074 = vadd.f32 0.0, %v7073
    %v7075 = vpop.f32.mrf.mxu0
    %7076 = vdwg.mxu0
    %7077 = vmatpush.bf16.msra.mxu0 %v5678
    %7078 = vmatpush.bf16.msra.mxu0 %v5674
    %7079 = vmatpush.bf16.msra.mxu0 %v5670
    %7080 = vmatpush.bf16.msra.mxu0 %v5666
    %7081 = vmatpush.bf16.msra.mxu0 %v5662
    %7082 = vmatpush.bf16.msra.mxu0 %v5658
    %7083 = vmatpush.bf16.msra.mxu0 %v5654
    %7084 = vmatpush.bf16.msra.mxu0 %v5650
    %7085 = vmatmul.bf16.gmra.mxu0 %v7062
    %v7086 = vpop.f32.mrf.mxu0
    %v7087 = vadd.f32 0.0, %v7086
    %v7088 = vpop.f32.mrf.mxu0
    %7089 = vdwg.mxu0
    %7090 = vmatpush.bf16.msra.mxu0 %v5679
    %7091 = vmatpush.bf16.msra.mxu0 %v5675
    %7092 = vmatpush.bf16.msra.mxu0 %v5671
    %7093 = vmatpush.bf16.msra.mxu0 %v5667
    %7094 = vmatpush.bf16.msra.mxu0 %v5663
    %7095 = vmatpush.bf16.msra.mxu0 %v5659
    %7096 = vmatpush.bf16.msra.mxu0 %v5655
    %7097 = vmatpush.bf16.msra.mxu0 %v5651
    %7098 = vmatmul.bf16.gmra.mxu0 %v7062
    %v7099 = vpop.f32.mrf.mxu0
    %v7100 = vadd.f32 0.0, %v7099
    %v7101 = vpop.f32.mrf.mxu0
    %7102 = vdwg.mxu0
    %7103 = vmatpush.bf16.msra.mxu0 %v5680
    %7104 = vmatpush.bf16.msra.mxu0 %v5676
    %7105 = vmatpush.bf16.msra.mxu0 %v5672
    %7106 = vmatpush.bf16.msra.mxu0 %v5668
    %7107 = vmatpush.bf16.msra.mxu0 %v5664
    %7108 = vmatpush.bf16.msra.mxu0 %v5660
    %7109 = vmatpush.bf16.msra.mxu0 %v5656
    %7110 = vmatpush.bf16.msra.mxu0 %v5652
    %7111 = vmatmul.bf16.gmra.mxu0 %v7062
    %v7112 = vpop.f32.mrf.mxu0
    %v7113 = vadd.f32 0.0, %v7112
    %v7114 = vpop.f32.mrf.mxu0
    %7115 = vdwg.mxu0
    %v7120 = vrot.slane %v7074, 4
    %v7121 = vrot.slane %v7087, 4
    %v7122 = vrot.slane %v7100, 4
    %v7123 = vrot.slane %v7113, 4
    %v7128 = vadd.f32 %v5249, %v7120
    %v7129 = vadd.f32 %v5277, %v7121
    %v7130 = vadd.f32 %v5305, %v7122
    %v7131 = vadd.f32 %v5333, %v7123
    %v7132 = vxor.u32 %v7056, 2147483648
    %v7133 = vmul.f32 %v7132, 1.442695
    %v7134 = vpow.pop %v7133
    %v7135 = vadd.f32 %v7134, 1.0
    %v7136 = vrcp.pop %v7135
    %v7137 = vmul.f32 %v7135, %v7136
    %v7138 = vsub.f32 1.0, %v7137
    %v7139 = vmul.f32 %v7136, %v7138
    %v7140 = vadd.f32 %v7136, %v7139
    %vm7141 = vweird.f32 %v7135
    %vm7142 = vweird.f32 %v7136
    %vm7143 = vmor %vm7141, %vm7142
    %v7144 = vsel %vm7143, %v7136, %v7140
    %v7145 = vand.u32 2147483647, %v7135
    %vm7146 = vcmp.eq.f32.partialorder %v7145, 8.507059e+37
    %v7147 = vand.u32 %v7135, 2147483648
    %v7148 = vor.u32 1.1754944e-38, %v7147
    %v7149 = vsel %vm7146, %v7148, %v7144
    %v7150 = vmul.f32 1.0, %v7149
    %v7151 = vxor.u32 %v7057, 2147483648
    %v7152 = vmul.f32 %v7151, 1.442695
    %v7153 = vpow.pop %v7152
    %v7154 = vadd.f32 %v7153, 1.0
    %v7155 = vrcp.pop %v7154
    %v7156 = vmul.f32 %v7154, %v7155
    %v7157 = vsub.f32 1.0, %v7156
    %v7158 = vmul.f32 %v7155, %v7157
    %v7159 = vadd.f32 %v7155, %v7158
    %vm7160 = vweird.f32 %v7154
    %vm7161 = vweird.f32 %v7155
    %vm7162 = vmor %vm7160, %vm7161
    %v7163 = vsel %vm7162, %v7155, %v7159
    %v7164 = vand.u32 2147483647, %v7154
    %vm7165 = vcmp.eq.f32.partialorder %v7164, 8.507059e+37
    %v7166 = vand.u32 %v7154, 2147483648
    %v7167 = vor.u32 1.1754944e-38, %v7166
    %v7168 = vsel %vm7165, %v7167, %v7163
    %v7169 = vmul.f32 1.0, %v7168
    %v7170 = vtanh.pop %v7058
    %v7171 = vxor.u32 %v7059, 2147483648
    %v7172 = vmul.f32 %v7171, 1.442695
    %v7173 = vpow.pop %v7172
    %v7174 = vadd.f32 %v7173, 1.0
    %v7175 = vrcp.pop %v7174
    %v7176 = vmul.f32 %v7174, %v7175
    %v7177 = vsub.f32 1.0, %v7176
    %v7178 = vmul.f32 %v7175, %v7177
    %v7179 = vadd.f32 %v7175, %v7178
    %vm7180 = vweird.f32 %v7174
    %vm7181 = vweird.f32 %v7175
    %vm7182 = vmor %vm7180, %vm7181
    %v7183 = vsel %vm7182, %v7175, %v7179
    %v7184 = vand.u32 2147483647, %v7174
    %vm7185 = vcmp.eq.f32.partialorder %v7184, 8.507059e+37
    %v7186 = vand.u32 %v7174, 2147483648
    %v7187 = vor.u32 1.1754944e-38, %v7186
    %v7188 = vsel %vm7185, %v7187, %v7183
    %v7189 = vmul.f32 1.0, %v7188
    %v7191 = vrot.slane %v6920, 6
    %v7193 = vmul.f32 %v7169, %v7191
    %v7194 = vmul.f32 %v7150, %v7170
    %v7195 = vadd.f32 %v7193, %v7194
    %v7196 = vtanh.pop %v7195
    %v7197 = vmul.f32 %v7189, %v7196
    %v7198 = vxor.u32 %v7128, 2147483648
    %v7199 = vmul.f32 %v7198, 1.442695
    %v7200 = vpow.pop %v7199
    %v7201 = vadd.f32 %v7200, 1.0
    %v7202 = vrcp.pop %v7201
    %v7203 = vmul.f32 %v7201, %v7202
    %v7204 = vsub.f32 1.0, %v7203
    %v7205 = vmul.f32 %v7202, %v7204
    %v7206 = vadd.f32 %v7202, %v7205
    %vm7207 = vweird.f32 %v7201
    %vm7208 = vweird.f32 %v7202
    %vm7209 = vmor %vm7207, %vm7208
    %v7210 = vsel %vm7209, %v7202, %v7206
    %v7211 = vand.u32 2147483647, %v7201
    %vm7212 = vcmp.eq.f32.partialorder %v7211, 8.507059e+37
    %v7213 = vand.u32 %v7201, 2147483648
    %v7214 = vor.u32 1.1754944e-38, %v7213
    %v7215 = vsel %vm7212, %v7214, %v7210
    %v7216 = vmul.f32 1.0, %v7215
    %v7217 = vxor.u32 %v7129, 2147483648
    %v7218 = vmul.f32 %v7217, 1.442695
    %v7219 = vpow.pop %v7218
    %v7220 = vadd.f32 %v7219, 1.0
    %v7221 = vrcp.pop %v7220
    %v7222 = vmul.f32 %v7220, %v7221
    %v7223 = vsub.f32 1.0, %v7222
    %v7224 = vmul.f32 %v7221, %v7223
    %v7225 = vadd.f32 %v7221, %v7224
    %vm7226 = vweird.f32 %v7220
    %vm7227 = vweird.f32 %v7221
    %vm7228 = vmor %vm7226, %vm7227
    %v7229 = vsel %vm7228, %v7221, %v7225
    %v7230 = vand.u32 2147483647, %v7220
    %vm7231 = vcmp.eq.f32.partialorder %v7230, 8.507059e+37
    %v7232 = vand.u32 %v7220, 2147483648
    %v7233 = vor.u32 1.1754944e-38, %v7232
    %v7234 = vsel %vm7231, %v7233, %v7229
    %v7235 = vmul.f32 1.0, %v7234
    %v7236 = vtanh.pop %v7130
    %v7237 = vxor.u32 %v7131, 2147483648
    %v7238 = vmul.f32 %v7237, 1.442695
    %v7239 = vpow.pop %v7238
    %v7240 = vadd.f32 %v7239, 1.0
    %v7241 = vrcp.pop %v7240
    %v7242 = vmul.f32 %v7240, %v7241
    %v7243 = vsub.f32 1.0, %v7242
    %v7244 = vmul.f32 %v7241, %v7243
    %v7245 = vadd.f32 %v7241, %v7244
    %vm7246 = vweird.f32 %v7240
    %vm7247 = vweird.f32 %v7241
    %vm7248 = vmor %vm7246, %vm7247
    %v7249 = vsel %vm7248, %v7241, %v7245
    %v7250 = vand.u32 2147483647, %v7240
    %vm7251 = vcmp.eq.f32.partialorder %v7250, 8.507059e+37
    %v7252 = vand.u32 %v7240, 2147483648
    %v7253 = vor.u32 1.1754944e-38, %v7252
    %v7254 = vsel %vm7251, %v7253, %v7249
    %v7255 = vmul.f32 1.0, %v7254
    %v7257 = vrot.slane %v6986, 2
    %v7259 = vmul.f32 %v7235, %v7257
    %v7260 = vmul.f32 %v7216, %v7236
    %v7261 = vadd.f32 %v7259, %v7260
    %v7262 = vtanh.pop %v7261
    %v7263 = vmul.f32 %v7255, %v7262
    %7264 = vst [vmem:[#allocation3 + $0x10] sm:$0xc] %v7197
    %7265 = vst [vmem:[#allocation3 + $0x8] sm:$0x30] %v7263
    %v7266 = vpack.c.bf16 %v7197, %v7197
    %v7268 = vrot.slane %v7266, 1
    %7270 = vmatpush.bf16.msra.mxu0 %v5461
    %7271 = vmatpush.bf16.msra.mxu0 %v5457
    %7272 = vmatpush.bf16.msra.mxu0 %v5453
    %7273 = vmatpush.bf16.msra.mxu0 %v5449
    %7274 = vmatpush.bf16.msra.mxu0 %v5445
    %7275 = vmatpush.bf16.msra.mxu0 %v5441
    %7276 = vmatpush.bf16.msra.mxu0 %v5437
    %7277 = vmatpush.bf16.msra.mxu0 %v5433
    %7278 = vmatmul.bf16.gmra.mxu0 %v7268
    %v7279 = vpop.f32.mrf.mxu0
    %v7280 = vadd.f32 0.0, %v7279
    %v7281 = vpop.f32.mrf.mxu0
    %7282 = vdwg.mxu0
    %7283 = vmatpush.bf16.msra.mxu0 %v5462
    %7284 = vmatpush.bf16.msra.mxu0 %v5458
    %7285 = vmatpush.bf16.msra.mxu0 %v5454
    %7286 = vmatpush.bf16.msra.mxu0 %v5450
    %7287 = vmatpush.bf16.msra.mxu0 %v5446
    %7288 = vmatpush.bf16.msra.mxu0 %v5442
    %7289 = vmatpush.bf16.msra.mxu0 %v5438
    %7290 = vmatpush.bf16.msra.mxu0 %v5434
    %7291 = vmatmul.bf16.gmra.mxu0 %v7268
    %v7292 = vpop.f32.mrf.mxu0
    %v7293 = vadd.f32 0.0, %v7292
    %v7294 = vpop.f32.mrf.mxu0
    %7295 = vdwg.mxu0
    %7296 = vmatpush.bf16.msra.mxu0 %v5463
    %7297 = vmatpush.bf16.msra.mxu0 %v5459
    %7298 = vmatpush.bf16.msra.mxu0 %v5455
    %7299 = vmatpush.bf16.msra.mxu0 %v5451
    %7300 = vmatpush.bf16.msra.mxu0 %v5447
    %7301 = vmatpush.bf16.msra.mxu0 %v5443
    %7302 = vmatpush.bf16.msra.mxu0 %v5439
    %7303 = vmatpush.bf16.msra.mxu0 %v5435
    %7304 = vmatmul.bf16.gmra.mxu0 %v7268
    %v7305 = vpop.f32.mrf.mxu0
    %v7306 = vadd.f32 0.0, %v7305
    %v7307 = vpop.f32.mrf.mxu0
    %7308 = vdwg.mxu0
    %7309 = vmatpush.bf16.msra.mxu0 %v5464
    %7310 = vmatpush.bf16.msra.mxu0 %v5460
    %7311 = vmatpush.bf16.msra.mxu0 %v5456
    %7312 = vmatpush.bf16.msra.mxu0 %v5452
    %7313 = vmatpush.bf16.msra.mxu0 %v5448
    %7314 = vmatpush.bf16.msra.mxu0 %v5444
    %7315 = vmatpush.bf16.msra.mxu0 %v5440
    %7316 = vmatpush.bf16.msra.mxu0 %v5436
    %7317 = vmatmul.bf16.gmra.mxu0 %v7268
    %v7318 = vpop.f32.mrf.mxu0
    %v7319 = vadd.f32 0.0, %v7318
    %v7320 = vpop.f32.mrf.mxu0
    %7321 = vdwg.mxu0
    %v7326 = vrot.slane %v7280, 4
    %v7327 = vrot.slane %v7293, 4
    %v7328 = vrot.slane %v7306, 4
    %v7329 = vrot.slane %v7319, 4
    %v7334 = vadd.f32 %v5139, %v7326
    %v7335 = vadd.f32 %v5167, %v7327
    %v7336 = vadd.f32 %v5195, %v7328
    %v7337 = vadd.f32 %v5223, %v7329
    %v7338 = vpack.c.bf16 %v7263, %v7263
    %v7340 = vrot.slane %v7338, 2
    %7342 = vmatpush.bf16.msra.mxu0 %v5677
    %7343 = vmatpush.bf16.msra.mxu0 %v5673
    %7344 = vmatpush.bf16.msra.mxu0 %v5669
    %7345 = vmatpush.bf16.msra.mxu0 %v5665
    %7346 = vmatpush.bf16.msra.mxu0 %v5661
    %7347 = vmatpush.bf16.msra.mxu0 %v5657
    %7348 = vmatpush.bf16.msra.mxu0 %v5653
    %7349 = vmatpush.bf16.msra.mxu0 %v5649
    %7350 = vmatmul.bf16.gmra.mxu0 %v7340
    %v7351 = vpop.f32.mrf.mxu0
    %v7352 = vadd.f32 0.0, %v7351
    %v7353 = vpop.f32.mrf.mxu0
    %7354 = vdwg.mxu0
    %7355 = vmatpush.bf16.msra.mxu0 %v5678
    %7356 = vmatpush.bf16.msra.mxu0 %v5674
    %7357 = vmatpush.bf16.msra.mxu0 %v5670
    %7358 = vmatpush.bf16.msra.mxu0 %v5666
    %7359 = vmatpush.bf16.msra.mxu0 %v5662
    %7360 = vmatpush.bf16.msra.mxu0 %v5658
    %7361 = vmatpush.bf16.msra.mxu0 %v5654
    %7362 = vmatpush.bf16.msra.mxu0 %v5650
    %7363 = vmatmul.bf16.gmra.mxu0 %v7340
    %v7364 = vpop.f32.mrf.mxu0
    %v7365 = vadd.f32 0.0, %v7364
    %v7366 = vpop.f32.mrf.mxu0
    %7367 = vdwg.mxu0
    %7368 = vmatpush.bf16.msra.mxu0 %v5679
    %7369 = vmatpush.bf16.msra.mxu0 %v5675
    %7370 = vmatpush.bf16.msra.mxu0 %v5671
    %7371 = vmatpush.bf16.msra.mxu0 %v5667
    %7372 = vmatpush.bf16.msra.mxu0 %v5663
    %7373 = vmatpush.bf16.msra.mxu0 %v5659
    %7374 = vmatpush.bf16.msra.mxu0 %v5655
    %7375 = vmatpush.bf16.msra.mxu0 %v5651
    %7376 = vmatmul.bf16.gmra.mxu0 %v7340
    %v7377 = vpop.f32.mrf.mxu0
    %v7378 = vadd.f32 0.0, %v7377
    %v7379 = vpop.f32.mrf.mxu0
    %7380 = vdwg.mxu0
    %7381 = vmatpush.bf16.msra.mxu0 %v5680
    %7382 = vmatpush.bf16.msra.mxu0 %v5676
    %7383 = vmatpush.bf16.msra.mxu0 %v5672
    %7384 = vmatpush.bf16.msra.mxu0 %v5668
    %7385 = vmatpush.bf16.msra.mxu0 %v5664
    %7386 = vmatpush.bf16.msra.mxu0 %v5660
    %7387 = vmatpush.bf16.msra.mxu0 %v5656
    %7388 = vmatpush.bf16.msra.mxu0 %v5652
    %7389 = vmatmul.bf16.gmra.mxu0 %v7340
    %v7390 = vpop.f32.mrf.mxu0
    %v7391 = vadd.f32 0.0, %v7390
    %v7392 = vpop.f32.mrf.mxu0
    %7393 = vdwg.mxu0
    %v7398 = vrot.slane %v7352, 6
    %v7399 = vrot.slane %v7365, 6
    %v7400 = vrot.slane %v7378, 6
    %v7401 = vrot.slane %v7391, 6
    %v7406 = vadd.f32 %v5249, %v7398
    %v7407 = vadd.f32 %v5277, %v7399
    %v7408 = vadd.f32 %v5305, %v7400
    %v7409 = vadd.f32 %v5333, %v7401
    %v7410 = vxor.u32 %v7334, 2147483648
    %v7411 = vmul.f32 %v7410, 1.442695
    %v7412 = vpow.pop %v7411
    %v7413 = vadd.f32 %v7412, 1.0
    %v7414 = vrcp.pop %v7413
    %v7415 = vmul.f32 %v7413, %v7414
    %v7416 = vsub.f32 1.0, %v7415
    %v7417 = vmul.f32 %v7414, %v7416
    %v7418 = vadd.f32 %v7414, %v7417
    %vm7419 = vweird.f32 %v7413
    %vm7420 = vweird.f32 %v7414
    %vm7421 = vmor %vm7419, %vm7420
    %v7422 = vsel %vm7421, %v7414, %v7418
    %v7423 = vand.u32 2147483647, %v7413
    %vm7424 = vcmp.eq.f32.partialorder %v7423, 8.507059e+37
    %v7425 = vand.u32 %v7413, 2147483648
    %v7426 = vor.u32 1.1754944e-38, %v7425
    %v7427 = vsel %vm7424, %v7426, %v7422
    %v7428 = vmul.f32 1.0, %v7427
    %v7429 = vxor.u32 %v7335, 2147483648
    %v7430 = vmul.f32 %v7429, 1.442695
    %v7431 = vpow.pop %v7430
    %v7432 = vadd.f32 %v7431, 1.0
    %v7433 = vrcp.pop %v7432
    %v7434 = vmul.f32 %v7432, %v7433
    %v7435 = vsub.f32 1.0, %v7434
    %v7436 = vmul.f32 %v7433, %v7435
    %v7437 = vadd.f32 %v7433, %v7436
    %vm7438 = vweird.f32 %v7432
    %vm7439 = vweird.f32 %v7433
    %vm7440 = vmor %vm7438, %vm7439
    %v7441 = vsel %vm7440, %v7433, %v7437
    %v7442 = vand.u32 2147483647, %v7432
    %vm7443 = vcmp.eq.f32.partialorder %v7442, 8.507059e+37
    %v7444 = vand.u32 %v7432, 2147483648
    %v7445 = vor.u32 1.1754944e-38, %v7444
    %v7446 = vsel %vm7443, %v7445, %v7441
    %v7447 = vmul.f32 1.0, %v7446
    %v7448 = vtanh.pop %v7336
    %v7449 = vxor.u32 %v7337, 2147483648
    %v7450 = vmul.f32 %v7449, 1.442695
    %v7451 = vpow.pop %v7450
    %v7452 = vadd.f32 %v7451, 1.0
    %v7453 = vrcp.pop %v7452
    %v7454 = vmul.f32 %v7452, %v7453
    %v7455 = vsub.f32 1.0, %v7454
    %v7456 = vmul.f32 %v7453, %v7455
    %v7457 = vadd.f32 %v7453, %v7456
    %vm7458 = vweird.f32 %v7452
    %vm7459 = vweird.f32 %v7453
    %vm7460 = vmor %vm7458, %vm7459
    %v7461 = vsel %vm7460, %v7453, %v7457
    %v7462 = vand.u32 2147483647, %v7452
    %vm7463 = vcmp.eq.f32.partialorder %v7462, 8.507059e+37
    %v7464 = vand.u32 %v7452, 2147483648
    %v7465 = vor.u32 1.1754944e-38, %v7464
    %v7466 = vsel %vm7463, %v7465, %v7461
    %v7467 = vmul.f32 1.0, %v7466
    %v7469 = vrot.slane %v7195, 6
    %v7471 = vmul.f32 %v7447, %v7469
    %v7472 = vmul.f32 %v7428, %v7448
    %v7473 = vadd.f32 %v7471, %v7472
    %v7474 = vtanh.pop %v7473
    %v7475 = vmul.f32 %v7467, %v7474
    %v7476 = vxor.u32 %v7406, 2147483648
    %v7477 = vmul.f32 %v7476, 1.442695
    %v7478 = vpow.pop %v7477
    %v7479 = vadd.f32 %v7478, 1.0
    %v7480 = vrcp.pop %v7479
    %v7481 = vmul.f32 %v7479, %v7480
    %v7482 = vsub.f32 1.0, %v7481
    %v7483 = vmul.f32 %v7480, %v7482
    %v7484 = vadd.f32 %v7480, %v7483
    %vm7485 = vweird.f32 %v7479
    %vm7486 = vweird.f32 %v7480
    %vm7487 = vmor %vm7485, %vm7486
    %v7488 = vsel %vm7487, %v7480, %v7484
    %v7489 = vand.u32 2147483647, %v7479
    %vm7490 = vcmp.eq.f32.partialorder %v7489, 8.507059e+37
    %v7491 = vand.u32 %v7479, 2147483648
    %v7492 = vor.u32 1.1754944e-38, %v7491
    %v7493 = vsel %vm7490, %v7492, %v7488
    %v7494 = vmul.f32 1.0, %v7493
    %v7495 = vxor.u32 %v7407, 2147483648
    %v7496 = vmul.f32 %v7495, 1.442695
    %v7497 = vpow.pop %v7496
    %v7498 = vadd.f32 %v7497, 1.0
    %v7499 = vrcp.pop %v7498
    %v7500 = vmul.f32 %v7498, %v7499
    %v7501 = vsub.f32 1.0, %v7500
    %v7502 = vmul.f32 %v7499, %v7501
    %v7503 = vadd.f32 %v7499, %v7502
    %vm7504 = vweird.f32 %v7498
    %vm7505 = vweird.f32 %v7499
    %vm7506 = vmor %vm7504, %vm7505
    %v7507 = vsel %vm7506, %v7499, %v7503
    %v7508 = vand.u32 2147483647, %v7498
    %vm7509 = vcmp.eq.f32.partialorder %v7508, 8.507059e+37
    %v7510 = vand.u32 %v7498, 2147483648
    %v7511 = vor.u32 1.1754944e-38, %v7510
    %v7512 = vsel %vm7509, %v7511, %v7507
    %v7513 = vmul.f32 1.0, %v7512
    %v7514 = vtanh.pop %v7408
    %v7515 = vxor.u32 %v7409, 2147483648
    %v7516 = vmul.f32 %v7515, 1.442695
    %v7517 = vpow.pop %v7516
    %v7518 = vadd.f32 %v7517, 1.0
    %v7519 = vrcp.pop %v7518
    %v7520 = vmul.f32 %v7518, %v7519
    %v7521 = vsub.f32 1.0, %v7520
    %v7522 = vmul.f32 %v7519, %v7521
    %v7523 = vadd.f32 %v7519, %v7522
    %vm7524 = vweird.f32 %v7518
    %vm7525 = vweird.f32 %v7519
    %vm7526 = vmor %vm7524, %vm7525
    %v7527 = vsel %vm7526, %v7519, %v7523
    %v7528 = vand.u32 2147483647, %v7518
    %vm7529 = vcmp.eq.f32.partialorder %v7528, 8.507059e+37
    %v7530 = vand.u32 %v7518, 2147483648
    %v7531 = vor.u32 1.1754944e-38, %v7530
    %v7532 = vsel %vm7529, %v7531, %v7527
    %v7533 = vmul.f32 1.0, %v7532
    %v7535 = vrot.slane %v7261, 2
    %v7537 = vmul.f32 %v7513, %v7535
    %v7538 = vmul.f32 %v7494, %v7514
    %v7539 = vadd.f32 %v7537, %v7538
    %v7540 = vtanh.pop %v7539
    %v7541 = vmul.f32 %v7533, %v7540
    %7542 = vst [vmem:[#allocation3 + $0x10] sm:$0x30] %v7475
    %7543 = vst [vmem:[#allocation3 + $0x8] sm:$0xc] %v7541
    %v7544 = vpack.c.bf16 %v7475, %v7475
    %v7546 = vrot.slane %v7544, 2
    %7548 = vmatpush.bf16.msra.mxu0 %v5461
    %7549 = vmatpush.bf16.msra.mxu0 %v5457
    %7550 = vmatpush.bf16.msra.mxu0 %v5453
    %7551 = vmatpush.bf16.msra.mxu0 %v5449
    %7552 = vmatpush.bf16.msra.mxu0 %v5445
    %7553 = vmatpush.bf16.msra.mxu0 %v5441
    %7554 = vmatpush.bf16.msra.mxu0 %v5437
    %7555 = vmatpush.bf16.msra.mxu0 %v5433
    %7556 = vmatmul.bf16.gmra.mxu0 %v7546
    %v7557 = vpop.f32.mrf.mxu0
    %v7558 = vadd.f32 0.0, %v7557
    %v7559 = vpop.f32.mrf.mxu0
    %7560 = vdwg.mxu0
    %7561 = vmatpush.bf16.msra.mxu0 %v5462
    %7562 = vmatpush.bf16.msra.mxu0 %v5458
    %7563 = vmatpush.bf16.msra.mxu0 %v5454
    %7564 = vmatpush.bf16.msra.mxu0 %v5450
    %7565 = vmatpush.bf16.msra.mxu0 %v5446
    %7566 = vmatpush.bf16.msra.mxu0 %v5442
    %7567 = vmatpush.bf16.msra.mxu0 %v5438
    %7568 = vmatpush.bf16.msra.mxu0 %v5434
    %7569 = vmatmul.bf16.gmra.mxu0 %v7546
    %v7570 = vpop.f32.mrf.mxu0
    %v7571 = vadd.f32 0.0, %v7570
    %v7572 = vpop.f32.mrf.mxu0
    %7573 = vdwg.mxu0
    %7574 = vmatpush.bf16.msra.mxu0 %v5463
    %7575 = vmatpush.bf16.msra.mxu0 %v5459
    %7576 = vmatpush.bf16.msra.mxu0 %v5455
    %7577 = vmatpush.bf16.msra.mxu0 %v5451
    %7578 = vmatpush.bf16.msra.mxu0 %v5447
    %7579 = vmatpush.bf16.msra.mxu0 %v5443
    %7580 = vmatpush.bf16.msra.mxu0 %v5439
    %7581 = vmatpush.bf16.msra.mxu0 %v5435
    %7582 = vmatmul.bf16.gmra.mxu0 %v7546
    %v7583 = vpop.f32.mrf.mxu0
    %v7584 = vadd.f32 0.0, %v7583
    %v7585 = vpop.f32.mrf.mxu0
    %7586 = vdwg.mxu0
    %7587 = vmatpush.bf16.msra.mxu0 %v5464
    %7588 = vmatpush.bf16.msra.mxu0 %v5460
    %7589 = vmatpush.bf16.msra.mxu0 %v5456
    %7590 = vmatpush.bf16.msra.mxu0 %v5452
    %7591 = vmatpush.bf16.msra.mxu0 %v5448
    %7592 = vmatpush.bf16.msra.mxu0 %v5444
    %7593 = vmatpush.bf16.msra.mxu0 %v5440
    %7594 = vmatpush.bf16.msra.mxu0 %v5436
    %7595 = vmatmul.bf16.gmra.mxu0 %v7546
    %v7596 = vpop.f32.mrf.mxu0
    %v7597 = vadd.f32 0.0, %v7596
    %v7598 = vpop.f32.mrf.mxu0
    %7599 = vdwg.mxu0
    %v7604 = vrot.slane %v7558, 2
    %v7605 = vrot.slane %v7571, 2
    %v7606 = vrot.slane %v7584, 2
    %v7607 = vrot.slane %v7597, 2
    %v7612 = vadd.f32 %v5139, %v7604
    %v7613 = vadd.f32 %v5167, %v7605
    %v7614 = vadd.f32 %v5195, %v7606
    %v7615 = vadd.f32 %v5223, %v7607
    %v7616 = vpack.c.bf16 %v7541, %v7541
    %v7618 = vrot.slane %v7616, 1
    %7620 = vmatpush.bf16.msra.mxu0 %v5677
    %7621 = vmatpush.bf16.msra.mxu0 %v5673
    %7622 = vmatpush.bf16.msra.mxu0 %v5669
    %7623 = vmatpush.bf16.msra.mxu0 %v5665
    %7624 = vmatpush.bf16.msra.mxu0 %v5661
    %7625 = vmatpush.bf16.msra.mxu0 %v5657
    %7626 = vmatpush.bf16.msra.mxu0 %v5653
    %7627 = vmatpush.bf16.msra.mxu0 %v5649
    %7628 = vmatmul.bf16.gmra.mxu0 %v7618
    %v7629 = vpop.f32.mrf.mxu0
    %v7630 = vadd.f32 0.0, %v7629
    %v7631 = vpop.f32.mrf.mxu0
    %7632 = vdwg.mxu0
    %7633 = vmatpush.bf16.msra.mxu0 %v5678
    %7634 = vmatpush.bf16.msra.mxu0 %v5674
    %7635 = vmatpush.bf16.msra.mxu0 %v5670
    %7636 = vmatpush.bf16.msra.mxu0 %v5666
    %7637 = vmatpush.bf16.msra.mxu0 %v5662
    %7638 = vmatpush.bf16.msra.mxu0 %v5658
    %7639 = vmatpush.bf16.msra.mxu0 %v5654
    %7640 = vmatpush.bf16.msra.mxu0 %v5650
    %7641 = vmatmul.bf16.gmra.mxu0 %v7618
    %v7642 = vpop.f32.mrf.mxu0
    %v7643 = vadd.f32 0.0, %v7642
    %v7644 = vpop.f32.mrf.mxu0
    %7645 = vdwg.mxu0
    %7646 = vmatpush.bf16.msra.mxu0 %v5679
    %7647 = vmatpush.bf16.msra.mxu0 %v5675
    %7648 = vmatpush.bf16.msra.mxu0 %v5671
    %7649 = vmatpush.bf16.msra.mxu0 %v5667
    %7650 = vmatpush.bf16.msra.mxu0 %v5663
    %7651 = vmatpush.bf16.msra.mxu0 %v5659
    %7652 = vmatpush.bf16.msra.mxu0 %v5655
    %7653 = vmatpush.bf16.msra.mxu0 %v5651
    %7654 = vmatmul.bf16.gmra.mxu0 %v7618
    %v7655 = vpop.f32.mrf.mxu0
    %v7656 = vadd.f32 0.0, %v7655
    %v7657 = vpop.f32.mrf.mxu0
    %7658 = vdwg.mxu0
    %7659 = vmatpush.bf16.msra.mxu0 %v5680
    %7660 = vmatpush.bf16.msra.mxu0 %v5676
    %7661 = vmatpush.bf16.msra.mxu0 %v5672
    %7662 = vmatpush.bf16.msra.mxu0 %v5668
    %7663 = vmatpush.bf16.msra.mxu0 %v5664
    %7664 = vmatpush.bf16.msra.mxu0 %v5660
    %7665 = vmatpush.bf16.msra.mxu0 %v5656
    %7666 = vmatpush.bf16.msra.mxu0 %v5652
    %7667 = vmatmul.bf16.gmra.mxu0 %v7618
    %v7668 = vpop.f32.mrf.mxu0
    %v7669 = vadd.f32 0.0, %v7668
    %v7670 = vpop.f32.mrf.mxu0
    %7671 = vdwg.mxu0
    %v7672 = vadd.f32 %v5249, %v7630
    %v7673 = vadd.f32 %v5277, %v7643
    %v7674 = vadd.f32 %v5305, %v7656
    %v7675 = vadd.f32 %v5333, %v7669
    %v7676 = vxor.u32 %v7612, 2147483648
    %v7677 = vmul.f32 %v7676, 1.442695
    %v7678 = vpow.pop %v7677
    %v7679 = vadd.f32 %v7678, 1.0
    %v7680 = vrcp.pop %v7679
    %v7681 = vmul.f32 %v7679, %v7680
    %v7682 = vsub.f32 1.0, %v7681
    %v7683 = vmul.f32 %v7680, %v7682
    %v7684 = vadd.f32 %v7680, %v7683
    %vm7685 = vweird.f32 %v7679
    %vm7686 = vweird.f32 %v7680
    %vm7687 = vmor %vm7685, %vm7686
    %v7688 = vsel %vm7687, %v7680, %v7684
    %v7689 = vand.u32 2147483647, %v7679
    %vm7690 = vcmp.eq.f32.partialorder %v7689, 8.507059e+37
    %v7691 = vand.u32 %v7679, 2147483648
    %v7692 = vor.u32 1.1754944e-38, %v7691
    %v7693 = vsel %vm7690, %v7692, %v7688
    %v7694 = vmul.f32 1.0, %v7693
    %v7695 = vxor.u32 %v7613, 2147483648
    %v7696 = vmul.f32 %v7695, 1.442695
    %v7697 = vpow.pop %v7696
    %v7698 = vadd.f32 %v7697, 1.0
    %v7699 = vrcp.pop %v7698
    %v7700 = vmul.f32 %v7698, %v7699
    %v7701 = vsub.f32 1.0, %v7700
    %v7702 = vmul.f32 %v7699, %v7701
    %v7703 = vadd.f32 %v7699, %v7702
    %vm7704 = vweird.f32 %v7698
    %vm7705 = vweird.f32 %v7699
    %vm7706 = vmor %vm7704, %vm7705
    %v7707 = vsel %vm7706, %v7699, %v7703
    %v7708 = vand.u32 2147483647, %v7698
    %vm7709 = vcmp.eq.f32.partialorder %v7708, 8.507059e+37
    %v7710 = vand.u32 %v7698, 2147483648
    %v7711 = vor.u32 1.1754944e-38, %v7710
    %v7712 = vsel %vm7709, %v7711, %v7707
    %v7713 = vmul.f32 1.0, %v7712
    %v7714 = vtanh.pop %v7614
    %v7715 = vxor.u32 %v7615, 2147483648
    %v7716 = vmul.f32 %v7715, 1.442695
    %v7717 = vpow.pop %v7716
    %v7718 = vadd.f32 %v7717, 1.0
    %v7719 = vrcp.pop %v7718
    %v7720 = vmul.f32 %v7718, %v7719
    %v7721 = vsub.f32 1.0, %v7720
    %v7722 = vmul.f32 %v7719, %v7721
    %v7723 = vadd.f32 %v7719, %v7722
    %vm7724 = vweird.f32 %v7718
    %vm7725 = vweird.f32 %v7719
    %vm7726 = vmor %vm7724, %vm7725
    %v7727 = vsel %vm7726, %v7719, %v7723
    %v7728 = vand.u32 2147483647, %v7718
    %vm7729 = vcmp.eq.f32.partialorder %v7728, 8.507059e+37
    %v7730 = vand.u32 %v7718, 2147483648
    %v7731 = vor.u32 1.1754944e-38, %v7730
    %v7732 = vsel %vm7729, %v7731, %v7727
    %v7733 = vmul.f32 1.0, %v7732
    %v7735 = vrot.slane %v7473, 6
    %v7737 = vmul.f32 %v7713, %v7735
    %v7738 = vmul.f32 %v7694, %v7714
    %v7739 = vadd.f32 %v7737, %v7738
    %v7740 = vtanh.pop %v7739
    %v7741 = vmul.f32 %v7733, %v7740
    %v7742 = vxor.u32 %v7672, 2147483648
    %v7743 = vmul.f32 %v7742, 1.442695
    %v7744 = vpow.pop %v7743
    %v7745 = vadd.f32 %v7744, 1.0
    %v7746 = vrcp.pop %v7745
    %v7747 = vmul.f32 %v7745, %v7746
    %v7748 = vsub.f32 1.0, %v7747
    %v7749 = vmul.f32 %v7746, %v7748
    %v7750 = vadd.f32 %v7746, %v7749
    %vm7751 = vweird.f32 %v7745
    %vm7752 = vweird.f32 %v7746
    %vm7753 = vmor %vm7751, %vm7752
    %v7754 = vsel %vm7753, %v7746, %v7750
    %v7755 = vand.u32 2147483647, %v7745
    %vm7756 = vcmp.eq.f32.partialorder %v7755, 8.507059e+37
    %v7757 = vand.u32 %v7745, 2147483648
    %v7758 = vor.u32 1.1754944e-38, %v7757
    %v7759 = vsel %vm7756, %v7758, %v7754
    %v7760 = vmul.f32 1.0, %v7759
    %v7761 = vxor.u32 %v7673, 2147483648
    %v7762 = vmul.f32 %v7761, 1.442695
    %v7763 = vpow.pop %v7762
    %v7764 = vadd.f32 %v7763, 1.0
    %v7765 = vrcp.pop %v7764
    %v7766 = vmul.f32 %v7764, %v7765
    %v7767 = vsub.f32 1.0, %v7766
    %v7768 = vmul.f32 %v7765, %v7767
    %v7769 = vadd.f32 %v7765, %v7768
    %vm7770 = vweird.f32 %v7764
    %vm7771 = vweird.f32 %v7765
    %vm7772 = vmor %vm7770, %vm7771
    %v7773 = vsel %vm7772, %v7765, %v7769
    %v7774 = vand.u32 2147483647, %v7764
    %vm7775 = vcmp.eq.f32.partialorder %v7774, 8.507059e+37
    %v7776 = vand.u32 %v7764, 2147483648
    %v7777 = vor.u32 1.1754944e-38, %v7776
    %v7778 = vsel %vm7775, %v7777, %v7773
    %v7779 = vmul.f32 1.0, %v7778
    %v7780 = vtanh.pop %v7674
    %v7781 = vxor.u32 %v7675, 2147483648
    %v7782 = vmul.f32 %v7781, 1.442695
    %v7783 = vpow.pop %v7782
    %v7784 = vadd.f32 %v7783, 1.0
    %v7785 = vrcp.pop %v7784
    %v7786 = vmul.f32 %v7784, %v7785
    %v7787 = vsub.f32 1.0, %v7786
    %v7788 = vmul.f32 %v7785, %v7787
    %v7789 = vadd.f32 %v7785, %v7788
    %vm7790 = vweird.f32 %v7784
    %vm7791 = vweird.f32 %v7785
    %vm7792 = vmor %vm7790, %vm7791
    %v7793 = vsel %vm7792, %v7785, %v7789
    %v7794 = vand.u32 2147483647, %v7784
    %vm7795 = vcmp.eq.f32.partialorder %v7794, 8.507059e+37
    %v7796 = vand.u32 %v7784, 2147483648
    %v7797 = vor.u32 1.1754944e-38, %v7796
    %v7798 = vsel %vm7795, %v7797, %v7793
    %v7799 = vmul.f32 1.0, %v7798
    %v7801 = vrot.slane %v7539, 2
    %v7803 = vmul.f32 %v7779, %v7801
    %v7804 = vmul.f32 %v7760, %v7780
    %v7805 = vadd.f32 %v7803, %v7804
    %v7806 = vtanh.pop %v7805
    %v7807 = vmul.f32 %v7799, %v7806
    %7808 = vst [vmem:[#allocation3 + $0x10] sm:$0xc0] %v7741
    %7809 = vst [vmem:[#allocation3 + $0x8] sm:$0x3] %v7807
    %v7810 = vld [vmem:[#allocation3] sm:$0xff]
    %v7811 = vld [vmem:[#allocation3 + $0x8] sm:$0xff]
    %v7812 = vld [vmem:[#allocation3 + $0x10] sm:$0xff]
    %v7813 = vld [vmem:[#allocation3 + $0x18] sm:$0xff]
    %v7814 = vpack.c.bf16 %v7812, %v7810
    %v7815 = vpack.c.bf16 %v7813, %v7811
    %v7816 = vld [vmem:[#allocation14] sm:$0xff]
    %v7817 = vld [vmem:[#allocation14 + $0x8] sm:$0xff]
    %v7818 = vld [vmem:[#allocation14 + $0x10] sm:$0xff]
    %v7819 = vld [vmem:[#allocation14 + $0x18] sm:$0xff]
    %v7820 = vld [vmem:[#allocation14 + $0x20] sm:$0xff]
    %v7821 = vld [vmem:[#allocation14 + $0x28] sm:$0xff]
    %v7822 = vld [vmem:[#allocation14 + $0x30] sm:$0xff]
    %v7823 = vld [vmem:[#allocation14 + $0x38] sm:$0xff]
    %v7824 = vld [vmem:[#allocation14 + $0x40] sm:$0xff]
    %v7825 = vld [vmem:[#allocation14 + $0x48] sm:$0xff]
    %v7826 = vld [vmem:[#allocation14 + $0x50] sm:$0xff]
    %v7827 = vld [vmem:[#allocation14 + $0x58] sm:$0xff]
    %v7828 = vld [vmem:[#allocation14 + $0x60] sm:$0xff]
    %v7829 = vld [vmem:[#allocation14 + $0x68] sm:$0xff]
    %v7830 = vld [vmem:[#allocation14 + $0x70] sm:$0xff]
    %v7831 = vld [vmem:[#allocation14 + $0x78] sm:$0xff]
    %v7832 = vld [vmem:[#allocation14 + $0x80] sm:$0xff]
    %v7833 = vld [vmem:[#allocation14 + $0x88] sm:$0xff]
    %v7834 = vld [vmem:[#allocation14 + $0x90] sm:$0xff]
    %v7835 = vld [vmem:[#allocation14 + $0x98] sm:$0xff]
    %v7836 = vld [vmem:[#allocation14 + $0xa0] sm:$0xff]
    %v7837 = vld [vmem:[#allocation14 + $0xa8] sm:$0xff]
    %v7838 = vld [vmem:[#allocation14 + $0xb0] sm:$0xff]
    %v7839 = vld [vmem:[#allocation14 + $0xb8] sm:$0xff]
    %v7840 = vld [vmem:[#allocation14 + $0xc0] sm:$0xff]
    %v7841 = vld [vmem:[#allocation14 + $0xc8] sm:$0xff]
    %v7842 = vld [vmem:[#allocation14 + $0xd0] sm:$0xff]
    %v7843 = vld [vmem:[#allocation14 + $0xd8] sm:$0xff]
    %v7844 = vld [vmem:[#allocation14 + $0xe0] sm:$0xff]
    %v7845 = vld [vmem:[#allocation14 + $0xe8] sm:$0xff]
    %v7846 = vld [vmem:[#allocation14 + $0xf0] sm:$0xff]
    %v7847 = vld [vmem:[#allocation14 + $0xf8] sm:$0xff]
    %v7848 = vld [vmem:[%s10] sm:$0x3]
    %v7850 = vperm.slane %v7848, 0
    %v7851 = vperm.slane %v7848, 1
    %v7886 = vunpack.c.l.b16 %v7816
    %v7887 = vunpack.c.h.b16 %v7816
    %v7888 = vunpack.c.l.b16 %v7817
    %v7889 = vunpack.c.h.b16 %v7817
    %v7890 = vunpack.c.l.b16 %v7818
    %v7891 = vunpack.c.h.b16 %v7818
    %v7892 = vunpack.c.l.b16 %v7819
    %v7893 = vunpack.c.h.b16 %v7819
    %v7894 = vunpack.c.l.b16 %v7820
    %v7895 = vunpack.c.h.b16 %v7820
    %v7896 = vunpack.c.l.b16 %v7821
    %v7897 = vunpack.c.h.b16 %v7821
    %v7898 = vunpack.c.l.b16 %v7822
    %v7899 = vunpack.c.h.b16 %v7822
    %v7900 = vunpack.c.l.b16 %v7823
    %v7901 = vunpack.c.h.b16 %v7823
    %v7902 = vunpack.c.l.b16 %v7824
    %v7903 = vunpack.c.h.b16 %v7824
    %v7904 = vunpack.c.l.b16 %v7825
    %v7905 = vunpack.c.h.b16 %v7825
    %v7906 = vunpack.c.l.b16 %v7826
    %v7907 = vunpack.c.h.b16 %v7826
    %v7908 = vunpack.c.l.b16 %v7827
    %v7909 = vunpack.c.h.b16 %v7827
    %v7910 = vunpack.c.l.b16 %v7828
    %v7911 = vunpack.c.h.b16 %v7828
    %v7912 = vunpack.c.l.b16 %v7829
    %v7913 = vunpack.c.h.b16 %v7829
    %v7914 = vunpack.c.l.b16 %v7830
    %v7915 = vunpack.c.h.b16 %v7830
    %v7916 = vunpack.c.l.b16 %v7831
    %v7917 = vunpack.c.h.b16 %v7831
    %v7918 = vunpack.c.l.b16 %v7832
    %v7919 = vunpack.c.h.b16 %v7832
    %v7920 = vunpack.c.l.b16 %v7833
    %v7921 = vunpack.c.h.b16 %v7833
    %v7922 = vunpack.c.l.b16 %v7834
    %v7923 = vunpack.c.h.b16 %v7834
    %v7924 = vunpack.c.l.b16 %v7835
    %v7925 = vunpack.c.h.b16 %v7835
    %v7926 = vunpack.c.l.b16 %v7836
    %v7927 = vunpack.c.h.b16 %v7836
    %v7928 = vunpack.c.l.b16 %v7837
    %v7929 = vunpack.c.h.b16 %v7837
    %v7930 = vunpack.c.l.b16 %v7838
    %v7931 = vunpack.c.h.b16 %v7838
    %v7932 = vunpack.c.l.b16 %v7839
    %v7933 = vunpack.c.h.b16 %v7839
    %v7934 = vunpack.c.l.b16 %v7840
    %v7935 = vunpack.c.h.b16 %v7840
    %v7936 = vunpack.c.l.b16 %v7841
    %v7937 = vunpack.c.h.b16 %v7841
    %v7938 = vunpack.c.l.b16 %v7842
    %v7939 = vunpack.c.h.b16 %v7842
    %v7940 = vunpack.c.l.b16 %v7843
    %v7941 = vunpack.c.h.b16 %v7843
    %v7942 = vunpack.c.l.b16 %v7844
    %v7943 = vunpack.c.h.b16 %v7844
    %v7944 = vunpack.c.l.b16 %v7845
    %v7945 = vunpack.c.h.b16 %v7845
    %v7946 = vunpack.c.l.b16 %v7846
    %v7947 = vunpack.c.h.b16 %v7846
    %v7948 = vunpack.c.l.b16 %v7847
    %v7949 = vunpack.c.h.b16 %v7847
    %v7950 = vpack.c.b16 %v7888, %v7886
    %v7951 = vpack.c.b16 %v7889, %v7887
    %v7952 = vpack.c.b16 %v7892, %v7890
    %v7953 = vpack.c.b16 %v7893, %v7891
    %v7954 = vpack.c.b16 %v7896, %v7894
    %v7955 = vpack.c.b16 %v7897, %v7895
    %v7956 = vpack.c.b16 %v7900, %v7898
    %v7957 = vpack.c.b16 %v7901, %v7899
    %v7958 = vpack.c.b16 %v7904, %v7902
    %v7959 = vpack.c.b16 %v7905, %v7903
    %v7960 = vpack.c.b16 %v7908, %v7906
    %v7961 = vpack.c.b16 %v7909, %v7907
    %v7962 = vpack.c.b16 %v7912, %v7910
    %v7963 = vpack.c.b16 %v7913, %v7911
    %v7964 = vpack.c.b16 %v7916, %v7914
    %v7965 = vpack.c.b16 %v7917, %v7915
    %v7966 = vpack.c.b16 %v7920, %v7918
    %v7967 = vpack.c.b16 %v7921, %v7919
    %v7968 = vpack.c.b16 %v7924, %v7922
    %v7969 = vpack.c.b16 %v7925, %v7923
    %v7970 = vpack.c.b16 %v7928, %v7926
    %v7971 = vpack.c.b16 %v7929, %v7927
    %v7972 = vpack.c.b16 %v7932, %v7930
    %v7973 = vpack.c.b16 %v7933, %v7931
    %v7974 = vpack.c.b16 %v7936, %v7934
    %v7975 = vpack.c.b16 %v7937, %v7935
    %v7976 = vpack.c.b16 %v7940, %v7938
    %v7977 = vpack.c.b16 %v7941, %v7939
    %v7978 = vpack.c.b16 %v7944, %v7942
    %v7979 = vpack.c.b16 %v7945, %v7943
    %v7980 = vpack.c.b16 %v7948, %v7946
    %v7981 = vpack.c.b16 %v7949, %v7947
    %8014 = vmatpush.bf16.msra.mxu0 %v7964
    %8015 = vmatpush.bf16.msra.mxu0 %v7962
    %8016 = vmatpush.bf16.msra.mxu0 %v7960
    %8017 = vmatpush.bf16.msra.mxu0 %v7958
    %8018 = vmatpush.bf16.msra.mxu0 %v7956
    %8019 = vmatpush.bf16.msra.mxu0 %v7954
    %8020 = vmatpush.bf16.msra.mxu0 %v7952
    %8021 = vmatpush.bf16.msra.mxu0 %v7950
    %8022 = vmatmul.bf16.gmra.mxu0 %v4261
    %v8023 = vpop.f32.mrf.mxu0
    %v8024 = vadd.f32 %v7850, %v8023
    %v8025 = vpop.f32.mrf.mxu0
    %v8026 = vadd.f32 %v7850, %v8025
    %8027 = vdwg.mxu0
    %8028 = vmatpush.bf16.msra.mxu0 %v7980
    %8029 = vmatpush.bf16.msra.mxu0 %v7978
    %8030 = vmatpush.bf16.msra.mxu0 %v7976
    %8031 = vmatpush.bf16.msra.mxu0 %v7974
    %8032 = vmatpush.bf16.msra.mxu0 %v7972
    %8033 = vmatpush.bf16.msra.mxu0 %v7970
    %8034 = vmatpush.bf16.msra.mxu0 %v7968
    %8035 = vmatpush.bf16.msra.mxu0 %v7966
    %8036 = vmatmul.bf16.gmra.mxu0 %v4262
    %v8037 = vpop.f32.mrf.mxu0
    %v8038 = vadd.f32 %v8024, %v8037
    %v8039 = vpop.f32.mrf.mxu0
    %v8040 = vadd.f32 %v8026, %v8039
    %8041 = vdwg.mxu0
    %8042 = vmatpush.bf16.msra.mxu0 %v7965
    %8043 = vmatpush.bf16.msra.mxu0 %v7963
    %8044 = vmatpush.bf16.msra.mxu0 %v7961
    %8045 = vmatpush.bf16.msra.mxu0 %v7959
    %8046 = vmatpush.bf16.msra.mxu0 %v7957
    %8047 = vmatpush.bf16.msra.mxu0 %v7955
    %8048 = vmatpush.bf16.msra.mxu0 %v7953
    %8049 = vmatpush.bf16.msra.mxu0 %v7951
    %8050 = vmatmul.bf16.gmra.mxu0 %v4261
    %v8051 = vpop.f32.mrf.mxu0
    %v8052 = vadd.f32 %v7851, %v8051
    %v8053 = vpop.f32.mrf.mxu0
    %v8054 = vadd.f32 %v7851, %v8053
    %8055 = vdwg.mxu0
    %8056 = vmatpush.bf16.msra.mxu0 %v7981
    %8057 = vmatpush.bf16.msra.mxu0 %v7979
    %8058 = vmatpush.bf16.msra.mxu0 %v7977
    %8059 = vmatpush.bf16.msra.mxu0 %v7975
    %8060 = vmatpush.bf16.msra.mxu0 %v7973
    %8061 = vmatpush.bf16.msra.mxu0 %v7971
    %8062 = vmatpush.bf16.msra.mxu0 %v7969
    %8063 = vmatpush.bf16.msra.mxu0 %v7967
    %8064 = vmatmul.bf16.gmra.mxu0 %v4262
    %v8065 = vpop.f32.mrf.mxu0
    %v8066 = vadd.f32 %v8052, %v8065
    %v8067 = vpop.f32.mrf.mxu0
    %v8068 = vadd.f32 %v8054, %v8067
    %8069 = vdwg.mxu0
    %v8070 = vmax.f32 %v8038, 0.0
    %v8071 = vmax.f32 %v8066, 0.0
    %v8072 = vmax.f32 %v8040, 0.0
    %v8073 = vmax.f32 %v8068, 0.0
    %v8074 = vld [vmem:[#allocation15] sm:$0xff]
    %v8075 = vld [vmem:[#allocation15 + $0x8] sm:$0xff]
    %v8076 = vld [vmem:[#allocation15 + $0x10] sm:$0xff]
    %v8077 = vld [vmem:[#allocation15 + $0x18] sm:$0xff]
    %v8078 = vld [vmem:[#allocation15 + $0x20] sm:$0xff]
    %v8079 = vld [vmem:[#allocation15 + $0x28] sm:$0xff]
    %v8080 = vld [vmem:[#allocation15 + $0x30] sm:$0xff]
    %v8081 = vld [vmem:[#allocation15 + $0x38] sm:$0xff]
    %v8082 = vld [vmem:[#allocation15 + $0x40] sm:$0xff]
    %v8083 = vld [vmem:[#allocation15 + $0x48] sm:$0xff]
    %v8084 = vld [vmem:[#allocation15 + $0x50] sm:$0xff]
    %v8085 = vld [vmem:[#allocation15 + $0x58] sm:$0xff]
    %v8086 = vld [vmem:[#allocation15 + $0x60] sm:$0xff]
    %v8087 = vld [vmem:[#allocation15 + $0x68] sm:$0xff]
    %v8088 = vld [vmem:[#allocation15 + $0x70] sm:$0xff]
    %v8089 = vld [vmem:[#allocation15 + $0x78] sm:$0xff]
    %v8090 = vld [vmem:[#allocation15 + $0x80] sm:$0xff]
    %v8091 = vld [vmem:[#allocation15 + $0x88] sm:$0xff]
    %v8092 = vld [vmem:[#allocation15 + $0x90] sm:$0xff]
    %v8093 = vld [vmem:[#allocation15 + $0x98] sm:$0xff]
    %v8094 = vld [vmem:[#allocation15 + $0xa0] sm:$0xff]
    %v8095 = vld [vmem:[#allocation15 + $0xa8] sm:$0xff]
    %v8096 = vld [vmem:[#allocation15 + $0xb0] sm:$0xff]
    %v8097 = vld [vmem:[#allocation15 + $0xb8] sm:$0xff]
    %v8098 = vld [vmem:[#allocation15 + $0xc0] sm:$0xff]
    %v8099 = vld [vmem:[#allocation15 + $0xc8] sm:$0xff]
    %v8100 = vld [vmem:[#allocation15 + $0xd0] sm:$0xff]
    %v8101 = vld [vmem:[#allocation15 + $0xd8] sm:$0xff]
    %v8102 = vld [vmem:[#allocation15 + $0xe0] sm:$0xff]
    %v8103 = vld [vmem:[#allocation15 + $0xe8] sm:$0xff]
    %v8104 = vld [vmem:[#allocation15 + $0xf0] sm:$0xff]
    %v8105 = vld [vmem:[#allocation15 + $0xf8] sm:$0xff]
    %v8106 = vld [vmem:[%s12] sm:$0x3]
    %v8108 = vperm.slane %v8106, 0
    %v8109 = vperm.slane %v8106, 1
    %v8144 = vunpack.c.l.b16 %v8074
    %v8145 = vunpack.c.h.b16 %v8074
    %v8146 = vunpack.c.l.b16 %v8075
    %v8147 = vunpack.c.h.b16 %v8075
    %v8148 = vunpack.c.l.b16 %v8076
    %v8149 = vunpack.c.h.b16 %v8076
    %v8150 = vunpack.c.l.b16 %v8077
    %v8151 = vunpack.c.h.b16 %v8077
    %v8152 = vunpack.c.l.b16 %v8078
    %v8153 = vunpack.c.h.b16 %v8078
    %v8154 = vunpack.c.l.b16 %v8079
    %v8155 = vunpack.c.h.b16 %v8079
    %v8156 = vunpack.c.l.b16 %v8080
    %v8157 = vunpack.c.h.b16 %v8080
    %v8158 = vunpack.c.l.b16 %v8081
    %v8159 = vunpack.c.h.b16 %v8081
    %v8160 = vunpack.c.l.b16 %v8082
    %v8161 = vunpack.c.h.b16 %v8082
    %v8162 = vunpack.c.l.b16 %v8083
    %v8163 = vunpack.c.h.b16 %v8083
    %v8164 = vunpack.c.l.b16 %v8084
    %v8165 = vunpack.c.h.b16 %v8084
    %v8166 = vunpack.c.l.b16 %v8085
    %v8167 = vunpack.c.h.b16 %v8085
    %v8168 = vunpack.c.l.b16 %v8086
    %v8169 = vunpack.c.h.b16 %v8086
    %v8170 = vunpack.c.l.b16 %v8087
    %v8171 = vunpack.c.h.b16 %v8087
    %v8172 = vunpack.c.l.b16 %v8088
    %v8173 = vunpack.c.h.b16 %v8088
    %v8174 = vunpack.c.l.b16 %v8089
    %v8175 = vunpack.c.h.b16 %v8089
    %v8176 = vunpack.c.l.b16 %v8090
    %v8177 = vunpack.c.h.b16 %v8090
    %v8178 = vunpack.c.l.b16 %v8091
    %v8179 = vunpack.c.h.b16 %v8091
    %v8180 = vunpack.c.l.b16 %v8092
    %v8181 = vunpack.c.h.b16 %v8092
    %v8182 = vunpack.c.l.b16 %v8093
    %v8183 = vunpack.c.h.b16 %v8093
    %v8184 = vunpack.c.l.b16 %v8094
    %v8185 = vunpack.c.h.b16 %v8094
    %v8186 = vunpack.c.l.b16 %v8095
    %v8187 = vunpack.c.h.b16 %v8095
    %v8188 = vunpack.c.l.b16 %v8096
    %v8189 = vunpack.c.h.b16 %v8096
    %v8190 = vunpack.c.l.b16 %v8097
    %v8191 = vunpack.c.h.b16 %v8097
    %v8192 = vunpack.c.l.b16 %v8098
    %v8193 = vunpack.c.h.b16 %v8098
    %v8194 = vunpack.c.l.b16 %v8099
    %v8195 = vunpack.c.h.b16 %v8099
    %v8196 = vunpack.c.l.b16 %v8100
    %v8197 = vunpack.c.h.b16 %v8100
    %v8198 = vunpack.c.l.b16 %v8101
    %v8199 = vunpack.c.h.b16 %v8101
    %v8200 = vunpack.c.l.b16 %v8102
    %v8201 = vunpack.c.h.b16 %v8102
    %v8202 = vunpack.c.l.b16 %v8103
    %v8203 = vunpack.c.h.b16 %v8103
    %v8204 = vunpack.c.l.b16 %v8104
    %v8205 = vunpack.c.h.b16 %v8104
    %v8206 = vunpack.c.l.b16 %v8105
    %v8207 = vunpack.c.h.b16 %v8105
    %v8208 = vpack.c.b16 %v8146, %v8144
    %v8209 = vpack.c.b16 %v8147, %v8145
    %v8210 = vpack.c.b16 %v8150, %v8148
    %v8211 = vpack.c.b16 %v8151, %v8149
    %v8212 = vpack.c.b16 %v8154, %v8152
    %v8213 = vpack.c.b16 %v8155, %v8153
    %v8214 = vpack.c.b16 %v8158, %v8156
    %v8215 = vpack.c.b16 %v8159, %v8157
    %v8216 = vpack.c.b16 %v8162, %v8160
    %v8217 = vpack.c.b16 %v8163, %v8161
    %v8218 = vpack.c.b16 %v8166, %v8164
    %v8219 = vpack.c.b16 %v8167, %v8165
    %v8220 = vpack.c.b16 %v8170, %v8168
    %v8221 = vpack.c.b16 %v8171, %v8169
    %v8222 = vpack.c.b16 %v8174, %v8172
    %v8223 = vpack.c.b16 %v8175, %v8173
    %v8224 = vpack.c.b16 %v8178, %v8176
    %v8225 = vpack.c.b16 %v8179, %v8177
    %v8226 = vpack.c.b16 %v8182, %v8180
    %v8227 = vpack.c.b16 %v8183, %v8181
    %v8228 = vpack.c.b16 %v8186, %v8184
    %v8229 = vpack.c.b16 %v8187, %v8185
    %v8230 = vpack.c.b16 %v8190, %v8188
    %v8231 = vpack.c.b16 %v8191, %v8189
    %v8232 = vpack.c.b16 %v8194, %v8192
    %v8233 = vpack.c.b16 %v8195, %v8193
    %v8234 = vpack.c.b16 %v8198, %v8196
    %v8235 = vpack.c.b16 %v8199, %v8197
    %v8236 = vpack.c.b16 %v8202, %v8200
    %v8237 = vpack.c.b16 %v8203, %v8201
    %v8238 = vpack.c.b16 %v8206, %v8204
    %v8239 = vpack.c.b16 %v8207, %v8205
    %8272 = vmatpush.bf16.msra.mxu0 %v8222
    %8273 = vmatpush.bf16.msra.mxu0 %v8220
    %8274 = vmatpush.bf16.msra.mxu0 %v8218
    %8275 = vmatpush.bf16.msra.mxu0 %v8216
    %8276 = vmatpush.bf16.msra.mxu0 %v8214
    %8277 = vmatpush.bf16.msra.mxu0 %v8212
    %8278 = vmatpush.bf16.msra.mxu0 %v8210
    %8279 = vmatpush.bf16.msra.mxu0 %v8208
    %8280 = vmatmul.bf16.gmra.mxu0 %v7814
    %v8281 = vpop.f32.mrf.mxu0
    %v8282 = vadd.f32 %v8108, %v8281
    %v8283 = vpop.f32.mrf.mxu0
    %v8284 = vadd.f32 %v8108, %v8283
    %8285 = vdwg.mxu0
    %8286 = vmatpush.bf16.msra.mxu0 %v8238
    %8287 = vmatpush.bf16.msra.mxu0 %v8236
    %8288 = vmatpush.bf16.msra.mxu0 %v8234
    %8289 = vmatpush.bf16.msra.mxu0 %v8232
    %8290 = vmatpush.bf16.msra.mxu0 %v8230
    %8291 = vmatpush.bf16.msra.mxu0 %v8228
    %8292 = vmatpush.bf16.msra.mxu0 %v8226
    %8293 = vmatpush.bf16.msra.mxu0 %v8224
    %8294 = vmatmul.bf16.gmra.mxu0 %v7815
    %v8295 = vpop.f32.mrf.mxu0
    %v8296 = vadd.f32 %v8282, %v8295
    %v8297 = vpop.f32.mrf.mxu0
    %v8298 = vadd.f32 %v8284, %v8297
    %8299 = vdwg.mxu0
    %8300 = vmatpush.bf16.msra.mxu0 %v8223
    %8301 = vmatpush.bf16.msra.mxu0 %v8221
    %8302 = vmatpush.bf16.msra.mxu0 %v8219
    %8303 = vmatpush.bf16.msra.mxu0 %v8217
    %8304 = vmatpush.bf16.msra.mxu0 %v8215
    %8305 = vmatpush.bf16.msra.mxu0 %v8213
    %8306 = vmatpush.bf16.msra.mxu0 %v8211
    %8307 = vmatpush.bf16.msra.mxu0 %v8209
    %8308 = vmatmul.bf16.gmra.mxu0 %v7814
    %v8309 = vpop.f32.mrf.mxu0
    %v8310 = vadd.f32 %v8109, %v8309
    %v8311 = vpop.f32.mrf.mxu0
    %v8312 = vadd.f32 %v8109, %v8311
    %8313 = vdwg.mxu0
    %8314 = vmatpush.bf16.msra.mxu0 %v8239
    %8315 = vmatpush.bf16.msra.mxu0 %v8237
    %8316 = vmatpush.bf16.msra.mxu0 %v8235
    %8317 = vmatpush.bf16.msra.mxu0 %v8233
    %8318 = vmatpush.bf16.msra.mxu0 %v8231
    %8319 = vmatpush.bf16.msra.mxu0 %v8229
    %8320 = vmatpush.bf16.msra.mxu0 %v8227
    %8321 = vmatpush.bf16.msra.mxu0 %v8225
    %8322 = vmatmul.bf16.gmra.mxu0 %v7815
    %v8323 = vpop.f32.mrf.mxu0
    %v8324 = vadd.f32 %v8310, %v8323
    %v8325 = vpop.f32.mrf.mxu0
    %v8326 = vadd.f32 %v8312, %v8325
    %8327 = vdwg.mxu0
    %v8328 = vmax.f32 %v8296, 0.0
    %v8329 = vmax.f32 %v8324, 0.0
    %v8330 = vmax.f32 %v8298, 0.0
    %v8331 = vmax.f32 %v8326, 0.0
    %v8332 = vadd.f32 %v4257, %v7810
    %v8333 = vadd.f32 %v4258, %v7811
    %v8334 = vadd.f32 %v4259, %v7812
    %v8335 = vadd.f32 %v4260, %v7813
    %v8336 = vadd.f32 %v8332, %v8070
    %v8337 = vadd.f32 %v8333, %v8071
    %v8338 = vadd.f32 %v8334, %v8072
    %v8339 = vadd.f32 %v8335, %v8073
    %v8340 = vadd.f32 %v8336, %v8328
    %v8341 = vadd.f32 %v8337, %v8329
    %v8342 = vadd.f32 %v8338, %v8330
    %v8343 = vadd.f32 %v8339, %v8331
    %v8344 = vpack.c.bf16 %v8342, %v8340
    %v8345 = vpack.c.bf16 %v8343, %v8341
    %v8346 = vld [vmem:[%s13] sm:$0xf]
    %v8347 = vld [vmem:[%s13 + $0x4] sm:$0xf]
    %v8348 = vld [vmem:[%s13 + $0x8] sm:$0xf]
    %v8349 = vld [vmem:[%s13 + $0xc] sm:$0xf]
    %v8350 = vld [vmem:[%s13 + $0x10] sm:$0xf]
    %v8351 = vld [vmem:[%s13 + $0x14] sm:$0xf]
    %v8352 = vld [vmem:[%s13 + $0x18] sm:$0xf]
    %v8353 = vld [vmem:[%s13 + $0x1c] sm:$0xf]
    %v8354 = vld [vmem:[%s13 + $0x20] sm:$0xf]
    %v8355 = vld [vmem:[%s13 + $0x24] sm:$0xf]
    %v8356 = vld [vmem:[%s13 + $0x28] sm:$0xf]
    %v8357 = vld [vmem:[%s13 + $0x2c] sm:$0xf]
    %v8358 = vld [vmem:[%s13 + $0x30] sm:$0xf]
    %v8359 = vld [vmem:[%s13 + $0x34] sm:$0xf]
    %v8360 = vld [vmem:[%s13 + $0x38] sm:$0xf]
    %v8361 = vld [vmem:[%s13 + $0x3c] sm:$0xf]
    %v8362 = vld [vmem:[%s13 + $0x40] sm:$0xf]
    %v8363 = vld [vmem:[%s13 + $0x44] sm:$0xf]
    %v8364 = vld [vmem:[%s13 + $0x48] sm:$0xf]
    %v8365 = vld [vmem:[%s13 + $0x4c] sm:$0xf]
    %v8366 = vld [vmem:[%s13 + $0x50] sm:$0xf]
    %v8367 = vld [vmem:[%s13 + $0x54] sm:$0xf]
    %v8368 = vld [vmem:[%s13 + $0x58] sm:$0xf]
    %v8369 = vld [vmem:[%s13 + $0x5c] sm:$0xf]
    %v8370 = vld [vmem:[%s13 + $0x60] sm:$0xf]
    %v8371 = vld [vmem:[%s13 + $0x64] sm:$0xf]
    %v8372 = vld [vmem:[%s13 + $0x68] sm:$0xf]
    %v8373 = vld [vmem:[%s13 + $0x6c] sm:$0xf]
    %v8374 = vld [vmem:[%s13 + $0x70] sm:$0xf]
    %v8375 = vld [vmem:[%s13 + $0x74] sm:$0xf]
    %v8376 = vld [vmem:[%s13 + $0x78] sm:$0xf]
    %v8377 = vld [vmem:[%s13 + $0x7c] sm:$0xf]
    %v8378 = vld [vmem:[#allocation17] sm:$0xf]
    %v8379 = vld [vmem:[#allocation17 + $0x4] sm:$0xf]
    %v8380 = vld [vmem:[#allocation17 + $0x8] sm:$0xf]
    %v8381 = vld [vmem:[#allocation17 + $0xc] sm:$0xf]
    %v8382 = vld [vmem:[#allocation17 + $0x10] sm:$0xf]
    %v8383 = vld [vmem:[#allocation17 + $0x14] sm:$0xf]
    %v8384 = vld [vmem:[#allocation17 + $0x18] sm:$0xf]
    %v8385 = vld [vmem:[#allocation17 + $0x1c] sm:$0xf]
    %v8386 = vld [vmem:[#allocation17 + $0x20] sm:$0xf]
    %v8387 = vld [vmem:[#allocation17 + $0x24] sm:$0xf]
    %v8388 = vld [vmem:[#allocation17 + $0x28] sm:$0xf]
    %v8389 = vld [vmem:[#allocation17 + $0x2c] sm:$0xf]
    %v8390 = vld [vmem:[#allocation17 + $0x30] sm:$0xf]
    %v8391 = vld [vmem:[#allocation17 + $0x34] sm:$0xf]
    %v8392 = vld [vmem:[#allocation17 + $0x38] sm:$0xf]
    %v8393 = vld [vmem:[#allocation17 + $0x3c] sm:$0xf]
    %v8410 = vunpack.c.l.b16 %v8378
    %v8411 = vunpack.c.l.b16 %v8379
    %v8412 = vunpack.c.l.b16 %v8380
    %v8413 = vunpack.c.l.b16 %v8381
    %v8414 = vunpack.c.l.b16 %v8382
    %v8415 = vunpack.c.l.b16 %v8383
    %v8416 = vunpack.c.l.b16 %v8384
    %v8417 = vunpack.c.l.b16 %v8385
    %v8418 = vunpack.c.l.b16 %v8386
    %v8419 = vunpack.c.l.b16 %v8387
    %v8420 = vunpack.c.l.b16 %v8388
    %v8421 = vunpack.c.l.b16 %v8389
    %v8422 = vunpack.c.l.b16 %v8390
    %v8423 = vunpack.c.l.b16 %v8391
    %v8424 = vunpack.c.l.b16 %v8392
    %v8425 = vunpack.c.l.b16 %v8393
    %v8426 = vpack.c.b16 %v8411, %v8410
    %v8427 = vpack.c.b16 %v8413, %v8412
    %v8428 = vpack.c.b16 %v8415, %v8414
    %v8429 = vpack.c.b16 %v8417, %v8416
    %v8430 = vpack.c.b16 %v8419, %v8418
    %v8431 = vpack.c.b16 %v8421, %v8420
    %v8432 = vpack.c.b16 %v8423, %v8422
    %v8433 = vpack.c.b16 %v8425, %v8424
    %8442 = vmatpush.bf16.msra.mxu0 %v8433
    %8443 = vmatpush.bf16.msra.mxu0 %v8432
    %8444 = vmatpush.bf16.msra.mxu0 %v8431
    %8445 = vmatpush.bf16.msra.mxu0 %v8430
    %8446 = vmatpush.bf16.msra.mxu0 %v8429
    %8447 = vmatpush.bf16.msra.mxu0 %v8428
    %8448 = vmatpush.bf16.msra.mxu0 %v8427
    %8449 = vmatpush.bf16.msra.mxu0 %v8426
    %8450 = vmatmul.bf16.gmra.mxu0 %v482
    %v8451 = vpop.f32.mrf.mxu0
    %v8452 = vadd.f32 0.0, %v8451
    %v8453 = vpop.f32.mrf.mxu0
    %v8454 = vadd.f32 0.0, %v8453
    %8455 = vdwg.mxu0
    %v8488 = vunpack.c.l.b16 %v8346
    %v8489 = vunpack.c.l.b16 %v8347
    %v8490 = vunpack.c.l.b16 %v8348
    %v8491 = vunpack.c.l.b16 %v8349
    %v8492 = vunpack.c.l.b16 %v8350
    %v8493 = vunpack.c.l.b16 %v8351
    %v8494 = vunpack.c.l.b16 %v8352
    %v8495 = vunpack.c.l.b16 %v8353
    %v8496 = vunpack.c.l.b16 %v8354
    %v8497 = vunpack.c.l.b16 %v8355
    %v8498 = vunpack.c.l.b16 %v8356
    %v8499 = vunpack.c.l.b16 %v8357
    %v8500 = vunpack.c.l.b16 %v8358
    %v8501 = vunpack.c.l.b16 %v8359
    %v8502 = vunpack.c.l.b16 %v8360
    %v8503 = vunpack.c.l.b16 %v8361
    %v8504 = vunpack.c.l.b16 %v8362
    %v8505 = vunpack.c.l.b16 %v8363
    %v8506 = vunpack.c.l.b16 %v8364
    %v8507 = vunpack.c.l.b16 %v8365
    %v8508 = vunpack.c.l.b16 %v8366
    %v8509 = vunpack.c.l.b16 %v8367
    %v8510 = vunpack.c.l.b16 %v8368
    %v8511 = vunpack.c.l.b16 %v8369
    %v8512 = vunpack.c.l.b16 %v8370
    %v8513 = vunpack.c.l.b16 %v8371
    %v8514 = vunpack.c.l.b16 %v8372
    %v8515 = vunpack.c.l.b16 %v8373
    %v8516 = vunpack.c.l.b16 %v8374
    %v8517 = vunpack.c.l.b16 %v8375
    %v8518 = vunpack.c.l.b16 %v8376
    %v8519 = vunpack.c.l.b16 %v8377
    %v8520 = vpack.c.b16 %v8489, %v8488
    %v8521 = vpack.c.b16 %v8491, %v8490
    %v8522 = vpack.c.b16 %v8493, %v8492
    %v8523 = vpack.c.b16 %v8495, %v8494
    %v8524 = vpack.c.b16 %v8497, %v8496
    %v8525 = vpack.c.b16 %v8499, %v8498
    %v8526 = vpack.c.b16 %v8501, %v8500
    %v8527 = vpack.c.b16 %v8503, %v8502
    %v8528 = vpack.c.b16 %v8505, %v8504
    %v8529 = vpack.c.b16 %v8507, %v8506
    %v8530 = vpack.c.b16 %v8509, %v8508
    %v8531 = vpack.c.b16 %v8511, %v8510
    %v8532 = vpack.c.b16 %v8513, %v8512
    %v8533 = vpack.c.b16 %v8515, %v8514
    %v8534 = vpack.c.b16 %v8517, %v8516
    %v8535 = vpack.c.b16 %v8519, %v8518
    %8552 = vmatpush.bf16.msra.mxu0 %v8527
    %8553 = vmatpush.bf16.msra.mxu0 %v8526
    %8554 = vmatpush.bf16.msra.mxu0 %v8525
    %8555 = vmatpush.bf16.msra.mxu0 %v8524
    %8556 = vmatpush.bf16.msra.mxu0 %v8523
    %8557 = vmatpush.bf16.msra.mxu0 %v8522
    %8558 = vmatpush.bf16.msra.mxu0 %v8521
    %8559 = vmatpush.bf16.msra.mxu0 %v8520
    %8560 = vmatmul.bf16.gmra.mxu0 %v8344
    %v8561 = vpop.f32.mrf.mxu0
    %v8562 = vadd.f32 %v8452, %v8561
    %v8563 = vpop.f32.mrf.mxu0
    %v8564 = vadd.f32 %v8454, %v8563
    %8565 = vdwg.mxu0
    %8566 = vmatpush.bf16.msra.mxu0 %v8535
    %8567 = vmatpush.bf16.msra.mxu0 %v8534
    %8568 = vmatpush.bf16.msra.mxu0 %v8533
    %8569 = vmatpush.bf16.msra.mxu0 %v8532
    %8570 = vmatpush.bf16.msra.mxu0 %v8531
    %8571 = vmatpush.bf16.msra.mxu0 %v8530
    %8572 = vmatpush.bf16.msra.mxu0 %v8529
    %8573 = vmatpush.bf16.msra.mxu0 %v8528
    %8574 = vmatmul.bf16.gmra.mxu0 %v8345
    %v8575 = vpop.f32.mrf.mxu0
    %v8576 = vadd.f32 %v8562, %v8575
    %v8577 = vpop.f32.mrf.mxu0
    %v8578 = vadd.f32 %v8564, %v8577
    %8579 = vdwg.mxu0
    %v8580 = vld [vmem:[%s15] sm:$0x1]
    %v8582 = vperm.slane %v8580, 0
    %v8584 = vadd.f32 %v8576, %v8582
    %v8585 = vadd.f32 %v8578, %v8582
    %8586 = vst [vmem:[%s16] sm:$0xff] %v8584
    %8587 = vst [vmem:[%s16 + $0x8] sm:$0xff] %v8585
    // Predicated region
    $region102: #{neuralnet_forward.1} parent=1 // pred_check
      _
    $region103: #{neuralnet_forward.1} parent=1 // pred_check_branch
      %8589 = sbr.rel (0) target = $region105
    $region104: #{neuralnet_forward.1} parent=1 // pred_region
      _
    $region105: #{neuralnet_forward.1} parent=1 // pred_fallthru
      _
    // Predicated region
    $region106: #{neuralnet_forward.1} parent=1 // pred_check
      _
    $region107: #{neuralnet_forward.1} parent=1 // pred_check_branch
      %8591 = sbr.rel (0) target = $region109
    $region108: #{neuralnet_forward.1} parent=1 // pred_region
      _
    $region109: #{neuralnet_forward.1} parent=1 // pred_fallthru
      _
    %8592 = vsyncpa [#allocation5], 1
    %8593 = vsyncpa [#allocation7], 1
    %8594 = vsyncpa [#allocation10], 1
    %8595 = vsyncpa [#allocation13], 1
    %8596 = vsyncpa [#allocation16], 1

</llo_original>
